<compile_context>
chip_gen: v7x
topology: tpu7x:2x2x1
jax: 0.10.0
libtpu: 0.0.40
codegen_flags: <defaults>
</compile_context>

<pallas_src>
import jax
import jax.numpy as jnp
from jax.experimental import pallas as pl
from jax.experimental.pallas import tpu as pltpu


# ------------------------------ fused kernel --------------------------------

def vgg_fused_kernel(x_ref, wc1_ref, bc1_ref, wc2_ref, bc2_ref,
                     b1_ref, b2_ref, b3_ref, alpha_ref,
                     w1_hbm, w2_hbm, w3_hbm,
                     o_ref,
                     xpad1, imc1, q1, xpad2, imc2, p2h, fcin,
                     w1v, w2v, w3v, sem):
    f32, bf16 = jnp.float32, jnp.bfloat16
    B, H, W, C0 = x_ref.shape
    C1 = wc1_ref.shape[1]
    H2, W2 = H // 2, W // 2
    H3, W3 = H2 // 2, W2 // 2

    # ---- kick off classifier-weight DMAs (HBM -> VMEM); hidden behind convs --
    cp1 = pltpu.make_async_copy(w1_hbm, w1v, sem.at[0])
    cp2 = pltpu.make_async_copy(w2_hbm, w2v, sem.at[1])
    cp3 = pltpu.make_async_copy(w3_hbm, w3v, sem.at[2])
    cp1.start()
    cp2.start()
    cp3.start()

    def build_padded(xpad_ref, interior, Hs, Ws):
        """Zero-pad halo (aligned slabs only) + store interior at (row 1, col 8).

        Taps later read rows [0, Hs+2) and cols [7, Ws+9); anything else in the
        buffer is never read, so it is left uninitialized.
        """
        Bb, _, Wp, Cc = xpad_ref.shape
        xpad_ref[:, 0, :, :] = jnp.zeros((Bb, Wp, Cc), f32)
        xpad_ref[:, Hs + 1, :, :] = jnp.zeros((Bb, Wp, Cc), f32)
        xpad_ref[:, :, 0:8, :] = jnp.zeros((Bb, Hs + 2, 8, Cc), f32)
        xpad_ref[:, :, Ws + 8:Ws + 16, :] = jnp.zeros((Bb, Hs + 2, 8, Cc), f32)
        xpad_ref[:, 1:Hs + 1, 8:8 + Ws, :] = interior      # aligned sublane store

    def im2col(xpad_ref, imc_ref, Hs, Ws, Cin):
        """9 tap reads straight from the padded ref into the im2col scratch."""
        Bb = xpad_ref.shape[0]
        M = Bb * Hs * Ws
        for dh in range(3):
            for dw in range(3):
                t = dh * 3 + dw
                patch = xpad_ref[:, dh:dh + Hs, 7 + dw:7 + dw + Ws, :]   # (B,Hs,Ws,Cin)
                imc_ref[:, t * Cin:(t + 1) * Cin] = (
                    patch.reshape(M, Cin).astype(bf16))

    # ----------------------------- conv1 + ReLU ------------------------------
    build_padded(xpad1, x_ref[...], H, W)
    im2col(xpad1, imc1, H, W, C0)

    # Chunked MXU dots (M=128 per chunk) with the H-direction of maxpool1 fused
    # into the epilogue; keeps the accumulator at 16 vregs (no spills).
    HC = 128 // W                       # rows of H per chunk (8 here; H % HC == 0)
    for b in range(B):
        for h0 in range(0, H, HC):
            r0 = (b * H + h0) * W
            lhs = imc1[r0:r0 + HC * W, :]                            # (128, 9*C0) bf16
            y = jnp.dot(lhs, wc1_ref[...], preferred_element_type=f32)
            y = jnp.maximum(y + bc1_ref[...], 0.0)                   # (128, C1) f32
            yr = y.reshape(HC // 2, 2, W, C1)                        # outer-dim split
            q1[b * H2 + h0 // 2: b * H2 + h0 // 2 + HC // 2, :, :] = (
                jnp.maximum(yr[:, 0], yr[:, 1]))                     # H-pair max

    # maxpool1, W-direction: stride-2 sublane reads from the scratch ref.
    p1 = jnp.maximum(q1[:, pl.ds(0, W2, 2), :],
                     q1[:, pl.ds(1, W2, 2), :])                      # (B*H2, W2, C1)

    # ----------------------------- conv2 + ReLU ------------------------------
    build_padded(xpad2, p1.reshape(B, H2, W2, C1), H2, W2)
    im2col(xpad2, imc2, H2, W2, C1)
    y2 = jnp.dot(imc2[...], wc2_ref[...], preferred_element_type=f32)
    y2 = jnp.maximum(y2 + bc2_ref[...], 0.0)                         # (B*H2*W2, C1)

    # maxpool2 H-direction fused into the conv2 epilogue.
    y2r = y2.reshape(B, H3, 2, W2, C1)
    p2h[...] = jnp.maximum(y2r[:, :, 0], y2r[:, :, 1])               # (B, H3, W2, C1)

    # maxpool2 W-direction + staging of the FC1 input: window (h3,w3) lands at
    # lane offset (h3*W3+w3)*C1 of fcin; w1 rows are pre-permuted to the same
    # (h3, w3, c) order, so this reproduces torch's NCHW flatten exactly.
    for h3 in range(H3):
        for w3 in range(W3):
            win = jnp.maximum(p2h[:, h3, 2 * w3, :],
                              p2h[:, h3, 2 * w3 + 1, :])             # (B, C1)
            k = (h3 * W3 + w3) * C1
            fcin[:, k:k + C1] = win.astype(bf16)

    # ------------------------------ classifier -------------------------------
    cp1.wait()
    h1 = jnp.dot(fcin[...], w1v[...], preferred_element_type=f32) + b1_ref[...]
    h1 = jnp.where(h1 > 0.0, h1, alpha_ref[0] * h1)                  # PReLU(init=0)
    # TODO(synk): nn.Dropout() is stochastic in train mode; eval-mode identity here.
    cp2.wait()
    h2 = jnp.dot(h1.astype(bf16), w2v[...], preferred_element_type=f32) + b2_ref[...]
    h2 = jnp.where(h2 > 0.0, h2, alpha_ref[1] * h2)                  # PReLU(init=0)
    # TODO(synk): second nn.Dropout() — eval-mode identity.
    cp3.wait()
    o_ref[...] = (jnp.dot(h2.astype(bf16), w3v[...], preferred_element_type=f32)
                  + b3_ref[...])


# -------------------------------- wrapper ------------------------------------

def vgg_forward(x_nchw, params, num_classes=10):
    B, C0, H, W = x_nchw.shape
    C1 = params["wc1"].shape[1]
    H2, W2 = H // 2, W // 2
    H3, W3 = H2 // 2, W2 // 2
    feat = params["w1v"].shape[0]
    n_pad = params["w3p"].shape[1]

    x_nhwc = jnp.transpose(x_nchw, (0, 2, 3, 1)).astype(jnp.float32)

    vmem = pl.BlockSpec(memory_space=pltpu.MemorySpace.VMEM)
    smem = pl.BlockSpec(memory_space=pltpu.MemorySpace.SMEM)
    hbm = pl.BlockSpec(memory_space=pl.ANY)     # FC weights stay in HBM; DMA'd in-kernel

    out_padded = pl.pallas_call(
        vgg_fused_kernel,
        out_shape=jax.ShapeDtypeStruct((B, n_pad), jnp.float32),
        in_specs=[vmem] * 8 + [smem] + [hbm] * 3,
        out_specs=vmem,
        scratch_shapes=[
            pltpu.VMEM((B, H + 2, W + 16, C0), jnp.float32),     # xpad1 (padded conv1 in)
            pltpu.VMEM((B * H * W, 9 * C0), jnp.bfloat16),       # imc1 (im2col conv1)
            pltpu.VMEM((B * H2, W, C1), jnp.float32),            # q1   (H-pooled conv1)
            pltpu.VMEM((B, H2 + 2, W2 + 16, C1), jnp.float32),   # xpad2 (padded conv2 in)
            pltpu.VMEM((B * H2 * W2, 9 * C1), jnp.bfloat16),     # imc2 (im2col conv2)
            pltpu.VMEM((B, H3, W2, C1), jnp.float32),            # p2h  (H-pooled conv2)
            pltpu.VMEM((B, H3 * W3 * C1), jnp.bfloat16),         # fcin (flattened FC1 in)
            pltpu.VMEM((feat, feat), jnp.bfloat16),              # w1 landing buffer
            pltpu.VMEM((feat, feat), jnp.bfloat16),              # w2 landing buffer
            pltpu.VMEM((feat, n_pad), jnp.bfloat16),             # w3 landing buffer
            pltpu.SemaphoreType.DMA((3,)),                       # one sem per weight DMA
        ],
    )(x_nhwc, params["wc1"], params["bc1"], params["wc2"], params["bc2"],
      params["b1"], params["b2"], params["b3p"], params["alphas"],
      params["w1v"], params["w2"], params["w3p"])
    return out_padded[:, :num_classes]


# ------------------------- deterministic parameters --------------------------

def init_params(key, num_classes=10, c_in=4, c_mid=32, h=16, w=16):
    ks = jax.random.split(key, 5)
    h3, w3 = h // 4, w // 4
    feat = h3 * w3 * c_mid                       # 512, matches Linear(512, ...)
    bf16 = jnp.bfloat16
    # Conv2d: kaiming_normal_(mode='fan_out', nonlinearity='relu'); bias = 0.
    # Kernel layout (9*Cin, Cout): row (dh*3+dw)*Cin + cin ==
    #   torch (Cout,Cin,3,3).transpose(2,3,1,0).reshape(9*Cin, Cout)
    std_c = (2.0 / (c_mid * 3 * 3)) ** 0.5
    wc1 = (std_c * jax.random.normal(ks[0], (9 * c_in, c_mid), jnp.float32)).astype(bf16)
    wc2 = (std_c * jax.random.normal(ks[1], (9 * c_mid, c_mid), jnp.float32)).astype(bf16)
    bc1 = jnp.zeros((1, c_mid), jnp.float32)
    bc2 = jnp.zeros((1, c_mid), jnp.float32)
    # Linear: normal(0, 0.01); bias = 0.  w1 is stored as (in, out) = W1.T, and
    # its rows (torch NCHW flatten order k = c*h3*w3 + y*w3 + x) are regrouped
    # to (y, x, c) so the kernel's NHWC-pooled feature staging matches exactly.
    w1 = 0.01 * jax.random.normal(ks[2], (feat, feat), jnp.float32)
    w1v = jnp.transpose(w1.reshape(c_mid, h3, w3, feat),
                        (1, 2, 0, 3)).reshape(feat, feat).astype(bf16)
    w2 = (0.01 * jax.random.normal(ks[3], (feat, feat), jnp.float32)).astype(bf16)
    w3 = 0.01 * jax.random.normal(ks[4], (feat, num_classes), jnp.float32)
    # Pad the final layer to a 128-lane output (lane-dense store); wrapper slices back.
    n_pad = ((num_classes + 127) // 128) * 128
    w3p = jnp.zeros((feat, n_pad), jnp.float32).at[:, :num_classes].set(w3).astype(bf16)
    b1 = jnp.zeros((1, feat), jnp.float32)
    b2 = jnp.zeros((1, feat), jnp.float32)
    b3p = jnp.zeros((1, n_pad), jnp.float32)
    alphas = jnp.zeros((2,), jnp.float32)        # PReLU(init=0) x 2, kept in SMEM
    return dict(wc1=wc1, bc1=bc1, wc2=wc2, bc2=bc2, w1v=w1v, b1=b1,
                w2=w2, b2=b2, w3p=w3p, b3p=b3p, alphas=alphas)


if __name__ == "__main__":
    key = jax.random.PRNGKey(0)
    kx, kp = jax.random.split(key)
    B, Cin, H, W = 2, 4, 16, 16
    x = jax.random.normal(kx, (B, Cin, H, W), jnp.float32)   # PyTorch-style NCHW
    params = init_params(kp, num_classes=10, c_in=Cin, h=H, w=W)

    fwd = jax.jit(vgg_forward, static_argnames=("num_classes",))
    out = jax.block_until_ready(fwd(x, params, num_classes=10))
    assert out.shape == (B, 10) and out.dtype == jnp.float32
    assert bool(jnp.isfinite(out).all())
    print("KERNEL_OK")
</pallas_src>

<mosaic_0001>
module attributes {stable_mosaic.version = 11 : i64} {
  func.func @vgg_fused_kernel(%arg0: memref<2x16x16x4xf32, #tpu.memory_space<vmem>>, %arg1: memref<36x32xbf16, #tpu.memory_space<vmem>>, %arg2: memref<1x32xf32, #tpu.memory_space<vmem>>, %arg3: memref<288x32xbf16, #tpu.memory_space<vmem>>, %arg4: memref<1x32xf32, #tpu.memory_space<vmem>>, %arg5: memref<1x512xf32, #tpu.memory_space<vmem>>, %arg6: memref<1x512xf32, #tpu.memory_space<vmem>>, %arg7: memref<1x128xf32, #tpu.memory_space<vmem>>, %arg8: memref<2xf32, #tpu.memory_space<smem>>, %arg9: memref<512x512xbf16, #tpu.memory_space<any>>, %arg10: memref<512x512xbf16, #tpu.memory_space<any>>, %arg11: memref<512x128xbf16, #tpu.memory_space<any>>, %arg12: memref<2x128xf32, #tpu.memory_space<vmem>>, %arg13: memref<2x18x32x4xf32, #tpu.memory_space<vmem>>, %arg14: memref<512x36xbf16, #tpu.memory_space<vmem>>, %arg15: memref<16x16x32xf32, #tpu.memory_space<vmem>>, %arg16: memref<2x10x24x32xf32, #tpu.memory_space<vmem>>, %arg17: memref<128x288xbf16, #tpu.memory_space<vmem>>, %arg18: memref<2x4x8x32xf32, #tpu.memory_space<vmem>>, %arg19: memref<2x512xbf16, #tpu.memory_space<vmem>>, %arg20: memref<512x512xbf16, #tpu.memory_space<vmem>>, %arg21: memref<512x512xbf16, #tpu.memory_space<vmem>>, %arg22: memref<512x128xbf16, #tpu.memory_space<vmem>>, %arg23: memref<3x!tpu.dma_semaphore, #tpu.memory_space<semaphore_mem>>) attributes {dimension_semantics = [], scalar_prefetch = 0 : i64, scratch_operands = 11 : i64, tpu.core_type = #tpu.core_type<tc>} {
    %c0_i32 = arith.constant 0 : i32
    %0 = tpu.memref_slice %arg23[%c0_i32] : memref<3x!tpu.dma_semaphore, #tpu.memory_space<semaphore_mem>> -> memref<1x!tpu.dma_semaphore, #tpu.memory_space<semaphore_mem>>
    %1 = tpu.memref_squeeze %0 : memref<1x!tpu.dma_semaphore, #tpu.memory_space<semaphore_mem>> -> memref<!tpu.dma_semaphore, #tpu.memory_space<semaphore_mem>>
    tpu.enqueue_dma source(%arg9 : memref<512x512xbf16, #tpu.memory_space<any>>) target(%arg20 : memref<512x512xbf16, #tpu.memory_space<vmem>>) target_semaphore(%1 : memref<!tpu.dma_semaphore, #tpu.memory_space<semaphore_mem>>)
    %c1_i32 = arith.constant 1 : i32
    %2 = tpu.memref_slice %arg23[%c1_i32] : memref<3x!tpu.dma_semaphore, #tpu.memory_space<semaphore_mem>> -> memref<1x!tpu.dma_semaphore, #tpu.memory_space<semaphore_mem>>
    %3 = tpu.memref_squeeze %2 : memref<1x!tpu.dma_semaphore, #tpu.memory_space<semaphore_mem>> -> memref<!tpu.dma_semaphore, #tpu.memory_space<semaphore_mem>>
    tpu.enqueue_dma source(%arg10 : memref<512x512xbf16, #tpu.memory_space<any>>) target(%arg21 : memref<512x512xbf16, #tpu.memory_space<vmem>>) target_semaphore(%3 : memref<!tpu.dma_semaphore, #tpu.memory_space<semaphore_mem>>)
    %c2_i32 = arith.constant 2 : i32
    %4 = tpu.memref_slice %arg23[%c2_i32] : memref<3x!tpu.dma_semaphore, #tpu.memory_space<semaphore_mem>> -> memref<1x!tpu.dma_semaphore, #tpu.memory_space<semaphore_mem>>
    %5 = tpu.memref_squeeze %4 : memref<1x!tpu.dma_semaphore, #tpu.memory_space<semaphore_mem>> -> memref<!tpu.dma_semaphore, #tpu.memory_space<semaphore_mem>>
    tpu.enqueue_dma source(%arg11 : memref<512x128xbf16, #tpu.memory_space<any>>) target(%arg22 : memref<512x128xbf16, #tpu.memory_space<vmem>>) target_semaphore(%5 : memref<!tpu.dma_semaphore, #tpu.memory_space<semaphore_mem>>)
    %c0 = arith.constant 0 : index
    %c0_0 = arith.constant 0 : index
    %c0_1 = arith.constant 0 : index
    %c0_2 = arith.constant 0 : index
    %6 = vector.load %arg0[%c0, %c0_0, %c0_1, %c0_2] : memref<2x16x16x4xf32, #tpu.memory_space<vmem>>, vector<2x16x16x4xf32>
    %cst = arith.constant 0.000000e+00 : f32
    %7 = vector.broadcast %cst : f32 to vector<2x32x4xf32>
    %c0_3 = arith.constant 0 : index
    %c0_4 = arith.constant 0 : index
    %c0_5 = arith.constant 0 : index
    %c0_6 = arith.constant 0 : index
    %8 = vector.load %arg13[%c0_3, %c0_4, %c0_5, %c0_6] : memref<2x18x32x4xf32, #tpu.memory_space<vmem>>, vector<2x1x32x4xf32>
    %9 = vector.shape_cast %8 : vector<2x1x32x4xf32> to vector<2x32x4xf32>
    %10 = vector.shape_cast %7 : vector<2x32x4xf32> to vector<2x1x32x4xf32>
    tpu.vector_store %arg13[%c0_3, %c0_4, %c0_5, %c0_6], %10 {strides = array<i32>} : memref<2x18x32x4xf32, #tpu.memory_space<vmem>>, vector<2x1x32x4xf32>,
    %cst_7 = arith.constant 0.000000e+00 : f32
    %11 = vector.broadcast %cst_7 : f32 to vector<2x32x4xf32>
    %c0_8 = arith.constant 0 : index
    %c17 = arith.constant 17 : index
    %c0_9 = arith.constant 0 : index
    %c0_10 = arith.constant 0 : index
    %12 = vector.load %arg13[%c0_8, %c17, %c0_9, %c0_10] : memref<2x18x32x4xf32, #tpu.memory_space<vmem>>, vector<2x1x32x4xf32>
    %13 = vector.shape_cast %12 : vector<2x1x32x4xf32> to vector<2x32x4xf32>
    %14 = vector.shape_cast %11 : vector<2x32x4xf32> to vector<2x1x32x4xf32>
    tpu.vector_store %arg13[%c0_8, %c17, %c0_9, %c0_10], %14 {strides = array<i32>} : memref<2x18x32x4xf32, #tpu.memory_space<vmem>>, vector<2x1x32x4xf32>,
    %cst_11 = arith.constant 0.000000e+00 : f32
    %15 = vector.broadcast %cst_11 : f32 to vector<2x18x8x4xf32>
    %c0_12 = arith.constant 0 : index
    %c0_13 = arith.constant 0 : index
    %c0_14 = arith.constant 0 : index
    %c0_15 = arith.constant 0 : index
    %16 = vector.load %arg13[%c0_12, %c0_13, %c0_14, %c0_15] : memref<2x18x32x4xf32, #tpu.memory_space<vmem>>, vector<2x18x8x4xf32>
    tpu.vector_store %arg13[%c0_12, %c0_13, %c0_14, %c0_15], %15 {strides = array<i32>} : memref<2x18x32x4xf32, #tpu.memory_space<vmem>>, vector<2x18x8x4xf32>,
    %cst_16 = arith.constant 0.000000e+00 : f32
    %17 = vector.broadcast %cst_16 : f32 to vector<2x18x8x4xf32>
    %c0_17 = arith.constant 0 : index
    %c0_18 = arith.constant 0 : index
    %c24 = arith.constant 24 : index
    %c0_19 = arith.constant 0 : index
    %18 = vector.load %arg13[%c0_17, %c0_18, %c24, %c0_19] : memref<2x18x32x4xf32, #tpu.memory_space<vmem>>, vector<2x18x8x4xf32>
    tpu.vector_store %arg13[%c0_17, %c0_18, %c24, %c0_19], %17 {strides = array<i32>} : memref<2x18x32x4xf32, #tpu.memory_space<vmem>>, vector<2x18x8x4xf32>,
    %c0_20 = arith.constant 0 : index
    %c1 = arith.constant 1 : index
    %c8 = arith.constant 8 : index
    %c0_21 = arith.constant 0 : index
    %19 = vector.load %arg13[%c0_20, %c1, %c8, %c0_21] : memref<2x18x32x4xf32, #tpu.memory_space<vmem>>, vector<2x16x16x4xf32>
    tpu.vector_store %arg13[%c0_20, %c1, %c8, %c0_21], %6 {strides = array<i32>} : memref<2x18x32x4xf32, #tpu.memory_space<vmem>>, vector<2x16x16x4xf32>,
    %c0_22 = arith.constant 0 : index
    %c0_23 = arith.constant 0 : index
    %c7 = arith.constant 7 : index
    %c0_24 = arith.constant 0 : index
    %20 = vector.load %arg13[%c0_22, %c0_23, %c7, %c0_24] : memref<2x18x32x4xf32, #tpu.memory_space<vmem>>, vector<2x16x16x4xf32>
    %21 = vector.shape_cast %20 : vector<2x16x16x4xf32> to vector<512x4xf32>
    %22 = arith.truncf %21 : vector<512x4xf32> to vector<512x4xbf16>
    %c0_25 = arith.constant 0 : index
    %c0_26 = arith.constant 0 : index
    %23 = vector.load %arg14[%c0_25, %c0_26] : memref<512x36xbf16, #tpu.memory_space<vmem>>, vector<512x4xbf16>
    tpu.vector_store %arg14[%c0_25, %c0_26], %22 {strides = array<i32>} : memref<512x36xbf16, #tpu.memory_space<vmem>>, vector<512x4xbf16>,
    %c0_27 = arith.constant 0 : index
    %c0_28 = arith.constant 0 : index
    %c8_29 = arith.constant 8 : index
    %c0_30 = arith.constant 0 : index
    %24 = vector.load %arg13[%c0_27, %c0_28, %c8_29, %c0_30] : memref<2x18x32x4xf32, #tpu.memory_space<vmem>>, vector<2x16x16x4xf32>
    %25 = vector.shape_cast %24 : vector<2x16x16x4xf32> to vector<512x4xf32>
    %26 = arith.truncf %25 : vector<512x4xf32> to vector<512x4xbf16>
    %c0_31 = arith.constant 0 : index
    %c4 = arith.constant 4 : index
    %27 = vector.load %arg14[%c0_31, %c4] : memref<512x36xbf16, #tpu.memory_space<vmem>>, vector<512x4xbf16>
    tpu.vector_store %arg14[%c0_31, %c4], %26 {strides = array<i32>} : memref<512x36xbf16, #tpu.memory_space<vmem>>, vector<512x4xbf16>,
    %c0_32 = arith.constant 0 : index
    %c0_33 = arith.constant 0 : index
    %c9 = arith.constant 9 : index
    %c0_34 = arith.constant 0 : index
    %28 = vector.load %arg13[%c0_32, %c0_33, %c9, %c0_34] : memref<2x18x32x4xf32, #tpu.memory_space<vmem>>, vector<2x16x16x4xf32>
    %29 = vector.shape_cast %28 : vector<2x16x16x4xf32> to vector<512x4xf32>
    %30 = arith.truncf %29 : vector<512x4xf32> to vector<512x4xbf16>
    %c0_35 = arith.constant 0 : index
    %c8_36 = arith.constant 8 : index
    %31 = vector.load %arg14[%c0_35, %c8_36] : memref<512x36xbf16, #tpu.memory_space<vmem>>, vector<512x4xbf16>
    tpu.vector_store %arg14[%c0_35, %c8_36], %30 {strides = array<i32>} : memref<512x36xbf16, #tpu.memory_space<vmem>>, vector<512x4xbf16>,
    %c0_37 = arith.constant 0 : index
    %c1_38 = arith.constant 1 : index
    %c7_39 = arith.constant 7 : index
    %c0_40 = arith.constant 0 : index
    %32 = vector.load %arg13[%c0_37, %c1_38, %c7_39, %c0_40] : memref<2x18x32x4xf32, #tpu.memory_space<vmem>>, vector<2x16x16x4xf32>
    %33 = vector.shape_cast %32 : vector<2x16x16x4xf32> to vector<512x4xf32>
    %34 = arith.truncf %33 : vector<512x4xf32> to vector<512x4xbf16>
    %c0_41 = arith.constant 0 : index
    %c12 = arith.constant 12 : index
    %35 = vector.load %arg14[%c0_41, %c12] : memref<512x36xbf16, #tpu.memory_space<vmem>>, vector<512x4xbf16>
    tpu.vector_store %arg14[%c0_41, %c12], %34 {strides = array<i32>} : memref<512x36xbf16, #tpu.memory_space<vmem>>, vector<512x4xbf16>,
    %c0_42 = arith.constant 0 : index
    %c1_43 = arith.constant 1 : index
    %c8_44 = arith.constant 8 : index
    %c0_45 = arith.constant 0 : index
    %36 = vector.load %arg13[%c0_42, %c1_43, %c8_44, %c0_45] : memref<2x18x32x4xf32, #tpu.memory_space<vmem>>, vector<2x16x16x4xf32>
    %37 = vector.shape_cast %36 : vector<2x16x16x4xf32> to vector<512x4xf32>
    %38 = arith.truncf %37 : vector<512x4xf32> to vector<512x4xbf16>
    %c0_46 = arith.constant 0 : index
    %c16 = arith.constant 16 : index
    %39 = vector.load %arg14[%c0_46, %c16] : memref<512x36xbf16, #tpu.memory_space<vmem>>, vector<512x4xbf16>
    tpu.vector_store %arg14[%c0_46, %c16], %38 {strides = array<i32>} : memref<512x36xbf16, #tpu.memory_space<vmem>>, vector<512x4xbf16>,
    %c0_47 = arith.constant 0 : index
    %c1_48 = arith.constant 1 : index
    %c9_49 = arith.constant 9 : index
    %c0_50 = arith.constant 0 : index
    %40 = vector.load %arg13[%c0_47, %c1_48, %c9_49, %c0_50] : memref<2x18x32x4xf32, #tpu.memory_space<vmem>>, vector<2x16x16x4xf32>
    %41 = vector.shape_cast %40 : vector<2x16x16x4xf32> to vector<512x4xf32>
    %42 = arith.truncf %41 : vector<512x4xf32> to vector<512x4xbf16>
    %c0_51 = arith.constant 0 : index
    %c20 = arith.constant 20 : index
    %43 = vector.load %arg14[%c0_51, %c20] : memref<512x36xbf16, #tpu.memory_space<vmem>>, vector<512x4xbf16>
    tpu.vector_store %arg14[%c0_51, %c20], %42 {strides = array<i32>} : memref<512x36xbf16, #tpu.memory_space<vmem>>, vector<512x4xbf16>,
    %c0_52 = arith.constant 0 : index
    %c2 = arith.constant 2 : index
    %c7_53 = arith.constant 7 : index
    %c0_54 = arith.constant 0 : index
    %44 = vector.load %arg13[%c0_52, %c2, %c7_53, %c0_54] : memref<2x18x32x4xf32, #tpu.memory_space<vmem>>, vector<2x16x16x4xf32>
    %45 = vector.shape_cast %44 : vector<2x16x16x4xf32> to vector<512x4xf32>
    %46 = arith.truncf %45 : vector<512x4xf32> to vector<512x4xbf16>
    %c0_55 = arith.constant 0 : index
    %c24_56 = arith.constant 24 : index
    %47 = vector.load %arg14[%c0_55, %c24_56] : memref<512x36xbf16, #tpu.memory_space<vmem>>, vector<512x4xbf16>
    tpu.vector_store %arg14[%c0_55, %c24_56], %46 {strides = array<i32>} : memref<512x36xbf16, #tpu.memory_space<vmem>>, vector<512x4xbf16>,
    %c0_57 = arith.constant 0 : index
    %c2_58 = arith.constant 2 : index
    %c8_59 = arith.constant 8 : index
    %c0_60 = arith.constant 0 : index
    %48 = vector.load %arg13[%c0_57, %c2_58, %c8_59, %c0_60] : memref<2x18x32x4xf32, #tpu.memory_space<vmem>>, vector<2x16x16x4xf32>
    %49 = vector.shape_cast %48 : vector<2x16x16x4xf32> to vector<512x4xf32>
    %50 = arith.truncf %49 : vector<512x4xf32> to vector<512x4xbf16>
    %c0_61 = arith.constant 0 : index
    %c28 = arith.constant 28 : index
    %51 = vector.load %arg14[%c0_61, %c28] : memref<512x36xbf16, #tpu.memory_space<vmem>>, vector<512x4xbf16>
    tpu.vector_store %arg14[%c0_61, %c28], %50 {strides = array<i32>} : memref<512x36xbf16, #tpu.memory_space<vmem>>, vector<512x4xbf16>,
    %c0_62 = arith.constant 0 : index
    %c2_63 = arith.constant 2 : index
    %c9_64 = arith.constant 9 : index
    %c0_65 = arith.constant 0 : index
    %52 = vector.load %arg13[%c0_62, %c2_63, %c9_64, %c0_65] : memref<2x18x32x4xf32, #tpu.memory_space<vmem>>, vector<2x16x16x4xf32>
    %53 = vector.shape_cast %52 : vector<2x16x16x4xf32> to vector<512x4xf32>
    %54 = arith.truncf %53 : vector<512x4xf32> to vector<512x4xbf16>
    %c0_66 = arith.constant 0 : index
    %c32 = arith.constant 32 : index
    %55 = vector.load %arg14[%c0_66, %c32] : memref<512x36xbf16, #tpu.memory_space<vmem>>, vector<512x4xbf16>
    tpu.vector_store %arg14[%c0_66, %c32], %54 {strides = array<i32>} : memref<512x36xbf16, #tpu.memory_space<vmem>>, vector<512x4xbf16>,
    %c0_67 = arith.constant 0 : index
    %c0_68 = arith.constant 0 : index
    %56 = vector.load %arg14[%c0_67, %c0_68] : memref<512x36xbf16, #tpu.memory_space<vmem>>, vector<128x36xbf16>
    %c0_69 = arith.constant 0 : index
    %c0_70 = arith.constant 0 : index
    %57 = vector.load %arg1[%c0_69, %c0_70] : memref<36x32xbf16, #tpu.memory_space<vmem>>, vector<36x32xbf16>
    %cst_71 = arith.constant dense<0.000000e+00> : vector<128x32xf32>
    %58 = tpu.matmul %56, %57, %cst_71 {dimension_numbers = #tpu.dot_dimension_numbers<[1], [0], [0], [1], [0, 0, 1, 1], [], []>} : vector<128x36xbf16>, vector<36x32xbf16>, vector<128x32xf32> -> vector<128x32xf32>
    %c0_72 = arith.constant 0 : index
    %c0_73 = arith.constant 0 : index
    %59 = vector.load %arg2[%c0_72, %c0_73] : memref<1x32xf32, #tpu.memory_space<vmem>>, vector<1x32xf32>
    %60 = vector.broadcast %59 : vector<1x32xf32> to vector<128x32xf32>
    %61 = arith.addf %58, %60 : vector<128x32xf32>
    %cst_74 = arith.constant 0.000000e+00 : f32
    %62 = vector.broadcast %cst_74 : f32 to vector<128x32xf32>
    %63 = arith.maximumf %61, %62 : vector<128x32xf32>
    %64 = vector.shape_cast %63 : vector<128x32xf32> to vector<4x2x16x32xf32>
    %65 = vector.extract_strided_slice %64 {offsets = [0, 0, 0, 0], sizes = [4, 1, 16, 32], strides = [1, 1, 1, 1]} : vector<4x2x16x32xf32> to vector<4x1x16x32xf32>
    %66 = vector.shape_cast %65 : vector<4x1x16x32xf32> to vector<4x16x32xf32>
    %67 = vector.extract_strided_slice %64 {offsets = [0, 1, 0, 0], sizes = [4, 1, 16, 32], strides = [1, 1, 1, 1]} : vector<4x2x16x32xf32> to vector<4x1x16x32xf32>
    %68 = vector.shape_cast %67 : vector<4x1x16x32xf32> to vector<4x16x32xf32>
    %69 = arith.maximumf %66, %68 : vector<4x16x32xf32>
    %c0_75 = arith.constant 0 : index
    %c0_76 = arith.constant 0 : index
    %c0_77 = arith.constant 0 : index
    %70 = vector.load %arg15[%c0_75, %c0_76, %c0_77] : memref<16x16x32xf32, #tpu.memory_space<vmem>>, vector<4x16x32xf32>
    tpu.vector_store %arg15[%c0_75, %c0_76, %c0_77], %69 {strides = array<i32>} : memref<16x16x32xf32, #tpu.memory_space<vmem>>, vector<4x16x32xf32>,
    %c128 = arith.constant 128 : index
    %c0_78 = arith.constant 0 : index
    %71 = vector.load %arg14[%c128, %c0_78] : memref<512x36xbf16, #tpu.memory_space<vmem>>, vector<128x36xbf16>
    %c0_79 = arith.constant 0 : index
    %c0_80 = arith.constant 0 : index
    %72 = vector.load %arg1[%c0_79, %c0_80] : memref<36x32xbf16, #tpu.memory_space<vmem>>, vector<36x32xbf16>
    %cst_81 = arith.constant dense<0.000000e+00> : vector<128x32xf32>
    %73 = tpu.matmul %71, %72, %cst_81 {dimension_numbers = #tpu.dot_dimension_numbers<[1], [0], [0], [1], [0, 0, 1, 1], [], []>} : vector<128x36xbf16>, vector<36x32xbf16>, vector<128x32xf32> -> vector<128x32xf32>
    %c0_82 = arith.constant 0 : index
    %c0_83 = arith.constant 0 : index
    %74 = vector.load %arg2[%c0_82, %c0_83] : memref<1x32xf32, #tpu.memory_space<vmem>>, vector<1x32xf32>
    %75 = vector.broadcast %74 : vector<1x32xf32> to vector<128x32xf32>
    %76 = arith.addf %73, %75 : vector<128x32xf32>
    %cst_84 = arith.constant 0.000000e+00 : f32
    %77 = vector.broadcast %cst_84 : f32 to vector<128x32xf32>
    %78 = arith.maximumf %76, %77 : vector<128x32xf32>
    %79 = vector.shape_cast %78 : vector<128x32xf32> to vector<4x2x16x32xf32>
    %80 = vector.extract_strided_slice %79 {offsets = [0, 0, 0, 0], sizes = [4, 1, 16, 32], strides = [1, 1, 1, 1]} : vector<4x2x16x32xf32> to vector<4x1x16x32xf32>
    %81 = vector.shape_cast %80 : vector<4x1x16x32xf32> to vector<4x16x32xf32>
    %82 = vector.extract_strided_slice %79 {offsets = [0, 1, 0, 0], sizes = [4, 1, 16, 32], strides = [1, 1, 1, 1]} : vector<4x2x16x32xf32> to vector<4x1x16x32xf32>
    %83 = vector.shape_cast %82 : vector<4x1x16x32xf32> to vector<4x16x32xf32>
    %84 = arith.maximumf %81, %83 : vector<4x16x32xf32>
    %c4_85 = arith.constant 4 : index
    %c0_86 = arith.constant 0 : index
    %c0_87 = arith.constant 0 : index
    %85 = vector.load %arg15[%c4_85, %c0_86, %c0_87] : memref<16x16x32xf32, #tpu.memory_space<vmem>>, vector<4x16x32xf32>
    tpu.vector_store %arg15[%c4_85, %c0_86, %c0_87], %84 {strides = array<i32>} : memref<16x16x32xf32, #tpu.memory_space<vmem>>, vector<4x16x32xf32>,
    %c256 = arith.constant 256 : index
    %c0_88 = arith.constant 0 : index
    %86 = vector.load %arg14[%c256, %c0_88] : memref<512x36xbf16, #tpu.memory_space<vmem>>, vector<128x36xbf16>
    %c0_89 = arith.constant 0 : index
    %c0_90 = arith.constant 0 : index
    %87 = vector.load %arg1[%c0_89, %c0_90] : memref<36x32xbf16, #tpu.memory_space<vmem>>, vector<36x32xbf16>
    %cst_91 = arith.constant dense<0.000000e+00> : vector<128x32xf32>
    %88 = tpu.matmul %86, %87, %cst_91 {dimension_numbers = #tpu.dot_dimension_numbers<[1], [0], [0], [1], [0, 0, 1, 1], [], []>} : vector<128x36xbf16>, vector<36x32xbf16>, vector<128x32xf32> -> vector<128x32xf32>
    %c0_92 = arith.constant 0 : index
    %c0_93 = arith.constant 0 : index
    %89 = vector.load %arg2[%c0_92, %c0_93] : memref<1x32xf32, #tpu.memory_space<vmem>>, vector<1x32xf32>
    %90 = vector.broadcast %89 : vector<1x32xf32> to vector<128x32xf32>
    %91 = arith.addf %88, %90 : vector<128x32xf32>
    %cst_94 = arith.constant 0.000000e+00 : f32
    %92 = vector.broadcast %cst_94 : f32 to vector<128x32xf32>
    %93 = arith.maximumf %91, %92 : vector<128x32xf32>
    %94 = vector.shape_cast %93 : vector<128x32xf32> to vector<4x2x16x32xf32>
    %95 = vector.extract_strided_slice %94 {offsets = [0, 0, 0, 0], sizes = [4, 1, 16, 32], strides = [1, 1, 1, 1]} : vector<4x2x16x32xf32> to vector<4x1x16x32xf32>
    %96 = vector.shape_cast %95 : vector<4x1x16x32xf32> to vector<4x16x32xf32>
    %97 = vector.extract_strided_slice %94 {offsets = [0, 1, 0, 0], sizes = [4, 1, 16, 32], strides = [1, 1, 1, 1]} : vector<4x2x16x32xf32> to vector<4x1x16x32xf32>
    %98 = vector.shape_cast %97 : vector<4x1x16x32xf32> to vector<4x16x32xf32>
    %99 = arith.maximumf %96, %98 : vector<4x16x32xf32>
    %c8_95 = arith.constant 8 : index
    %c0_96 = arith.constant 0 : index
    %c0_97 = arith.constant 0 : index
    %100 = vector.load %arg15[%c8_95, %c0_96, %c0_97] : memref<16x16x32xf32, #tpu.memory_space<vmem>>, vector<4x16x32xf32>
    tpu.vector_store %arg15[%c8_95, %c0_96, %c0_97], %99 {strides = array<i32>} : memref<16x16x32xf32, #tpu.memory_space<vmem>>, vector<4x16x32xf32>,
    %c384 = arith.constant 384 : index
    %c0_98 = arith.constant 0 : index
    %101 = vector.load %arg14[%c384, %c0_98] : memref<512x36xbf16, #tpu.memory_space<vmem>>, vector<128x36xbf16>
    %c0_99 = arith.constant 0 : index
    %c0_100 = arith.constant 0 : index
    %102 = vector.load %arg1[%c0_99, %c0_100] : memref<36x32xbf16, #tpu.memory_space<vmem>>, vector<36x32xbf16>
    %cst_101 = arith.constant dense<0.000000e+00> : vector<128x32xf32>
    %103 = tpu.matmul %101, %102, %cst_101 {dimension_numbers = #tpu.dot_dimension_numbers<[1], [0], [0], [1], [0, 0, 1, 1], [], []>} : vector<128x36xbf16>, vector<36x32xbf16>, vector<128x32xf32> -> vector<128x32xf32>
    %c0_102 = arith.constant 0 : index
    %c0_103 = arith.constant 0 : index
    %104 = vector.load %arg2[%c0_102, %c0_103] : memref<1x32xf32, #tpu.memory_space<vmem>>, vector<1x32xf32>
    %105 = vector.broadcast %104 : vector<1x32xf32> to vector<128x32xf32>
    %106 = arith.addf %103, %105 : vector<128x32xf32>
    %cst_104 = arith.constant 0.000000e+00 : f32
    %107 = vector.broadcast %cst_104 : f32 to vector<128x32xf32>
    %108 = arith.maximumf %106, %107 : vector<128x32xf32>
    %109 = vector.shape_cast %108 : vector<128x32xf32> to vector<4x2x16x32xf32>
    %110 = vector.extract_strided_slice %109 {offsets = [0, 0, 0, 0], sizes = [4, 1, 16, 32], strides = [1, 1, 1, 1]} : vector<4x2x16x32xf32> to vector<4x1x16x32xf32>
    %111 = vector.shape_cast %110 : vector<4x1x16x32xf32> to vector<4x16x32xf32>
    %112 = vector.extract_strided_slice %109 {offsets = [0, 1, 0, 0], sizes = [4, 1, 16, 32], strides = [1, 1, 1, 1]} : vector<4x2x16x32xf32> to vector<4x1x16x32xf32>
    %113 = vector.shape_cast %112 : vector<4x1x16x32xf32> to vector<4x16x32xf32>
    %114 = arith.maximumf %111, %113 : vector<4x16x32xf32>
    %c12_105 = arith.constant 12 : index
    %c0_106 = arith.constant 0 : index
    %c0_107 = arith.constant 0 : index
    %115 = vector.load %arg15[%c12_105, %c0_106, %c0_107] : memref<16x16x32xf32, #tpu.memory_space<vmem>>, vector<4x16x32xf32>
    tpu.vector_store %arg15[%c12_105, %c0_106, %c0_107], %114 {strides = array<i32>} : memref<16x16x32xf32, #tpu.memory_space<vmem>>, vector<4x16x32xf32>,
    %c0_108 = arith.constant 0 : index
    %c0_109 = arith.constant 0 : index
    %c0_110 = arith.constant 0 : index
    %116 = tpu.strided_load %arg15[%c0_108, %c0_109, %c0_110] {strides = array<i32: 1, 2, 1>} : memref<16x16x32xf32, #tpu.memory_space<vmem>>, vector<16x8x32xf32>
    %c0_111 = arith.constant 0 : index
    %c1_112 = arith.constant 1 : index
    %c0_113 = arith.constant 0 : index
    %117 = tpu.strided_load %arg15[%c0_111, %c1_112, %c0_113] {strides = array<i32: 1, 2, 1>} : memref<16x16x32xf32, #tpu.memory_space<vmem>>, vector<16x8x32xf32>
    %118 = arith.maximumf %116, %117 : vector<16x8x32xf32>
    %119 = vector.shape_cast %118 : vector<16x8x32xf32> to vector<2x8x8x32xf32>
    %cst_114 = arith.constant 0.000000e+00 : f32
    %120 = vector.broadcast %cst_114 : f32 to vector<2x24x32xf32>
    %c0_115 = arith.constant 0 : index
    %c0_116 = arith.constant 0 : index
    %c0_117 = arith.constant 0 : index
    %c0_118 = arith.constant 0 : index
    %121 = vector.load %arg16[%c0_115, %c0_116, %c0_117, %c0_118] : memref<2x10x24x32xf32, #tpu.memory_space<vmem>>, vector<2x1x24x32xf32>
    %122 = vector.shape_cast %121 : vector<2x1x24x32xf32> to vector<2x24x32xf32>
    %123 = vector.shape_cast %120 : vector<2x24x32xf32> to vector<2x1x24x32xf32>
    tpu.vector_store %arg16[%c0_115, %c0_116, %c0_117, %c0_118], %123 {strides = array<i32>} : memref<2x10x24x32xf32, #tpu.memory_space<vmem>>, vector<2x1x24x32xf32>,
    %cst_119 = arith.constant 0.000000e+00 : f32
    %124 = vector.broadcast %cst_119 : f32 to vector<2x24x32xf32>
    %c0_120 = arith.constant 0 : index
    %c9_121 = arith.constant 9 : index
    %c0_122 = arith.constant 0 : index
    %c0_123 = arith.constant 0 : index
    %125 = vector.load %arg16[%c0_120, %c9_121, %c0_122, %c0_123] : memref<2x10x24x32xf32, #tpu.memory_space<vmem>>, vector<2x1x24x32xf32>
    %126 = vector.shape_cast %125 : vector<2x1x24x32xf32> to vector<2x24x32xf32>
    %127 = vector.shape_cast %124 : vector<2x24x32xf32> to vector<2x1x24x32xf32>
    tpu.vector_store %arg16[%c0_120, %c9_121, %c0_122, %c0_123], %127 {strides = array<i32>} : memref<2x10x24x32xf32, #tpu.memory_space<vmem>>, vector<2x1x24x32xf32>,
    %cst_124 = arith.constant 0.000000e+00 : f32
    %128 = vector.broadcast %cst_124 : f32 to vector<2x10x8x32xf32>
    %c0_125 = arith.constant 0 : index
    %c0_126 = arith.constant 0 : index
    %c0_127 = arith.constant 0 : index
    %c0_128 = arith.constant 0 : index
    %129 = vector.load %arg16[%c0_125, %c0_126, %c0_127, %c0_128] : memref<2x10x24x32xf32, #tpu.memory_space<vmem>>, vector<2x10x8x32xf32>
    tpu.vector_store %arg16[%c0_125, %c0_126, %c0_127, %c0_128], %128 {strides = array<i32>} : memref<2x10x24x32xf32, #tpu.memory_space<vmem>>, vector<2x10x8x32xf32>,
    %cst_129 = arith.constant 0.000000e+00 : f32
    %130 = vector.broadcast %cst_129 : f32 to vector<2x10x8x32xf32>
    %c0_130 = arith.constant 0 : index
    %c0_131 = arith.constant 0 : index
    %c16_132 = arith.constant 16 : index
    %c0_133 = arith.constant 0 : index
    %131 = vector.load %arg16[%c0_130, %c0_131, %c16_132, %c0_133] : memref<2x10x24x32xf32, #tpu.memory_space<vmem>>, vector<2x10x8x32xf32>
    tpu.vector_store %arg16[%c0_130, %c0_131, %c16_132, %c0_133], %130 {strides = array<i32>} : memref<2x10x24x32xf32, #tpu.memory_space<vmem>>, vector<2x10x8x32xf32>,
    %c0_134 = arith.constant 0 : index
    %c1_135 = arith.constant 1 : index
    %c8_136 = arith.constant 8 : index
    %c0_137 = arith.constant 0 : index
    %132 = vector.load %arg16[%c0_134, %c1_135, %c8_136, %c0_137] : memref<2x10x24x32xf32, #tpu.memory_space<vmem>>, vector<2x8x8x32xf32>
    tpu.vector_store %arg16[%c0_134, %c1_135, %c8_136, %c0_137], %119 {strides = array<i32>} : memref<2x10x24x32xf32, #tpu.memory_space<vmem>>, vector<2x8x8x32xf32>,
    %c0_138 = arith.constant 0 : index
    %c0_139 = arith.constant 0 : index
    %c7_140 = arith.constant 7 : index
    %c0_141 = arith.constant 0 : index
    %133 = vector.load %arg16[%c0_138, %c0_139, %c7_140, %c0_141] : memref<2x10x24x32xf32, #tpu.memory_space<vmem>>, vector<2x8x8x32xf32>
    %134 = vector.shape_cast %133 : vector<2x8x8x32xf32> to vector<128x32xf32>
    %135 = arith.truncf %134 : vector<128x32xf32> to vector<128x32xbf16>
    %c0_142 = arith.constant 0 : index
    %c0_143 = arith.constant 0 : index
    %136 = vector.load %arg17[%c0_142, %c0_143] : memref<128x288xbf16, #tpu.memory_space<vmem>>, vector<128x32xbf16>
    tpu.vector_store %arg17[%c0_142, %c0_143], %135 {strides = array<i32>} : memref<128x288xbf16, #tpu.memory_space<vmem>>, vector<128x32xbf16>,
    %c0_144 = arith.constant 0 : index
    %c0_145 = arith.constant 0 : index
    %c8_146 = arith.constant 8 : index
    %c0_147 = arith.constant 0 : index
    %137 = vector.load %arg16[%c0_144, %c0_145, %c8_146, %c0_147] : memref<2x10x24x32xf32, #tpu.memory_space<vmem>>, vector<2x8x8x32xf32>
    %138 = vector.shape_cast %137 : vector<2x8x8x32xf32> to vector<128x32xf32>
    %139 = arith.truncf %138 : vector<128x32xf32> to vector<128x32xbf16>
    %c0_148 = arith.constant 0 : index
    %c32_149 = arith.constant 32 : index
    %140 = vector.load %arg17[%c0_148, %c32_149] : memref<128x288xbf16, #tpu.memory_space<vmem>>, vector<128x32xbf16>
    tpu.vector_store %arg17[%c0_148, %c32_149], %139 {strides = array<i32>} : memref<128x288xbf16, #tpu.memory_space<vmem>>, vector<128x32xbf16>,
    %c0_150 = arith.constant 0 : index
    %c0_151 = arith.constant 0 : index
    %c9_152 = arith.constant 9 : index
    %c0_153 = arith.constant 0 : index
    %141 = vector.load %arg16[%c0_150, %c0_151, %c9_152, %c0_153] : memref<2x10x24x32xf32, #tpu.memory_space<vmem>>, vector<2x8x8x32xf32>
    %142 = vector.shape_cast %141 : vector<2x8x8x32xf32> to vector<128x32xf32>
    %143 = arith.truncf %142 : vector<128x32xf32> to vector<128x32xbf16>
    %c0_154 = arith.constant 0 : index
    %c64 = arith.constant 64 : index
    %144 = vector.load %arg17[%c0_154, %c64] : memref<128x288xbf16, #tpu.memory_space<vmem>>, vector<128x32xbf16>
    tpu.vector_store %arg17[%c0_154, %c64], %143 {strides = array<i32>} : memref<128x288xbf16, #tpu.memory_space<vmem>>, vector<128x32xbf16>,
    %c0_155 = arith.constant 0 : index
    %c1_156 = arith.constant 1 : index
    %c7_157 = arith.constant 7 : index
    %c0_158 = arith.constant 0 : index
    %145 = vector.load %arg16[%c0_155, %c1_156, %c7_157, %c0_158] : memref<2x10x24x32xf32, #tpu.memory_space<vmem>>, vector<2x8x8x32xf32>
    %146 = vector.shape_cast %145 : vector<2x8x8x32xf32> to vector<128x32xf32>
    %147 = arith.truncf %146 : vector<128x32xf32> to vector<128x32xbf16>
    %c0_159 = arith.constant 0 : index
    %c96 = arith.constant 96 : index
    %148 = vector.load %arg17[%c0_159, %c96] : memref<128x288xbf16, #tpu.memory_space<vmem>>, vector<128x32xbf16>
    tpu.vector_store %arg17[%c0_159, %c96], %147 {strides = array<i32>} : memref<128x288xbf16, #tpu.memory_space<vmem>>, vector<128x32xbf16>,
    %c0_160 = arith.constant 0 : index
    %c1_161 = arith.constant 1 : index
    %c8_162 = arith.constant 8 : index
    %c0_163 = arith.constant 0 : index
    %149 = vector.load %arg16[%c0_160, %c1_161, %c8_162, %c0_163] : memref<2x10x24x32xf32, #tpu.memory_space<vmem>>, vector<2x8x8x32xf32>
    %150 = vector.shape_cast %149 : vector<2x8x8x32xf32> to vector<128x32xf32>
    %151 = arith.truncf %150 : vector<128x32xf32> to vector<128x32xbf16>
    %c0_164 = arith.constant 0 : index
    %c128_165 = arith.constant 128 : index
    %152 = vector.load %arg17[%c0_164, %c128_165] : memref<128x288xbf16, #tpu.memory_space<vmem>>, vector<128x32xbf16>
    tpu.vector_store %arg17[%c0_164, %c128_165], %151 {strides = array<i32>} : memref<128x288xbf16, #tpu.memory_space<vmem>>, vector<128x32xbf16>,
    %c0_166 = arith.constant 0 : index
    %c1_167 = arith.constant 1 : index
    %c9_168 = arith.constant 9 : index
    %c0_169 = arith.constant 0 : index
    %153 = vector.load %arg16[%c0_166, %c1_167, %c9_168, %c0_169] : memref<2x10x24x32xf32, #tpu.memory_space<vmem>>, vector<2x8x8x32xf32>
    %154 = vector.shape_cast %153 : vector<2x8x8x32xf32> to vector<128x32xf32>
    %155 = arith.truncf %154 : vector<128x32xf32> to vector<128x32xbf16>
    %c0_170 = arith.constant 0 : index
    %c160 = arith.constant 160 : index
    %156 = vector.load %arg17[%c0_170, %c160] : memref<128x288xbf16, #tpu.memory_space<vmem>>, vector<128x32xbf16>
    tpu.vector_store %arg17[%c0_170, %c160], %155 {strides = array<i32>} : memref<128x288xbf16, #tpu.memory_space<vmem>>, vector<128x32xbf16>,
    %c0_171 = arith.constant 0 : index
    %c2_172 = arith.constant 2 : index
    %c7_173 = arith.constant 7 : index
    %c0_174 = arith.constant 0 : index
    %157 = vector.load %arg16[%c0_171, %c2_172, %c7_173, %c0_174] : memref<2x10x24x32xf32, #tpu.memory_space<vmem>>, vector<2x8x8x32xf32>
    %158 = vector.shape_cast %157 : vector<2x8x8x32xf32> to vector<128x32xf32>
    %159 = arith.truncf %158 : vector<128x32xf32> to vector<128x32xbf16>
    %c0_175 = arith.constant 0 : index
    %c192 = arith.constant 192 : index
    %160 = vector.load %arg17[%c0_175, %c192] : memref<128x288xbf16, #tpu.memory_space<vmem>>, vector<128x32xbf16>
    tpu.vector_store %arg17[%c0_175, %c192], %159 {strides = array<i32>} : memref<128x288xbf16, #tpu.memory_space<vmem>>, vector<128x32xbf16>,
    %c0_176 = arith.constant 0 : index
    %c2_177 = arith.constant 2 : index
    %c8_178 = arith.constant 8 : index
    %c0_179 = arith.constant 0 : index
    %161 = vector.load %arg16[%c0_176, %c2_177, %c8_178, %c0_179] : memref<2x10x24x32xf32, #tpu.memory_space<vmem>>, vector<2x8x8x32xf32>
    %162 = vector.shape_cast %161 : vector<2x8x8x32xf32> to vector<128x32xf32>
    %163 = arith.truncf %162 : vector<128x32xf32> to vector<128x32xbf16>
    %c0_180 = arith.constant 0 : index
    %c224 = arith.constant 224 : index
    %164 = vector.load %arg17[%c0_180, %c224] : memref<128x288xbf16, #tpu.memory_space<vmem>>, vector<128x32xbf16>
    tpu.vector_store %arg17[%c0_180, %c224], %163 {strides = array<i32>} : memref<128x288xbf16, #tpu.memory_space<vmem>>, vector<128x32xbf16>,
    %c0_181 = arith.constant 0 : index
    %c2_182 = arith.constant 2 : index
    %c9_183 = arith.constant 9 : index
    %c0_184 = arith.constant 0 : index
    %165 = vector.load %arg16[%c0_181, %c2_182, %c9_183, %c0_184] : memref<2x10x24x32xf32, #tpu.memory_space<vmem>>, vector<2x8x8x32xf32>
    %166 = vector.shape_cast %165 : vector<2x8x8x32xf32> to vector<128x32xf32>
    %167 = arith.truncf %166 : vector<128x32xf32> to vector<128x32xbf16>
    %c0_185 = arith.constant 0 : index
    %c256_186 = arith.constant 256 : index
    %168 = vector.load %arg17[%c0_185, %c256_186] : memref<128x288xbf16, #tpu.memory_space<vmem>>, vector<128x32xbf16>
    tpu.vector_store %arg17[%c0_185, %c256_186], %167 {strides = array<i32>} : memref<128x288xbf16, #tpu.memory_space<vmem>>, vector<128x32xbf16>,
    %c0_187 = arith.constant 0 : index
    %c0_188 = arith.constant 0 : index
    %169 = vector.load %arg17[%c0_187, %c0_188] : memref<128x288xbf16, #tpu.memory_space<vmem>>, vector<128x288xbf16>
    %c0_189 = arith.constant 0 : index
    %c0_190 = arith.constant 0 : index
    %170 = vector.load %arg3[%c0_189, %c0_190] : memref<288x32xbf16, #tpu.memory_space<vmem>>, vector<288x32xbf16>
    %cst_191 = arith.constant dense<0.000000e+00> : vector<128x32xf32>
    %171 = tpu.matmul %169, %170, %cst_191 {dimension_numbers = #tpu.dot_dimension_numbers<[1], [0], [0], [1], [0, 0, 1, 1], [], []>} : vector<128x288xbf16>, vector<288x32xbf16>, vector<128x32xf32> -> vector<128x32xf32>
    %c0_192 = arith.constant 0 : index
    %c0_193 = arith.constant 0 : index
    %172 = vector.load %arg4[%c0_192, %c0_193] : memref<1x32xf32, #tpu.memory_space<vmem>>, vector<1x32xf32>
    %173 = vector.broadcast %172 : vector<1x32xf32> to vector<128x32xf32>
    %174 = arith.addf %171, %173 : vector<128x32xf32>
    %cst_194 = arith.constant 0.000000e+00 : f32
    %175 = vector.broadcast %cst_194 : f32 to vector<128x32xf32>
    %176 = arith.maximumf %174, %175 : vector<128x32xf32>
    %177 = vector.shape_cast %176 : vector<128x32xf32> to vector<2x4x2x8x32xf32>
    %178 = vector.extract_strided_slice %177 {offsets = [0, 0, 0, 0, 0], sizes = [2, 4, 1, 8, 32], strides = [1, 1, 1, 1, 1]} : vector<2x4x2x8x32xf32> to vector<2x4x1x8x32xf32>
    %179 = vector.shape_cast %178 : vector<2x4x1x8x32xf32> to vector<2x4x8x32xf32>
    %180 = vector.extract_strided_slice %177 {offsets = [0, 0, 1, 0, 0], sizes = [2, 4, 1, 8, 32], strides = [1, 1, 1, 1, 1]} : vector<2x4x2x8x32xf32> to vector<2x4x1x8x32xf32>
    %181 = vector.shape_cast %180 : vector<2x4x1x8x32xf32> to vector<2x4x8x32xf32>
    %182 = arith.maximumf %179, %181 : vector<2x4x8x32xf32>
    %c0_195 = arith.constant 0 : index
    %c0_196 = arith.constant 0 : index
    %c0_197 = arith.constant 0 : index
    %c0_198 = arith.constant 0 : index
    %183 = vector.load %arg18[%c0_195, %c0_196, %c0_197, %c0_198] : memref<2x4x8x32xf32, #tpu.memory_space<vmem>>, vector<2x4x8x32xf32>
    tpu.vector_store %arg18[%c0_195, %c0_196, %c0_197, %c0_198], %182 {strides = array<i32>} : memref<2x4x8x32xf32, #tpu.memory_space<vmem>>, vector<2x4x8x32xf32>,
    %c0_199 = arith.constant 0 : index
    %c0_200 = arith.constant 0 : index
    %c0_201 = arith.constant 0 : index
    %c0_202 = arith.constant 0 : index
    %184 = vector.load %arg18[%c0_199, %c0_200, %c0_201, %c0_202] : memref<2x4x8x32xf32, #tpu.memory_space<vmem>>, vector<2x1x1x32xf32>
    %185 = vector.shape_cast %184 : vector<2x1x1x32xf32> to vector<2x32xf32>
    %c0_203 = arith.constant 0 : index
    %c0_204 = arith.constant 0 : index
    %c1_205 = arith.constant 1 : index
    %c0_206 = arith.constant 0 : index
    %186 = vector.load %arg18[%c0_203, %c0_204, %c1_205, %c0_206] : memref<2x4x8x32xf32, #tpu.memory_space<vmem>>, vector<2x1x1x32xf32>
    %187 = vector.shape_cast %186 : vector<2x1x1x32xf32> to vector<2x32xf32>
    %188 = arith.maximumf %185, %187 : vector<2x32xf32>
    %189 = arith.truncf %188 : vector<2x32xf32> to vector<2x32xbf16>
    %c0_207 = arith.constant 0 : index
    %c0_208 = arith.constant 0 : index
    %190 = vector.load %arg19[%c0_207, %c0_208] : memref<2x512xbf16, #tpu.memory_space<vmem>>, vector<2x32xbf16>
    tpu.vector_store %arg19[%c0_207, %c0_208], %189 {strides = array<i32>} : memref<2x512xbf16, #tpu.memory_space<vmem>>, vector<2x32xbf16>,
    %c0_209 = arith.constant 0 : index
    %c0_210 = arith.constant 0 : index
    %c2_211 = arith.constant 2 : index
    %c0_212 = arith.constant 0 : index
    %191 = vector.load %arg18[%c0_209, %c0_210, %c2_211, %c0_212] : memref<2x4x8x32xf32, #tpu.memory_space<vmem>>, vector<2x1x1x32xf32>
    %192 = vector.shape_cast %191 : vector<2x1x1x32xf32> to vector<2x32xf32>
    %c0_213 = arith.constant 0 : index
    %c0_214 = arith.constant 0 : index
    %c3 = arith.constant 3 : index
    %c0_215 = arith.constant 0 : index
    %193 = vector.load %arg18[%c0_213, %c0_214, %c3, %c0_215] : memref<2x4x8x32xf32, #tpu.memory_space<vmem>>, vector<2x1x1x32xf32>
    %194 = vector.shape_cast %193 : vector<2x1x1x32xf32> to vector<2x32xf32>
    %195 = arith.maximumf %192, %194 : vector<2x32xf32>
    %196 = arith.truncf %195 : vector<2x32xf32> to vector<2x32xbf16>
    %c0_216 = arith.constant 0 : index
    %c32_217 = arith.constant 32 : index
    %197 = vector.load %arg19[%c0_216, %c32_217] : memref<2x512xbf16, #tpu.memory_space<vmem>>, vector<2x32xbf16>
    tpu.vector_store %arg19[%c0_216, %c32_217], %196 {strides = array<i32>} : memref<2x512xbf16, #tpu.memory_space<vmem>>, vector<2x32xbf16>,
    %c0_218 = arith.constant 0 : index
    %c0_219 = arith.constant 0 : index
    %c4_220 = arith.constant 4 : index
    %c0_221 = arith.constant 0 : index
    %198 = vector.load %arg18[%c0_218, %c0_219, %c4_220, %c0_221] : memref<2x4x8x32xf32, #tpu.memory_space<vmem>>, vector<2x1x1x32xf32>
    %199 = vector.shape_cast %198 : vector<2x1x1x32xf32> to vector<2x32xf32>
    %c0_222 = arith.constant 0 : index
    %c0_223 = arith.constant 0 : index
    %c5 = arith.constant 5 : index
    %c0_224 = arith.constant 0 : index
    %200 = vector.load %arg18[%c0_222, %c0_223, %c5, %c0_224] : memref<2x4x8x32xf32, #tpu.memory_space<vmem>>, vector<2x1x1x32xf32>
    %201 = vector.shape_cast %200 : vector<2x1x1x32xf32> to vector<2x32xf32>
    %202 = arith.maximumf %199, %201 : vector<2x32xf32>
    %203 = arith.truncf %202 : vector<2x32xf32> to vector<2x32xbf16>
    %c0_225 = arith.constant 0 : index
    %c64_226 = arith.constant 64 : index
    %204 = vector.load %arg19[%c0_225, %c64_226] : memref<2x512xbf16, #tpu.memory_space<vmem>>, vector<2x32xbf16>
    tpu.vector_store %arg19[%c0_225, %c64_226], %203 {strides = array<i32>} : memref<2x512xbf16, #tpu.memory_space<vmem>>, vector<2x32xbf16>,
    %c0_227 = arith.constant 0 : index
    %c0_228 = arith.constant 0 : index
    %c6 = arith.constant 6 : index
    %c0_229 = arith.constant 0 : index
    %205 = vector.load %arg18[%c0_227, %c0_228, %c6, %c0_229] : memref<2x4x8x32xf32, #tpu.memory_space<vmem>>, vector<2x1x1x32xf32>
    %206 = vector.shape_cast %205 : vector<2x1x1x32xf32> to vector<2x32xf32>
    %c0_230 = arith.constant 0 : index
    %c0_231 = arith.constant 0 : index
    %c7_232 = arith.constant 7 : index
    %c0_233 = arith.constant 0 : index
    %207 = vector.load %arg18[%c0_230, %c0_231, %c7_232, %c0_233] : memref<2x4x8x32xf32, #tpu.memory_space<vmem>>, vector<2x1x1x32xf32>
    %208 = vector.shape_cast %207 : vector<2x1x1x32xf32> to vector<2x32xf32>
    %209 = arith.maximumf %206, %208 : vector<2x32xf32>
    %210 = arith.truncf %209 : vector<2x32xf32> to vector<2x32xbf16>
    %c0_234 = arith.constant 0 : index
    %c96_235 = arith.constant 96 : index
    %211 = vector.load %arg19[%c0_234, %c96_235] : memref<2x512xbf16, #tpu.memory_space<vmem>>, vector<2x32xbf16>
    tpu.vector_store %arg19[%c0_234, %c96_235], %210 {strides = array<i32>} : memref<2x512xbf16, #tpu.memory_space<vmem>>, vector<2x32xbf16>,
    %c0_236 = arith.constant 0 : index
    %c1_237 = arith.constant 1 : index
    %c0_238 = arith.constant 0 : index
    %c0_239 = arith.constant 0 : index
    %212 = vector.load %arg18[%c0_236, %c1_237, %c0_238, %c0_239] : memref<2x4x8x32xf32, #tpu.memory_space<vmem>>, vector<2x1x1x32xf32>
    %213 = vector.shape_cast %212 : vector<2x1x1x32xf32> to vector<2x32xf32>
    %c0_240 = arith.constant 0 : index
    %c1_241 = arith.constant 1 : index
    %c1_242 = arith.constant 1 : index
    %c0_243 = arith.constant 0 : index
    %214 = vector.load %arg18[%c0_240, %c1_241, %c1_242, %c0_243] : memref<2x4x8x32xf32, #tpu.memory_space<vmem>>, vector<2x1x1x32xf32>
    %215 = vector.shape_cast %214 : vector<2x1x1x32xf32> to vector<2x32xf32>
    %216 = arith.maximumf %213, %215 : vector<2x32xf32>
    %217 = arith.truncf %216 : vector<2x32xf32> to vector<2x32xbf16>
    %c0_244 = arith.constant 0 : index
    %c128_245 = arith.constant 128 : index
    %218 = vector.load %arg19[%c0_244, %c128_245] : memref<2x512xbf16, #tpu.memory_space<vmem>>, vector<2x32xbf16>
    tpu.vector_store %arg19[%c0_244, %c128_245], %217 {strides = array<i32>} : memref<2x512xbf16, #tpu.memory_space<vmem>>, vector<2x32xbf16>,
    %c0_246 = arith.constant 0 : index
    %c1_247 = arith.constant 1 : index
    %c2_248 = arith.constant 2 : index
    %c0_249 = arith.constant 0 : index
    %219 = vector.load %arg18[%c0_246, %c1_247, %c2_248, %c0_249] : memref<2x4x8x32xf32, #tpu.memory_space<vmem>>, vector<2x1x1x32xf32>
    %220 = vector.shape_cast %219 : vector<2x1x1x32xf32> to vector<2x32xf32>
    %c0_250 = arith.constant 0 : index
    %c1_251 = arith.constant 1 : index
    %c3_252 = arith.constant 3 : index
    %c0_253 = arith.constant 0 : index
    %221 = vector.load %arg18[%c0_250, %c1_251, %c3_252, %c0_253] : memref<2x4x8x32xf32, #tpu.memory_space<vmem>>, vector<2x1x1x32xf32>
    %222 = vector.shape_cast %221 : vector<2x1x1x32xf32> to vector<2x32xf32>
    %223 = arith.maximumf %220, %222 : vector<2x32xf32>
    %224 = arith.truncf %223 : vector<2x32xf32> to vector<2x32xbf16>
    %c0_254 = arith.constant 0 : index
    %c160_255 = arith.constant 160 : index
    %225 = vector.load %arg19[%c0_254, %c160_255] : memref<2x512xbf16, #tpu.memory_space<vmem>>, vector<2x32xbf16>
    tpu.vector_store %arg19[%c0_254, %c160_255], %224 {strides = array<i32>} : memref<2x512xbf16, #tpu.memory_space<vmem>>, vector<2x32xbf16>,
    %c0_256 = arith.constant 0 : index
    %c1_257 = arith.constant 1 : index
    %c4_258 = arith.constant 4 : index
    %c0_259 = arith.constant 0 : index
    %226 = vector.load %arg18[%c0_256, %c1_257, %c4_258, %c0_259] : memref<2x4x8x32xf32, #tpu.memory_space<vmem>>, vector<2x1x1x32xf32>
    %227 = vector.shape_cast %226 : vector<2x1x1x32xf32> to vector<2x32xf32>
    %c0_260 = arith.constant 0 : index
    %c1_261 = arith.constant 1 : index
    %c5_262 = arith.constant 5 : index
    %c0_263 = arith.constant 0 : index
    %228 = vector.load %arg18[%c0_260, %c1_261, %c5_262, %c0_263] : memref<2x4x8x32xf32, #tpu.memory_space<vmem>>, vector<2x1x1x32xf32>
    %229 = vector.shape_cast %228 : vector<2x1x1x32xf32> to vector<2x32xf32>
    %230 = arith.maximumf %227, %229 : vector<2x32xf32>
    %231 = arith.truncf %230 : vector<2x32xf32> to vector<2x32xbf16>
    %c0_264 = arith.constant 0 : index
    %c192_265 = arith.constant 192 : index
    %232 = vector.load %arg19[%c0_264, %c192_265] : memref<2x512xbf16, #tpu.memory_space<vmem>>, vector<2x32xbf16>
    tpu.vector_store %arg19[%c0_264, %c192_265], %231 {strides = array<i32>} : memref<2x512xbf16, #tpu.memory_space<vmem>>, vector<2x32xbf16>,
    %c0_266 = arith.constant 0 : index
    %c1_267 = arith.constant 1 : index
    %c6_268 = arith.constant 6 : index
    %c0_269 = arith.constant 0 : index
    %233 = vector.load %arg18[%c0_266, %c1_267, %c6_268, %c0_269] : memref<2x4x8x32xf32, #tpu.memory_space<vmem>>, vector<2x1x1x32xf32>
    %234 = vector.shape_cast %233 : vector<2x1x1x32xf32> to vector<2x32xf32>
    %c0_270 = arith.constant 0 : index
    %c1_271 = arith.constant 1 : index
    %c7_272 = arith.constant 7 : index
    %c0_273 = arith.constant 0 : index
    %235 = vector.load %arg18[%c0_270, %c1_271, %c7_272, %c0_273] : memref<2x4x8x32xf32, #tpu.memory_space<vmem>>, vector<2x1x1x32xf32>
    %236 = vector.shape_cast %235 : vector<2x1x1x32xf32> to vector<2x32xf32>
    %237 = arith.maximumf %234, %236 : vector<2x32xf32>
    %238 = arith.truncf %237 : vector<2x32xf32> to vector<2x32xbf16>
    %c0_274 = arith.constant 0 : index
    %c224_275 = arith.constant 224 : index
    %239 = vector.load %arg19[%c0_274, %c224_275] : memref<2x512xbf16, #tpu.memory_space<vmem>>, vector<2x32xbf16>
    tpu.vector_store %arg19[%c0_274, %c224_275], %238 {strides = array<i32>} : memref<2x512xbf16, #tpu.memory_space<vmem>>, vector<2x32xbf16>,
    %c0_276 = arith.constant 0 : index
    %c2_277 = arith.constant 2 : index
    %c0_278 = arith.constant 0 : index
    %c0_279 = arith.constant 0 : index
    %240 = vector.load %arg18[%c0_276, %c2_277, %c0_278, %c0_279] : memref<2x4x8x32xf32, #tpu.memory_space<vmem>>, vector<2x1x1x32xf32>
    %241 = vector.shape_cast %240 : vector<2x1x1x32xf32> to vector<2x32xf32>
    %c0_280 = arith.constant 0 : index
    %c2_281 = arith.constant 2 : index
    %c1_282 = arith.constant 1 : index
    %c0_283 = arith.constant 0 : index
    %242 = vector.load %arg18[%c0_280, %c2_281, %c1_282, %c0_283] : memref<2x4x8x32xf32, #tpu.memory_space<vmem>>, vector<2x1x1x32xf32>
    %243 = vector.shape_cast %242 : vector<2x1x1x32xf32> to vector<2x32xf32>
    %244 = arith.maximumf %241, %243 : vector<2x32xf32>
    %245 = arith.truncf %244 : vector<2x32xf32> to vector<2x32xbf16>
    %c0_284 = arith.constant 0 : index
    %c256_285 = arith.constant 256 : index
    %246 = vector.load %arg19[%c0_284, %c256_285] : memref<2x512xbf16, #tpu.memory_space<vmem>>, vector<2x32xbf16>
    tpu.vector_store %arg19[%c0_284, %c256_285], %245 {strides = array<i32>} : memref<2x512xbf16, #tpu.memory_space<vmem>>, vector<2x32xbf16>,
    %c0_286 = arith.constant 0 : index
    %c2_287 = arith.constant 2 : index
    %c2_288 = arith.constant 2 : index
    %c0_289 = arith.constant 0 : index
    %247 = vector.load %arg18[%c0_286, %c2_287, %c2_288, %c0_289] : memref<2x4x8x32xf32, #tpu.memory_space<vmem>>, vector<2x1x1x32xf32>
    %248 = vector.shape_cast %247 : vector<2x1x1x32xf32> to vector<2x32xf32>
    %c0_290 = arith.constant 0 : index
    %c2_291 = arith.constant 2 : index
    %c3_292 = arith.constant 3 : index
    %c0_293 = arith.constant 0 : index
    %249 = vector.load %arg18[%c0_290, %c2_291, %c3_292, %c0_293] : memref<2x4x8x32xf32, #tpu.memory_space<vmem>>, vector<2x1x1x32xf32>
    %250 = vector.shape_cast %249 : vector<2x1x1x32xf32> to vector<2x32xf32>
    %251 = arith.maximumf %248, %250 : vector<2x32xf32>
    %252 = arith.truncf %251 : vector<2x32xf32> to vector<2x32xbf16>
    %c0_294 = arith.constant 0 : index
    %c288 = arith.constant 288 : index
    %253 = vector.load %arg19[%c0_294, %c288] : memref<2x512xbf16, #tpu.memory_space<vmem>>, vector<2x32xbf16>
    tpu.vector_store %arg19[%c0_294, %c288], %252 {strides = array<i32>} : memref<2x512xbf16, #tpu.memory_space<vmem>>, vector<2x32xbf16>,
    %c0_295 = arith.constant 0 : index
    %c2_296 = arith.constant 2 : index
    %c4_297 = arith.constant 4 : index
    %c0_298 = arith.constant 0 : index
    %254 = vector.load %arg18[%c0_295, %c2_296, %c4_297, %c0_298] : memref<2x4x8x32xf32, #tpu.memory_space<vmem>>, vector<2x1x1x32xf32>
    %255 = vector.shape_cast %254 : vector<2x1x1x32xf32> to vector<2x32xf32>
    %c0_299 = arith.constant 0 : index
    %c2_300 = arith.constant 2 : index
    %c5_301 = arith.constant 5 : index
    %c0_302 = arith.constant 0 : index
    %256 = vector.load %arg18[%c0_299, %c2_300, %c5_301, %c0_302] : memref<2x4x8x32xf32, #tpu.memory_space<vmem>>, vector<2x1x1x32xf32>
    %257 = vector.shape_cast %256 : vector<2x1x1x32xf32> to vector<2x32xf32>
    %258 = arith.maximumf %255, %257 : vector<2x32xf32>
    %259 = arith.truncf %258 : vector<2x32xf32> to vector<2x32xbf16>
    %c0_303 = arith.constant 0 : index
    %c320 = arith.constant 320 : index
    %260 = vector.load %arg19[%c0_303, %c320] : memref<2x512xbf16, #tpu.memory_space<vmem>>, vector<2x32xbf16>
    tpu.vector_store %arg19[%c0_303, %c320], %259 {strides = array<i32>} : memref<2x512xbf16, #tpu.memory_space<vmem>>, vector<2x32xbf16>,
    %c0_304 = arith.constant 0 : index
    %c2_305 = arith.constant 2 : index
    %c6_306 = arith.constant 6 : index
    %c0_307 = arith.constant 0 : index
    %261 = vector.load %arg18[%c0_304, %c2_305, %c6_306, %c0_307] : memref<2x4x8x32xf32, #tpu.memory_space<vmem>>, vector<2x1x1x32xf32>
    %262 = vector.shape_cast %261 : vector<2x1x1x32xf32> to vector<2x32xf32>
    %c0_308 = arith.constant 0 : index
    %c2_309 = arith.constant 2 : index
    %c7_310 = arith.constant 7 : index
    %c0_311 = arith.constant 0 : index
    %263 = vector.load %arg18[%c0_308, %c2_309, %c7_310, %c0_311] : memref<2x4x8x32xf32, #tpu.memory_space<vmem>>, vector<2x1x1x32xf32>
    %264 = vector.shape_cast %263 : vector<2x1x1x32xf32> to vector<2x32xf32>
    %265 = arith.maximumf %262, %264 : vector<2x32xf32>
    %266 = arith.truncf %265 : vector<2x32xf32> to vector<2x32xbf16>
    %c0_312 = arith.constant 0 : index
    %c352 = arith.constant 352 : index
    %267 = vector.load %arg19[%c0_312, %c352] : memref<2x512xbf16, #tpu.memory_space<vmem>>, vector<2x32xbf16>
    tpu.vector_store %arg19[%c0_312, %c352], %266 {strides = array<i32>} : memref<2x512xbf16, #tpu.memory_space<vmem>>, vector<2x32xbf16>,
    %c0_313 = arith.constant 0 : index
    %c3_314 = arith.constant 3 : index
    %c0_315 = arith.constant 0 : index
    %c0_316 = arith.constant 0 : index
    %268 = vector.load %arg18[%c0_313, %c3_314, %c0_315, %c0_316] : memref<2x4x8x32xf32, #tpu.memory_space<vmem>>, vector<2x1x1x32xf32>
    %269 = vector.shape_cast %268 : vector<2x1x1x32xf32> to vector<2x32xf32>
    %c0_317 = arith.constant 0 : index
    %c3_318 = arith.constant 3 : index
    %c1_319 = arith.constant 1 : index
    %c0_320 = arith.constant 0 : index
    %270 = vector.load %arg18[%c0_317, %c3_318, %c1_319, %c0_320] : memref<2x4x8x32xf32, #tpu.memory_space<vmem>>, vector<2x1x1x32xf32>
    %271 = vector.shape_cast %270 : vector<2x1x1x32xf32> to vector<2x32xf32>
    %272 = arith.maximumf %269, %271 : vector<2x32xf32>
    %273 = arith.truncf %272 : vector<2x32xf32> to vector<2x32xbf16>
    %c0_321 = arith.constant 0 : index
    %c384_322 = arith.constant 384 : index
    %274 = vector.load %arg19[%c0_321, %c384_322] : memref<2x512xbf16, #tpu.memory_space<vmem>>, vector<2x32xbf16>
    tpu.vector_store %arg19[%c0_321, %c384_322], %273 {strides = array<i32>} : memref<2x512xbf16, #tpu.memory_space<vmem>>, vector<2x32xbf16>,
    %c0_323 = arith.constant 0 : index
    %c3_324 = arith.constant 3 : index
    %c2_325 = arith.constant 2 : index
    %c0_326 = arith.constant 0 : index
    %275 = vector.load %arg18[%c0_323, %c3_324, %c2_325, %c0_326] : memref<2x4x8x32xf32, #tpu.memory_space<vmem>>, vector<2x1x1x32xf32>
    %276 = vector.shape_cast %275 : vector<2x1x1x32xf32> to vector<2x32xf32>
    %c0_327 = arith.constant 0 : index
    %c3_328 = arith.constant 3 : index
    %c3_329 = arith.constant 3 : index
    %c0_330 = arith.constant 0 : index
    %277 = vector.load %arg18[%c0_327, %c3_328, %c3_329, %c0_330] : memref<2x4x8x32xf32, #tpu.memory_space<vmem>>, vector<2x1x1x32xf32>
    %278 = vector.shape_cast %277 : vector<2x1x1x32xf32> to vector<2x32xf32>
    %279 = arith.maximumf %276, %278 : vector<2x32xf32>
    %280 = arith.truncf %279 : vector<2x32xf32> to vector<2x32xbf16>
    %c0_331 = arith.constant 0 : index
    %c416 = arith.constant 416 : index
    %281 = vector.load %arg19[%c0_331, %c416] : memref<2x512xbf16, #tpu.memory_space<vmem>>, vector<2x32xbf16>
    tpu.vector_store %arg19[%c0_331, %c416], %280 {strides = array<i32>} : memref<2x512xbf16, #tpu.memory_space<vmem>>, vector<2x32xbf16>,
    %c0_332 = arith.constant 0 : index
    %c3_333 = arith.constant 3 : index
    %c4_334 = arith.constant 4 : index
    %c0_335 = arith.constant 0 : index
    %282 = vector.load %arg18[%c0_332, %c3_333, %c4_334, %c0_335] : memref<2x4x8x32xf32, #tpu.memory_space<vmem>>, vector<2x1x1x32xf32>
    %283 = vector.shape_cast %282 : vector<2x1x1x32xf32> to vector<2x32xf32>
    %c0_336 = arith.constant 0 : index
    %c3_337 = arith.constant 3 : index
    %c5_338 = arith.constant 5 : index
    %c0_339 = arith.constant 0 : index
    %284 = vector.load %arg18[%c0_336, %c3_337, %c5_338, %c0_339] : memref<2x4x8x32xf32, #tpu.memory_space<vmem>>, vector<2x1x1x32xf32>
    %285 = vector.shape_cast %284 : vector<2x1x1x32xf32> to vector<2x32xf32>
    %286 = arith.maximumf %283, %285 : vector<2x32xf32>
    %287 = arith.truncf %286 : vector<2x32xf32> to vector<2x32xbf16>
    %c0_340 = arith.constant 0 : index
    %c448 = arith.constant 448 : index
    %288 = vector.load %arg19[%c0_340, %c448] : memref<2x512xbf16, #tpu.memory_space<vmem>>, vector<2x32xbf16>
    tpu.vector_store %arg19[%c0_340, %c448], %287 {strides = array<i32>} : memref<2x512xbf16, #tpu.memory_space<vmem>>, vector<2x32xbf16>,
    %c0_341 = arith.constant 0 : index
    %c3_342 = arith.constant 3 : index
    %c6_343 = arith.constant 6 : index
    %c0_344 = arith.constant 0 : index
    %289 = vector.load %arg18[%c0_341, %c3_342, %c6_343, %c0_344] : memref<2x4x8x32xf32, #tpu.memory_space<vmem>>, vector<2x1x1x32xf32>
    %290 = vector.shape_cast %289 : vector<2x1x1x32xf32> to vector<2x32xf32>
    %c0_345 = arith.constant 0 : index
    %c3_346 = arith.constant 3 : index
    %c7_347 = arith.constant 7 : index
    %c0_348 = arith.constant 0 : index
    %291 = vector.load %arg18[%c0_345, %c3_346, %c7_347, %c0_348] : memref<2x4x8x32xf32, #tpu.memory_space<vmem>>, vector<2x1x1x32xf32>
    %292 = vector.shape_cast %291 : vector<2x1x1x32xf32> to vector<2x32xf32>
    %293 = arith.maximumf %290, %292 : vector<2x32xf32>
    %294 = arith.truncf %293 : vector<2x32xf32> to vector<2x32xbf16>
    %c0_349 = arith.constant 0 : index
    %c480 = arith.constant 480 : index
    %295 = vector.load %arg19[%c0_349, %c480] : memref<2x512xbf16, #tpu.memory_space<vmem>>, vector<2x32xbf16>
    tpu.vector_store %arg19[%c0_349, %c480], %294 {strides = array<i32>} : memref<2x512xbf16, #tpu.memory_space<vmem>>, vector<2x32xbf16>,
    %c0_i32_350 = arith.constant 0 : i32
    %296 = tpu.memref_slice %arg23[%c0_i32_350] : memref<3x!tpu.dma_semaphore, #tpu.memory_space<semaphore_mem>> -> memref<1x!tpu.dma_semaphore, #tpu.memory_space<semaphore_mem>>
    %297 = tpu.memref_squeeze %296 : memref<1x!tpu.dma_semaphore, #tpu.memory_space<semaphore_mem>> -> memref<!tpu.dma_semaphore, #tpu.memory_space<semaphore_mem>>
    tpu.wait_dma2 semaphore(%297 : memref<!tpu.dma_semaphore, #tpu.memory_space<semaphore_mem>>) src(%arg9 : memref<512x512xbf16, #tpu.memory_space<any>>) dst(%arg20 : memref<512x512xbf16, #tpu.memory_space<vmem>>)
    %c0_351 = arith.constant 0 : index
    %c0_352 = arith.constant 0 : index
    %298 = vector.load %arg19[%c0_351, %c0_352] : memref<2x512xbf16, #tpu.memory_space<vmem>>, vector<2x512xbf16>
    %c0_353 = arith.constant 0 : index
    %c0_354 = arith.constant 0 : index
    %299 = vector.load %arg20[%c0_353, %c0_354] : memref<512x512xbf16, #tpu.memory_space<vmem>>, vector<512x512xbf16>
    %cst_355 = arith.constant dense<0.000000e+00> : vector<2x512xf32>
    %300 = tpu.matmul %298, %299, %cst_355 {dimension_numbers = #tpu.dot_dimension_numbers<[1], [0], [0], [1], [0, 0, 1, 1], [], []>} : vector<2x512xbf16>, vector<512x512xbf16>, vector<2x512xf32> -> vector<2x512xf32>
    %c0_356 = arith.constant 0 : index
    %c0_357 = arith.constant 0 : index
    %301 = vector.load %arg5[%c0_356, %c0_357] : memref<1x512xf32, #tpu.memory_space<vmem>>, vector<1x512xf32>
    %302 = vector.broadcast %301 : vector<1x512xf32> to vector<2x512xf32>
    %303 = arith.addf %300, %302 : vector<2x512xf32>
    %cst_358 = arith.constant 0.000000e+00 : f32
    %304 = vector.broadcast %cst_358 : f32 to vector<2x512xf32>
    %305 = arith.cmpf ogt, %303, %304 : vector<2x512xf32>
    %c0_359 = arith.constant 0 : index
    %306 = memref.load %arg8[%c0_359] : memref<2xf32, #tpu.memory_space<smem>>
    %307 = vector.broadcast %306 : f32 to vector<2x512xf32>
    %308 = arith.mulf %307, %303 : vector<2x512xf32>
    %309 = arith.select %305, %303, %308 : vector<2x512xi1>, vector<2x512xf32>
    %c1_i32_360 = arith.constant 1 : i32
    %310 = tpu.memref_slice %arg23[%c1_i32_360] : memref<3x!tpu.dma_semaphore, #tpu.memory_space<semaphore_mem>> -> memref<1x!tpu.dma_semaphore, #tpu.memory_space<semaphore_mem>>
    %311 = tpu.memref_squeeze %310 : memref<1x!tpu.dma_semaphore, #tpu.memory_space<semaphore_mem>> -> memref<!tpu.dma_semaphore, #tpu.memory_space<semaphore_mem>>
    tpu.wait_dma2 semaphore(%311 : memref<!tpu.dma_semaphore, #tpu.memory_space<semaphore_mem>>) src(%arg10 : memref<512x512xbf16, #tpu.memory_space<any>>) dst(%arg21 : memref<512x512xbf16, #tpu.memory_space<vmem>>)
    %312 = arith.truncf %309 : vector<2x512xf32> to vector<2x512xbf16>
    %c0_361 = arith.constant 0 : index
    %c0_362 = arith.constant 0 : index
    %313 = vector.load %arg21[%c0_361, %c0_362] : memref<512x512xbf16, #tpu.memory_space<vmem>>, vector<512x512xbf16>
    %cst_363 = arith.constant dense<0.000000e+00> : vector<2x512xf32>
    %314 = tpu.matmul %312, %313, %cst_363 {dimension_numbers = #tpu.dot_dimension_numbers<[1], [0], [0], [1], [0, 0, 1, 1], [], []>} : vector<2x512xbf16>, vector<512x512xbf16>, vector<2x512xf32> -> vector<2x512xf32>
    %c0_364 = arith.constant 0 : index
    %c0_365 = arith.constant 0 : index
    %315 = vector.load %arg6[%c0_364, %c0_365] : memref<1x512xf32, #tpu.memory_space<vmem>>, vector<1x512xf32>
    %316 = vector.broadcast %315 : vector<1x512xf32> to vector<2x512xf32>
    %317 = arith.addf %314, %316 : vector<2x512xf32>
    %cst_366 = arith.constant 0.000000e+00 : f32
    %318 = vector.broadcast %cst_366 : f32 to vector<2x512xf32>
    %319 = arith.cmpf ogt, %317, %318 : vector<2x512xf32>
    %c1_367 = arith.constant 1 : index
    %320 = memref.load %arg8[%c1_367] : memref<2xf32, #tpu.memory_space<smem>>
    %321 = vector.broadcast %320 : f32 to vector<2x512xf32>
    %322 = arith.mulf %321, %317 : vector<2x512xf32>
    %323 = arith.select %319, %317, %322 : vector<2x512xi1>, vector<2x512xf32>
    %c2_i32_368 = arith.constant 2 : i32
    %324 = tpu.memref_slice %arg23[%c2_i32_368] : memref<3x!tpu.dma_semaphore, #tpu.memory_space<semaphore_mem>> -> memref<1x!tpu.dma_semaphore, #tpu.memory_space<semaphore_mem>>
    %325 = tpu.memref_squeeze %324 : memref<1x!tpu.dma_semaphore, #tpu.memory_space<semaphore_mem>> -> memref<!tpu.dma_semaphore, #tpu.memory_space<semaphore_mem>>
    tpu.wait_dma2 semaphore(%325 : memref<!tpu.dma_semaphore, #tpu.memory_space<semaphore_mem>>) src(%arg11 : memref<512x128xbf16, #tpu.memory_space<any>>) dst(%arg22 : memref<512x128xbf16, #tpu.memory_space<vmem>>)
    %326 = arith.truncf %323 : vector<2x512xf32> to vector<2x512xbf16>
    %c0_369 = arith.constant 0 : index
    %c0_370 = arith.constant 0 : index
    %327 = vector.load %arg22[%c0_369, %c0_370] : memref<512x128xbf16, #tpu.memory_space<vmem>>, vector<512x128xbf16>
    %cst_371 = arith.constant dense<0.000000e+00> : vector<2x128xf32>
    %328 = tpu.matmul %326, %327, %cst_371 {dimension_numbers = #tpu.dot_dimension_numbers<[1], [0], [0], [1], [0, 0, 1, 1], [], []>} : vector<2x512xbf16>, vector<512x128xbf16>, vector<2x128xf32> -> vector<2x128xf32>
    %c0_372 = arith.constant 0 : index
    %c0_373 = arith.constant 0 : index
    %329 = vector.load %arg7[%c0_372, %c0_373] : memref<1x128xf32, #tpu.memory_space<vmem>>, vector<1x128xf32>
    %330 = vector.broadcast %329 : vector<1x128xf32> to vector<2x128xf32>
    %331 = arith.addf %328, %330 : vector<2x128xf32>
    %c0_374 = arith.constant 0 : index
    %c0_375 = arith.constant 0 : index
    %332 = vector.load %arg12[%c0_374, %c0_375] : memref<2x128xf32, #tpu.memory_space<vmem>>, vector<2x128xf32>
    tpu.vector_store %arg12[%c0_374, %c0_375], %331 {strides = array<i32>} : memref<2x128xf32, #tpu.memory_space<vmem>>, vector<2x128xf32>,
    return
  }
}

</mosaic_0001>

<llo_original>
// kernel: vgg_forward.1
$region0: #{vgg_forward.1}
  #allocation0 [shape = 'u32[]', space=smem, size = 0x4, offset = 0x4, fixed_abs, tag = 'smem constant byte address 0x4 - core index']
  #allocation1 [shape = 'u32[144,128]{1,0:T(1,128)}', space=vmem, size = 0x12000, scoped, tag = 'internal scratch']
  #allocation2 [shape = 'f32[2,18,32,4]{3,2,1,0:T(8,128)}', space=vmem, size = 0x90000, scoped, tag = 'scratch operand']
  #allocation3 [shape = 'bf16[512,36]{1,0:T(16,128)(2,1)}', space=vmem, size = 0x20000, scoped, tag = 'scratch operand']
  #allocation4 [shape = 'f32[16,16,32]{2,1,0:T(8,128)}', space=vmem, size = 0x20000, scoped, tag = 'scratch operand']
  #allocation5 [shape = 'f32[2,10,24,32]{3,2,1,0:T(8,128)}', space=vmem, size = 0x3c000, scoped, tag = 'scratch operand']
  #allocation6 [shape = 'bf16[128,288]{1,0:T(16,128)(2,1)}', space=vmem, size = 0x18000, scoped, tag = 'scratch operand']
  #allocation7 [shape = 'f32[2,4,8,32]{3,2,1,0:T(8,128)}', space=vmem, size = 0x8000, scoped, tag = 'scratch operand']
  #allocation8 [shape = 'bf16[2,512]{1,0:T(2,128)(2,1)}', space=vmem, size = 0x800, scoped, tag = 'scratch operand']
  #allocation9 [shape = 'bf16[512,512]{1,0:T(16,128)(2,1)}', space=vmem, size = 0x80000, scoped, tag = 'scratch operand']
  #allocation10 [shape = 'bf16[512,512]{1,0:T(16,128)(2,1)}', space=vmem, size = 0x80000, scoped, tag = 'scratch operand']
  #allocation11 [shape = 'bf16[512,128]{1,0:T(16,128)(2,1)}', space=vmem, size = 0x20000, scoped, tag = 'scratch operand']
  #allocation12 [shape = 's32[3]{0}', space=sflag, size = 0xc, scoped, tag = 'scratch operand']
  #allocation17 [shape = 's32[]', space=sflag, size = 0x4, offset = 0, fixed_abs, tag = 'sflag constant byte address 0x0 - dummy sync flag']
  #allocation19 [shape = 's32[]', space=sflag, size = 0x4, offset = 0, fixed_abs, tag = 'sflag constant byte address 0x0 - dummy sync flag']
  #allocation21 [shape = 's32[]', space=sflag, size = 0x4, offset = 0, fixed_abs, tag = 'sflag constant byte address 0x0 - dummy sync flag']
  %s0 = inlined_call_operand.vmem [shape: f32[2,16,16,4], index: 0, kind: input, shape index: {}]
  %s1 = inlined_call_operand.vmem [shape: bf16[36,32], index: 1, kind: input, shape index: {}]
  %s2 = inlined_call_operand.vmem [shape: f32[1,32], index: 2, kind: input, shape index: {}]
  %s3 = inlined_call_operand.vmem [shape: bf16[288,32], index: 3, kind: input, shape index: {}]
  %s4 = inlined_call_operand.vmem [shape: f32[1,32], index: 4, kind: input, shape index: {}]
  %s5 = inlined_call_operand.vmem [shape: f32[1,512], index: 5, kind: input, shape index: {}]
  %s6 = inlined_call_operand.vmem [shape: f32[1,512], index: 6, kind: input, shape index: {}]
  %s7 = inlined_call_operand.vmem [shape: f32[1,128], index: 7, kind: input, shape index: {}]
  %s8 = inlined_call_operand.vmem [shape: f32[2], index: 8, kind: input, shape index: {}]
  %s9 = inlined_call_operand.hbm [shape: bf16[512,512], index: 9, kind: input, shape index: {}]
  %s10 = inlined_call_operand.hbm [shape: bf16[512,512], index: 10, kind: input, shape index: {}]
  %s11 = inlined_call_operand.vmem [shape: bf16[512,128], index: 11, kind: input, shape index: {}]
  %s12 = inlined_call_operand.hbm [shape: f32[2,128], index: 12, kind: output, shape index: {}]
  %s13 = sld [smem:[#allocation0]]
  $region84: #{vgg_forward.1} parent=0
    _
  %s15 = ssub.s32 1, %s13
  %s16 = scalar_select 0, %s15, %s13
  $region1: #{vgg_forward.1} parent=0
    #allocation13 [shape = 'u8[512]{0}', space=smem, size = 0x200, scoped, tag = 'input window, operand 8, single buffered']
    #allocation14 [shape = 's32[1]{0}', space=sflag, size = 0x4, scoped, tag = 'scoped memory for vgg_forward.1']
    #allocation15 [shape = 's32[1]{0}', space=sflag, size = 0x4, scoped, tag = 'scoped memory for vgg_forward.1']
    #allocation16 [shape = 'u8[1024]{0}', space=vmem, size = 0x400, scoped, tag = 'output window, operand 0, single buffered']
    #allocation18 [shape = 'u32[9]{0}', space=smem, size = 0x24, scoped, tag = 'DMA stride descriptor']
    #allocation20 [shape = 'u32[9]{0}', space=smem, size = 0x24, scoped, tag = 'DMA stride descriptor']
    %17 = vsyncpa [#allocation15], 0
    %18 = vsyncpa [#allocation14], 0
    // Predicated region
    $region2: #{vgg_forward.1} parent=1 // pred_check
      _
    $region3: #{vgg_forward.1} parent=1 // pred_check_branch
      %20 = sbr.rel (0) target = $region5
    $region4: #{vgg_forward.1} parent=1 // pred_region
      _
    $region5: #{vgg_forward.1} parent=1 // pred_fallthru
      _
    // Predicated region
    $region6: #{vgg_forward.1} parent=1 // pred_check
      _
    $region7: #{vgg_forward.1} parent=1 // pred_check_branch
      %22 = sbr.rel (0) target = $region9
    $region8: #{vgg_forward.1} parent=1 // pred_region
      _
    $region9: #{vgg_forward.1} parent=1 // pred_fallthru
      _
    // Predicated region
    $region10: #{vgg_forward.1} parent=1 // pred_check
      _
    $region11: #{vgg_forward.1} parent=1 // pred_check_branch
      %24 = sbr.rel (0) target = $region13
    $region12: #{vgg_forward.1} parent=1 // pred_region
      _
    $region13: #{vgg_forward.1} parent=1 // pred_fallthru
      _
    // Predicated region
    $region14: #{vgg_forward.1} parent=1 // pred_check
      _
    $region15: #{vgg_forward.1} parent=1 // pred_check_branch
      %26 = sbr.rel (0) target = $region17
    $region16: #{vgg_forward.1} parent=1 // pred_region
      _
    $region17: #{vgg_forward.1} parent=1 // pred_fallthru
      _
    // Predicated region
    $region18: #{vgg_forward.1} parent=1 // pred_check
      _
    $region19: #{vgg_forward.1} parent=1 // pred_check_branch
      %28 = sbr.rel (0) target = $region21
    $region20: #{vgg_forward.1} parent=1 // pred_region
      _
    $region21: #{vgg_forward.1} parent=1 // pred_fallthru
      _
    // Predicated region
    $region22: #{vgg_forward.1} parent=1 // pred_check
      _
    $region23: #{vgg_forward.1} parent=1 // pred_check_branch
      %30 = sbr.rel (0) target = $region25
    $region24: #{vgg_forward.1} parent=1 // pred_region
      _
    $region25: #{vgg_forward.1} parent=1 // pred_fallthru
      _
    // Predicated region
    $region26: #{vgg_forward.1} parent=1 // pred_check
      _
    $region27: #{vgg_forward.1} parent=1 // pred_check_branch
      %32 = sbr.rel (0) target = $region29
    $region28: #{vgg_forward.1} parent=1 // pred_region
      _
    $region29: #{vgg_forward.1} parent=1 // pred_fallthru
      _
    // Predicated region
    $region30: #{vgg_forward.1} parent=1 // pred_check
      _
    $region31: #{vgg_forward.1} parent=1 // pred_check_branch
      %34 = sbr.rel (0) target = $region33
    $region32: #{vgg_forward.1} parent=1 // pred_region
      _
    $region33: #{vgg_forward.1} parent=1 // pred_fallthru
      _
    // Predicated region
    $region34: #{vgg_forward.1} parent=1 // pred_check
      _
    $region35: #{vgg_forward.1} parent=1 // pred_check_branch
      %36 = sbr.rel (0) target = $region37
    $region36: #{vgg_forward.1} parent=1 // pred_region
      %s38 = ssub.s32 16, 16
      %39 = vsyncadd [#allocation15], %s38
      %s41 = sshll.u32 %s8, 4
      %s42 = int_to_ptr.vmem [resolvable:$true] %s41
      %44 = dma.vmem_to_smem %s42, 16, [#allocation13], [#allocation15]
    $region37: #{vgg_forward.1} parent=1 // pred_fallthru
      _
    // Predicated region
    $region38: #{vgg_forward.1} parent=1 // pred_check
      _
    $region39: #{vgg_forward.1} parent=1 // pred_check_branch
      %46 = sbr.rel (0) target = $region41
    $region40: #{vgg_forward.1} parent=1 // pred_region
      %47 = dma.done [#allocation15], 16
    $region41: #{vgg_forward.1} parent=1 // pred_fallthru
      _
    %48 = sfence
    %s51 = sshll.u32 1, 14
    %s52 = sxor.u32 4294967295, %s51
    %s54 = sld [smem:[#allocation0]]
    %s55 = sadd.s32 2, %s54
    %s57 = sshll.u32 7, 26
    %s58 = sxor.u32 4294967295, %s57
    %s59 = sand.u32 0, %s58
    %s60 = sshll.u32 %s55, 26
    %s61 = sor.u32 %s59, %s60
    %s62 = sshll.u32 [#allocation9], 4
    %s63 = int_to_ptr.vmem [resolvable:$true] %s62
    %66 = sst [smem:[#allocation18]] 512
    %s67 = scalar_lea.smem [#allocation18], 1
    %68 = sst [smem:[%s67]] 512
    %s69 = scalar_lea.smem [#allocation18], 2
    %70 = sst [smem:[%s69]] 4
    %s71 = scalar_lea.smem [#allocation18], 3
    %72 = sst [smem:[%s71]] 64
    %s73 = scalar_lea.smem [#allocation18], 4
    %74 = sst [smem:[%s73]] 128
    %s75 = scalar_lea.smem [#allocation18], 5
    %76 = sst [smem:[%s75]] 2
    %s77 = scalar_lea.smem [#allocation18], 6
    %78 = sst [smem:[%s77]] 256
    %s79 = scalar_lea.smem [#allocation18], 7
    %80 = sst [smem:[%s79]] 64
    %s81 = scalar_lea.smem [#allocation18], 8
    %82 = sst [smem:[%s81]] 4
    %84 = dma.general %s9, 16384, %s63, [#allocation12], [#allocation17], [#allocation18], %s61, 0
    %s85 = scalar_lea.sflag [#allocation12], 1
    %s87 = sshll.u32 1, 14
    %s88 = sxor.u32 4294967295, %s87
    %s90 = sadd.s32 2, %s54
    %s92 = sshll.u32 7, 26
    %s93 = sxor.u32 4294967295, %s92
    %s94 = sand.u32 0, %s93
    %s95 = sshll.u32 %s90, 26
    %s96 = sor.u32 %s94, %s95
    %s97 = sshll.u32 [#allocation10], 4
    %s98 = int_to_ptr.vmem [resolvable:$true] %s97
    %101 = sst [smem:[#allocation20]] 512
    %s102 = scalar_lea.smem [#allocation20], 1
    %103 = sst [smem:[%s102]] 512
    %s104 = scalar_lea.smem [#allocation20], 2
    %105 = sst [smem:[%s104]] 4
    %s106 = scalar_lea.smem [#allocation20], 3
    %107 = sst [smem:[%s106]] 64
    %s108 = scalar_lea.smem [#allocation20], 4
    %109 = sst [smem:[%s108]] 128
    %s110 = scalar_lea.smem [#allocation20], 5
    %111 = sst [smem:[%s110]] 2
    %s112 = scalar_lea.smem [#allocation20], 6
    %113 = sst [smem:[%s112]] 256
    %s114 = scalar_lea.smem [#allocation20], 7
    %115 = sst [smem:[%s114]] 64
    %s116 = scalar_lea.smem [#allocation20], 8
    %117 = sst [smem:[%s116]] 4
    %119 = dma.general %s10, 16384, %s98, %s85, [#allocation19], [#allocation20], %s96, 0
    %s120 = scalar_lea.sflag [#allocation12], 2
    %p122 = scmp.lt.u32.totalorder 256, 8
    %p123 = pneg %p122
    // Predicated region
    $region42: #{vgg_forward.1} parent=1 // pred_check
      _
    $region43: #{vgg_forward.1} parent=1 // pred_check_branch
      %125 = sbr.rel (%p122) target = $region45
    $region44: #{vgg_forward.1} parent=1 // pred_region
      %s140 = sand.u32 256, 7
      %p141 = scmp.eq.s32.totalorder %s140, 0
      // Predicated region
      $region57: #{vgg_forward.1} parent=44 // pred_check
        %p142 = pneg %p141
      $region58: #{vgg_forward.1} parent=44 // pred_check_branch
        %144 = sbr.rel (%p142) target = $region60
      $region59: #{vgg_forward.1} parent=44 // pred_region
        loop: start=0, step=1, limit=1
        $region61: #{vgg_forward.1} parent=59 // loop_pre_header
          _
        $region62: #{vgg_forward.1} parent=59 // loop_header
          %s146 = sphi 0, %s150
          %p147 = scmp.ge.s32.totalorder %s146, 1
          %s151 = sphi %s11, %s11
          %s152 = sphi [#allocation11], [#allocation11]
        $region63: #{vgg_forward.1} parent=59 // loop_header_branch
          %149 = sbr.rel (%p147) target = $region67
        $region64: #{vgg_forward.1} parent=59 // loop_body
          %v153 = vld [vmem:[%s151] sm:$0xff]
          %154 = vst [vmem:[%s152] sm:$0xff] %v153
          %v155 = vld [vmem:[%s151 + $0x8] sm:$0xff]
          %156 = vst [vmem:[%s152 + $0x8] sm:$0xff] %v155
          %v157 = vld [vmem:[%s151 + $0x10] sm:$0xff]
          %158 = vst [vmem:[%s152 + $0x10] sm:$0xff] %v157
          %v159 = vld [vmem:[%s151 + $0x18] sm:$0xff]
          %160 = vst [vmem:[%s152 + $0x18] sm:$0xff] %v159
          %v161 = vld [vmem:[%s151 + $0x20] sm:$0xff]
          %162 = vst [vmem:[%s152 + $0x20] sm:$0xff] %v161
          %v163 = vld [vmem:[%s151 + $0x28] sm:$0xff]
          %164 = vst [vmem:[%s152 + $0x28] sm:$0xff] %v163
          %v165 = vld [vmem:[%s151 + $0x30] sm:$0xff]
          %166 = vst [vmem:[%s152 + $0x30] sm:$0xff] %v165
          %v167 = vld [vmem:[%s151 + $0x38] sm:$0xff]
          %168 = vst [vmem:[%s152 + $0x38] sm:$0xff] %v167
          %v169 = vld [vmem:[%s151 + $0x40] sm:$0xff]
          %170 = vst [vmem:[%s152 + $0x40] sm:$0xff] %v169
          %v171 = vld [vmem:[%s151 + $0x48] sm:$0xff]
          %172 = vst [vmem:[%s152 + $0x48] sm:$0xff] %v171
          %v173 = vld [vmem:[%s151 + $0x50] sm:$0xff]
          %174 = vst [vmem:[%s152 + $0x50] sm:$0xff] %v173
          %v175 = vld [vmem:[%s151 + $0x58] sm:$0xff]
          %176 = vst [vmem:[%s152 + $0x58] sm:$0xff] %v175
          %v177 = vld [vmem:[%s151 + $0x60] sm:$0xff]
          %178 = vst [vmem:[%s152 + $0x60] sm:$0xff] %v177
          %v179 = vld [vmem:[%s151 + $0x68] sm:$0xff]
          %180 = vst [vmem:[%s152 + $0x68] sm:$0xff] %v179
          %v181 = vld [vmem:[%s151 + $0x70] sm:$0xff]
          %182 = vst [vmem:[%s152 + $0x70] sm:$0xff] %v181
          %v183 = vld [vmem:[%s151 + $0x78] sm:$0xff]
          %184 = vst [vmem:[%s152 + $0x78] sm:$0xff] %v183
          %v185 = vld [vmem:[%s151 + $0x80] sm:$0xff]
          %186 = vst [vmem:[%s152 + $0x80] sm:$0xff] %v185
          %v187 = vld [vmem:[%s151 + $0x88] sm:$0xff]
          %188 = vst [vmem:[%s152 + $0x88] sm:$0xff] %v187
          %v189 = vld [vmem:[%s151 + $0x90] sm:$0xff]
          %190 = vst [vmem:[%s152 + $0x90] sm:$0xff] %v189
          %v191 = vld [vmem:[%s151 + $0x98] sm:$0xff]
          %192 = vst [vmem:[%s152 + $0x98] sm:$0xff] %v191
          %v193 = vld [vmem:[%s151 + $0xa0] sm:$0xff]
          %194 = vst [vmem:[%s152 + $0xa0] sm:$0xff] %v193
          %v195 = vld [vmem:[%s151 + $0xa8] sm:$0xff]
          %196 = vst [vmem:[%s152 + $0xa8] sm:$0xff] %v195
          %v197 = vld [vmem:[%s151 + $0xb0] sm:$0xff]
          %198 = vst [vmem:[%s152 + $0xb0] sm:$0xff] %v197
          %v199 = vld [vmem:[%s151 + $0xb8] sm:$0xff]
          %200 = vst [vmem:[%s152 + $0xb8] sm:$0xff] %v199
          %v201 = vld [vmem:[%s151 + $0xc0] sm:$0xff]
          %202 = vst [vmem:[%s152 + $0xc0] sm:$0xff] %v201
          %v203 = vld [vmem:[%s151 + $0xc8] sm:$0xff]
          %204 = vst [vmem:[%s152 + $0xc8] sm:$0xff] %v203
          %v205 = vld [vmem:[%s151 + $0xd0] sm:$0xff]
          %206 = vst [vmem:[%s152 + $0xd0] sm:$0xff] %v205
          %v207 = vld [vmem:[%s151 + $0xd8] sm:$0xff]
          %208 = vst [vmem:[%s152 + $0xd8] sm:$0xff] %v207
          %v209 = vld [vmem:[%s151 + $0xe0] sm:$0xff]
          %210 = vst [vmem:[%s152 + $0xe0] sm:$0xff] %v209
          %v211 = vld [vmem:[%s151 + $0xe8] sm:$0xff]
          %212 = vst [vmem:[%s152 + $0xe8] sm:$0xff] %v211
          %v213 = vld [vmem:[%s151 + $0xf0] sm:$0xff]
          %214 = vst [vmem:[%s152 + $0xf0] sm:$0xff] %v213
          %v215 = vld [vmem:[%s151 + $0xf8] sm:$0xff]
          %216 = vst [vmem:[%s152 + $0xf8] sm:$0xff] %v215
        $region65: #{vgg_forward.1} parent=59 // loop_footer
          %s150 = sadd.s32 1, %s146
        $region66: #{vgg_forward.1} parent=59 // loop_footer_branch
          %145 = sbr.rel target = $region62
        $region67: #{vgg_forward.1} parent=59 // loop_exit
          _
      $region60: #{vgg_forward.1} parent=44 // pred_fallthru
        _
      %p217 = pneg %p141
      // Predicated region
      $region68: #{vgg_forward.1} parent=44 // pred_check
        _
      $region69: #{vgg_forward.1} parent=44 // pred_check_branch
        %219 = sbr.rel (%p141) target = $region71
      $region70: #{vgg_forward.1} parent=44 // pred_region
        %s220 = sand.u32 256, 7
      $region71: #{vgg_forward.1} parent=44 // pred_fallthru
        _
    $region45: #{vgg_forward.1} parent=1 // pred_fallthru
      _
    // Predicated region
    $region46: #{vgg_forward.1} parent=1 // pred_check
      %p126 = pneg %p122
    $region47: #{vgg_forward.1} parent=1 // pred_check_branch
      %128 = sbr.rel (%p126) target = $region49
    $region48: #{vgg_forward.1} parent=1 // pred_region
      %s129 = sshllo.u32 0, 256
      loop: start=0, step=1, limit=1
      $region50: #{vgg_forward.1} parent=48 // loop_pre_header
        _
      $region51: #{vgg_forward.1} parent=48 // loop_header
        %s131 = sphi 0, %s135
        %p132 = scmp.ge.s32.totalorder %s131, 1
        %s136 = sphi %s11, %s11
        %s137 = sphi [#allocation11], [#allocation11]
      $region52: #{vgg_forward.1} parent=48 // loop_header_branch
        %134 = sbr.rel (%p132) target = $region56
      $region53: #{vgg_forward.1} parent=48 // loop_body
        %v138 = vld [vmem:[%s136] sm:%s129]
        %139 = vst [vmem:[%s137] sm:%s129] %v138
      $region54: #{vgg_forward.1} parent=48 // loop_footer
        %s135 = sadd.s32 1, %s131
      $region55: #{vgg_forward.1} parent=48 // loop_footer_branch
        %130 = sbr.rel target = $region51
      $region56: #{vgg_forward.1} parent=48 // loop_exit
        _
    $region49: #{vgg_forward.1} parent=1 // pred_fallthru
      _
    // Predicated region
    $region72: #{vgg_forward.1} parent=1 // pred_check
      _
    $region73: #{vgg_forward.1} parent=1 // pred_check_branch
      %223 = sbr.rel (0) target = $region75
    $region74: #{vgg_forward.1} parent=1 // pred_region
      %224 = vsyncadd %s120, 4096
    $region75: #{vgg_forward.1} parent=1 // pred_fallthru
      _
    %v225 = vld [vmem:[%s0] sm:$0xff]
    %v226 = vld [vmem:[%s0 + $0x8] sm:$0xff]
    %v227 = vld [vmem:[%s0 + $0x10] sm:$0xff]
    %v228 = vld [vmem:[%s0 + $0x18] sm:$0xff]
    %v229 = vld [vmem:[%s0 + $0x20] sm:$0xff]
    %v230 = vld [vmem:[%s0 + $0x28] sm:$0xff]
    %v231 = vld [vmem:[%s0 + $0x30] sm:$0xff]
    %v232 = vld [vmem:[%s0 + $0x38] sm:$0xff]
    %v233 = vld [vmem:[%s0 + $0x40] sm:$0xff]
    %v234 = vld [vmem:[%s0 + $0x48] sm:$0xff]
    %v235 = vld [vmem:[%s0 + $0x50] sm:$0xff]
    %v236 = vld [vmem:[%s0 + $0x58] sm:$0xff]
    %v237 = vld [vmem:[%s0 + $0x60] sm:$0xff]
    %v238 = vld [vmem:[%s0 + $0x68] sm:$0xff]
    %v239 = vld [vmem:[%s0 + $0x70] sm:$0xff]
    %v240 = vld [vmem:[%s0 + $0x78] sm:$0xff]
    %v241 = vld [vmem:[%s0 + $0x80] sm:$0xff]
    %v242 = vld [vmem:[%s0 + $0x88] sm:$0xff]
    %v243 = vld [vmem:[%s0 + $0x90] sm:$0xff]
    %v244 = vld [vmem:[%s0 + $0x98] sm:$0xff]
    %v245 = vld [vmem:[%s0 + $0xa0] sm:$0xff]
    %v246 = vld [vmem:[%s0 + $0xa8] sm:$0xff]
    %v247 = vld [vmem:[%s0 + $0xb0] sm:$0xff]
    %v248 = vld [vmem:[%s0 + $0xb8] sm:$0xff]
    %v249 = vld [vmem:[%s0 + $0xc0] sm:$0xff]
    %v250 = vld [vmem:[%s0 + $0xc8] sm:$0xff]
    %v251 = vld [vmem:[%s0 + $0xd0] sm:$0xff]
    %v252 = vld [vmem:[%s0 + $0xd8] sm:$0xff]
    %v253 = vld [vmem:[%s0 + $0xe0] sm:$0xff]
    %v254 = vld [vmem:[%s0 + $0xe8] sm:$0xff]
    %v255 = vld [vmem:[%s0 + $0xf0] sm:$0xff]
    %v256 = vld [vmem:[%s0 + $0xf8] sm:$0xff]
    %v257 = vld [vmem:[%s0 + $0x100] sm:$0xff]
    %v258 = vld [vmem:[%s0 + $0x108] sm:$0xff]
    %v259 = vld [vmem:[%s0 + $0x110] sm:$0xff]
    %v260 = vld [vmem:[%s0 + $0x118] sm:$0xff]
    %v261 = vld [vmem:[%s0 + $0x120] sm:$0xff]
    %v262 = vld [vmem:[%s0 + $0x128] sm:$0xff]
    %v263 = vld [vmem:[%s0 + $0x130] sm:$0xff]
    %v264 = vld [vmem:[%s0 + $0x138] sm:$0xff]
    %v265 = vld [vmem:[%s0 + $0x140] sm:$0xff]
    %v266 = vld [vmem:[%s0 + $0x148] sm:$0xff]
    %v267 = vld [vmem:[%s0 + $0x150] sm:$0xff]
    %v268 = vld [vmem:[%s0 + $0x158] sm:$0xff]
    %v269 = vld [vmem:[%s0 + $0x160] sm:$0xff]
    %v270 = vld [vmem:[%s0 + $0x168] sm:$0xff]
    %v271 = vld [vmem:[%s0 + $0x170] sm:$0xff]
    %v272 = vld [vmem:[%s0 + $0x178] sm:$0xff]
    %v273 = vld [vmem:[%s0 + $0x180] sm:$0xff]
    %v274 = vld [vmem:[%s0 + $0x188] sm:$0xff]
    %v275 = vld [vmem:[%s0 + $0x190] sm:$0xff]
    %v276 = vld [vmem:[%s0 + $0x198] sm:$0xff]
    %v277 = vld [vmem:[%s0 + $0x1a0] sm:$0xff]
    %v278 = vld [vmem:[%s0 + $0x1a8] sm:$0xff]
    %v279 = vld [vmem:[%s0 + $0x1b0] sm:$0xff]
    %v280 = vld [vmem:[%s0 + $0x1b8] sm:$0xff]
    %v281 = vld [vmem:[%s0 + $0x1c0] sm:$0xff]
    %v282 = vld [vmem:[%s0 + $0x1c8] sm:$0xff]
    %v283 = vld [vmem:[%s0 + $0x1d0] sm:$0xff]
    %v284 = vld [vmem:[%s0 + $0x1d8] sm:$0xff]
    %v285 = vld [vmem:[%s0 + $0x1e0] sm:$0xff]
    %v286 = vld [vmem:[%s0 + $0x1e8] sm:$0xff]
    %v287 = vld [vmem:[%s0 + $0x1f0] sm:$0xff]
    %v288 = vld [vmem:[%s0 + $0x1f8] sm:$0xff]
    %vm289 = vcmask 31744
    %290 = vst.msk [vmem:[#allocation2] sm:$0xff] %vm289, 0.0
    %291 = vst.msk [vmem:[#allocation2 + $0x8] sm:$0xff] %vm289, 0.0
    %292 = vst.msk [vmem:[#allocation2 + $0x10] sm:$0xff] %vm289, 0.0
    %293 = vst.msk [vmem:[#allocation2 + $0x18] sm:$0xff] %vm289, 0.0
    %294 = vst.msk [vmem:[#allocation2 + $0x240] sm:$0xff] %vm289, 0.0
    %295 = vst.msk [vmem:[#allocation2 + $0x248] sm:$0xff] %vm289, 0.0
    %296 = vst.msk [vmem:[#allocation2 + $0x250] sm:$0xff] %vm289, 0.0
    %297 = vst.msk [vmem:[#allocation2 + $0x258] sm:$0xff] %vm289, 0.0
    %s298 = scalar_lea.vmem [#allocation2], 544
    %299 = vst.msk [vmem:[%s298] sm:$0xff] %vm289, 0.0
    %300 = vst.msk [vmem:[%s298 + $0x8] sm:$0xff] %vm289, 0.0
    %301 = vst.msk [vmem:[%s298 + $0x10] sm:$0xff] %vm289, 0.0
    %302 = vst.msk [vmem:[%s298 + $0x18] sm:$0xff] %vm289, 0.0
    %303 = vst.msk [vmem:[%s298 + $0x240] sm:$0xff] %vm289, 0.0
    %304 = vst.msk [vmem:[%s298 + $0x248] sm:$0xff] %vm289, 0.0
    %305 = vst.msk [vmem:[%s298 + $0x250] sm:$0xff] %vm289, 0.0
    %306 = vst.msk [vmem:[%s298 + $0x258] sm:$0xff] %vm289, 0.0
    %307 = vst.msk [vmem:[#allocation2] sm:$0xff] %vm289, 0.0
    %308 = vst.msk [vmem:[#allocation2 + $0x20] sm:$0xff] %vm289, 0.0
    %309 = vst.msk [vmem:[#allocation2 + $0x40] sm:$0xff] %vm289, 0.0
    %310 = vst.msk [vmem:[#allocation2 + $0x60] sm:$0xff] %vm289, 0.0
    %311 = vst.msk [vmem:[#allocation2 + $0x80] sm:$0xff] %vm289, 0.0
    %312 = vst.msk [vmem:[#allocation2 + $0xa0] sm:$0xff] %vm289, 0.0
    %313 = vst.msk [vmem:[#allocation2 + $0xc0] sm:$0xff] %vm289, 0.0
    %314 = vst.msk [vmem:[#allocation2 + $0xe0] sm:$0xff] %vm289, 0.0
    %315 = vst.msk [vmem:[#allocation2 + $0x100] sm:$0xff] %vm289, 0.0
    %316 = vst.msk [vmem:[#allocation2 + $0x120] sm:$0xff] %vm289, 0.0
    %317 = vst.msk [vmem:[#allocation2 + $0x140] sm:$0xff] %vm289, 0.0
    %318 = vst.msk [vmem:[#allocation2 + $0x160] sm:$0xff] %vm289, 0.0
    %319 = vst.msk [vmem:[#allocation2 + $0x180] sm:$0xff] %vm289, 0.0
    %320 = vst.msk [vmem:[#allocation2 + $0x1a0] sm:$0xff] %vm289, 0.0
    %321 = vst.msk [vmem:[#allocation2 + $0x1c0] sm:$0xff] %vm289, 0.0
    %322 = vst.msk [vmem:[#allocation2 + $0x1e0] sm:$0xff] %vm289, 0.0
    %323 = vst.msk [vmem:[#allocation2 + $0x200] sm:$0xff] %vm289, 0.0
    %324 = vst.msk [vmem:[#allocation2 + $0x220] sm:$0xff] %vm289, 0.0
    %325 = vst.msk [vmem:[#allocation2 + $0x240] sm:$0xff] %vm289, 0.0
    %326 = vst.msk [vmem:[#allocation2 + $0x260] sm:$0xff] %vm289, 0.0
    %327 = vst.msk [vmem:[#allocation2 + $0x280] sm:$0xff] %vm289, 0.0
    %328 = vst.msk [vmem:[#allocation2 + $0x2a0] sm:$0xff] %vm289, 0.0
    %329 = vst.msk [vmem:[#allocation2 + $0x2c0] sm:$0xff] %vm289, 0.0
    %330 = vst.msk [vmem:[#allocation2 + $0x2e0] sm:$0xff] %vm289, 0.0
    %331 = vst.msk [vmem:[#allocation2 + $0x300] sm:$0xff] %vm289, 0.0
    %332 = vst.msk [vmem:[#allocation2 + $0x320] sm:$0xff] %vm289, 0.0
    %333 = vst.msk [vmem:[#allocation2 + $0x340] sm:$0xff] %vm289, 0.0
    %334 = vst.msk [vmem:[#allocation2 + $0x360] sm:$0xff] %vm289, 0.0
    %335 = vst.msk [vmem:[#allocation2 + $0x380] sm:$0xff] %vm289, 0.0
    %336 = vst.msk [vmem:[#allocation2 + $0x3a0] sm:$0xff] %vm289, 0.0
    %337 = vst.msk [vmem:[#allocation2 + $0x3c0] sm:$0xff] %vm289, 0.0
    %338 = vst.msk [vmem:[#allocation2 + $0x3e0] sm:$0xff] %vm289, 0.0
    %339 = vst.msk [vmem:[#allocation2 + $0x400] sm:$0xff] %vm289, 0.0
    %340 = vst.msk [vmem:[#allocation2 + $0x420] sm:$0xff] %vm289, 0.0
    %341 = vst.msk [vmem:[#allocation2 + $0x440] sm:$0xff] %vm289, 0.0
    %342 = vst.msk [vmem:[#allocation2 + $0x460] sm:$0xff] %vm289, 0.0
    %343 = vst.msk [vmem:[#allocation2 + $0x18] sm:$0xff] %vm289, 0.0
    %344 = vst.msk [vmem:[#allocation2 + $0x38] sm:$0xff] %vm289, 0.0
    %345 = vst.msk [vmem:[#allocation2 + $0x58] sm:$0xff] %vm289, 0.0
    %346 = vst.msk [vmem:[#allocation2 + $0x78] sm:$0xff] %vm289, 0.0
    %347 = vst.msk [vmem:[#allocation2 + $0x98] sm:$0xff] %vm289, 0.0
    %348 = vst.msk [vmem:[#allocation2 + $0xb8] sm:$0xff] %vm289, 0.0
    %349 = vst.msk [vmem:[#allocation2 + $0xd8] sm:$0xff] %vm289, 0.0
    %350 = vst.msk [vmem:[#allocation2 + $0xf8] sm:$0xff] %vm289, 0.0
    %351 = vst.msk [vmem:[#allocation2 + $0x118] sm:$0xff] %vm289, 0.0
    %352 = vst.msk [vmem:[#allocation2 + $0x138] sm:$0xff] %vm289, 0.0
    %353 = vst.msk [vmem:[#allocation2 + $0x158] sm:$0xff] %vm289, 0.0
    %354 = vst.msk [vmem:[#allocation2 + $0x178] sm:$0xff] %vm289, 0.0
    %355 = vst.msk [vmem:[#allocation2 + $0x198] sm:$0xff] %vm289, 0.0
    %356 = vst.msk [vmem:[#allocation2 + $0x1b8] sm:$0xff] %vm289, 0.0
    %357 = vst.msk [vmem:[#allocation2 + $0x1d8] sm:$0xff] %vm289, 0.0
    %358 = vst.msk [vmem:[#allocation2 + $0x1f8] sm:$0xff] %vm289, 0.0
    %359 = vst.msk [vmem:[#allocation2 + $0x218] sm:$0xff] %vm289, 0.0
    %360 = vst.msk [vmem:[#allocation2 + $0x238] sm:$0xff] %vm289, 0.0
    %361 = vst.msk [vmem:[#allocation2 + $0x258] sm:$0xff] %vm289, 0.0
    %362 = vst.msk [vmem:[#allocation2 + $0x278] sm:$0xff] %vm289, 0.0
    %363 = vst.msk [vmem:[#allocation2 + $0x298] sm:$0xff] %vm289, 0.0
    %364 = vst.msk [vmem:[#allocation2 + $0x2b8] sm:$0xff] %vm289, 0.0
    %365 = vst.msk [vmem:[#allocation2 + $0x2d8] sm:$0xff] %vm289, 0.0
    %366 = vst.msk [vmem:[#allocation2 + $0x2f8] sm:$0xff] %vm289, 0.0
    %367 = vst.msk [vmem:[#allocation2 + $0x318] sm:$0xff] %vm289, 0.0
    %368 = vst.msk [vmem:[#allocation2 + $0x338] sm:$0xff] %vm289, 0.0
    %369 = vst.msk [vmem:[#allocation2 + $0x358] sm:$0xff] %vm289, 0.0
    %370 = vst.msk [vmem:[#allocation2 + $0x378] sm:$0xff] %vm289, 0.0
    %371 = vst.msk [vmem:[#allocation2 + $0x398] sm:$0xff] %vm289, 0.0
    %372 = vst.msk [vmem:[#allocation2 + $0x3b8] sm:$0xff] %vm289, 0.0
    %373 = vst.msk [vmem:[#allocation2 + $0x3d8] sm:$0xff] %vm289, 0.0
    %374 = vst.msk [vmem:[#allocation2 + $0x3f8] sm:$0xff] %vm289, 0.0
    %375 = vst.msk [vmem:[#allocation2 + $0x418] sm:$0xff] %vm289, 0.0
    %376 = vst.msk [vmem:[#allocation2 + $0x438] sm:$0xff] %vm289, 0.0
    %377 = vst.msk [vmem:[#allocation2 + $0x458] sm:$0xff] %vm289, 0.0
    %378 = vst.msk [vmem:[#allocation2 + $0x478] sm:$0xff] %vm289, 0.0
    %s379 = scalar_lea.vmem [#allocation2], 32
    %380 = vst.msk [vmem:[%s379 + $0x8] sm:$0xff] %vm289, %v225
    %381 = vst.msk [vmem:[%s379 + $0x10] sm:$0xff] %vm289, %v226
    %382 = vst.msk [vmem:[%s379 + $0x28] sm:$0xff] %vm289, %v227
    %383 = vst.msk [vmem:[%s379 + $0x30] sm:$0xff] %vm289, %v228
    %384 = vst.msk [vmem:[%s379 + $0x48] sm:$0xff] %vm289, %v229
    %385 = vst.msk [vmem:[%s379 + $0x50] sm:$0xff] %vm289, %v230
    %386 = vst.msk [vmem:[%s379 + $0x68] sm:$0xff] %vm289, %v231
    %387 = vst.msk [vmem:[%s379 + $0x70] sm:$0xff] %vm289, %v232
    %388 = vst.msk [vmem:[%s379 + $0x88] sm:$0xff] %vm289, %v233
    %389 = vst.msk [vmem:[%s379 + $0x90] sm:$0xff] %vm289, %v234
    %390 = vst.msk [vmem:[%s379 + $0xa8] sm:$0xff] %vm289, %v235
    %391 = vst.msk [vmem:[%s379 + $0xb0] sm:$0xff] %vm289, %v236
    %392 = vst.msk [vmem:[%s379 + $0xc8] sm:$0xff] %vm289, %v237
    %393 = vst.msk [vmem:[%s379 + $0xd0] sm:$0xff] %vm289, %v238
    %394 = vst.msk [vmem:[%s379 + $0xe8] sm:$0xff] %vm289, %v239
    %395 = vst.msk [vmem:[%s379 + $0xf0] sm:$0xff] %vm289, %v240
    %396 = vst.msk [vmem:[%s379 + $0x108] sm:$0xff] %vm289, %v241
    %397 = vst.msk [vmem:[%s379 + $0x110] sm:$0xff] %vm289, %v242
    %398 = vst.msk [vmem:[%s379 + $0x128] sm:$0xff] %vm289, %v243
    %399 = vst.msk [vmem:[%s379 + $0x130] sm:$0xff] %vm289, %v244
    %400 = vst.msk [vmem:[%s379 + $0x148] sm:$0xff] %vm289, %v245
    %401 = vst.msk [vmem:[%s379 + $0x150] sm:$0xff] %vm289, %v246
    %402 = vst.msk [vmem:[%s379 + $0x168] sm:$0xff] %vm289, %v247
    %403 = vst.msk [vmem:[%s379 + $0x170] sm:$0xff] %vm289, %v248
    %404 = vst.msk [vmem:[%s379 + $0x188] sm:$0xff] %vm289, %v249
    %405 = vst.msk [vmem:[%s379 + $0x190] sm:$0xff] %vm289, %v250
    %406 = vst.msk [vmem:[%s379 + $0x1a8] sm:$0xff] %vm289, %v251
    %407 = vst.msk [vmem:[%s379 + $0x1b0] sm:$0xff] %vm289, %v252
    %408 = vst.msk [vmem:[%s379 + $0x1c8] sm:$0xff] %vm289, %v253
    %409 = vst.msk [vmem:[%s379 + $0x1d0] sm:$0xff] %vm289, %v254
    %410 = vst.msk [vmem:[%s379 + $0x1e8] sm:$0xff] %vm289, %v255
    %411 = vst.msk [vmem:[%s379 + $0x1f0] sm:$0xff] %vm289, %v256
    %412 = vst.msk [vmem:[%s379 + $0x248] sm:$0xff] %vm289, %v257
    %413 = vst.msk [vmem:[%s379 + $0x250] sm:$0xff] %vm289, %v258
    %414 = vst.msk [vmem:[%s379 + $0x268] sm:$0xff] %vm289, %v259
    %415 = vst.msk [vmem:[%s379 + $0x270] sm:$0xff] %vm289, %v260
    %416 = vst.msk [vmem:[%s379 + $0x288] sm:$0xff] %vm289, %v261
    %417 = vst.msk [vmem:[%s379 + $0x290] sm:$0xff] %vm289, %v262
    %418 = vst.msk [vmem:[%s379 + $0x2a8] sm:$0xff] %vm289, %v263
    %419 = vst.msk [vmem:[%s379 + $0x2b0] sm:$0xff] %vm289, %v264
    %420 = vst.msk [vmem:[%s379 + $0x2c8] sm:$0xff] %vm289, %v265
    %421 = vst.msk [vmem:[%s379 + $0x2d0] sm:$0xff] %vm289, %v266
    %422 = vst.msk [vmem:[%s379 + $0x2e8] sm:$0xff] %vm289, %v267
    %423 = vst.msk [vmem:[%s379 + $0x2f0] sm:$0xff] %vm289, %v268
    %424 = vst.msk [vmem:[%s379 + $0x308] sm:$0xff] %vm289, %v269
    %425 = vst.msk [vmem:[%s379 + $0x310] sm:$0xff] %vm289, %v270
    %426 = vst.msk [vmem:[%s379 + $0x328] sm:$0xff] %vm289, %v271
    %427 = vst.msk [vmem:[%s379 + $0x330] sm:$0xff] %vm289, %v272
    %428 = vst.msk [vmem:[%s379 + $0x348] sm:$0xff] %vm289, %v273
    %429 = vst.msk [vmem:[%s379 + $0x350] sm:$0xff] %vm289, %v274
    %430 = vst.msk [vmem:[%s379 + $0x368] sm:$0xff] %vm289, %v275
    %431 = vst.msk [vmem:[%s379 + $0x370] sm:$0xff] %vm289, %v276
    %432 = vst.msk [vmem:[%s379 + $0x388] sm:$0xff] %vm289, %v277
    %433 = vst.msk [vmem:[%s379 + $0x390] sm:$0xff] %vm289, %v278
    %434 = vst.msk [vmem:[%s379 + $0x3a8] sm:$0xff] %vm289, %v279
    %435 = vst.msk [vmem:[%s379 + $0x3b0] sm:$0xff] %vm289, %v280
    %436 = vst.msk [vmem:[%s379 + $0x3c8] sm:$0xff] %vm289, %v281
    %437 = vst.msk [vmem:[%s379 + $0x3d0] sm:$0xff] %vm289, %v282
    %438 = vst.msk [vmem:[%s379 + $0x3e8] sm:$0xff] %vm289, %v283
    %439 = vst.msk [vmem:[%s379 + $0x3f0] sm:$0xff] %vm289, %v284
    %440 = vst.msk [vmem:[%s379 + $0x408] sm:$0xff] %vm289, %v285
    %441 = vst.msk [vmem:[%s379 + $0x410] sm:$0xff] %vm289, %v286
    %442 = vst.msk [vmem:[%s379 + $0x428] sm:$0xff] %vm289, %v287
    %443 = vst.msk [vmem:[%s379 + $0x430] sm:$0xff] %vm289, %v288
    %v444 = vld [vmem:[#allocation2 + $0x7] sm:$0xff]
    %v445 = vld [vmem:[#allocation2 + $0xf] sm:$0xff]
    %v446 = vld [vmem:[#allocation2 + $0x27] sm:$0xff]
    %v447 = vld [vmem:[#allocation2 + $0x2f] sm:$0xff]
    %v448 = vld [vmem:[#allocation2 + $0x47] sm:$0xff]
    %v449 = vld [vmem:[#allocation2 + $0x4f] sm:$0xff]
    %v450 = vld [vmem:[#allocation2 + $0x67] sm:$0xff]
    %v451 = vld [vmem:[#allocation2 + $0x6f] sm:$0xff]
    %v452 = vld [vmem:[#allocation2 + $0x87] sm:$0xff]
    %v453 = vld [vmem:[#allocation2 + $0x8f] sm:$0xff]
    %v454 = vld [vmem:[#allocation2 + $0xa7] sm:$0xff]
    %v455 = vld [vmem:[#allocation2 + $0xaf] sm:$0xff]
    %v456 = vld [vmem:[#allocation2 + $0xc7] sm:$0xff]
    %v457 = vld [vmem:[#allocation2 + $0xcf] sm:$0xff]
    %v458 = vld [vmem:[#allocation2 + $0xe7] sm:$0xff]
    %v459 = vld [vmem:[#allocation2 + $0xef] sm:$0xff]
    %v460 = vld [vmem:[#allocation2 + $0x107] sm:$0xff]
    %v461 = vld [vmem:[#allocation2 + $0x10f] sm:$0xff]
    %v462 = vld [vmem:[#allocation2 + $0x127] sm:$0xff]
    %v463 = vld [vmem:[#allocation2 + $0x12f] sm:$0xff]
    %v464 = vld [vmem:[#allocation2 + $0x147] sm:$0xff]
    %v465 = vld [vmem:[#allocation2 + $0x14f] sm:$0xff]
    %v466 = vld [vmem:[#allocation2 + $0x167] sm:$0xff]
    %v467 = vld [vmem:[#allocation2 + $0x16f] sm:$0xff]
    %v468 = vld [vmem:[#allocation2 + $0x187] sm:$0xff]
    %v469 = vld [vmem:[#allocation2 + $0x18f] sm:$0xff]
    %v470 = vld [vmem:[#allocation2 + $0x1a7] sm:$0xff]
    %v471 = vld [vmem:[#allocation2 + $0x1af] sm:$0xff]
    %v472 = vld [vmem:[#allocation2 + $0x1c7] sm:$0xff]
    %v473 = vld [vmem:[#allocation2 + $0x1cf] sm:$0xff]
    %v474 = vld [vmem:[#allocation2 + $0x1e7] sm:$0xff]
    %v475 = vld [vmem:[#allocation2 + $0x1ef] sm:$0xff]
    %v476 = vld [vmem:[#allocation2 + $0x247] sm:$0xff]
    %v477 = vld [vmem:[#allocation2 + $0x24f] sm:$0xff]
    %v478 = vld [vmem:[#allocation2 + $0x267] sm:$0xff]
    %v479 = vld [vmem:[#allocation2 + $0x26f] sm:$0xff]
    %v480 = vld [vmem:[#allocation2 + $0x287] sm:$0xff]
    %v481 = vld [vmem:[#allocation2 + $0x28f] sm:$0xff]
    %v482 = vld [vmem:[#allocation2 + $0x2a7] sm:$0xff]
    %v483 = vld [vmem:[#allocation2 + $0x2af] sm:$0xff]
    %v484 = vld [vmem:[#allocation2 + $0x2c7] sm:$0xff]
    %v485 = vld [vmem:[#allocation2 + $0x2cf] sm:$0xff]
    %v486 = vld [vmem:[#allocation2 + $0x2e7] sm:$0xff]
    %v487 = vld [vmem:[#allocation2 + $0x2ef] sm:$0xff]
    %v488 = vld [vmem:[#allocation2 + $0x307] sm:$0xff]
    %v489 = vld [vmem:[#allocation2 + $0x30f] sm:$0xff]
    %v490 = vld [vmem:[#allocation2 + $0x327] sm:$0xff]
    %v491 = vld [vmem:[#allocation2 + $0x32f] sm:$0xff]
    %v492 = vld [vmem:[#allocation2 + $0x347] sm:$0xff]
    %v493 = vld [vmem:[#allocation2 + $0x34f] sm:$0xff]
    %v494 = vld [vmem:[#allocation2 + $0x367] sm:$0xff]
    %v495 = vld [vmem:[#allocation2 + $0x36f] sm:$0xff]
    %v496 = vld [vmem:[#allocation2 + $0x387] sm:$0xff]
    %v497 = vld [vmem:[#allocation2 + $0x38f] sm:$0xff]
    %v498 = vld [vmem:[#allocation2 + $0x3a7] sm:$0xff]
    %v499 = vld [vmem:[#allocation2 + $0x3af] sm:$0xff]
    %v500 = vld [vmem:[#allocation2 + $0x3c7] sm:$0xff]
    %v501 = vld [vmem:[#allocation2 + $0x3cf] sm:$0xff]
    %v502 = vld [vmem:[#allocation2 + $0x3e7] sm:$0xff]
    %v503 = vld [vmem:[#allocation2 + $0x3ef] sm:$0xff]
    %v504 = vld [vmem:[#allocation2 + $0x407] sm:$0xff]
    %v505 = vld [vmem:[#allocation2 + $0x40f] sm:$0xff]
    %v506 = vld [vmem:[#allocation2 + $0x427] sm:$0xff]
    %v507 = vld [vmem:[#allocation2 + $0x42f] sm:$0xff]
    %v508 = vpack.c.bf16 %v445, %v444
    %v509 = vpack.c.bf16 %v447, %v446
    %v510 = vpack.c.bf16 %v449, %v448
    %v511 = vpack.c.bf16 %v451, %v450
    %v512 = vpack.c.bf16 %v453, %v452
    %v513 = vpack.c.bf16 %v455, %v454
    %v514 = vpack.c.bf16 %v457, %v456
    %v515 = vpack.c.bf16 %v459, %v458
    %v516 = vpack.c.bf16 %v461, %v460
    %v517 = vpack.c.bf16 %v463, %v462
    %v518 = vpack.c.bf16 %v465, %v464
    %v519 = vpack.c.bf16 %v467, %v466
    %v520 = vpack.c.bf16 %v469, %v468
    %v521 = vpack.c.bf16 %v471, %v470
    %v522 = vpack.c.bf16 %v473, %v472
    %v523 = vpack.c.bf16 %v475, %v474
    %v524 = vpack.c.bf16 %v477, %v476
    %v525 = vpack.c.bf16 %v479, %v478
    %v526 = vpack.c.bf16 %v481, %v480
    %v527 = vpack.c.bf16 %v483, %v482
    %v528 = vpack.c.bf16 %v485, %v484
    %v529 = vpack.c.bf16 %v487, %v486
    %v530 = vpack.c.bf16 %v489, %v488
    %v531 = vpack.c.bf16 %v491, %v490
    %v532 = vpack.c.bf16 %v493, %v492
    %v533 = vpack.c.bf16 %v495, %v494
    %v534 = vpack.c.bf16 %v497, %v496
    %v535 = vpack.c.bf16 %v499, %v498
    %v536 = vpack.c.bf16 %v501, %v500
    %v537 = vpack.c.bf16 %v503, %v502
    %v538 = vpack.c.bf16 %v505, %v504
    %v539 = vpack.c.bf16 %v507, %v506
    %540 = vst.msk [vmem:[#allocation3] sm:$0xff] %vm289, %v508
    %541 = vst.msk [vmem:[#allocation3 + $0x8] sm:$0xff] %vm289, %v509
    %542 = vst.msk [vmem:[#allocation3 + $0x10] sm:$0xff] %vm289, %v510
    %543 = vst.msk [vmem:[#allocation3 + $0x18] sm:$0xff] %vm289, %v511
    %544 = vst.msk [vmem:[#allocation3 + $0x20] sm:$0xff] %vm289, %v512
    %545 = vst.msk [vmem:[#allocation3 + $0x28] sm:$0xff] %vm289, %v513
    %546 = vst.msk [vmem:[#allocation3 + $0x30] sm:$0xff] %vm289, %v514
    %547 = vst.msk [vmem:[#allocation3 + $0x38] sm:$0xff] %vm289, %v515
    %548 = vst.msk [vmem:[#allocation3 + $0x40] sm:$0xff] %vm289, %v516
    %549 = vst.msk [vmem:[#allocation3 + $0x48] sm:$0xff] %vm289, %v517
    %550 = vst.msk [vmem:[#allocation3 + $0x50] sm:$0xff] %vm289, %v518
    %551 = vst.msk [vmem:[#allocation3 + $0x58] sm:$0xff] %vm289, %v519
    %552 = vst.msk [vmem:[#allocation3 + $0x60] sm:$0xff] %vm289, %v520
    %553 = vst.msk [vmem:[#allocation3 + $0x68] sm:$0xff] %vm289, %v521
    %554 = vst.msk [vmem:[#allocation3 + $0x70] sm:$0xff] %vm289, %v522
    %555 = vst.msk [vmem:[#allocation3 + $0x78] sm:$0xff] %vm289, %v523
    %556 = vst.msk [vmem:[#allocation3 + $0x80] sm:$0xff] %vm289, %v524
    %557 = vst.msk [vmem:[#allocation3 + $0x88] sm:$0xff] %vm289, %v525
    %558 = vst.msk [vmem:[#allocation3 + $0x90] sm:$0xff] %vm289, %v526
    %559 = vst.msk [vmem:[#allocation3 + $0x98] sm:$0xff] %vm289, %v527
    %560 = vst.msk [vmem:[#allocation3 + $0xa0] sm:$0xff] %vm289, %v528
    %561 = vst.msk [vmem:[#allocation3 + $0xa8] sm:$0xff] %vm289, %v529
    %562 = vst.msk [vmem:[#allocation3 + $0xb0] sm:$0xff] %vm289, %v530
    %563 = vst.msk [vmem:[#allocation3 + $0xb8] sm:$0xff] %vm289, %v531
    %564 = vst.msk [vmem:[#allocation3 + $0xc0] sm:$0xff] %vm289, %v532
    %565 = vst.msk [vmem:[#allocation3 + $0xc8] sm:$0xff] %vm289, %v533
    %566 = vst.msk [vmem:[#allocation3 + $0xd0] sm:$0xff] %vm289, %v534
    %567 = vst.msk [vmem:[#allocation3 + $0xd8] sm:$0xff] %vm289, %v535
    %568 = vst.msk [vmem:[#allocation3 + $0xe0] sm:$0xff] %vm289, %v536
    %569 = vst.msk [vmem:[#allocation3 + $0xe8] sm:$0xff] %vm289, %v537
    %570 = vst.msk [vmem:[#allocation3 + $0xf0] sm:$0xff] %vm289, %v538
    %571 = vst.msk [vmem:[#allocation3 + $0xf8] sm:$0xff] %vm289, %v539
    %v572 = vld [vmem:[#allocation2 + $0x8] sm:$0xff]
    %v573 = vld [vmem:[#allocation2 + $0x10] sm:$0xff]
    %v574 = vld [vmem:[#allocation2 + $0x28] sm:$0xff]
    %v575 = vld [vmem:[#allocation2 + $0x30] sm:$0xff]
    %v576 = vld [vmem:[#allocation2 + $0x48] sm:$0xff]
    %v577 = vld [vmem:[#allocation2 + $0x50] sm:$0xff]
    %v578 = vld [vmem:[#allocation2 + $0x68] sm:$0xff]
    %v579 = vld [vmem:[#allocation2 + $0x70] sm:$0xff]
    %v580 = vld [vmem:[#allocation2 + $0x88] sm:$0xff]
    %v581 = vld [vmem:[#allocation2 + $0x90] sm:$0xff]
    %v582 = vld [vmem:[#allocation2 + $0xa8] sm:$0xff]
    %v583 = vld [vmem:[#allocation2 + $0xb0] sm:$0xff]
    %v584 = vld [vmem:[#allocation2 + $0xc8] sm:$0xff]
    %v585 = vld [vmem:[#allocation2 + $0xd0] sm:$0xff]
    %v586 = vld [vmem:[#allocation2 + $0xe8] sm:$0xff]
    %v587 = vld [vmem:[#allocation2 + $0xf0] sm:$0xff]
    %v588 = vld [vmem:[#allocation2 + $0x108] sm:$0xff]
    %v589 = vld [vmem:[#allocation2 + $0x110] sm:$0xff]
    %v590 = vld [vmem:[#allocation2 + $0x128] sm:$0xff]
    %v591 = vld [vmem:[#allocation2 + $0x130] sm:$0xff]
    %v592 = vld [vmem:[#allocation2 + $0x148] sm:$0xff]
    %v593 = vld [vmem:[#allocation2 + $0x150] sm:$0xff]
    %v594 = vld [vmem:[#allocation2 + $0x168] sm:$0xff]
    %v595 = vld [vmem:[#allocation2 + $0x170] sm:$0xff]
    %v596 = vld [vmem:[#allocation2 + $0x188] sm:$0xff]
    %v597 = vld [vmem:[#allocation2 + $0x190] sm:$0xff]
    %v598 = vld [vmem:[#allocation2 + $0x1a8] sm:$0xff]
    %v599 = vld [vmem:[#allocation2 + $0x1b0] sm:$0xff]
    %v600 = vld [vmem:[#allocation2 + $0x1c8] sm:$0xff]
    %v601 = vld [vmem:[#allocation2 + $0x1d0] sm:$0xff]
    %v602 = vld [vmem:[#allocation2 + $0x1e8] sm:$0xff]
    %v603 = vld [vmem:[#allocation2 + $0x1f0] sm:$0xff]
    %v604 = vld [vmem:[#allocation2 + $0x248] sm:$0xff]
    %v605 = vld [vmem:[#allocation2 + $0x250] sm:$0xff]
    %v606 = vld [vmem:[#allocation2 + $0x268] sm:$0xff]
    %v607 = vld [vmem:[#allocation2 + $0x270] sm:$0xff]
    %v608 = vld [vmem:[#allocation2 + $0x288] sm:$0xff]
    %v609 = vld [vmem:[#allocation2 + $0x290] sm:$0xff]
    %v610 = vld [vmem:[#allocation2 + $0x2a8] sm:$0xff]
    %v611 = vld [vmem:[#allocation2 + $0x2b0] sm:$0xff]
    %v612 = vld [vmem:[#allocation2 + $0x2c8] sm:$0xff]
    %v613 = vld [vmem:[#allocation2 + $0x2d0] sm:$0xff]
    %v614 = vld [vmem:[#allocation2 + $0x2e8] sm:$0xff]
    %v615 = vld [vmem:[#allocation2 + $0x2f0] sm:$0xff]
    %v616 = vld [vmem:[#allocation2 + $0x308] sm:$0xff]
    %v617 = vld [vmem:[#allocation2 + $0x310] sm:$0xff]
    %v618 = vld [vmem:[#allocation2 + $0x328] sm:$0xff]
    %v619 = vld [vmem:[#allocation2 + $0x330] sm:$0xff]
    %v620 = vld [vmem:[#allocation2 + $0x348] sm:$0xff]
    %v621 = vld [vmem:[#allocation2 + $0x350] sm:$0xff]
    %v622 = vld [vmem:[#allocation2 + $0x368] sm:$0xff]
    %v623 = vld [vmem:[#allocation2 + $0x370] sm:$0xff]
    %v624 = vld [vmem:[#allocation2 + $0x388] sm:$0xff]
    %v625 = vld [vmem:[#allocation2 + $0x390] sm:$0xff]
    %v626 = vld [vmem:[#allocation2 + $0x3a8] sm:$0xff]
    %v627 = vld [vmem:[#allocation2 + $0x3b0] sm:$0xff]
    %v628 = vld [vmem:[#allocation2 + $0x3c8] sm:$0xff]
    %v629 = vld [vmem:[#allocation2 + $0x3d0] sm:$0xff]
    %v630 = vld [vmem:[#allocation2 + $0x3e8] sm:$0xff]
    %v631 = vld [vmem:[#allocation2 + $0x3f0] sm:$0xff]
    %v632 = vld [vmem:[#allocation2 + $0x408] sm:$0xff]
    %v633 = vld [vmem:[#allocation2 + $0x410] sm:$0xff]
    %v634 = vld [vmem:[#allocation2 + $0x428] sm:$0xff]
    %v635 = vld [vmem:[#allocation2 + $0x430] sm:$0xff]
    %v636 = vpack.c.bf16 %v573, %v572
    %v637 = vpack.c.bf16 %v575, %v574
    %v638 = vpack.c.bf16 %v577, %v576
    %v639 = vpack.c.bf16 %v579, %v578
    %v640 = vpack.c.bf16 %v581, %v580
    %v641 = vpack.c.bf16 %v583, %v582
    %v642 = vpack.c.bf16 %v585, %v584
    %v643 = vpack.c.bf16 %v587, %v586
    %v644 = vpack.c.bf16 %v589, %v588
    %v645 = vpack.c.bf16 %v591, %v590
    %v646 = vpack.c.bf16 %v593, %v592
    %v647 = vpack.c.bf16 %v595, %v594
    %v648 = vpack.c.bf16 %v597, %v596
    %v649 = vpack.c.bf16 %v599, %v598
    %v650 = vpack.c.bf16 %v601, %v600
    %v651 = vpack.c.bf16 %v603, %v602
    %v652 = vpack.c.bf16 %v605, %v604
    %v653 = vpack.c.bf16 %v607, %v606
    %v654 = vpack.c.bf16 %v609, %v608
    %v655 = vpack.c.bf16 %v611, %v610
    %v656 = vpack.c.bf16 %v613, %v612
    %v657 = vpack.c.bf16 %v615, %v614
    %v658 = vpack.c.bf16 %v617, %v616
    %v659 = vpack.c.bf16 %v619, %v618
    %v660 = vpack.c.bf16 %v621, %v620
    %v661 = vpack.c.bf16 %v623, %v622
    %v662 = vpack.c.bf16 %v625, %v624
    %v663 = vpack.c.bf16 %v627, %v626
    %v664 = vpack.c.bf16 %v629, %v628
    %v665 = vpack.c.bf16 %v631, %v630
    %v666 = vpack.c.bf16 %v633, %v632
    %v667 = vpack.c.bf16 %v635, %v634
    %700 = vrot.lane.b32.xlu0 %v636, 4
    %v701 = vpop.permute.xlu0 %700
    %702 = vrot.lane.b32.xlu0 %v637, 4
    %v703 = vpop.permute.xlu0 %702
    %704 = vrot.lane.b32.xlu0 %v638, 4
    %v705 = vpop.permute.xlu0 %704
    %706 = vrot.lane.b32.xlu0 %v639, 4
    %v707 = vpop.permute.xlu0 %706
    %708 = vrot.lane.b32.xlu0 %v640, 4
    %v709 = vpop.permute.xlu0 %708
    %710 = vrot.lane.b32.xlu0 %v641, 4
    %v711 = vpop.permute.xlu0 %710
    %712 = vrot.lane.b32.xlu0 %v642, 4
    %v713 = vpop.permute.xlu0 %712
    %714 = vrot.lane.b32.xlu0 %v643, 4
    %v715 = vpop.permute.xlu0 %714
    %716 = vrot.lane.b32.xlu0 %v644, 4
    %v717 = vpop.permute.xlu0 %716
    %718 = vrot.lane.b32.xlu0 %v645, 4
    %v719 = vpop.permute.xlu0 %718
    %720 = vrot.lane.b32.xlu0 %v646, 4
    %v721 = vpop.permute.xlu0 %720
    %722 = vrot.lane.b32.xlu0 %v647, 4
    %v723 = vpop.permute.xlu0 %722
    %724 = vrot.lane.b32.xlu0 %v648, 4
    %v725 = vpop.permute.xlu0 %724
    %726 = vrot.lane.b32.xlu0 %v649, 4
    %v727 = vpop.permute.xlu0 %726
    %728 = vrot.lane.b32.xlu0 %v650, 4
    %v729 = vpop.permute.xlu0 %728
    %730 = vrot.lane.b32.xlu0 %v651, 4
    %v731 = vpop.permute.xlu0 %730
    %732 = vrot.lane.b32.xlu0 %v652, 4
    %v733 = vpop.permute.xlu0 %732
    %734 = vrot.lane.b32.xlu0 %v653, 4
    %v735 = vpop.permute.xlu0 %734
    %736 = vrot.lane.b32.xlu0 %v654, 4
    %v737 = vpop.permute.xlu0 %736
    %738 = vrot.lane.b32.xlu0 %v655, 4
    %v739 = vpop.permute.xlu0 %738
    %740 = vrot.lane.b32.xlu0 %v656, 4
    %v741 = vpop.permute.xlu0 %740
    %742 = vrot.lane.b32.xlu0 %v657, 4
    %v743 = vpop.permute.xlu0 %742
    %744 = vrot.lane.b32.xlu0 %v658, 4
    %v745 = vpop.permute.xlu0 %744
    %746 = vrot.lane.b32.xlu0 %v659, 4
    %v747 = vpop.permute.xlu0 %746
    %748 = vrot.lane.b32.xlu0 %v660, 4
    %v749 = vpop.permute.xlu0 %748
    %750 = vrot.lane.b32.xlu0 %v661, 4
    %v751 = vpop.permute.xlu0 %750
    %752 = vrot.lane.b32.xlu0 %v662, 4
    %v753 = vpop.permute.xlu0 %752
    %754 = vrot.lane.b32.xlu0 %v663, 4
    %v755 = vpop.permute.xlu0 %754
    %756 = vrot.lane.b32.xlu0 %v664, 4
    %v757 = vpop.permute.xlu0 %756
    %758 = vrot.lane.b32.xlu0 %v665, 4
    %v759 = vpop.permute.xlu0 %758
    %760 = vrot.lane.b32.xlu0 %v666, 4
    %v761 = vpop.permute.xlu0 %760
    %762 = vrot.lane.b32.xlu0 %v667, 4
    %v763 = vpop.permute.xlu0 %762
    %vm796 = vcmask 64544
    %797 = vst.msk [vmem:[#allocation3] sm:$0xff] %vm796, %v701
    %798 = vst.msk [vmem:[#allocation3 + $0x8] sm:$0xff] %vm796, %v703
    %799 = vst.msk [vmem:[#allocation3 + $0x10] sm:$0xff] %vm796, %v705
    %800 = vst.msk [vmem:[#allocation3 + $0x18] sm:$0xff] %vm796, %v707
    %801 = vst.msk [vmem:[#allocation3 + $0x20] sm:$0xff] %vm796, %v709
    %802 = vst.msk [vmem:[#allocation3 + $0x28] sm:$0xff] %vm796, %v711
    %803 = vst.msk [vmem:[#allocation3 + $0x30] sm:$0xff] %vm796, %v713
    %804 = vst.msk [vmem:[#allocation3 + $0x38] sm:$0xff] %vm796, %v715
    %805 = vst.msk [vmem:[#allocation3 + $0x40] sm:$0xff] %vm796, %v717
    %806 = vst.msk [vmem:[#allocation3 + $0x48] sm:$0xff] %vm796, %v719
    %807 = vst.msk [vmem:[#allocation3 + $0x50] sm:$0xff] %vm796, %v721
    %808 = vst.msk [vmem:[#allocation3 + $0x58] sm:$0xff] %vm796, %v723
    %809 = vst.msk [vmem:[#allocation3 + $0x60] sm:$0xff] %vm796, %v725
    %810 = vst.msk [vmem:[#allocation3 + $0x68] sm:$0xff] %vm796, %v727
    %811 = vst.msk [vmem:[#allocation3 + $0x70] sm:$0xff] %vm796, %v729
    %812 = vst.msk [vmem:[#allocation3 + $0x78] sm:$0xff] %vm796, %v731
    %813 = vst.msk [vmem:[#allocation3 + $0x80] sm:$0xff] %vm796, %v733
    %814 = vst.msk [vmem:[#allocation3 + $0x88] sm:$0xff] %vm796, %v735
    %815 = vst.msk [vmem:[#allocation3 + $0x90] sm:$0xff] %vm796, %v737
    %816 = vst.msk [vmem:[#allocation3 + $0x98] sm:$0xff] %vm796, %v739
    %817 = vst.msk [vmem:[#allocation3 + $0xa0] sm:$0xff] %vm796, %v741
    %818 = vst.msk [vmem:[#allocation3 + $0xa8] sm:$0xff] %vm796, %v743
    %819 = vst.msk [vmem:[#allocation3 + $0xb0] sm:$0xff] %vm796, %v745
    %820 = vst.msk [vmem:[#allocation3 + $0xb8] sm:$0xff] %vm796, %v747
    %821 = vst.msk [vmem:[#allocation3 + $0xc0] sm:$0xff] %vm796, %v749
    %822 = vst.msk [vmem:[#allocation3 + $0xc8] sm:$0xff] %vm796, %v751
    %823 = vst.msk [vmem:[#allocation3 + $0xd0] sm:$0xff] %vm796, %v753
    %824 = vst.msk [vmem:[#allocation3 + $0xd8] sm:$0xff] %vm796, %v755
    %825 = vst.msk [vmem:[#allocation3 + $0xe0] sm:$0xff] %vm796, %v757
    %826 = vst.msk [vmem:[#allocation3 + $0xe8] sm:$0xff] %vm796, %v759
    %827 = vst.msk [vmem:[#allocation3 + $0xf0] sm:$0xff] %vm796, %v761
    %828 = vst.msk [vmem:[#allocation3 + $0xf8] sm:$0xff] %vm796, %v763
    %v829 = vld [vmem:[#allocation2 + $0x9] sm:$0xff]
    %v830 = vld [vmem:[#allocation2 + $0x11] sm:$0xff]
    %v831 = vld [vmem:[#allocation2 + $0x29] sm:$0xff]
    %v832 = vld [vmem:[#allocation2 + $0x31] sm:$0xff]
    %v833 = vld [vmem:[#allocation2 + $0x49] sm:$0xff]
    %v834 = vld [vmem:[#allocation2 + $0x51] sm:$0xff]
    %v835 = vld [vmem:[#allocation2 + $0x69] sm:$0xff]
    %v836 = vld [vmem:[#allocation2 + $0x71] sm:$0xff]
    %v837 = vld [vmem:[#allocation2 + $0x89] sm:$0xff]
    %v838 = vld [vmem:[#allocation2 + $0x91] sm:$0xff]
    %v839 = vld [vmem:[#allocation2 + $0xa9] sm:$0xff]
    %v840 = vld [vmem:[#allocation2 + $0xb1] sm:$0xff]
    %v841 = vld [vmem:[#allocation2 + $0xc9] sm:$0xff]
    %v842 = vld [vmem:[#allocation2 + $0xd1] sm:$0xff]
    %v843 = vld [vmem:[#allocation2 + $0xe9] sm:$0xff]
    %v844 = vld [vmem:[#allocation2 + $0xf1] sm:$0xff]
    %v845 = vld [vmem:[#allocation2 + $0x109] sm:$0xff]
    %v846 = vld [vmem:[#allocation2 + $0x111] sm:$0xff]
    %v847 = vld [vmem:[#allocation2 + $0x129] sm:$0xff]
    %v848 = vld [vmem:[#allocation2 + $0x131] sm:$0xff]
    %v849 = vld [vmem:[#allocation2 + $0x149] sm:$0xff]
    %v850 = vld [vmem:[#allocation2 + $0x151] sm:$0xff]
    %v851 = vld [vmem:[#allocation2 + $0x169] sm:$0xff]
    %v852 = vld [vmem:[#allocation2 + $0x171] sm:$0xff]
    %v853 = vld [vmem:[#allocation2 + $0x189] sm:$0xff]
    %v854 = vld [vmem:[#allocation2 + $0x191] sm:$0xff]
    %v855 = vld [vmem:[#allocation2 + $0x1a9] sm:$0xff]
    %v856 = vld [vmem:[#allocation2 + $0x1b1] sm:$0xff]
    %v857 = vld [vmem:[#allocation2 + $0x1c9] sm:$0xff]
    %v858 = vld [vmem:[#allocation2 + $0x1d1] sm:$0xff]
    %v859 = vld [vmem:[#allocation2 + $0x1e9] sm:$0xff]
    %v860 = vld [vmem:[#allocation2 + $0x1f1] sm:$0xff]
    %v861 = vld [vmem:[#allocation2 + $0x249] sm:$0xff]
    %v862 = vld [vmem:[#allocation2 + $0x251] sm:$0xff]
    %v863 = vld [vmem:[#allocation2 + $0x269] sm:$0xff]
    %v864 = vld [vmem:[#allocation2 + $0x271] sm:$0xff]
    %v865 = vld [vmem:[#allocation2 + $0x289] sm:$0xff]
    %v866 = vld [vmem:[#allocation2 + $0x291] sm:$0xff]
    %v867 = vld [vmem:[#allocation2 + $0x2a9] sm:$0xff]
    %v868 = vld [vmem:[#allocation2 + $0x2b1] sm:$0xff]
    %v869 = vld [vmem:[#allocation2 + $0x2c9] sm:$0xff]
    %v870 = vld [vmem:[#allocation2 + $0x2d1] sm:$0xff]
    %v871 = vld [vmem:[#allocation2 + $0x2e9] sm:$0xff]
    %v872 = vld [vmem:[#allocation2 + $0x2f1] sm:$0xff]
    %v873 = vld [vmem:[#allocation2 + $0x309] sm:$0xff]
    %v874 = vld [vmem:[#allocation2 + $0x311] sm:$0xff]
    %v875 = vld [vmem:[#allocation2 + $0x329] sm:$0xff]
    %v876 = vld [vmem:[#allocation2 + $0x331] sm:$0xff]
    %v877 = vld [vmem:[#allocation2 + $0x349] sm:$0xff]
    %v878 = vld [vmem:[#allocation2 + $0x351] sm:$0xff]
    %v879 = vld [vmem:[#allocation2 + $0x369] sm:$0xff]
    %v880 = vld [vmem:[#allocation2 + $0x371] sm:$0xff]
    %v881 = vld [vmem:[#allocation2 + $0x389] sm:$0xff]
    %v882 = vld [vmem:[#allocation2 + $0x391] sm:$0xff]
    %v883 = vld [vmem:[#allocation2 + $0x3a9] sm:$0xff]
    %v884 = vld [vmem:[#allocation2 + $0x3b1] sm:$0xff]
    %v885 = vld [vmem:[#allocation2 + $0x3c9] sm:$0xff]
    %v886 = vld [vmem:[#allocation2 + $0x3d1] sm:$0xff]
    %v887 = vld [vmem:[#allocation2 + $0x3e9] sm:$0xff]
    %v888 = vld [vmem:[#allocation2 + $0x3f1] sm:$0xff]
    %v889 = vld [vmem:[#allocation2 + $0x409] sm:$0xff]
    %v890 = vld [vmem:[#allocation2 + $0x411] sm:$0xff]
    %v891 = vld [vmem:[#allocation2 + $0x429] sm:$0xff]
    %v892 = vld [vmem:[#allocation2 + $0x431] sm:$0xff]
    %v893 = vpack.c.bf16 %v830, %v829
    %v894 = vpack.c.bf16 %v832, %v831
    %v895 = vpack.c.bf16 %v834, %v833
    %v896 = vpack.c.bf16 %v836, %v835
    %v897 = vpack.c.bf16 %v838, %v837
    %v898 = vpack.c.bf16 %v840, %v839
    %v899 = vpack.c.bf16 %v842, %v841
    %v900 = vpack.c.bf16 %v844, %v843
    %v901 = vpack.c.bf16 %v846, %v845
    %v902 = vpack.c.bf16 %v848, %v847
    %v903 = vpack.c.bf16 %v850, %v849
    %v904 = vpack.c.bf16 %v852, %v851
    %v905 = vpack.c.bf16 %v854, %v853
    %v906 = vpack.c.bf16 %v856, %v855
    %v907 = vpack.c.bf16 %v858, %v857
    %v908 = vpack.c.bf16 %v860, %v859
    %v909 = vpack.c.bf16 %v862, %v861
    %v910 = vpack.c.bf16 %v864, %v863
    %v911 = vpack.c.bf16 %v866, %v865
    %v912 = vpack.c.bf16 %v868, %v867
    %v913 = vpack.c.bf16 %v870, %v869
    %v914 = vpack.c.bf16 %v872, %v871
    %v915 = vpack.c.bf16 %v874, %v873
    %v916 = vpack.c.bf16 %v876, %v875
    %v917 = vpack.c.bf16 %v878, %v877
    %v918 = vpack.c.bf16 %v880, %v879
    %v919 = vpack.c.bf16 %v882, %v881
    %v920 = vpack.c.bf16 %v884, %v883
    %v921 = vpack.c.bf16 %v886, %v885
    %v922 = vpack.c.bf16 %v888, %v887
    %v923 = vpack.c.bf16 %v890, %v889
    %v924 = vpack.c.bf16 %v892, %v891
    %957 = vrot.lane.b32.xlu0 %v893, 8
    %v958 = vpop.permute.xlu0 %957
    %959 = vrot.lane.b32.xlu0 %v894, 8
    %v960 = vpop.permute.xlu0 %959
    %961 = vrot.lane.b32.xlu0 %v895, 8
    %v962 = vpop.permute.xlu0 %961
    %963 = vrot.lane.b32.xlu0 %v896, 8
    %v964 = vpop.permute.xlu0 %963
    %965 = vrot.lane.b32.xlu0 %v897, 8
    %v966 = vpop.permute.xlu0 %965
    %967 = vrot.lane.b32.xlu0 %v898, 8
    %v968 = vpop.permute.xlu0 %967
    %969 = vrot.lane.b32.xlu0 %v899, 8
    %v970 = vpop.permute.xlu0 %969
    %971 = vrot.lane.b32.xlu0 %v900, 8
    %v972 = vpop.permute.xlu0 %971
    %973 = vrot.lane.b32.xlu0 %v901, 8
    %v974 = vpop.permute.xlu0 %973
    %975 = vrot.lane.b32.xlu0 %v902, 8
    %v976 = vpop.permute.xlu0 %975
    %977 = vrot.lane.b32.xlu0 %v903, 8
    %v978 = vpop.permute.xlu0 %977
    %979 = vrot.lane.b32.xlu0 %v904, 8
    %v980 = vpop.permute.xlu0 %979
    %981 = vrot.lane.b32.xlu0 %v905, 8
    %v982 = vpop.permute.xlu0 %981
    %983 = vrot.lane.b32.xlu0 %v906, 8
    %v984 = vpop.permute.xlu0 %983
    %985 = vrot.lane.b32.xlu0 %v907, 8
    %v986 = vpop.permute.xlu0 %985
    %987 = vrot.lane.b32.xlu0 %v908, 8
    %v988 = vpop.permute.xlu0 %987
    %989 = vrot.lane.b32.xlu0 %v909, 8
    %v990 = vpop.permute.xlu0 %989
    %991 = vrot.lane.b32.xlu0 %v910, 8
    %v992 = vpop.permute.xlu0 %991
    %993 = vrot.lane.b32.xlu0 %v911, 8
    %v994 = vpop.permute.xlu0 %993
    %995 = vrot.lane.b32.xlu0 %v912, 8
    %v996 = vpop.permute.xlu0 %995
    %997 = vrot.lane.b32.xlu0 %v913, 8
    %v998 = vpop.permute.xlu0 %997
    %999 = vrot.lane.b32.xlu0 %v914, 8
    %v1000 = vpop.permute.xlu0 %999
    %1001 = vrot.lane.b32.xlu0 %v915, 8
    %v1002 = vpop.permute.xlu0 %1001
    %1003 = vrot.lane.b32.xlu0 %v916, 8
    %v1004 = vpop.permute.xlu0 %1003
    %1005 = vrot.lane.b32.xlu0 %v917, 8
    %v1006 = vpop.permute.xlu0 %1005
    %1007 = vrot.lane.b32.xlu0 %v918, 8
    %v1008 = vpop.permute.xlu0 %1007
    %1009 = vrot.lane.b32.xlu0 %v919, 8
    %v1010 = vpop.permute.xlu0 %1009
    %1011 = vrot.lane.b32.xlu0 %v920, 8
    %v1012 = vpop.permute.xlu0 %1011
    %1013 = vrot.lane.b32.xlu0 %v921, 8
    %v1014 = vpop.permute.xlu0 %1013
    %1015 = vrot.lane.b32.xlu0 %v922, 8
    %v1016 = vpop.permute.xlu0 %1015
    %1017 = vrot.lane.b32.xlu0 %v923, 8
    %v1018 = vpop.permute.xlu0 %1017
    %1019 = vrot.lane.b32.xlu0 %v924, 8
    %v1020 = vpop.permute.xlu0 %1019
    %vm1053 = vcmask 97344
    %1054 = vst.msk [vmem:[#allocation3] sm:$0xff] %vm1053, %v958
    %1055 = vst.msk [vmem:[#allocation3 + $0x8] sm:$0xff] %vm1053, %v960
    %1056 = vst.msk [vmem:[#allocation3 + $0x10] sm:$0xff] %vm1053, %v962
    %1057 = vst.msk [vmem:[#allocation3 + $0x18] sm:$0xff] %vm1053, %v964
    %1058 = vst.msk [vmem:[#allocation3 + $0x20] sm:$0xff] %vm1053, %v966
    %1059 = vst.msk [vmem:[#allocation3 + $0x28] sm:$0xff] %vm1053, %v968
    %1060 = vst.msk [vmem:[#allocation3 + $0x30] sm:$0xff] %vm1053, %v970
    %1061 = vst.msk [vmem:[#allocation3 + $0x38] sm:$0xff] %vm1053, %v972
    %1062 = vst.msk [vmem:[#allocation3 + $0x40] sm:$0xff] %vm1053, %v974
    %1063 = vst.msk [vmem:[#allocation3 + $0x48] sm:$0xff] %vm1053, %v976
    %1064 = vst.msk [vmem:[#allocation3 + $0x50] sm:$0xff] %vm1053, %v978
    %1065 = vst.msk [vmem:[#allocation3 + $0x58] sm:$0xff] %vm1053, %v980
    %1066 = vst.msk [vmem:[#allocation3 + $0x60] sm:$0xff] %vm1053, %v982
    %1067 = vst.msk [vmem:[#allocation3 + $0x68] sm:$0xff] %vm1053, %v984
    %1068 = vst.msk [vmem:[#allocation3 + $0x70] sm:$0xff] %vm1053, %v986
    %1069 = vst.msk [vmem:[#allocation3 + $0x78] sm:$0xff] %vm1053, %v988
    %1070 = vst.msk [vmem:[#allocation3 + $0x80] sm:$0xff] %vm1053, %v990
    %1071 = vst.msk [vmem:[#allocation3 + $0x88] sm:$0xff] %vm1053, %v992
    %1072 = vst.msk [vmem:[#allocation3 + $0x90] sm:$0xff] %vm1053, %v994
    %1073 = vst.msk [vmem:[#allocation3 + $0x98] sm:$0xff] %vm1053, %v996
    %1074 = vst.msk [vmem:[#allocation3 + $0xa0] sm:$0xff] %vm1053, %v998
    %1075 = vst.msk [vmem:[#allocation3 + $0xa8] sm:$0xff] %vm1053, %v1000
    %1076 = vst.msk [vmem:[#allocation3 + $0xb0] sm:$0xff] %vm1053, %v1002
    %1077 = vst.msk [vmem:[#allocation3 + $0xb8] sm:$0xff] %vm1053, %v1004
    %1078 = vst.msk [vmem:[#allocation3 + $0xc0] sm:$0xff] %vm1053, %v1006
    %1079 = vst.msk [vmem:[#allocation3 + $0xc8] sm:$0xff] %vm1053, %v1008
    %1080 = vst.msk [vmem:[#allocation3 + $0xd0] sm:$0xff] %vm1053, %v1010
    %1081 = vst.msk [vmem:[#allocation3 + $0xd8] sm:$0xff] %vm1053, %v1012
    %1082 = vst.msk [vmem:[#allocation3 + $0xe0] sm:$0xff] %vm1053, %v1014
    %1083 = vst.msk [vmem:[#allocation3 + $0xe8] sm:$0xff] %vm1053, %v1016
    %1084 = vst.msk [vmem:[#allocation3 + $0xf0] sm:$0xff] %vm1053, %v1018
    %1085 = vst.msk [vmem:[#allocation3 + $0xf8] sm:$0xff] %vm1053, %v1020
    %v1086 = vld [vmem:[%s379 + $0x7] sm:$0xff]
    %v1087 = vld [vmem:[%s379 + $0xf] sm:$0xff]
    %v1088 = vld [vmem:[%s379 + $0x27] sm:$0xff]
    %v1089 = vld [vmem:[%s379 + $0x2f] sm:$0xff]
    %v1090 = vld [vmem:[%s379 + $0x47] sm:$0xff]
    %v1091 = vld [vmem:[%s379 + $0x4f] sm:$0xff]
    %v1092 = vld [vmem:[%s379 + $0x67] sm:$0xff]
    %v1093 = vld [vmem:[%s379 + $0x6f] sm:$0xff]
    %v1094 = vld [vmem:[%s379 + $0x87] sm:$0xff]
    %v1095 = vld [vmem:[%s379 + $0x8f] sm:$0xff]
    %v1096 = vld [vmem:[%s379 + $0xa7] sm:$0xff]
    %v1097 = vld [vmem:[%s379 + $0xaf] sm:$0xff]
    %v1098 = vld [vmem:[%s379 + $0xc7] sm:$0xff]
    %v1099 = vld [vmem:[%s379 + $0xcf] sm:$0xff]
    %v1100 = vld [vmem:[%s379 + $0xe7] sm:$0xff]
    %v1101 = vld [vmem:[%s379 + $0xef] sm:$0xff]
    %v1102 = vld [vmem:[%s379 + $0x107] sm:$0xff]
    %v1103 = vld [vmem:[%s379 + $0x10f] sm:$0xff]
    %v1104 = vld [vmem:[%s379 + $0x127] sm:$0xff]
    %v1105 = vld [vmem:[%s379 + $0x12f] sm:$0xff]
    %v1106 = vld [vmem:[%s379 + $0x147] sm:$0xff]
    %v1107 = vld [vmem:[%s379 + $0x14f] sm:$0xff]
    %v1108 = vld [vmem:[%s379 + $0x167] sm:$0xff]
    %v1109 = vld [vmem:[%s379 + $0x16f] sm:$0xff]
    %v1110 = vld [vmem:[%s379 + $0x187] sm:$0xff]
    %v1111 = vld [vmem:[%s379 + $0x18f] sm:$0xff]
    %v1112 = vld [vmem:[%s379 + $0x1a7] sm:$0xff]
    %v1113 = vld [vmem:[%s379 + $0x1af] sm:$0xff]
    %v1114 = vld [vmem:[%s379 + $0x1c7] sm:$0xff]
    %v1115 = vld [vmem:[%s379 + $0x1cf] sm:$0xff]
    %v1116 = vld [vmem:[%s379 + $0x1e7] sm:$0xff]
    %v1117 = vld [vmem:[%s379 + $0x1ef] sm:$0xff]
    %v1118 = vld [vmem:[%s379 + $0x247] sm:$0xff]
    %v1119 = vld [vmem:[%s379 + $0x24f] sm:$0xff]
    %v1120 = vld [vmem:[%s379 + $0x267] sm:$0xff]
    %v1121 = vld [vmem:[%s379 + $0x26f] sm:$0xff]
    %v1122 = vld [vmem:[%s379 + $0x287] sm:$0xff]
    %v1123 = vld [vmem:[%s379 + $0x28f] sm:$0xff]
    %v1124 = vld [vmem:[%s379 + $0x2a7] sm:$0xff]
    %v1125 = vld [vmem:[%s379 + $0x2af] sm:$0xff]
    %v1126 = vld [vmem:[%s379 + $0x2c7] sm:$0xff]
    %v1127 = vld [vmem:[%s379 + $0x2cf] sm:$0xff]
    %v1128 = vld [vmem:[%s379 + $0x2e7] sm:$0xff]
    %v1129 = vld [vmem:[%s379 + $0x2ef] sm:$0xff]
    %v1130 = vld [vmem:[%s379 + $0x307] sm:$0xff]
    %v1131 = vld [vmem:[%s379 + $0x30f] sm:$0xff]
    %v1132 = vld [vmem:[%s379 + $0x327] sm:$0xff]
    %v1133 = vld [vmem:[%s379 + $0x32f] sm:$0xff]
    %v1134 = vld [vmem:[%s379 + $0x347] sm:$0xff]
    %v1135 = vld [vmem:[%s379 + $0x34f] sm:$0xff]
    %v1136 = vld [vmem:[%s379 + $0x367] sm:$0xff]
    %v1137 = vld [vmem:[%s379 + $0x36f] sm:$0xff]
    %v1138 = vld [vmem:[%s379 + $0x387] sm:$0xff]
    %v1139 = vld [vmem:[%s379 + $0x38f] sm:$0xff]
    %v1140 = vld [vmem:[%s379 + $0x3a7] sm:$0xff]
    %v1141 = vld [vmem:[%s379 + $0x3af] sm:$0xff]
    %v1142 = vld [vmem:[%s379 + $0x3c7] sm:$0xff]
    %v1143 = vld [vmem:[%s379 + $0x3cf] sm:$0xff]
    %v1144 = vld [vmem:[%s379 + $0x3e7] sm:$0xff]
    %v1145 = vld [vmem:[%s379 + $0x3ef] sm:$0xff]
    %v1146 = vld [vmem:[%s379 + $0x407] sm:$0xff]
    %v1147 = vld [vmem:[%s379 + $0x40f] sm:$0xff]
    %v1148 = vld [vmem:[%s379 + $0x427] sm:$0xff]
    %v1149 = vld [vmem:[%s379 + $0x42f] sm:$0xff]
    %v1150 = vpack.c.bf16 %v1087, %v1086
    %v1151 = vpack.c.bf16 %v1089, %v1088
    %v1152 = vpack.c.bf16 %v1091, %v1090
    %v1153 = vpack.c.bf16 %v1093, %v1092
    %v1154 = vpack.c.bf16 %v1095, %v1094
    %v1155 = vpack.c.bf16 %v1097, %v1096
    %v1156 = vpack.c.bf16 %v1099, %v1098
    %v1157 = vpack.c.bf16 %v1101, %v1100
    %v1158 = vpack.c.bf16 %v1103, %v1102
    %v1159 = vpack.c.bf16 %v1105, %v1104
    %v1160 = vpack.c.bf16 %v1107, %v1106
    %v1161 = vpack.c.bf16 %v1109, %v1108
    %v1162 = vpack.c.bf16 %v1111, %v1110
    %v1163 = vpack.c.bf16 %v1113, %v1112
    %v1164 = vpack.c.bf16 %v1115, %v1114
    %v1165 = vpack.c.bf16 %v1117, %v1116
    %v1166 = vpack.c.bf16 %v1119, %v1118
    %v1167 = vpack.c.bf16 %v1121, %v1120
    %v1168 = vpack.c.bf16 %v1123, %v1122
    %v1169 = vpack.c.bf16 %v1125, %v1124
    %v1170 = vpack.c.bf16 %v1127, %v1126
    %v1171 = vpack.c.bf16 %v1129, %v1128
    %v1172 = vpack.c.bf16 %v1131, %v1130
    %v1173 = vpack.c.bf16 %v1133, %v1132
    %v1174 = vpack.c.bf16 %v1135, %v1134
    %v1175 = vpack.c.bf16 %v1137, %v1136
    %v1176 = vpack.c.bf16 %v1139, %v1138
    %v1177 = vpack.c.bf16 %v1141, %v1140
    %v1178 = vpack.c.bf16 %v1143, %v1142
    %v1179 = vpack.c.bf16 %v1145, %v1144
    %v1180 = vpack.c.bf16 %v1147, %v1146
    %v1181 = vpack.c.bf16 %v1149, %v1148
    %1214 = vrot.lane.b32.xlu0 %v1150, 12
    %v1215 = vpop.permute.xlu0 %1214
    %1216 = vrot.lane.b32.xlu0 %v1151, 12
    %v1217 = vpop.permute.xlu0 %1216
    %1218 = vrot.lane.b32.xlu0 %v1152, 12
    %v1219 = vpop.permute.xlu0 %1218
    %1220 = vrot.lane.b32.xlu0 %v1153, 12
    %v1221 = vpop.permute.xlu0 %1220
    %1222 = vrot.lane.b32.xlu0 %v1154, 12
    %v1223 = vpop.permute.xlu0 %1222
    %1224 = vrot.lane.b32.xlu0 %v1155, 12
    %v1225 = vpop.permute.xlu0 %1224
    %1226 = vrot.lane.b32.xlu0 %v1156, 12
    %v1227 = vpop.permute.xlu0 %1226
    %1228 = vrot.lane.b32.xlu0 %v1157, 12
    %v1229 = vpop.permute.xlu0 %1228
    %1230 = vrot.lane.b32.xlu0 %v1158, 12
    %v1231 = vpop.permute.xlu0 %1230
    %1232 = vrot.lane.b32.xlu0 %v1159, 12
    %v1233 = vpop.permute.xlu0 %1232
    %1234 = vrot.lane.b32.xlu0 %v1160, 12
    %v1235 = vpop.permute.xlu0 %1234
    %1236 = vrot.lane.b32.xlu0 %v1161, 12
    %v1237 = vpop.permute.xlu0 %1236
    %1238 = vrot.lane.b32.xlu0 %v1162, 12
    %v1239 = vpop.permute.xlu0 %1238
    %1240 = vrot.lane.b32.xlu0 %v1163, 12
    %v1241 = vpop.permute.xlu0 %1240
    %1242 = vrot.lane.b32.xlu0 %v1164, 12
    %v1243 = vpop.permute.xlu0 %1242
    %1244 = vrot.lane.b32.xlu0 %v1165, 12
    %v1245 = vpop.permute.xlu0 %1244
    %1246 = vrot.lane.b32.xlu0 %v1166, 12
    %v1247 = vpop.permute.xlu0 %1246
    %1248 = vrot.lane.b32.xlu0 %v1167, 12
    %v1249 = vpop.permute.xlu0 %1248
    %1250 = vrot.lane.b32.xlu0 %v1168, 12
    %v1251 = vpop.permute.xlu0 %1250
    %1252 = vrot.lane.b32.xlu0 %v1169, 12
    %v1253 = vpop.permute.xlu0 %1252
    %1254 = vrot.lane.b32.xlu0 %v1170, 12
    %v1255 = vpop.permute.xlu0 %1254
    %1256 = vrot.lane.b32.xlu0 %v1171, 12
    %v1257 = vpop.permute.xlu0 %1256
    %1258 = vrot.lane.b32.xlu0 %v1172, 12
    %v1259 = vpop.permute.xlu0 %1258
    %1260 = vrot.lane.b32.xlu0 %v1173, 12
    %v1261 = vpop.permute.xlu0 %1260
    %1262 = vrot.lane.b32.xlu0 %v1174, 12
    %v1263 = vpop.permute.xlu0 %1262
    %1264 = vrot.lane.b32.xlu0 %v1175, 12
    %v1265 = vpop.permute.xlu0 %1264
    %1266 = vrot.lane.b32.xlu0 %v1176, 12
    %v1267 = vpop.permute.xlu0 %1266
    %1268 = vrot.lane.b32.xlu0 %v1177, 12
    %v1269 = vpop.permute.xlu0 %1268
    %1270 = vrot.lane.b32.xlu0 %v1178, 12
    %v1271 = vpop.permute.xlu0 %1270
    %1272 = vrot.lane.b32.xlu0 %v1179, 12
    %v1273 = vpop.permute.xlu0 %1272
    %1274 = vrot.lane.b32.xlu0 %v1180, 12
    %v1275 = vpop.permute.xlu0 %1274
    %1276 = vrot.lane.b32.xlu0 %v1181, 12
    %v1277 = vpop.permute.xlu0 %1276
    %vm1310 = vcmask 130144
    %1311 = vst.msk [vmem:[#allocation3] sm:$0xff] %vm1310, %v1215
    %1312 = vst.msk [vmem:[#allocation3 + $0x8] sm:$0xff] %vm1310, %v1217
    %1313 = vst.msk [vmem:[#allocation3 + $0x10] sm:$0xff] %vm1310, %v1219
    %1314 = vst.msk [vmem:[#allocation3 + $0x18] sm:$0xff] %vm1310, %v1221
    %1315 = vst.msk [vmem:[#allocation3 + $0x20] sm:$0xff] %vm1310, %v1223
    %1316 = vst.msk [vmem:[#allocation3 + $0x28] sm:$0xff] %vm1310, %v1225
    %1317 = vst.msk [vmem:[#allocation3 + $0x30] sm:$0xff] %vm1310, %v1227
    %1318 = vst.msk [vmem:[#allocation3 + $0x38] sm:$0xff] %vm1310, %v1229
    %1319 = vst.msk [vmem:[#allocation3 + $0x40] sm:$0xff] %vm1310, %v1231
    %1320 = vst.msk [vmem:[#allocation3 + $0x48] sm:$0xff] %vm1310, %v1233
    %1321 = vst.msk [vmem:[#allocation3 + $0x50] sm:$0xff] %vm1310, %v1235
    %1322 = vst.msk [vmem:[#allocation3 + $0x58] sm:$0xff] %vm1310, %v1237
    %1323 = vst.msk [vmem:[#allocation3 + $0x60] sm:$0xff] %vm1310, %v1239
    %1324 = vst.msk [vmem:[#allocation3 + $0x68] sm:$0xff] %vm1310, %v1241
    %1325 = vst.msk [vmem:[#allocation3 + $0x70] sm:$0xff] %vm1310, %v1243
    %1326 = vst.msk [vmem:[#allocation3 + $0x78] sm:$0xff] %vm1310, %v1245
    %1327 = vst.msk [vmem:[#allocation3 + $0x80] sm:$0xff] %vm1310, %v1247
    %1328 = vst.msk [vmem:[#allocation3 + $0x88] sm:$0xff] %vm1310, %v1249
    %1329 = vst.msk [vmem:[#allocation3 + $0x90] sm:$0xff] %vm1310, %v1251
    %1330 = vst.msk [vmem:[#allocation3 + $0x98] sm:$0xff] %vm1310, %v1253
    %1331 = vst.msk [vmem:[#allocation3 + $0xa0] sm:$0xff] %vm1310, %v1255
    %1332 = vst.msk [vmem:[#allocation3 + $0xa8] sm:$0xff] %vm1310, %v1257
    %1333 = vst.msk [vmem:[#allocation3 + $0xb0] sm:$0xff] %vm1310, %v1259
    %1334 = vst.msk [vmem:[#allocation3 + $0xb8] sm:$0xff] %vm1310, %v1261
    %1335 = vst.msk [vmem:[#allocation3 + $0xc0] sm:$0xff] %vm1310, %v1263
    %1336 = vst.msk [vmem:[#allocation3 + $0xc8] sm:$0xff] %vm1310, %v1265
    %1337 = vst.msk [vmem:[#allocation3 + $0xd0] sm:$0xff] %vm1310, %v1267
    %1338 = vst.msk [vmem:[#allocation3 + $0xd8] sm:$0xff] %vm1310, %v1269
    %1339 = vst.msk [vmem:[#allocation3 + $0xe0] sm:$0xff] %vm1310, %v1271
    %1340 = vst.msk [vmem:[#allocation3 + $0xe8] sm:$0xff] %vm1310, %v1273
    %1341 = vst.msk [vmem:[#allocation3 + $0xf0] sm:$0xff] %vm1310, %v1275
    %1342 = vst.msk [vmem:[#allocation3 + $0xf8] sm:$0xff] %vm1310, %v1277
    %v1343 = vld [vmem:[%s379 + $0x8] sm:$0xff]
    %v1344 = vld [vmem:[%s379 + $0x10] sm:$0xff]
    %v1345 = vld [vmem:[%s379 + $0x28] sm:$0xff]
    %v1346 = vld [vmem:[%s379 + $0x30] sm:$0xff]
    %v1347 = vld [vmem:[%s379 + $0x48] sm:$0xff]
    %v1348 = vld [vmem:[%s379 + $0x50] sm:$0xff]
    %v1349 = vld [vmem:[%s379 + $0x68] sm:$0xff]
    %v1350 = vld [vmem:[%s379 + $0x70] sm:$0xff]
    %v1351 = vld [vmem:[%s379 + $0x88] sm:$0xff]
    %v1352 = vld [vmem:[%s379 + $0x90] sm:$0xff]
    %v1353 = vld [vmem:[%s379 + $0xa8] sm:$0xff]
    %v1354 = vld [vmem:[%s379 + $0xb0] sm:$0xff]
    %v1355 = vld [vmem:[%s379 + $0xc8] sm:$0xff]
    %v1356 = vld [vmem:[%s379 + $0xd0] sm:$0xff]
    %v1357 = vld [vmem:[%s379 + $0xe8] sm:$0xff]
    %v1358 = vld [vmem:[%s379 + $0xf0] sm:$0xff]
    %v1359 = vld [vmem:[%s379 + $0x108] sm:$0xff]
    %v1360 = vld [vmem:[%s379 + $0x110] sm:$0xff]
    %v1361 = vld [vmem:[%s379 + $0x128] sm:$0xff]
    %v1362 = vld [vmem:[%s379 + $0x130] sm:$0xff]
    %v1363 = vld [vmem:[%s379 + $0x148] sm:$0xff]
    %v1364 = vld [vmem:[%s379 + $0x150] sm:$0xff]
    %v1365 = vld [vmem:[%s379 + $0x168] sm:$0xff]
    %v1366 = vld [vmem:[%s379 + $0x170] sm:$0xff]
    %v1367 = vld [vmem:[%s379 + $0x188] sm:$0xff]
    %v1368 = vld [vmem:[%s379 + $0x190] sm:$0xff]
    %v1369 = vld [vmem:[%s379 + $0x1a8] sm:$0xff]
    %v1370 = vld [vmem:[%s379 + $0x1b0] sm:$0xff]
    %v1371 = vld [vmem:[%s379 + $0x1c8] sm:$0xff]
    %v1372 = vld [vmem:[%s379 + $0x1d0] sm:$0xff]
    %v1373 = vld [vmem:[%s379 + $0x1e8] sm:$0xff]
    %v1374 = vld [vmem:[%s379 + $0x1f0] sm:$0xff]
    %v1375 = vld [vmem:[%s379 + $0x248] sm:$0xff]
    %v1376 = vld [vmem:[%s379 + $0x250] sm:$0xff]
    %v1377 = vld [vmem:[%s379 + $0x268] sm:$0xff]
    %v1378 = vld [vmem:[%s379 + $0x270] sm:$0xff]
    %v1379 = vld [vmem:[%s379 + $0x288] sm:$0xff]
    %v1380 = vld [vmem:[%s379 + $0x290] sm:$0xff]
    %v1381 = vld [vmem:[%s379 + $0x2a8] sm:$0xff]
    %v1382 = vld [vmem:[%s379 + $0x2b0] sm:$0xff]
    %v1383 = vld [vmem:[%s379 + $0x2c8] sm:$0xff]
    %v1384 = vld [vmem:[%s379 + $0x2d0] sm:$0xff]
    %v1385 = vld [vmem:[%s379 + $0x2e8] sm:$0xff]
    %v1386 = vld [vmem:[%s379 + $0x2f0] sm:$0xff]
    %v1387 = vld [vmem:[%s379 + $0x308] sm:$0xff]
    %v1388 = vld [vmem:[%s379 + $0x310] sm:$0xff]
    %v1389 = vld [vmem:[%s379 + $0x328] sm:$0xff]
    %v1390 = vld [vmem:[%s379 + $0x330] sm:$0xff]
    %v1391 = vld [vmem:[%s379 + $0x348] sm:$0xff]
    %v1392 = vld [vmem:[%s379 + $0x350] sm:$0xff]
    %v1393 = vld [vmem:[%s379 + $0x368] sm:$0xff]
    %v1394 = vld [vmem:[%s379 + $0x370] sm:$0xff]
    %v1395 = vld [vmem:[%s379 + $0x388] sm:$0xff]
    %v1396 = vld [vmem:[%s379 + $0x390] sm:$0xff]
    %v1397 = vld [vmem:[%s379 + $0x3a8] sm:$0xff]
    %v1398 = vld [vmem:[%s379 + $0x3b0] sm:$0xff]
    %v1399 = vld [vmem:[%s379 + $0x3c8] sm:$0xff]
    %v1400 = vld [vmem:[%s379 + $0x3d0] sm:$0xff]
    %v1401 = vld [vmem:[%s379 + $0x3e8] sm:$0xff]
    %v1402 = vld [vmem:[%s379 + $0x3f0] sm:$0xff]
    %v1403 = vld [vmem:[%s379 + $0x408] sm:$0xff]
    %v1404 = vld [vmem:[%s379 + $0x410] sm:$0xff]
    %v1405 = vld [vmem:[%s379 + $0x428] sm:$0xff]
    %v1406 = vld [vmem:[%s379 + $0x430] sm:$0xff]
    %v1407 = vpack.c.bf16 %v1344, %v1343
    %v1408 = vpack.c.bf16 %v1346, %v1345
    %v1409 = vpack.c.bf16 %v1348, %v1347
    %v1410 = vpack.c.bf16 %v1350, %v1349
    %v1411 = vpack.c.bf16 %v1352, %v1351
    %v1412 = vpack.c.bf16 %v1354, %v1353
    %v1413 = vpack.c.bf16 %v1356, %v1355
    %v1414 = vpack.c.bf16 %v1358, %v1357
    %v1415 = vpack.c.bf16 %v1360, %v1359
    %v1416 = vpack.c.bf16 %v1362, %v1361
    %v1417 = vpack.c.bf16 %v1364, %v1363
    %v1418 = vpack.c.bf16 %v1366, %v1365
    %v1419 = vpack.c.bf16 %v1368, %v1367
    %v1420 = vpack.c.bf16 %v1370, %v1369
    %v1421 = vpack.c.bf16 %v1372, %v1371
    %v1422 = vpack.c.bf16 %v1374, %v1373
    %v1423 = vpack.c.bf16 %v1376, %v1375
    %v1424 = vpack.c.bf16 %v1378, %v1377
    %v1425 = vpack.c.bf16 %v1380, %v1379
    %v1426 = vpack.c.bf16 %v1382, %v1381
    %v1427 = vpack.c.bf16 %v1384, %v1383
    %v1428 = vpack.c.bf16 %v1386, %v1385
    %v1429 = vpack.c.bf16 %v1388, %v1387
    %v1430 = vpack.c.bf16 %v1390, %v1389
    %v1431 = vpack.c.bf16 %v1392, %v1391
    %v1432 = vpack.c.bf16 %v1394, %v1393
    %v1433 = vpack.c.bf16 %v1396, %v1395
    %v1434 = vpack.c.bf16 %v1398, %v1397
    %v1435 = vpack.c.bf16 %v1400, %v1399
    %v1436 = vpack.c.bf16 %v1402, %v1401
    %v1437 = vpack.c.bf16 %v1404, %v1403
    %v1438 = vpack.c.bf16 %v1406, %v1405
    %1471 = vrot.lane.b32.xlu0 %v1407, 16
    %v1472 = vpop.permute.xlu0 %1471
    %1473 = vrot.lane.b32.xlu0 %v1408, 16
    %v1474 = vpop.permute.xlu0 %1473
    %1475 = vrot.lane.b32.xlu0 %v1409, 16
    %v1476 = vpop.permute.xlu0 %1475
    %1477 = vrot.lane.b32.xlu0 %v1410, 16
    %v1478 = vpop.permute.xlu0 %1477
    %1479 = vrot.lane.b32.xlu0 %v1411, 16
    %v1480 = vpop.permute.xlu0 %1479
    %1481 = vrot.lane.b32.xlu0 %v1412, 16
    %v1482 = vpop.permute.xlu0 %1481
    %1483 = vrot.lane.b32.xlu0 %v1413, 16
    %v1484 = vpop.permute.xlu0 %1483
    %1485 = vrot.lane.b32.xlu0 %v1414, 16
    %v1486 = vpop.permute.xlu0 %1485
    %1487 = vrot.lane.b32.xlu0 %v1415, 16
    %v1488 = vpop.permute.xlu0 %1487
    %1489 = vrot.lane.b32.xlu0 %v1416, 16
    %v1490 = vpop.permute.xlu0 %1489
    %1491 = vrot.lane.b32.xlu0 %v1417, 16
    %v1492 = vpop.permute.xlu0 %1491
    %1493 = vrot.lane.b32.xlu0 %v1418, 16
    %v1494 = vpop.permute.xlu0 %1493
    %1495 = vrot.lane.b32.xlu0 %v1419, 16
    %v1496 = vpop.permute.xlu0 %1495
    %1497 = vrot.lane.b32.xlu0 %v1420, 16
    %v1498 = vpop.permute.xlu0 %1497
    %1499 = vrot.lane.b32.xlu0 %v1421, 16
    %v1500 = vpop.permute.xlu0 %1499
    %1501 = vrot.lane.b32.xlu0 %v1422, 16
    %v1502 = vpop.permute.xlu0 %1501
    %1503 = vrot.lane.b32.xlu0 %v1423, 16
    %v1504 = vpop.permute.xlu0 %1503
    %1505 = vrot.lane.b32.xlu0 %v1424, 16
    %v1506 = vpop.permute.xlu0 %1505
    %1507 = vrot.lane.b32.xlu0 %v1425, 16
    %v1508 = vpop.permute.xlu0 %1507
    %1509 = vrot.lane.b32.xlu0 %v1426, 16
    %v1510 = vpop.permute.xlu0 %1509
    %1511 = vrot.lane.b32.xlu0 %v1427, 16
    %v1512 = vpop.permute.xlu0 %1511
    %1513 = vrot.lane.b32.xlu0 %v1428, 16
    %v1514 = vpop.permute.xlu0 %1513
    %1515 = vrot.lane.b32.xlu0 %v1429, 16
    %v1516 = vpop.permute.xlu0 %1515
    %1517 = vrot.lane.b32.xlu0 %v1430, 16
    %v1518 = vpop.permute.xlu0 %1517
    %1519 = vrot.lane.b32.xlu0 %v1431, 16
    %v1520 = vpop.permute.xlu0 %1519
    %1521 = vrot.lane.b32.xlu0 %v1432, 16
    %v1522 = vpop.permute.xlu0 %1521
    %1523 = vrot.lane.b32.xlu0 %v1433, 16
    %v1524 = vpop.permute.xlu0 %1523
    %1525 = vrot.lane.b32.xlu0 %v1434, 16
    %v1526 = vpop.permute.xlu0 %1525
    %1527 = vrot.lane.b32.xlu0 %v1435, 16
    %v1528 = vpop.permute.xlu0 %1527
    %1529 = vrot.lane.b32.xlu0 %v1436, 16
    %v1530 = vpop.permute.xlu0 %1529
    %1531 = vrot.lane.b32.xlu0 %v1437, 16
    %v1532 = vpop.permute.xlu0 %1531
    %1533 = vrot.lane.b32.xlu0 %v1438, 16
    %v1534 = vpop.permute.xlu0 %1533
    %vm1567 = vcmask 162944
    %1568 = vst.msk [vmem:[#allocation3] sm:$0xff] %vm1567, %v1472
    %1569 = vst.msk [vmem:[#allocation3 + $0x8] sm:$0xff] %vm1567, %v1474
    %1570 = vst.msk [vmem:[#allocation3 + $0x10] sm:$0xff] %vm1567, %v1476
    %1571 = vst.msk [vmem:[#allocation3 + $0x18] sm:$0xff] %vm1567, %v1478
    %1572 = vst.msk [vmem:[#allocation3 + $0x20] sm:$0xff] %vm1567, %v1480
    %1573 = vst.msk [vmem:[#allocation3 + $0x28] sm:$0xff] %vm1567, %v1482
    %1574 = vst.msk [vmem:[#allocation3 + $0x30] sm:$0xff] %vm1567, %v1484
    %1575 = vst.msk [vmem:[#allocation3 + $0x38] sm:$0xff] %vm1567, %v1486
    %1576 = vst.msk [vmem:[#allocation3 + $0x40] sm:$0xff] %vm1567, %v1488
    %1577 = vst.msk [vmem:[#allocation3 + $0x48] sm:$0xff] %vm1567, %v1490
    %1578 = vst.msk [vmem:[#allocation3 + $0x50] sm:$0xff] %vm1567, %v1492
    %1579 = vst.msk [vmem:[#allocation3 + $0x58] sm:$0xff] %vm1567, %v1494
    %1580 = vst.msk [vmem:[#allocation3 + $0x60] sm:$0xff] %vm1567, %v1496
    %1581 = vst.msk [vmem:[#allocation3 + $0x68] sm:$0xff] %vm1567, %v1498
    %1582 = vst.msk [vmem:[#allocation3 + $0x70] sm:$0xff] %vm1567, %v1500
    %1583 = vst.msk [vmem:[#allocation3 + $0x78] sm:$0xff] %vm1567, %v1502
    %1584 = vst.msk [vmem:[#allocation3 + $0x80] sm:$0xff] %vm1567, %v1504
    %1585 = vst.msk [vmem:[#allocation3 + $0x88] sm:$0xff] %vm1567, %v1506
    %1586 = vst.msk [vmem:[#allocation3 + $0x90] sm:$0xff] %vm1567, %v1508
    %1587 = vst.msk [vmem:[#allocation3 + $0x98] sm:$0xff] %vm1567, %v1510
    %1588 = vst.msk [vmem:[#allocation3 + $0xa0] sm:$0xff] %vm1567, %v1512
    %1589 = vst.msk [vmem:[#allocation3 + $0xa8] sm:$0xff] %vm1567, %v1514
    %1590 = vst.msk [vmem:[#allocation3 + $0xb0] sm:$0xff] %vm1567, %v1516
    %1591 = vst.msk [vmem:[#allocation3 + $0xb8] sm:$0xff] %vm1567, %v1518
    %1592 = vst.msk [vmem:[#allocation3 + $0xc0] sm:$0xff] %vm1567, %v1520
    %1593 = vst.msk [vmem:[#allocation3 + $0xc8] sm:$0xff] %vm1567, %v1522
    %1594 = vst.msk [vmem:[#allocation3 + $0xd0] sm:$0xff] %vm1567, %v1524
    %1595 = vst.msk [vmem:[#allocation3 + $0xd8] sm:$0xff] %vm1567, %v1526
    %1596 = vst.msk [vmem:[#allocation3 + $0xe0] sm:$0xff] %vm1567, %v1528
    %1597 = vst.msk [vmem:[#allocation3 + $0xe8] sm:$0xff] %vm1567, %v1530
    %1598 = vst.msk [vmem:[#allocation3 + $0xf0] sm:$0xff] %vm1567, %v1532
    %1599 = vst.msk [vmem:[#allocation3 + $0xf8] sm:$0xff] %vm1567, %v1534
    %v1600 = vld [vmem:[%s379 + $0x9] sm:$0xff]
    %v1601 = vld [vmem:[%s379 + $0x11] sm:$0xff]
    %v1602 = vld [vmem:[%s379 + $0x29] sm:$0xff]
    %v1603 = vld [vmem:[%s379 + $0x31] sm:$0xff]
    %v1604 = vld [vmem:[%s379 + $0x49] sm:$0xff]
    %v1605 = vld [vmem:[%s379 + $0x51] sm:$0xff]
    %v1606 = vld [vmem:[%s379 + $0x69] sm:$0xff]
    %v1607 = vld [vmem:[%s379 + $0x71] sm:$0xff]
    %v1608 = vld [vmem:[%s379 + $0x89] sm:$0xff]
    %v1609 = vld [vmem:[%s379 + $0x91] sm:$0xff]
    %v1610 = vld [vmem:[%s379 + $0xa9] sm:$0xff]
    %v1611 = vld [vmem:[%s379 + $0xb1] sm:$0xff]
    %v1612 = vld [vmem:[%s379 + $0xc9] sm:$0xff]
    %v1613 = vld [vmem:[%s379 + $0xd1] sm:$0xff]
    %v1614 = vld [vmem:[%s379 + $0xe9] sm:$0xff]
    %v1615 = vld [vmem:[%s379 + $0xf1] sm:$0xff]
    %v1616 = vld [vmem:[%s379 + $0x109] sm:$0xff]
    %v1617 = vld [vmem:[%s379 + $0x111] sm:$0xff]
    %v1618 = vld [vmem:[%s379 + $0x129] sm:$0xff]
    %v1619 = vld [vmem:[%s379 + $0x131] sm:$0xff]
    %v1620 = vld [vmem:[%s379 + $0x149] sm:$0xff]
    %v1621 = vld [vmem:[%s379 + $0x151] sm:$0xff]
    %v1622 = vld [vmem:[%s379 + $0x169] sm:$0xff]
    %v1623 = vld [vmem:[%s379 + $0x171] sm:$0xff]
    %v1624 = vld [vmem:[%s379 + $0x189] sm:$0xff]
    %v1625 = vld [vmem:[%s379 + $0x191] sm:$0xff]
    %v1626 = vld [vmem:[%s379 + $0x1a9] sm:$0xff]
    %v1627 = vld [vmem:[%s379 + $0x1b1] sm:$0xff]
    %v1628 = vld [vmem:[%s379 + $0x1c9] sm:$0xff]
    %v1629 = vld [vmem:[%s379 + $0x1d1] sm:$0xff]
    %v1630 = vld [vmem:[%s379 + $0x1e9] sm:$0xff]
    %v1631 = vld [vmem:[%s379 + $0x1f1] sm:$0xff]
    %v1632 = vld [vmem:[%s379 + $0x249] sm:$0xff]
    %v1633 = vld [vmem:[%s379 + $0x251] sm:$0xff]
    %v1634 = vld [vmem:[%s379 + $0x269] sm:$0xff]
    %v1635 = vld [vmem:[%s379 + $0x271] sm:$0xff]
    %v1636 = vld [vmem:[%s379 + $0x289] sm:$0xff]
    %v1637 = vld [vmem:[%s379 + $0x291] sm:$0xff]
    %v1638 = vld [vmem:[%s379 + $0x2a9] sm:$0xff]
    %v1639 = vld [vmem:[%s379 + $0x2b1] sm:$0xff]
    %v1640 = vld [vmem:[%s379 + $0x2c9] sm:$0xff]
    %v1641 = vld [vmem:[%s379 + $0x2d1] sm:$0xff]
    %v1642 = vld [vmem:[%s379 + $0x2e9] sm:$0xff]
    %v1643 = vld [vmem:[%s379 + $0x2f1] sm:$0xff]
    %v1644 = vld [vmem:[%s379 + $0x309] sm:$0xff]
    %v1645 = vld [vmem:[%s379 + $0x311] sm:$0xff]
    %v1646 = vld [vmem:[%s379 + $0x329] sm:$0xff]
    %v1647 = vld [vmem:[%s379 + $0x331] sm:$0xff]
    %v1648 = vld [vmem:[%s379 + $0x349] sm:$0xff]
    %v1649 = vld [vmem:[%s379 + $0x351] sm:$0xff]
    %v1650 = vld [vmem:[%s379 + $0x369] sm:$0xff]
    %v1651 = vld [vmem:[%s379 + $0x371] sm:$0xff]
    %v1652 = vld [vmem:[%s379 + $0x389] sm:$0xff]
    %v1653 = vld [vmem:[%s379 + $0x391] sm:$0xff]
    %v1654 = vld [vmem:[%s379 + $0x3a9] sm:$0xff]
    %v1655 = vld [vmem:[%s379 + $0x3b1] sm:$0xff]
    %v1656 = vld [vmem:[%s379 + $0x3c9] sm:$0xff]
    %v1657 = vld [vmem:[%s379 + $0x3d1] sm:$0xff]
    %v1658 = vld [vmem:[%s379 + $0x3e9] sm:$0xff]
    %v1659 = vld [vmem:[%s379 + $0x3f1] sm:$0xff]
    %v1660 = vld [vmem:[%s379 + $0x409] sm:$0xff]
    %v1661 = vld [vmem:[%s379 + $0x411] sm:$0xff]
    %v1662 = vld [vmem:[%s379 + $0x429] sm:$0xff]
    %v1663 = vld [vmem:[%s379 + $0x431] sm:$0xff]
    %v1664 = vpack.c.bf16 %v1601, %v1600
    %v1665 = vpack.c.bf16 %v1603, %v1602
    %v1666 = vpack.c.bf16 %v1605, %v1604
    %v1667 = vpack.c.bf16 %v1607, %v1606
    %v1668 = vpack.c.bf16 %v1609, %v1608
    %v1669 = vpack.c.bf16 %v1611, %v1610
    %v1670 = vpack.c.bf16 %v1613, %v1612
    %v1671 = vpack.c.bf16 %v1615, %v1614
    %v1672 = vpack.c.bf16 %v1617, %v1616
    %v1673 = vpack.c.bf16 %v1619, %v1618
    %v1674 = vpack.c.bf16 %v1621, %v1620
    %v1675 = vpack.c.bf16 %v1623, %v1622
    %v1676 = vpack.c.bf16 %v1625, %v1624
    %v1677 = vpack.c.bf16 %v1627, %v1626
    %v1678 = vpack.c.bf16 %v1629, %v1628
    %v1679 = vpack.c.bf16 %v1631, %v1630
    %v1680 = vpack.c.bf16 %v1633, %v1632
    %v1681 = vpack.c.bf16 %v1635, %v1634
    %v1682 = vpack.c.bf16 %v1637, %v1636
    %v1683 = vpack.c.bf16 %v1639, %v1638
    %v1684 = vpack.c.bf16 %v1641, %v1640
    %v1685 = vpack.c.bf16 %v1643, %v1642
    %v1686 = vpack.c.bf16 %v1645, %v1644
    %v1687 = vpack.c.bf16 %v1647, %v1646
    %v1688 = vpack.c.bf16 %v1649, %v1648
    %v1689 = vpack.c.bf16 %v1651, %v1650
    %v1690 = vpack.c.bf16 %v1653, %v1652
    %v1691 = vpack.c.bf16 %v1655, %v1654
    %v1692 = vpack.c.bf16 %v1657, %v1656
    %v1693 = vpack.c.bf16 %v1659, %v1658
    %v1694 = vpack.c.bf16 %v1661, %v1660
    %v1695 = vpack.c.bf16 %v1663, %v1662
    %1728 = vrot.lane.b32.xlu0 %v1664, 20
    %v1729 = vpop.permute.xlu0 %1728
    %1730 = vrot.lane.b32.xlu0 %v1665, 20
    %v1731 = vpop.permute.xlu0 %1730
    %1732 = vrot.lane.b32.xlu0 %v1666, 20
    %v1733 = vpop.permute.xlu0 %1732
    %1734 = vrot.lane.b32.xlu0 %v1667, 20
    %v1735 = vpop.permute.xlu0 %1734
    %1736 = vrot.lane.b32.xlu0 %v1668, 20
    %v1737 = vpop.permute.xlu0 %1736
    %1738 = vrot.lane.b32.xlu0 %v1669, 20
    %v1739 = vpop.permute.xlu0 %1738
    %1740 = vrot.lane.b32.xlu0 %v1670, 20
    %v1741 = vpop.permute.xlu0 %1740
    %1742 = vrot.lane.b32.xlu0 %v1671, 20
    %v1743 = vpop.permute.xlu0 %1742
    %1744 = vrot.lane.b32.xlu0 %v1672, 20
    %v1745 = vpop.permute.xlu0 %1744
    %1746 = vrot.lane.b32.xlu0 %v1673, 20
    %v1747 = vpop.permute.xlu0 %1746
    %1748 = vrot.lane.b32.xlu0 %v1674, 20
    %v1749 = vpop.permute.xlu0 %1748
    %1750 = vrot.lane.b32.xlu0 %v1675, 20
    %v1751 = vpop.permute.xlu0 %1750
    %1752 = vrot.lane.b32.xlu0 %v1676, 20
    %v1753 = vpop.permute.xlu0 %1752
    %1754 = vrot.lane.b32.xlu0 %v1677, 20
    %v1755 = vpop.permute.xlu0 %1754
    %1756 = vrot.lane.b32.xlu0 %v1678, 20
    %v1757 = vpop.permute.xlu0 %1756
    %1758 = vrot.lane.b32.xlu0 %v1679, 20
    %v1759 = vpop.permute.xlu0 %1758
    %1760 = vrot.lane.b32.xlu0 %v1680, 20
    %v1761 = vpop.permute.xlu0 %1760
    %1762 = vrot.lane.b32.xlu0 %v1681, 20
    %v1763 = vpop.permute.xlu0 %1762
    %1764 = vrot.lane.b32.xlu0 %v1682, 20
    %v1765 = vpop.permute.xlu0 %1764
    %1766 = vrot.lane.b32.xlu0 %v1683, 20
    %v1767 = vpop.permute.xlu0 %1766
    %1768 = vrot.lane.b32.xlu0 %v1684, 20
    %v1769 = vpop.permute.xlu0 %1768
    %1770 = vrot.lane.b32.xlu0 %v1685, 20
    %v1771 = vpop.permute.xlu0 %1770
    %1772 = vrot.lane.b32.xlu0 %v1686, 20
    %v1773 = vpop.permute.xlu0 %1772
    %1774 = vrot.lane.b32.xlu0 %v1687, 20
    %v1775 = vpop.permute.xlu0 %1774
    %1776 = vrot.lane.b32.xlu0 %v1688, 20
    %v1777 = vpop.permute.xlu0 %1776
    %1778 = vrot.lane.b32.xlu0 %v1689, 20
    %v1779 = vpop.permute.xlu0 %1778
    %1780 = vrot.lane.b32.xlu0 %v1690, 20
    %v1781 = vpop.permute.xlu0 %1780
    %1782 = vrot.lane.b32.xlu0 %v1691, 20
    %v1783 = vpop.permute.xlu0 %1782
    %1784 = vrot.lane.b32.xlu0 %v1692, 20
    %v1785 = vpop.permute.xlu0 %1784
    %1786 = vrot.lane.b32.xlu0 %v1693, 20
    %v1787 = vpop.permute.xlu0 %1786
    %1788 = vrot.lane.b32.xlu0 %v1694, 20
    %v1789 = vpop.permute.xlu0 %1788
    %1790 = vrot.lane.b32.xlu0 %v1695, 20
    %v1791 = vpop.permute.xlu0 %1790
    %vm1824 = vcmask 195744
    %1825 = vst.msk [vmem:[#allocation3] sm:$0xff] %vm1824, %v1729
    %1826 = vst.msk [vmem:[#allocation3 + $0x8] sm:$0xff] %vm1824, %v1731
    %1827 = vst.msk [vmem:[#allocation3 + $0x10] sm:$0xff] %vm1824, %v1733
    %1828 = vst.msk [vmem:[#allocation3 + $0x18] sm:$0xff] %vm1824, %v1735
    %1829 = vst.msk [vmem:[#allocation3 + $0x20] sm:$0xff] %vm1824, %v1737
    %1830 = vst.msk [vmem:[#allocation3 + $0x28] sm:$0xff] %vm1824, %v1739
    %1831 = vst.msk [vmem:[#allocation3 + $0x30] sm:$0xff] %vm1824, %v1741
    %1832 = vst.msk [vmem:[#allocation3 + $0x38] sm:$0xff] %vm1824, %v1743
    %1833 = vst.msk [vmem:[#allocation3 + $0x40] sm:$0xff] %vm1824, %v1745
    %1834 = vst.msk [vmem:[#allocation3 + $0x48] sm:$0xff] %vm1824, %v1747
    %1835 = vst.msk [vmem:[#allocation3 + $0x50] sm:$0xff] %vm1824, %v1749
    %1836 = vst.msk [vmem:[#allocation3 + $0x58] sm:$0xff] %vm1824, %v1751
    %1837 = vst.msk [vmem:[#allocation3 + $0x60] sm:$0xff] %vm1824, %v1753
    %1838 = vst.msk [vmem:[#allocation3 + $0x68] sm:$0xff] %vm1824, %v1755
    %1839 = vst.msk [vmem:[#allocation3 + $0x70] sm:$0xff] %vm1824, %v1757
    %1840 = vst.msk [vmem:[#allocation3 + $0x78] sm:$0xff] %vm1824, %v1759
    %1841 = vst.msk [vmem:[#allocation3 + $0x80] sm:$0xff] %vm1824, %v1761
    %1842 = vst.msk [vmem:[#allocation3 + $0x88] sm:$0xff] %vm1824, %v1763
    %1843 = vst.msk [vmem:[#allocation3 + $0x90] sm:$0xff] %vm1824, %v1765
    %1844 = vst.msk [vmem:[#allocation3 + $0x98] sm:$0xff] %vm1824, %v1767
    %1845 = vst.msk [vmem:[#allocation3 + $0xa0] sm:$0xff] %vm1824, %v1769
    %1846 = vst.msk [vmem:[#allocation3 + $0xa8] sm:$0xff] %vm1824, %v1771
    %1847 = vst.msk [vmem:[#allocation3 + $0xb0] sm:$0xff] %vm1824, %v1773
    %1848 = vst.msk [vmem:[#allocation3 + $0xb8] sm:$0xff] %vm1824, %v1775
    %1849 = vst.msk [vmem:[#allocation3 + $0xc0] sm:$0xff] %vm1824, %v1777
    %1850 = vst.msk [vmem:[#allocation3 + $0xc8] sm:$0xff] %vm1824, %v1779
    %1851 = vst.msk [vmem:[#allocation3 + $0xd0] sm:$0xff] %vm1824, %v1781
    %1852 = vst.msk [vmem:[#allocation3 + $0xd8] sm:$0xff] %vm1824, %v1783
    %1853 = vst.msk [vmem:[#allocation3 + $0xe0] sm:$0xff] %vm1824, %v1785
    %1854 = vst.msk [vmem:[#allocation3 + $0xe8] sm:$0xff] %vm1824, %v1787
    %1855 = vst.msk [vmem:[#allocation3 + $0xf0] sm:$0xff] %vm1824, %v1789
    %1856 = vst.msk [vmem:[#allocation3 + $0xf8] sm:$0xff] %vm1824, %v1791
    %s1857 = scalar_lea.vmem [#allocation2], 64
    %v1858 = vld [vmem:[%s1857 + $0x7] sm:$0xff]
    %v1859 = vld [vmem:[%s1857 + $0xf] sm:$0xff]
    %v1860 = vld [vmem:[%s1857 + $0x27] sm:$0xff]
    %v1861 = vld [vmem:[%s1857 + $0x2f] sm:$0xff]
    %v1862 = vld [vmem:[%s1857 + $0x47] sm:$0xff]
    %v1863 = vld [vmem:[%s1857 + $0x4f] sm:$0xff]
    %v1864 = vld [vmem:[%s1857 + $0x67] sm:$0xff]
    %v1865 = vld [vmem:[%s1857 + $0x6f] sm:$0xff]
    %v1866 = vld [vmem:[%s1857 + $0x87] sm:$0xff]
    %v1867 = vld [vmem:[%s1857 + $0x8f] sm:$0xff]
    %v1868 = vld [vmem:[%s1857 + $0xa7] sm:$0xff]
    %v1869 = vld [vmem:[%s1857 + $0xaf] sm:$0xff]
    %v1870 = vld [vmem:[%s1857 + $0xc7] sm:$0xff]
    %v1871 = vld [vmem:[%s1857 + $0xcf] sm:$0xff]
    %v1872 = vld [vmem:[%s1857 + $0xe7] sm:$0xff]
    %v1873 = vld [vmem:[%s1857 + $0xef] sm:$0xff]
    %v1874 = vld [vmem:[%s1857 + $0x107] sm:$0xff]
    %v1875 = vld [vmem:[%s1857 + $0x10f] sm:$0xff]
    %v1876 = vld [vmem:[%s1857 + $0x127] sm:$0xff]
    %v1877 = vld [vmem:[%s1857 + $0x12f] sm:$0xff]
    %v1878 = vld [vmem:[%s1857 + $0x147] sm:$0xff]
    %v1879 = vld [vmem:[%s1857 + $0x14f] sm:$0xff]
    %v1880 = vld [vmem:[%s1857 + $0x167] sm:$0xff]
    %v1881 = vld [vmem:[%s1857 + $0x16f] sm:$0xff]
    %v1882 = vld [vmem:[%s1857 + $0x187] sm:$0xff]
    %v1883 = vld [vmem:[%s1857 + $0x18f] sm:$0xff]
    %v1884 = vld [vmem:[%s1857 + $0x1a7] sm:$0xff]
    %v1885 = vld [vmem:[%s1857 + $0x1af] sm:$0xff]
    %v1886 = vld [vmem:[%s1857 + $0x1c7] sm:$0xff]
    %v1887 = vld [vmem:[%s1857 + $0x1cf] sm:$0xff]
    %v1888 = vld [vmem:[%s1857 + $0x1e7] sm:$0xff]
    %v1889 = vld [vmem:[%s1857 + $0x1ef] sm:$0xff]
    %v1890 = vld [vmem:[%s1857 + $0x247] sm:$0xff]
    %v1891 = vld [vmem:[%s1857 + $0x24f] sm:$0xff]
    %v1892 = vld [vmem:[%s1857 + $0x267] sm:$0xff]
    %v1893 = vld [vmem:[%s1857 + $0x26f] sm:$0xff]
    %v1894 = vld [vmem:[%s1857 + $0x287] sm:$0xff]
    %v1895 = vld [vmem:[%s1857 + $0x28f] sm:$0xff]
    %v1896 = vld [vmem:[%s1857 + $0x2a7] sm:$0xff]
    %v1897 = vld [vmem:[%s1857 + $0x2af] sm:$0xff]
    %v1898 = vld [vmem:[%s1857 + $0x2c7] sm:$0xff]
    %v1899 = vld [vmem:[%s1857 + $0x2cf] sm:$0xff]
    %v1900 = vld [vmem:[%s1857 + $0x2e7] sm:$0xff]
    %v1901 = vld [vmem:[%s1857 + $0x2ef] sm:$0xff]
    %v1902 = vld [vmem:[%s1857 + $0x307] sm:$0xff]
    %v1903 = vld [vmem:[%s1857 + $0x30f] sm:$0xff]
    %v1904 = vld [vmem:[%s1857 + $0x327] sm:$0xff]
    %v1905 = vld [vmem:[%s1857 + $0x32f] sm:$0xff]
    %v1906 = vld [vmem:[%s1857 + $0x347] sm:$0xff]
    %v1907 = vld [vmem:[%s1857 + $0x34f] sm:$0xff]
    %v1908 = vld [vmem:[%s1857 + $0x367] sm:$0xff]
    %v1909 = vld [vmem:[%s1857 + $0x36f] sm:$0xff]
    %v1910 = vld [vmem:[%s1857 + $0x387] sm:$0xff]
    %v1911 = vld [vmem:[%s1857 + $0x38f] sm:$0xff]
    %v1912 = vld [vmem:[%s1857 + $0x3a7] sm:$0xff]
    %v1913 = vld [vmem:[%s1857 + $0x3af] sm:$0xff]
    %v1914 = vld [vmem:[%s1857 + $0x3c7] sm:$0xff]
    %v1915 = vld [vmem:[%s1857 + $0x3cf] sm:$0xff]
    %v1916 = vld [vmem:[%s1857 + $0x3e7] sm:$0xff]
    %v1917 = vld [vmem:[%s1857 + $0x3ef] sm:$0xff]
    %v1918 = vld [vmem:[%s1857 + $0x407] sm:$0xff]
    %v1919 = vld [vmem:[%s1857 + $0x40f] sm:$0xff]
    %v1920 = vld [vmem:[%s1857 + $0x427] sm:$0xff]
    %v1921 = vld [vmem:[%s1857 + $0x42f] sm:$0xff]
    %v1922 = vpack.c.bf16 %v1859, %v1858
    %v1923 = vpack.c.bf16 %v1861, %v1860
    %v1924 = vpack.c.bf16 %v1863, %v1862
    %v1925 = vpack.c.bf16 %v1865, %v1864
    %v1926 = vpack.c.bf16 %v1867, %v1866
    %v1927 = vpack.c.bf16 %v1869, %v1868
    %v1928 = vpack.c.bf16 %v1871, %v1870
    %v1929 = vpack.c.bf16 %v1873, %v1872
    %v1930 = vpack.c.bf16 %v1875, %v1874
    %v1931 = vpack.c.bf16 %v1877, %v1876
    %v1932 = vpack.c.bf16 %v1879, %v1878
    %v1933 = vpack.c.bf16 %v1881, %v1880
    %v1934 = vpack.c.bf16 %v1883, %v1882
    %v1935 = vpack.c.bf16 %v1885, %v1884
    %v1936 = vpack.c.bf16 %v1887, %v1886
    %v1937 = vpack.c.bf16 %v1889, %v1888
    %v1938 = vpack.c.bf16 %v1891, %v1890
    %v1939 = vpack.c.bf16 %v1893, %v1892
    %v1940 = vpack.c.bf16 %v1895, %v1894
    %v1941 = vpack.c.bf16 %v1897, %v1896
    %v1942 = vpack.c.bf16 %v1899, %v1898
    %v1943 = vpack.c.bf16 %v1901, %v1900
    %v1944 = vpack.c.bf16 %v1903, %v1902
    %v1945 = vpack.c.bf16 %v1905, %v1904
    %v1946 = vpack.c.bf16 %v1907, %v1906
    %v1947 = vpack.c.bf16 %v1909, %v1908
    %v1948 = vpack.c.bf16 %v1911, %v1910
    %v1949 = vpack.c.bf16 %v1913, %v1912
    %v1950 = vpack.c.bf16 %v1915, %v1914
    %v1951 = vpack.c.bf16 %v1917, %v1916
    %v1952 = vpack.c.bf16 %v1919, %v1918
    %v1953 = vpack.c.bf16 %v1921, %v1920
    %1986 = vrot.lane.b32.xlu0 %v1922, 24
    %v1987 = vpop.permute.xlu0 %1986
    %1988 = vrot.lane.b32.xlu0 %v1923, 24
    %v1989 = vpop.permute.xlu0 %1988
    %1990 = vrot.lane.b32.xlu0 %v1924, 24
    %v1991 = vpop.permute.xlu0 %1990
    %1992 = vrot.lane.b32.xlu0 %v1925, 24
    %v1993 = vpop.permute.xlu0 %1992
    %1994 = vrot.lane.b32.xlu0 %v1926, 24
    %v1995 = vpop.permute.xlu0 %1994
    %1996 = vrot.lane.b32.xlu0 %v1927, 24
    %v1997 = vpop.permute.xlu0 %1996
    %1998 = vrot.lane.b32.xlu0 %v1928, 24
    %v1999 = vpop.permute.xlu0 %1998
    %2000 = vrot.lane.b32.xlu0 %v1929, 24
    %v2001 = vpop.permute.xlu0 %2000
    %2002 = vrot.lane.b32.xlu0 %v1930, 24
    %v2003 = vpop.permute.xlu0 %2002
    %2004 = vrot.lane.b32.xlu0 %v1931, 24
    %v2005 = vpop.permute.xlu0 %2004
    %2006 = vrot.lane.b32.xlu0 %v1932, 24
    %v2007 = vpop.permute.xlu0 %2006
    %2008 = vrot.lane.b32.xlu0 %v1933, 24
    %v2009 = vpop.permute.xlu0 %2008
    %2010 = vrot.lane.b32.xlu0 %v1934, 24
    %v2011 = vpop.permute.xlu0 %2010
    %2012 = vrot.lane.b32.xlu0 %v1935, 24
    %v2013 = vpop.permute.xlu0 %2012
    %2014 = vrot.lane.b32.xlu0 %v1936, 24
    %v2015 = vpop.permute.xlu0 %2014
    %2016 = vrot.lane.b32.xlu0 %v1937, 24
    %v2017 = vpop.permute.xlu0 %2016
    %2018 = vrot.lane.b32.xlu0 %v1938, 24
    %v2019 = vpop.permute.xlu0 %2018
    %2020 = vrot.lane.b32.xlu0 %v1939, 24
    %v2021 = vpop.permute.xlu0 %2020
    %2022 = vrot.lane.b32.xlu0 %v1940, 24
    %v2023 = vpop.permute.xlu0 %2022
    %2024 = vrot.lane.b32.xlu0 %v1941, 24
    %v2025 = vpop.permute.xlu0 %2024
    %2026 = vrot.lane.b32.xlu0 %v1942, 24
    %v2027 = vpop.permute.xlu0 %2026
    %2028 = vrot.lane.b32.xlu0 %v1943, 24
    %v2029 = vpop.permute.xlu0 %2028
    %2030 = vrot.lane.b32.xlu0 %v1944, 24
    %v2031 = vpop.permute.xlu0 %2030
    %2032 = vrot.lane.b32.xlu0 %v1945, 24
    %v2033 = vpop.permute.xlu0 %2032
    %2034 = vrot.lane.b32.xlu0 %v1946, 24
    %v2035 = vpop.permute.xlu0 %2034
    %2036 = vrot.lane.b32.xlu0 %v1947, 24
    %v2037 = vpop.permute.xlu0 %2036
    %2038 = vrot.lane.b32.xlu0 %v1948, 24
    %v2039 = vpop.permute.xlu0 %2038
    %2040 = vrot.lane.b32.xlu0 %v1949, 24
    %v2041 = vpop.permute.xlu0 %2040
    %2042 = vrot.lane.b32.xlu0 %v1950, 24
    %v2043 = vpop.permute.xlu0 %2042
    %2044 = vrot.lane.b32.xlu0 %v1951, 24
    %v2045 = vpop.permute.xlu0 %2044
    %2046 = vrot.lane.b32.xlu0 %v1952, 24
    %v2047 = vpop.permute.xlu0 %2046
    %2048 = vrot.lane.b32.xlu0 %v1953, 24
    %v2049 = vpop.permute.xlu0 %2048
    %vm2082 = vcmask 228544
    %2083 = vst.msk [vmem:[#allocation3] sm:$0xff] %vm2082, %v1987
    %2084 = vst.msk [vmem:[#allocation3 + $0x8] sm:$0xff] %vm2082, %v1989
    %2085 = vst.msk [vmem:[#allocation3 + $0x10] sm:$0xff] %vm2082, %v1991
    %2086 = vst.msk [vmem:[#allocation3 + $0x18] sm:$0xff] %vm2082, %v1993
    %2087 = vst.msk [vmem:[#allocation3 + $0x20] sm:$0xff] %vm2082, %v1995
    %2088 = vst.msk [vmem:[#allocation3 + $0x28] sm:$0xff] %vm2082, %v1997
    %2089 = vst.msk [vmem:[#allocation3 + $0x30] sm:$0xff] %vm2082, %v1999
    %2090 = vst.msk [vmem:[#allocation3 + $0x38] sm:$0xff] %vm2082, %v2001
    %2091 = vst.msk [vmem:[#allocation3 + $0x40] sm:$0xff] %vm2082, %v2003
    %2092 = vst.msk [vmem:[#allocation3 + $0x48] sm:$0xff] %vm2082, %v2005
    %2093 = vst.msk [vmem:[#allocation3 + $0x50] sm:$0xff] %vm2082, %v2007
    %2094 = vst.msk [vmem:[#allocation3 + $0x58] sm:$0xff] %vm2082, %v2009
    %2095 = vst.msk [vmem:[#allocation3 + $0x60] sm:$0xff] %vm2082, %v2011
    %2096 = vst.msk [vmem:[#allocation3 + $0x68] sm:$0xff] %vm2082, %v2013
    %2097 = vst.msk [vmem:[#allocation3 + $0x70] sm:$0xff] %vm2082, %v2015
    %2098 = vst.msk [vmem:[#allocation3 + $0x78] sm:$0xff] %vm2082, %v2017
    %2099 = vst.msk [vmem:[#allocation3 + $0x80] sm:$0xff] %vm2082, %v2019
    %2100 = vst.msk [vmem:[#allocation3 + $0x88] sm:$0xff] %vm2082, %v2021
    %2101 = vst.msk [vmem:[#allocation3 + $0x90] sm:$0xff] %vm2082, %v2023
    %2102 = vst.msk [vmem:[#allocation3 + $0x98] sm:$0xff] %vm2082, %v2025
    %2103 = vst.msk [vmem:[#allocation3 + $0xa0] sm:$0xff] %vm2082, %v2027
    %2104 = vst.msk [vmem:[#allocation3 + $0xa8] sm:$0xff] %vm2082, %v2029
    %2105 = vst.msk [vmem:[#allocation3 + $0xb0] sm:$0xff] %vm2082, %v2031
    %2106 = vst.msk [vmem:[#allocation3 + $0xb8] sm:$0xff] %vm2082, %v2033
    %2107 = vst.msk [vmem:[#allocation3 + $0xc0] sm:$0xff] %vm2082, %v2035
    %2108 = vst.msk [vmem:[#allocation3 + $0xc8] sm:$0xff] %vm2082, %v2037
    %2109 = vst.msk [vmem:[#allocation3 + $0xd0] sm:$0xff] %vm2082, %v2039
    %2110 = vst.msk [vmem:[#allocation3 + $0xd8] sm:$0xff] %vm2082, %v2041
    %2111 = vst.msk [vmem:[#allocation3 + $0xe0] sm:$0xff] %vm2082, %v2043
    %2112 = vst.msk [vmem:[#allocation3 + $0xe8] sm:$0xff] %vm2082, %v2045
    %2113 = vst.msk [vmem:[#allocation3 + $0xf0] sm:$0xff] %vm2082, %v2047
    %2114 = vst.msk [vmem:[#allocation3 + $0xf8] sm:$0xff] %vm2082, %v2049
    %v2115 = vld [vmem:[%s1857 + $0x8] sm:$0xff]
    %v2116 = vld [vmem:[%s1857 + $0x10] sm:$0xff]
    %v2117 = vld [vmem:[%s1857 + $0x28] sm:$0xff]
    %v2118 = vld [vmem:[%s1857 + $0x30] sm:$0xff]
    %v2119 = vld [vmem:[%s1857 + $0x48] sm:$0xff]
    %v2120 = vld [vmem:[%s1857 + $0x50] sm:$0xff]
    %v2121 = vld [vmem:[%s1857 + $0x68] sm:$0xff]
    %v2122 = vld [vmem:[%s1857 + $0x70] sm:$0xff]
    %v2123 = vld [vmem:[%s1857 + $0x88] sm:$0xff]
    %v2124 = vld [vmem:[%s1857 + $0x90] sm:$0xff]
    %v2125 = vld [vmem:[%s1857 + $0xa8] sm:$0xff]
    %v2126 = vld [vmem:[%s1857 + $0xb0] sm:$0xff]
    %v2127 = vld [vmem:[%s1857 + $0xc8] sm:$0xff]
    %v2128 = vld [vmem:[%s1857 + $0xd0] sm:$0xff]
    %v2129 = vld [vmem:[%s1857 + $0xe8] sm:$0xff]
    %v2130 = vld [vmem:[%s1857 + $0xf0] sm:$0xff]
    %v2131 = vld [vmem:[%s1857 + $0x108] sm:$0xff]
    %v2132 = vld [vmem:[%s1857 + $0x110] sm:$0xff]
    %v2133 = vld [vmem:[%s1857 + $0x128] sm:$0xff]
    %v2134 = vld [vmem:[%s1857 + $0x130] sm:$0xff]
    %v2135 = vld [vmem:[%s1857 + $0x148] sm:$0xff]
    %v2136 = vld [vmem:[%s1857 + $0x150] sm:$0xff]
    %v2137 = vld [vmem:[%s1857 + $0x168] sm:$0xff]
    %v2138 = vld [vmem:[%s1857 + $0x170] sm:$0xff]
    %v2139 = vld [vmem:[%s1857 + $0x188] sm:$0xff]
    %v2140 = vld [vmem:[%s1857 + $0x190] sm:$0xff]
    %v2141 = vld [vmem:[%s1857 + $0x1a8] sm:$0xff]
    %v2142 = vld [vmem:[%s1857 + $0x1b0] sm:$0xff]
    %v2143 = vld [vmem:[%s1857 + $0x1c8] sm:$0xff]
    %v2144 = vld [vmem:[%s1857 + $0x1d0] sm:$0xff]
    %v2145 = vld [vmem:[%s1857 + $0x1e8] sm:$0xff]
    %v2146 = vld [vmem:[%s1857 + $0x1f0] sm:$0xff]
    %v2147 = vld [vmem:[%s1857 + $0x248] sm:$0xff]
    %v2148 = vld [vmem:[%s1857 + $0x250] sm:$0xff]
    %v2149 = vld [vmem:[%s1857 + $0x268] sm:$0xff]
    %v2150 = vld [vmem:[%s1857 + $0x270] sm:$0xff]
    %v2151 = vld [vmem:[%s1857 + $0x288] sm:$0xff]
    %v2152 = vld [vmem:[%s1857 + $0x290] sm:$0xff]
    %v2153 = vld [vmem:[%s1857 + $0x2a8] sm:$0xff]
    %v2154 = vld [vmem:[%s1857 + $0x2b0] sm:$0xff]
    %v2155 = vld [vmem:[%s1857 + $0x2c8] sm:$0xff]
    %v2156 = vld [vmem:[%s1857 + $0x2d0] sm:$0xff]
    %v2157 = vld [vmem:[%s1857 + $0x2e8] sm:$0xff]
    %v2158 = vld [vmem:[%s1857 + $0x2f0] sm:$0xff]
    %v2159 = vld [vmem:[%s1857 + $0x308] sm:$0xff]
    %v2160 = vld [vmem:[%s1857 + $0x310] sm:$0xff]
    %v2161 = vld [vmem:[%s1857 + $0x328] sm:$0xff]
    %v2162 = vld [vmem:[%s1857 + $0x330] sm:$0xff]
    %v2163 = vld [vmem:[%s1857 + $0x348] sm:$0xff]
    %v2164 = vld [vmem:[%s1857 + $0x350] sm:$0xff]
    %v2165 = vld [vmem:[%s1857 + $0x368] sm:$0xff]
    %v2166 = vld [vmem:[%s1857 + $0x370] sm:$0xff]
    %v2167 = vld [vmem:[%s1857 + $0x388] sm:$0xff]
    %v2168 = vld [vmem:[%s1857 + $0x390] sm:$0xff]
    %v2169 = vld [vmem:[%s1857 + $0x3a8] sm:$0xff]
    %v2170 = vld [vmem:[%s1857 + $0x3b0] sm:$0xff]
    %v2171 = vld [vmem:[%s1857 + $0x3c8] sm:$0xff]
    %v2172 = vld [vmem:[%s1857 + $0x3d0] sm:$0xff]
    %v2173 = vld [vmem:[%s1857 + $0x3e8] sm:$0xff]
    %v2174 = vld [vmem:[%s1857 + $0x3f0] sm:$0xff]
    %v2175 = vld [vmem:[%s1857 + $0x408] sm:$0xff]
    %v2176 = vld [vmem:[%s1857 + $0x410] sm:$0xff]
    %v2177 = vld [vmem:[%s1857 + $0x428] sm:$0xff]
    %v2178 = vld [vmem:[%s1857 + $0x430] sm:$0xff]
    %v2179 = vpack.c.bf16 %v2116, %v2115
    %v2180 = vpack.c.bf16 %v2118, %v2117
    %v2181 = vpack.c.bf16 %v2120, %v2119
    %v2182 = vpack.c.bf16 %v2122, %v2121
    %v2183 = vpack.c.bf16 %v2124, %v2123
    %v2184 = vpack.c.bf16 %v2126, %v2125
    %v2185 = vpack.c.bf16 %v2128, %v2127
    %v2186 = vpack.c.bf16 %v2130, %v2129
    %v2187 = vpack.c.bf16 %v2132, %v2131
    %v2188 = vpack.c.bf16 %v2134, %v2133
    %v2189 = vpack.c.bf16 %v2136, %v2135
    %v2190 = vpack.c.bf16 %v2138, %v2137
    %v2191 = vpack.c.bf16 %v2140, %v2139
    %v2192 = vpack.c.bf16 %v2142, %v2141
    %v2193 = vpack.c.bf16 %v2144, %v2143
    %v2194 = vpack.c.bf16 %v2146, %v2145
    %v2195 = vpack.c.bf16 %v2148, %v2147
    %v2196 = vpack.c.bf16 %v2150, %v2149
    %v2197 = vpack.c.bf16 %v2152, %v2151
    %v2198 = vpack.c.bf16 %v2154, %v2153
    %v2199 = vpack.c.bf16 %v2156, %v2155
    %v2200 = vpack.c.bf16 %v2158, %v2157
    %v2201 = vpack.c.bf16 %v2160, %v2159
    %v2202 = vpack.c.bf16 %v2162, %v2161
    %v2203 = vpack.c.bf16 %v2164, %v2163
    %v2204 = vpack.c.bf16 %v2166, %v2165
    %v2205 = vpack.c.bf16 %v2168, %v2167
    %v2206 = vpack.c.bf16 %v2170, %v2169
    %v2207 = vpack.c.bf16 %v2172, %v2171
    %v2208 = vpack.c.bf16 %v2174, %v2173
    %v2209 = vpack.c.bf16 %v2176, %v2175
    %v2210 = vpack.c.bf16 %v2178, %v2177
    %2243 = vrot.lane.b32.xlu0 %v2179, 28
    %v2244 = vpop.permute.xlu0 %2243
    %2245 = vrot.lane.b32.xlu0 %v2180, 28
    %v2246 = vpop.permute.xlu0 %2245
    %2247 = vrot.lane.b32.xlu0 %v2181, 28
    %v2248 = vpop.permute.xlu0 %2247
    %2249 = vrot.lane.b32.xlu0 %v2182, 28
    %v2250 = vpop.permute.xlu0 %2249
    %2251 = vrot.lane.b32.xlu0 %v2183, 28
    %v2252 = vpop.permute.xlu0 %2251
    %2253 = vrot.lane.b32.xlu0 %v2184, 28
    %v2254 = vpop.permute.xlu0 %2253
    %2255 = vrot.lane.b32.xlu0 %v2185, 28
    %v2256 = vpop.permute.xlu0 %2255
    %2257 = vrot.lane.b32.xlu0 %v2186, 28
    %v2258 = vpop.permute.xlu0 %2257
    %2259 = vrot.lane.b32.xlu0 %v2187, 28
    %v2260 = vpop.permute.xlu0 %2259
    %2261 = vrot.lane.b32.xlu0 %v2188, 28
    %v2262 = vpop.permute.xlu0 %2261
    %2263 = vrot.lane.b32.xlu0 %v2189, 28
    %v2264 = vpop.permute.xlu0 %2263
    %2265 = vrot.lane.b32.xlu0 %v2190, 28
    %v2266 = vpop.permute.xlu0 %2265
    %2267 = vrot.lane.b32.xlu0 %v2191, 28
    %v2268 = vpop.permute.xlu0 %2267
    %2269 = vrot.lane.b32.xlu0 %v2192, 28
    %v2270 = vpop.permute.xlu0 %2269
    %2271 = vrot.lane.b32.xlu0 %v2193, 28
    %v2272 = vpop.permute.xlu0 %2271
    %2273 = vrot.lane.b32.xlu0 %v2194, 28
    %v2274 = vpop.permute.xlu0 %2273
    %2275 = vrot.lane.b32.xlu0 %v2195, 28
    %v2276 = vpop.permute.xlu0 %2275
    %2277 = vrot.lane.b32.xlu0 %v2196, 28
    %v2278 = vpop.permute.xlu0 %2277
    %2279 = vrot.lane.b32.xlu0 %v2197, 28
    %v2280 = vpop.permute.xlu0 %2279
    %2281 = vrot.lane.b32.xlu0 %v2198, 28
    %v2282 = vpop.permute.xlu0 %2281
    %2283 = vrot.lane.b32.xlu0 %v2199, 28
    %v2284 = vpop.permute.xlu0 %2283
    %2285 = vrot.lane.b32.xlu0 %v2200, 28
    %v2286 = vpop.permute.xlu0 %2285
    %2287 = vrot.lane.b32.xlu0 %v2201, 28
    %v2288 = vpop.permute.xlu0 %2287
    %2289 = vrot.lane.b32.xlu0 %v2202, 28
    %v2290 = vpop.permute.xlu0 %2289
    %2291 = vrot.lane.b32.xlu0 %v2203, 28
    %v2292 = vpop.permute.xlu0 %2291
    %2293 = vrot.lane.b32.xlu0 %v2204, 28
    %v2294 = vpop.permute.xlu0 %2293
    %2295 = vrot.lane.b32.xlu0 %v2205, 28
    %v2296 = vpop.permute.xlu0 %2295
    %2297 = vrot.lane.b32.xlu0 %v2206, 28
    %v2298 = vpop.permute.xlu0 %2297
    %2299 = vrot.lane.b32.xlu0 %v2207, 28
    %v2300 = vpop.permute.xlu0 %2299
    %2301 = vrot.lane.b32.xlu0 %v2208, 28
    %v2302 = vpop.permute.xlu0 %2301
    %2303 = vrot.lane.b32.xlu0 %v2209, 28
    %v2304 = vpop.permute.xlu0 %2303
    %2305 = vrot.lane.b32.xlu0 %v2210, 28
    %v2306 = vpop.permute.xlu0 %2305
    %vm2339 = vcmask 261344
    %2340 = vst.msk [vmem:[#allocation3] sm:$0xff] %vm2339, %v2244
    %2341 = vst.msk [vmem:[#allocation3 + $0x8] sm:$0xff] %vm2339, %v2246
    %2342 = vst.msk [vmem:[#allocation3 + $0x10] sm:$0xff] %vm2339, %v2248
    %2343 = vst.msk [vmem:[#allocation3 + $0x18] sm:$0xff] %vm2339, %v2250
    %2344 = vst.msk [vmem:[#allocation3 + $0x20] sm:$0xff] %vm2339, %v2252
    %2345 = vst.msk [vmem:[#allocation3 + $0x28] sm:$0xff] %vm2339, %v2254
    %2346 = vst.msk [vmem:[#allocation3 + $0x30] sm:$0xff] %vm2339, %v2256
    %2347 = vst.msk [vmem:[#allocation3 + $0x38] sm:$0xff] %vm2339, %v2258
    %2348 = vst.msk [vmem:[#allocation3 + $0x40] sm:$0xff] %vm2339, %v2260
    %2349 = vst.msk [vmem:[#allocation3 + $0x48] sm:$0xff] %vm2339, %v2262
    %2350 = vst.msk [vmem:[#allocation3 + $0x50] sm:$0xff] %vm2339, %v2264
    %2351 = vst.msk [vmem:[#allocation3 + $0x58] sm:$0xff] %vm2339, %v2266
    %2352 = vst.msk [vmem:[#allocation3 + $0x60] sm:$0xff] %vm2339, %v2268
    %2353 = vst.msk [vmem:[#allocation3 + $0x68] sm:$0xff] %vm2339, %v2270
    %2354 = vst.msk [vmem:[#allocation3 + $0x70] sm:$0xff] %vm2339, %v2272
    %2355 = vst.msk [vmem:[#allocation3 + $0x78] sm:$0xff] %vm2339, %v2274
    %2356 = vst.msk [vmem:[#allocation3 + $0x80] sm:$0xff] %vm2339, %v2276
    %2357 = vst.msk [vmem:[#allocation3 + $0x88] sm:$0xff] %vm2339, %v2278
    %2358 = vst.msk [vmem:[#allocation3 + $0x90] sm:$0xff] %vm2339, %v2280
    %2359 = vst.msk [vmem:[#allocation3 + $0x98] sm:$0xff] %vm2339, %v2282
    %2360 = vst.msk [vmem:[#allocation3 + $0xa0] sm:$0xff] %vm2339, %v2284
    %2361 = vst.msk [vmem:[#allocation3 + $0xa8] sm:$0xff] %vm2339, %v2286
    %2362 = vst.msk [vmem:[#allocation3 + $0xb0] sm:$0xff] %vm2339, %v2288
    %2363 = vst.msk [vmem:[#allocation3 + $0xb8] sm:$0xff] %vm2339, %v2290
    %2364 = vst.msk [vmem:[#allocation3 + $0xc0] sm:$0xff] %vm2339, %v2292
    %2365 = vst.msk [vmem:[#allocation3 + $0xc8] sm:$0xff] %vm2339, %v2294
    %2366 = vst.msk [vmem:[#allocation3 + $0xd0] sm:$0xff] %vm2339, %v2296
    %2367 = vst.msk [vmem:[#allocation3 + $0xd8] sm:$0xff] %vm2339, %v2298
    %2368 = vst.msk [vmem:[#allocation3 + $0xe0] sm:$0xff] %vm2339, %v2300
    %2369 = vst.msk [vmem:[#allocation3 + $0xe8] sm:$0xff] %vm2339, %v2302
    %2370 = vst.msk [vmem:[#allocation3 + $0xf0] sm:$0xff] %vm2339, %v2304
    %2371 = vst.msk [vmem:[#allocation3 + $0xf8] sm:$0xff] %vm2339, %v2306
    %v2372 = vld [vmem:[%s1857 + $0x9] sm:$0xff]
    %v2373 = vld [vmem:[%s1857 + $0x11] sm:$0xff]
    %v2374 = vld [vmem:[%s1857 + $0x29] sm:$0xff]
    %v2375 = vld [vmem:[%s1857 + $0x31] sm:$0xff]
    %v2376 = vld [vmem:[%s1857 + $0x49] sm:$0xff]
    %v2377 = vld [vmem:[%s1857 + $0x51] sm:$0xff]
    %v2378 = vld [vmem:[%s1857 + $0x69] sm:$0xff]
    %v2379 = vld [vmem:[%s1857 + $0x71] sm:$0xff]
    %v2380 = vld [vmem:[%s1857 + $0x89] sm:$0xff]
    %v2381 = vld [vmem:[%s1857 + $0x91] sm:$0xff]
    %v2382 = vld [vmem:[%s1857 + $0xa9] sm:$0xff]
    %v2383 = vld [vmem:[%s1857 + $0xb1] sm:$0xff]
    %v2384 = vld [vmem:[%s1857 + $0xc9] sm:$0xff]
    %v2385 = vld [vmem:[%s1857 + $0xd1] sm:$0xff]
    %v2386 = vld [vmem:[%s1857 + $0xe9] sm:$0xff]
    %v2387 = vld [vmem:[%s1857 + $0xf1] sm:$0xff]
    %v2388 = vld [vmem:[%s1857 + $0x109] sm:$0xff]
    %v2389 = vld [vmem:[%s1857 + $0x111] sm:$0xff]
    %v2390 = vld [vmem:[%s1857 + $0x129] sm:$0xff]
    %v2391 = vld [vmem:[%s1857 + $0x131] sm:$0xff]
    %v2392 = vld [vmem:[%s1857 + $0x149] sm:$0xff]
    %v2393 = vld [vmem:[%s1857 + $0x151] sm:$0xff]
    %v2394 = vld [vmem:[%s1857 + $0x169] sm:$0xff]
    %v2395 = vld [vmem:[%s1857 + $0x171] sm:$0xff]
    %v2396 = vld [vmem:[%s1857 + $0x189] sm:$0xff]
    %v2397 = vld [vmem:[%s1857 + $0x191] sm:$0xff]
    %v2398 = vld [vmem:[%s1857 + $0x1a9] sm:$0xff]
    %v2399 = vld [vmem:[%s1857 + $0x1b1] sm:$0xff]
    %v2400 = vld [vmem:[%s1857 + $0x1c9] sm:$0xff]
    %v2401 = vld [vmem:[%s1857 + $0x1d1] sm:$0xff]
    %v2402 = vld [vmem:[%s1857 + $0x1e9] sm:$0xff]
    %v2403 = vld [vmem:[%s1857 + $0x1f1] sm:$0xff]
    %v2404 = vld [vmem:[%s1857 + $0x249] sm:$0xff]
    %v2405 = vld [vmem:[%s1857 + $0x251] sm:$0xff]
    %v2406 = vld [vmem:[%s1857 + $0x269] sm:$0xff]
    %v2407 = vld [vmem:[%s1857 + $0x271] sm:$0xff]
    %v2408 = vld [vmem:[%s1857 + $0x289] sm:$0xff]
    %v2409 = vld [vmem:[%s1857 + $0x291] sm:$0xff]
    %v2410 = vld [vmem:[%s1857 + $0x2a9] sm:$0xff]
    %v2411 = vld [vmem:[%s1857 + $0x2b1] sm:$0xff]
    %v2412 = vld [vmem:[%s1857 + $0x2c9] sm:$0xff]
    %v2413 = vld [vmem:[%s1857 + $0x2d1] sm:$0xff]
    %v2414 = vld [vmem:[%s1857 + $0x2e9] sm:$0xff]
    %v2415 = vld [vmem:[%s1857 + $0x2f1] sm:$0xff]
    %v2416 = vld [vmem:[%s1857 + $0x309] sm:$0xff]
    %v2417 = vld [vmem:[%s1857 + $0x311] sm:$0xff]
    %v2418 = vld [vmem:[%s1857 + $0x329] sm:$0xff]
    %v2419 = vld [vmem:[%s1857 + $0x331] sm:$0xff]
    %v2420 = vld [vmem:[%s1857 + $0x349] sm:$0xff]
    %v2421 = vld [vmem:[%s1857 + $0x351] sm:$0xff]
    %v2422 = vld [vmem:[%s1857 + $0x369] sm:$0xff]
    %v2423 = vld [vmem:[%s1857 + $0x371] sm:$0xff]
    %v2424 = vld [vmem:[%s1857 + $0x389] sm:$0xff]
    %v2425 = vld [vmem:[%s1857 + $0x391] sm:$0xff]
    %v2426 = vld [vmem:[%s1857 + $0x3a9] sm:$0xff]
    %v2427 = vld [vmem:[%s1857 + $0x3b1] sm:$0xff]
    %v2428 = vld [vmem:[%s1857 + $0x3c9] sm:$0xff]
    %v2429 = vld [vmem:[%s1857 + $0x3d1] sm:$0xff]
    %v2430 = vld [vmem:[%s1857 + $0x3e9] sm:$0xff]
    %v2431 = vld [vmem:[%s1857 + $0x3f1] sm:$0xff]
    %v2432 = vld [vmem:[%s1857 + $0x409] sm:$0xff]
    %v2433 = vld [vmem:[%s1857 + $0x411] sm:$0xff]
    %v2434 = vld [vmem:[%s1857 + $0x429] sm:$0xff]
    %v2435 = vld [vmem:[%s1857 + $0x431] sm:$0xff]
    %v2436 = vpack.c.bf16 %v2373, %v2372
    %v2437 = vpack.c.bf16 %v2375, %v2374
    %v2438 = vpack.c.bf16 %v2377, %v2376
    %v2439 = vpack.c.bf16 %v2379, %v2378
    %v2440 = vpack.c.bf16 %v2381, %v2380
    %v2441 = vpack.c.bf16 %v2383, %v2382
    %v2442 = vpack.c.bf16 %v2385, %v2384
    %v2443 = vpack.c.bf16 %v2387, %v2386
    %v2444 = vpack.c.bf16 %v2389, %v2388
    %v2445 = vpack.c.bf16 %v2391, %v2390
    %v2446 = vpack.c.bf16 %v2393, %v2392
    %v2447 = vpack.c.bf16 %v2395, %v2394
    %v2448 = vpack.c.bf16 %v2397, %v2396
    %v2449 = vpack.c.bf16 %v2399, %v2398
    %v2450 = vpack.c.bf16 %v2401, %v2400
    %v2451 = vpack.c.bf16 %v2403, %v2402
    %v2452 = vpack.c.bf16 %v2405, %v2404
    %v2453 = vpack.c.bf16 %v2407, %v2406
    %v2454 = vpack.c.bf16 %v2409, %v2408
    %v2455 = vpack.c.bf16 %v2411, %v2410
    %v2456 = vpack.c.bf16 %v2413, %v2412
    %v2457 = vpack.c.bf16 %v2415, %v2414
    %v2458 = vpack.c.bf16 %v2417, %v2416
    %v2459 = vpack.c.bf16 %v2419, %v2418
    %v2460 = vpack.c.bf16 %v2421, %v2420
    %v2461 = vpack.c.bf16 %v2423, %v2422
    %v2462 = vpack.c.bf16 %v2425, %v2424
    %v2463 = vpack.c.bf16 %v2427, %v2426
    %v2464 = vpack.c.bf16 %v2429, %v2428
    %v2465 = vpack.c.bf16 %v2431, %v2430
    %v2466 = vpack.c.bf16 %v2433, %v2432
    %v2467 = vpack.c.bf16 %v2435, %v2434
    %2500 = vrot.lane.b32.xlu0 %v2436, 32
    %v2501 = vpop.permute.xlu0 %2500
    %2502 = vrot.lane.b32.xlu0 %v2437, 32
    %v2503 = vpop.permute.xlu0 %2502
    %2504 = vrot.lane.b32.xlu0 %v2438, 32
    %v2505 = vpop.permute.xlu0 %2504
    %2506 = vrot.lane.b32.xlu0 %v2439, 32
    %v2507 = vpop.permute.xlu0 %2506
    %2508 = vrot.lane.b32.xlu0 %v2440, 32
    %v2509 = vpop.permute.xlu0 %2508
    %2510 = vrot.lane.b32.xlu0 %v2441, 32
    %v2511 = vpop.permute.xlu0 %2510
    %2512 = vrot.lane.b32.xlu0 %v2442, 32
    %v2513 = vpop.permute.xlu0 %2512
    %2514 = vrot.lane.b32.xlu0 %v2443, 32
    %v2515 = vpop.permute.xlu0 %2514
    %2516 = vrot.lane.b32.xlu0 %v2444, 32
    %v2517 = vpop.permute.xlu0 %2516
    %2518 = vrot.lane.b32.xlu0 %v2445, 32
    %v2519 = vpop.permute.xlu0 %2518
    %2520 = vrot.lane.b32.xlu0 %v2446, 32
    %v2521 = vpop.permute.xlu0 %2520
    %2522 = vrot.lane.b32.xlu0 %v2447, 32
    %v2523 = vpop.permute.xlu0 %2522
    %2524 = vrot.lane.b32.xlu0 %v2448, 32
    %v2525 = vpop.permute.xlu0 %2524
    %2526 = vrot.lane.b32.xlu0 %v2449, 32
    %v2527 = vpop.permute.xlu0 %2526
    %2528 = vrot.lane.b32.xlu0 %v2450, 32
    %v2529 = vpop.permute.xlu0 %2528
    %2530 = vrot.lane.b32.xlu0 %v2451, 32
    %v2531 = vpop.permute.xlu0 %2530
    %2532 = vrot.lane.b32.xlu0 %v2452, 32
    %v2533 = vpop.permute.xlu0 %2532
    %2534 = vrot.lane.b32.xlu0 %v2453, 32
    %v2535 = vpop.permute.xlu0 %2534
    %2536 = vrot.lane.b32.xlu0 %v2454, 32
    %v2537 = vpop.permute.xlu0 %2536
    %2538 = vrot.lane.b32.xlu0 %v2455, 32
    %v2539 = vpop.permute.xlu0 %2538
    %2540 = vrot.lane.b32.xlu0 %v2456, 32
    %v2541 = vpop.permute.xlu0 %2540
    %2542 = vrot.lane.b32.xlu0 %v2457, 32
    %v2543 = vpop.permute.xlu0 %2542
    %2544 = vrot.lane.b32.xlu0 %v2458, 32
    %v2545 = vpop.permute.xlu0 %2544
    %2546 = vrot.lane.b32.xlu0 %v2459, 32
    %v2547 = vpop.permute.xlu0 %2546
    %2548 = vrot.lane.b32.xlu0 %v2460, 32
    %v2549 = vpop.permute.xlu0 %2548
    %2550 = vrot.lane.b32.xlu0 %v2461, 32
    %v2551 = vpop.permute.xlu0 %2550
    %2552 = vrot.lane.b32.xlu0 %v2462, 32
    %v2553 = vpop.permute.xlu0 %2552
    %2554 = vrot.lane.b32.xlu0 %v2463, 32
    %v2555 = vpop.permute.xlu0 %2554
    %2556 = vrot.lane.b32.xlu0 %v2464, 32
    %v2557 = vpop.permute.xlu0 %2556
    %2558 = vrot.lane.b32.xlu0 %v2465, 32
    %v2559 = vpop.permute.xlu0 %2558
    %2560 = vrot.lane.b32.xlu0 %v2466, 32
    %v2561 = vpop.permute.xlu0 %2560
    %2562 = vrot.lane.b32.xlu0 %v2467, 32
    %v2563 = vpop.permute.xlu0 %2562
    %vm2596 = vcmask 294144
    %2597 = vst.msk [vmem:[#allocation3] sm:$0xff] %vm2596, %v2501
    %2598 = vst.msk [vmem:[#allocation3 + $0x8] sm:$0xff] %vm2596, %v2503
    %2599 = vst.msk [vmem:[#allocation3 + $0x10] sm:$0xff] %vm2596, %v2505
    %2600 = vst.msk [vmem:[#allocation3 + $0x18] sm:$0xff] %vm2596, %v2507
    %2601 = vst.msk [vmem:[#allocation3 + $0x20] sm:$0xff] %vm2596, %v2509
    %2602 = vst.msk [vmem:[#allocation3 + $0x28] sm:$0xff] %vm2596, %v2511
    %2603 = vst.msk [vmem:[#allocation3 + $0x30] sm:$0xff] %vm2596, %v2513
    %2604 = vst.msk [vmem:[#allocation3 + $0x38] sm:$0xff] %vm2596, %v2515
    %2605 = vst.msk [vmem:[#allocation3 + $0x40] sm:$0xff] %vm2596, %v2517
    %2606 = vst.msk [vmem:[#allocation3 + $0x48] sm:$0xff] %vm2596, %v2519
    %2607 = vst.msk [vmem:[#allocation3 + $0x50] sm:$0xff] %vm2596, %v2521
    %2608 = vst.msk [vmem:[#allocation3 + $0x58] sm:$0xff] %vm2596, %v2523
    %2609 = vst.msk [vmem:[#allocation3 + $0x60] sm:$0xff] %vm2596, %v2525
    %2610 = vst.msk [vmem:[#allocation3 + $0x68] sm:$0xff] %vm2596, %v2527
    %2611 = vst.msk [vmem:[#allocation3 + $0x70] sm:$0xff] %vm2596, %v2529
    %2612 = vst.msk [vmem:[#allocation3 + $0x78] sm:$0xff] %vm2596, %v2531
    %2613 = vst.msk [vmem:[#allocation3 + $0x80] sm:$0xff] %vm2596, %v2533
    %2614 = vst.msk [vmem:[#allocation3 + $0x88] sm:$0xff] %vm2596, %v2535
    %2615 = vst.msk [vmem:[#allocation3 + $0x90] sm:$0xff] %vm2596, %v2537
    %2616 = vst.msk [vmem:[#allocation3 + $0x98] sm:$0xff] %vm2596, %v2539
    %2617 = vst.msk [vmem:[#allocation3 + $0xa0] sm:$0xff] %vm2596, %v2541
    %2618 = vst.msk [vmem:[#allocation3 + $0xa8] sm:$0xff] %vm2596, %v2543
    %2619 = vst.msk [vmem:[#allocation3 + $0xb0] sm:$0xff] %vm2596, %v2545
    %2620 = vst.msk [vmem:[#allocation3 + $0xb8] sm:$0xff] %vm2596, %v2547
    %2621 = vst.msk [vmem:[#allocation3 + $0xc0] sm:$0xff] %vm2596, %v2549
    %2622 = vst.msk [vmem:[#allocation3 + $0xc8] sm:$0xff] %vm2596, %v2551
    %2623 = vst.msk [vmem:[#allocation3 + $0xd0] sm:$0xff] %vm2596, %v2553
    %2624 = vst.msk [vmem:[#allocation3 + $0xd8] sm:$0xff] %vm2596, %v2555
    %2625 = vst.msk [vmem:[#allocation3 + $0xe0] sm:$0xff] %vm2596, %v2557
    %2626 = vst.msk [vmem:[#allocation3 + $0xe8] sm:$0xff] %vm2596, %v2559
    %2627 = vst.msk [vmem:[#allocation3 + $0xf0] sm:$0xff] %vm2596, %v2561
    %2628 = vst.msk [vmem:[#allocation3 + $0xf8] sm:$0xff] %vm2596, %v2563
    %v2629 = vld [vmem:[#allocation3] sm:$0xff]
    %v2630 = vld [vmem:[#allocation3 + $0x8] sm:$0xff]
    %v2631 = vld [vmem:[#allocation3 + $0x10] sm:$0xff]
    %v2632 = vld [vmem:[#allocation3 + $0x18] sm:$0xff]
    %v2633 = vld [vmem:[#allocation3 + $0x20] sm:$0xff]
    %v2634 = vld [vmem:[#allocation3 + $0x28] sm:$0xff]
    %v2635 = vld [vmem:[#allocation3 + $0x30] sm:$0xff]
    %v2636 = vld [vmem:[#allocation3 + $0x38] sm:$0xff]
    %v2637 = vld [vmem:[%s1] sm:$0xf]
    %v2638 = vld [vmem:[%s1 + $0x4] sm:$0xf]
    %v2639 = vld [vmem:[%s1 + $0x8] sm:$0xf]
    %v2640 = vld [vmem:[%s1 + $0xc] sm:$0xf]
    %v2641 = vld [vmem:[%s1 + $0x10] sm:$0x3]
    %v2642 = vld [vmem:[%s2] sm:$0x1]
    %v2644 = vlaneseq
    %v2645 = vshrl.u32 %v2644, 7
    %v2646 = vsub.s32 0, %v2645
    %v2647 = vrot.slane %v2642, %v2646
    %v2654 = vunpack.c.l.b16 %v2637
    %v2655 = vunpack.c.l.b16 %v2638
    %v2656 = vunpack.c.l.b16 %v2639
    %v2657 = vunpack.c.l.b16 %v2640
    %v2658 = vunpack.c.l.b16 %v2641
    %v2659 = vpack.c.b16 %v2655, %v2654
    %v2660 = vpack.c.b16 %v2657, %v2656
    %v2661 = vpack.c.b16 %v2658, %v2658
    %vm2664 = vcmask 293888
    %v2666 = vsel %vm2664, %v2629, 0
    %v2669 = vsel %vm2664, %v2630, 0
    %v2672 = vsel %vm2664, %v2631, 0
    %v2675 = vsel %vm2664, %v2632, 0
    %v2678 = vsel %vm2664, %v2633, 0
    %v2681 = vsel %vm2664, %v2634, 0
    %v2684 = vsel %vm2664, %v2635, 0
    %v2687 = vsel %vm2664, %v2636, 0
    %vm2689 = vcmask 1041408
    %v2691 = vsel %vm2689, %v2661, 0
    %2693 = vmatprep.subr.bf16.mxu0 0
    %2694 = vmatpush1.bf16.msra.mxu0 %v2659
    %2695 = vmatprep.subr.bf16.mxu0 0
    %2696 = vmatpush1.bf16.msra.mxu0 %v2660
    %2697 = vmatprep.subr.bf16.mxu0 0
    %2698 = vmatpush1.bf16.msra.mxu0 %v2691
    %2699 = vmatprep.subr.bf16.mxu0 0
    %2700 = vmatpush1.bf16.msra.mxu0 0
    %2701 = vmatprep.subr.bf16.mxu0 0
    %2702 = vmatpush1.bf16.msra.mxu0 0
    %2703 = vmatprep.subr.bf16.mxu0 0
    %2704 = vmatpush1.bf16.msra.mxu0 0
    %2705 = vmatprep.subr.bf16.mxu0 0
    %2706 = vmatpush1.bf16.msra.mxu0 0
    %2707 = vmatprep.subr.bf16.mxu0 0
    %2708 = vmatpush1.bf16.msra.mxu0 0
    %2709 = vmatprep.subr.bf16.mxu0 0
    %2710 = vmatpush1.bf16.msra.mxu0 0
    %2711 = vmatprep.subr.bf16.mxu0 0
    %2712 = vmatpush1.bf16.msra.mxu0 0
    %2713 = vmatprep.subr.bf16.mxu0 0
    %2714 = vmatpush1.bf16.msra.mxu0 0
    %2715 = vmatprep.subr.bf16.mxu0 0
    %2716 = vmatpush1.bf16.msra.mxu0 0
    %2717 = vmatprep.subr.bf16.mxu0 0
    %2718 = vmatpush1.bf16.msra.mxu0 0
    %2719 = vmatprep.subr.bf16.mxu0 0
    %2720 = vmatpush1.bf16.msra.mxu0 0
    %2721 = vmatprep.subr.bf16.mxu0 0
    %2722 = vmatpush1.bf16.msra.mxu0 0
    %2723 = vmatprep.subr.bf16.mxu0 0
    %2724 = vmatpush1.bf16.msra.mxu0 0
    %2725 = vmatprep.mubr.bf16.mxu0 0
    %2726 = vmatmul.mubr.bf16.gmra.mrb[0].mxu0 %v2666
    %v2727 = vpop.f32.mrb[0].mxu0
    %v2728 = vadd.f32 %v2647, %v2727
    %v2729 = vpop.f32.mrb[0].mxu0
    %v2730 = vpop.f32.mrb[0].mxu0
    %v2731 = vadd.f32 %v2647, %v2730
    %v2732 = vpop.f32.mrb[0].mxu0
    %2733 = vmatprep.mubr.bf16.mxu0 0
    %2734 = vmatmul.mubr.bf16.gmra.mrb[0].mxu0 %v2669
    %v2735 = vpop.f32.mrb[0].mxu0
    %v2736 = vadd.f32 %v2647, %v2735
    %v2737 = vpop.f32.mrb[0].mxu0
    %v2738 = vpop.f32.mrb[0].mxu0
    %v2739 = vadd.f32 %v2647, %v2738
    %v2740 = vpop.f32.mrb[0].mxu0
    %2741 = vmatprep.mubr.bf16.mxu0 0
    %2742 = vmatmul.mubr.bf16.gmra.mrb[0].mxu0 %v2672
    %v2743 = vpop.f32.mrb[0].mxu0
    %v2744 = vadd.f32 %v2647, %v2743
    %v2745 = vpop.f32.mrb[0].mxu0
    %v2746 = vpop.f32.mrb[0].mxu0
    %v2747 = vadd.f32 %v2647, %v2746
    %v2748 = vpop.f32.mrb[0].mxu0
    %2749 = vmatprep.mubr.bf16.mxu0 0
    %2750 = vmatmul.mubr.bf16.gmra.mrb[0].mxu0 %v2675
    %v2751 = vpop.f32.mrb[0].mxu0
    %v2752 = vadd.f32 %v2647, %v2751
    %v2753 = vpop.f32.mrb[0].mxu0
    %v2754 = vpop.f32.mrb[0].mxu0
    %v2755 = vadd.f32 %v2647, %v2754
    %v2756 = vpop.f32.mrb[0].mxu0
    %2757 = vmatprep.mubr.bf16.mxu0 0
    %2758 = vmatmul.mubr.bf16.gmra.mrb[0].mxu0 %v2678
    %v2759 = vpop.f32.mrb[0].mxu0
    %v2760 = vadd.f32 %v2647, %v2759
    %v2761 = vpop.f32.mrb[0].mxu0
    %v2762 = vpop.f32.mrb[0].mxu0
    %v2763 = vadd.f32 %v2647, %v2762
    %v2764 = vpop.f32.mrb[0].mxu0
    %2765 = vmatprep.mubr.bf16.mxu0 0
    %2766 = vmatmul.mubr.bf16.gmra.mrb[0].mxu0 %v2681
    %v2767 = vpop.f32.mrb[0].mxu0
    %v2768 = vadd.f32 %v2647, %v2767
    %v2769 = vpop.f32.mrb[0].mxu0
    %v2770 = vpop.f32.mrb[0].mxu0
    %v2771 = vadd.f32 %v2647, %v2770
    %v2772 = vpop.f32.mrb[0].mxu0
    %2773 = vmatprep.mubr.bf16.mxu0 0
    %2774 = vmatmul.mubr.bf16.gmra.mrb[0].mxu0 %v2684
    %v2775 = vpop.f32.mrb[0].mxu0
    %v2776 = vadd.f32 %v2647, %v2775
    %v2777 = vpop.f32.mrb[0].mxu0
    %v2778 = vpop.f32.mrb[0].mxu0
    %v2779 = vadd.f32 %v2647, %v2778
    %v2780 = vpop.f32.mrb[0].mxu0
    %2781 = vmatprep.mubr.bf16.mxu0 0
    %2782 = vmatmul.mubr.bf16.gmra.mrb[0].mxu0 %v2687
    %v2783 = vpop.f32.mrb[0].mxu0
    %v2784 = vadd.f32 %v2647, %v2783
    %v2785 = vpop.f32.mrb[0].mxu0
    %v2786 = vpop.f32.mrb[0].mxu0
    %v2787 = vadd.f32 %v2647, %v2786
    %v2788 = vpop.f32.mrb[0].mxu0
    %2789 = vdwg.mxu0
    %v2790 = vmax.f32 %v2728, 0.0
    %v2791 = vmax.f32 %v2731, 0.0
    %v2792 = vmax.f32 %v2736, 0.0
    %v2793 = vmax.f32 %v2739, 0.0
    %v2794 = vmax.f32 %v2744, 0.0
    %v2795 = vmax.f32 %v2747, 0.0
    %v2796 = vmax.f32 %v2752, 0.0
    %v2797 = vmax.f32 %v2755, 0.0
    %v2798 = vmax.f32 %v2760, 0.0
    %v2799 = vmax.f32 %v2763, 0.0
    %v2800 = vmax.f32 %v2768, 0.0
    %v2801 = vmax.f32 %v2771, 0.0
    %v2802 = vmax.f32 %v2776, 0.0
    %v2803 = vmax.f32 %v2779, 0.0
    %v2804 = vmax.f32 %v2784, 0.0
    %v2805 = vmax.f32 %v2787, 0.0
    %v2806 = vmax.f32 %v2790, %v2792
    %v2807 = vmax.f32 %v2791, %v2793
    %v2808 = vmax.f32 %v2794, %v2796
    %v2809 = vmax.f32 %v2795, %v2797
    %v2810 = vmax.f32 %v2798, %v2800
    %v2811 = vmax.f32 %v2799, %v2801
    %v2812 = vmax.f32 %v2802, %v2804
    %v2813 = vmax.f32 %v2803, %v2805
    %vm2814 = vcmask 261120
    %2815 = vst.msk [vmem:[#allocation4] sm:$0xff] %vm2814, %v2806
    %2816 = vst.msk [vmem:[#allocation4 + $0x8] sm:$0xff] %vm2814, %v2807
    %2817 = vst.msk [vmem:[#allocation4 + $0x10] sm:$0xff] %vm2814, %v2808
    %2818 = vst.msk [vmem:[#allocation4 + $0x18] sm:$0xff] %vm2814, %v2809
    %2819 = vst.msk [vmem:[#allocation4 + $0x20] sm:$0xff] %vm2814, %v2810
    %2820 = vst.msk [vmem:[#allocation4 + $0x28] sm:$0xff] %vm2814, %v2811
    %2821 = vst.msk [vmem:[#allocation4 + $0x30] sm:$0xff] %vm2814, %v2812
    %2822 = vst.msk [vmem:[#allocation4 + $0x38] sm:$0xff] %vm2814, %v2813
    %v2823 = vld [vmem:[#allocation3 + $0x40] sm:$0xff]
    %v2824 = vld [vmem:[#allocation3 + $0x48] sm:$0xff]
    %v2825 = vld [vmem:[#allocation3 + $0x50] sm:$0xff]
    %v2826 = vld [vmem:[#allocation3 + $0x58] sm:$0xff]
    %v2827 = vld [vmem:[#allocation3 + $0x60] sm:$0xff]
    %v2828 = vld [vmem:[#allocation3 + $0x68] sm:$0xff]
    %v2829 = vld [vmem:[#allocation3 + $0x70] sm:$0xff]
    %v2830 = vld [vmem:[#allocation3 + $0x78] sm:$0xff]
    %v2831 = vld [vmem:[%s1] sm:$0xf]
    %v2832 = vld [vmem:[%s1 + $0x4] sm:$0xf]
    %v2833 = vld [vmem:[%s1 + $0x8] sm:$0xf]
    %v2834 = vld [vmem:[%s1 + $0xc] sm:$0xf]
    %v2835 = vld [vmem:[%s1 + $0x10] sm:$0x3]
    %v2836 = vld [vmem:[%s2] sm:$0x1]
    %v2838 = vlaneseq
    %v2839 = vshrl.u32 %v2838, 7
    %v2840 = vsub.s32 0, %v2839
    %v2841 = vrot.slane %v2836, %v2840
    %v2848 = vunpack.c.l.b16 %v2831
    %v2849 = vunpack.c.l.b16 %v2832
    %v2850 = vunpack.c.l.b16 %v2833
    %v2851 = vunpack.c.l.b16 %v2834
    %v2852 = vunpack.c.l.b16 %v2835
    %v2853 = vpack.c.b16 %v2849, %v2848
    %v2854 = vpack.c.b16 %v2851, %v2850
    %v2855 = vpack.c.b16 %v2852, %v2852
    %v2859 = vsel %vm2664, %v2823, 0
    %v2862 = vsel %vm2664, %v2824, 0
    %v2865 = vsel %vm2664, %v2825, 0
    %v2868 = vsel %vm2664, %v2826, 0
    %v2871 = vsel %vm2664, %v2827, 0
    %v2874 = vsel %vm2664, %v2828, 0
    %v2877 = vsel %vm2664, %v2829, 0
    %v2880 = vsel %vm2664, %v2830, 0
    %v2883 = vsel %vm2689, %v2855, 0
    %2885 = vmatprep.subr.bf16.mxu0 0
    %2886 = vmatpush1.bf16.msra.mxu0 %v2853
    %2887 = vmatprep.subr.bf16.mxu0 0
    %2888 = vmatpush1.bf16.msra.mxu0 %v2854
    %2889 = vmatprep.subr.bf16.mxu0 0
    %2890 = vmatpush1.bf16.msra.mxu0 %v2883
    %2891 = vmatprep.subr.bf16.mxu0 0
    %2892 = vmatpush1.bf16.msra.mxu0 0
    %2893 = vmatprep.subr.bf16.mxu0 0
    %2894 = vmatpush1.bf16.msra.mxu0 0
    %2895 = vmatprep.subr.bf16.mxu0 0
    %2896 = vmatpush1.bf16.msra.mxu0 0
    %2897 = vmatprep.subr.bf16.mxu0 0
    %2898 = vmatpush1.bf16.msra.mxu0 0
    %2899 = vmatprep.subr.bf16.mxu0 0
    %2900 = vmatpush1.bf16.msra.mxu0 0
    %2901 = vmatprep.subr.bf16.mxu0 0
    %2902 = vmatpush1.bf16.msra.mxu0 0
    %2903 = vmatprep.subr.bf16.mxu0 0
    %2904 = vmatpush1.bf16.msra.mxu0 0
    %2905 = vmatprep.subr.bf16.mxu0 0
    %2906 = vmatpush1.bf16.msra.mxu0 0
    %2907 = vmatprep.subr.bf16.mxu0 0
    %2908 = vmatpush1.bf16.msra.mxu0 0
    %2909 = vmatprep.subr.bf16.mxu0 0
    %2910 = vmatpush1.bf16.msra.mxu0 0
    %2911 = vmatprep.subr.bf16.mxu0 0
    %2912 = vmatpush1.bf16.msra.mxu0 0
    %2913 = vmatprep.subr.bf16.mxu0 0
    %2914 = vmatpush1.bf16.msra.mxu0 0
    %2915 = vmatprep.subr.bf16.mxu0 0
    %2916 = vmatpush1.bf16.msra.mxu0 0
    %2917 = vmatprep.mubr.bf16.mxu0 0
    %2918 = vmatmul.mubr.bf16.gmra.mrb[0].mxu0 %v2859
    %v2919 = vpop.f32.mrb[0].mxu0
    %v2920 = vadd.f32 %v2841, %v2919
    %v2921 = vpop.f32.mrb[0].mxu0
    %v2922 = vpop.f32.mrb[0].mxu0
    %v2923 = vadd.f32 %v2841, %v2922
    %v2924 = vpop.f32.mrb[0].mxu0
    %2925 = vmatprep.mubr.bf16.mxu0 0
    %2926 = vmatmul.mubr.bf16.gmra.mrb[0].mxu0 %v2862
    %v2927 = vpop.f32.mrb[0].mxu0
    %v2928 = vadd.f32 %v2841, %v2927
    %v2929 = vpop.f32.mrb[0].mxu0
    %v2930 = vpop.f32.mrb[0].mxu0
    %v2931 = vadd.f32 %v2841, %v2930
    %v2932 = vpop.f32.mrb[0].mxu0
    %2933 = vmatprep.mubr.bf16.mxu0 0
    %2934 = vmatmul.mubr.bf16.gmra.mrb[0].mxu0 %v2865
    %v2935 = vpop.f32.mrb[0].mxu0
    %v2936 = vadd.f32 %v2841, %v2935
    %v2937 = vpop.f32.mrb[0].mxu0
    %v2938 = vpop.f32.mrb[0].mxu0
    %v2939 = vadd.f32 %v2841, %v2938
    %v2940 = vpop.f32.mrb[0].mxu0
    %2941 = vmatprep.mubr.bf16.mxu0 0
    %2942 = vmatmul.mubr.bf16.gmra.mrb[0].mxu0 %v2868
    %v2943 = vpop.f32.mrb[0].mxu0
    %v2944 = vadd.f32 %v2841, %v2943
    %v2945 = vpop.f32.mrb[0].mxu0
    %v2946 = vpop.f32.mrb[0].mxu0
    %v2947 = vadd.f32 %v2841, %v2946
    %v2948 = vpop.f32.mrb[0].mxu0
    %2949 = vmatprep.mubr.bf16.mxu0 0
    %2950 = vmatmul.mubr.bf16.gmra.mrb[0].mxu0 %v2871
    %v2951 = vpop.f32.mrb[0].mxu0
    %v2952 = vadd.f32 %v2841, %v2951
    %v2953 = vpop.f32.mrb[0].mxu0
    %v2954 = vpop.f32.mrb[0].mxu0
    %v2955 = vadd.f32 %v2841, %v2954
    %v2956 = vpop.f32.mrb[0].mxu0
    %2957 = vmatprep.mubr.bf16.mxu0 0
    %2958 = vmatmul.mubr.bf16.gmra.mrb[0].mxu0 %v2874
    %v2959 = vpop.f32.mrb[0].mxu0
    %v2960 = vadd.f32 %v2841, %v2959
    %v2961 = vpop.f32.mrb[0].mxu0
    %v2962 = vpop.f32.mrb[0].mxu0
    %v2963 = vadd.f32 %v2841, %v2962
    %v2964 = vpop.f32.mrb[0].mxu0
    %2965 = vmatprep.mubr.bf16.mxu0 0
    %2966 = vmatmul.mubr.bf16.gmra.mrb[0].mxu0 %v2877
    %v2967 = vpop.f32.mrb[0].mxu0
    %v2968 = vadd.f32 %v2841, %v2967
    %v2969 = vpop.f32.mrb[0].mxu0
    %v2970 = vpop.f32.mrb[0].mxu0
    %v2971 = vadd.f32 %v2841, %v2970
    %v2972 = vpop.f32.mrb[0].mxu0
    %2973 = vmatprep.mubr.bf16.mxu0 0
    %2974 = vmatmul.mubr.bf16.gmra.mrb[0].mxu0 %v2880
    %v2975 = vpop.f32.mrb[0].mxu0
    %v2976 = vadd.f32 %v2841, %v2975
    %v2977 = vpop.f32.mrb[0].mxu0
    %v2978 = vpop.f32.mrb[0].mxu0
    %v2979 = vadd.f32 %v2841, %v2978
    %v2980 = vpop.f32.mrb[0].mxu0
    %2981 = vdwg.mxu0
    %v2982 = vmax.f32 %v2920, 0.0
    %v2983 = vmax.f32 %v2923, 0.0
    %v2984 = vmax.f32 %v2928, 0.0
    %v2985 = vmax.f32 %v2931, 0.0
    %v2986 = vmax.f32 %v2936, 0.0
    %v2987 = vmax.f32 %v2939, 0.0
    %v2988 = vmax.f32 %v2944, 0.0
    %v2989 = vmax.f32 %v2947, 0.0
    %v2990 = vmax.f32 %v2952, 0.0
    %v2991 = vmax.f32 %v2955, 0.0
    %v2992 = vmax.f32 %v2960, 0.0
    %v2993 = vmax.f32 %v2963, 0.0
    %v2994 = vmax.f32 %v2968, 0.0
    %v2995 = vmax.f32 %v2971, 0.0
    %v2996 = vmax.f32 %v2976, 0.0
    %v2997 = vmax.f32 %v2979, 0.0
    %v2998 = vmax.f32 %v2982, %v2984
    %v2999 = vmax.f32 %v2983, %v2985
    %v3000 = vmax.f32 %v2986, %v2988
    %v3001 = vmax.f32 %v2987, %v2989
    %v3002 = vmax.f32 %v2990, %v2992
    %v3003 = vmax.f32 %v2991, %v2993
    %v3004 = vmax.f32 %v2994, %v2996
    %v3005 = vmax.f32 %v2995, %v2997
    %s3006 = scalar_lea.vmem [#allocation4], 64
    %3007 = vst.msk [vmem:[%s3006] sm:$0xff] %vm2814, %v2998
    %3008 = vst.msk [vmem:[%s3006 + $0x8] sm:$0xff] %vm2814, %v2999
    %3009 = vst.msk [vmem:[%s3006 + $0x10] sm:$0xff] %vm2814, %v3000
    %3010 = vst.msk [vmem:[%s3006 + $0x18] sm:$0xff] %vm2814, %v3001
    %3011 = vst.msk [vmem:[%s3006 + $0x20] sm:$0xff] %vm2814, %v3002
    %3012 = vst.msk [vmem:[%s3006 + $0x28] sm:$0xff] %vm2814, %v3003
    %3013 = vst.msk [vmem:[%s3006 + $0x30] sm:$0xff] %vm2814, %v3004
    %3014 = vst.msk [vmem:[%s3006 + $0x38] sm:$0xff] %vm2814, %v3005
    %v3015 = vld [vmem:[#allocation3 + $0x80] sm:$0xff]
    %v3016 = vld [vmem:[#allocation3 + $0x88] sm:$0xff]
    %v3017 = vld [vmem:[#allocation3 + $0x90] sm:$0xff]
    %v3018 = vld [vmem:[#allocation3 + $0x98] sm:$0xff]
    %v3019 = vld [vmem:[#allocation3 + $0xa0] sm:$0xff]
    %v3020 = vld [vmem:[#allocation3 + $0xa8] sm:$0xff]
    %v3021 = vld [vmem:[#allocation3 + $0xb0] sm:$0xff]
    %v3022 = vld [vmem:[#allocation3 + $0xb8] sm:$0xff]
    %v3023 = vld [vmem:[%s1] sm:$0xf]
    %v3024 = vld [vmem:[%s1 + $0x4] sm:$0xf]
    %v3025 = vld [vmem:[%s1 + $0x8] sm:$0xf]
    %v3026 = vld [vmem:[%s1 + $0xc] sm:$0xf]
    %v3027 = vld [vmem:[%s1 + $0x10] sm:$0x3]
    %v3028 = vld [vmem:[%s2] sm:$0x1]
    %v3030 = vlaneseq
    %v3031 = vshrl.u32 %v3030, 7
    %v3032 = vsub.s32 0, %v3031
    %v3033 = vrot.slane %v3028, %v3032
    %v3040 = vunpack.c.l.b16 %v3023
    %v3041 = vunpack.c.l.b16 %v3024
    %v3042 = vunpack.c.l.b16 %v3025
    %v3043 = vunpack.c.l.b16 %v3026
    %v3044 = vunpack.c.l.b16 %v3027
    %v3045 = vpack.c.b16 %v3041, %v3040
    %v3046 = vpack.c.b16 %v3043, %v3042
    %v3047 = vpack.c.b16 %v3044, %v3044
    %v3051 = vsel %vm2664, %v3015, 0
    %v3054 = vsel %vm2664, %v3016, 0
    %v3057 = vsel %vm2664, %v3017, 0
    %v3060 = vsel %vm2664, %v3018, 0
    %v3063 = vsel %vm2664, %v3019, 0
    %v3066 = vsel %vm2664, %v3020, 0
    %v3069 = vsel %vm2664, %v3021, 0
    %v3072 = vsel %vm2664, %v3022, 0
    %v3075 = vsel %vm2689, %v3047, 0
    %3077 = vmatprep.subr.bf16.mxu0 0
    %3078 = vmatpush1.bf16.msra.mxu0 %v3045
    %3079 = vmatprep.subr.bf16.mxu0 0
    %3080 = vmatpush1.bf16.msra.mxu0 %v3046
    %3081 = vmatprep.subr.bf16.mxu0 0
    %3082 = vmatpush1.bf16.msra.mxu0 %v3075
    %3083 = vmatprep.subr.bf16.mxu0 0
    %3084 = vmatpush1.bf16.msra.mxu0 0
    %3085 = vmatprep.subr.bf16.mxu0 0
    %3086 = vmatpush1.bf16.msra.mxu0 0
    %3087 = vmatprep.subr.bf16.mxu0 0
    %3088 = vmatpush1.bf16.msra.mxu0 0
    %3089 = vmatprep.subr.bf16.mxu0 0
    %3090 = vmatpush1.bf16.msra.mxu0 0
    %3091 = vmatprep.subr.bf16.mxu0 0
    %3092 = vmatpush1.bf16.msra.mxu0 0
    %3093 = vmatprep.subr.bf16.mxu0 0
    %3094 = vmatpush1.bf16.msra.mxu0 0
    %3095 = vmatprep.subr.bf16.mxu0 0
    %3096 = vmatpush1.bf16.msra.mxu0 0
    %3097 = vmatprep.subr.bf16.mxu0 0
    %3098 = vmatpush1.bf16.msra.mxu0 0
    %3099 = vmatprep.subr.bf16.mxu0 0
    %3100 = vmatpush1.bf16.msra.mxu0 0
    %3101 = vmatprep.subr.bf16.mxu0 0
    %3102 = vmatpush1.bf16.msra.mxu0 0
    %3103 = vmatprep.subr.bf16.mxu0 0
    %3104 = vmatpush1.bf16.msra.mxu0 0
    %3105 = vmatprep.subr.bf16.mxu0 0
    %3106 = vmatpush1.bf16.msra.mxu0 0
    %3107 = vmatprep.subr.bf16.mxu0 0
    %3108 = vmatpush1.bf16.msra.mxu0 0
    %3109 = vmatprep.mubr.bf16.mxu0 0
    %3110 = vmatmul.mubr.bf16.gmra.mrb[0].mxu0 %v3051
    %v3111 = vpop.f32.mrb[0].mxu0
    %v3112 = vadd.f32 %v3033, %v3111
    %v3113 = vpop.f32.mrb[0].mxu0
    %v3114 = vpop.f32.mrb[0].mxu0
    %v3115 = vadd.f32 %v3033, %v3114
    %v3116 = vpop.f32.mrb[0].mxu0
    %3117 = vmatprep.mubr.bf16.mxu0 0
    %3118 = vmatmul.mubr.bf16.gmra.mrb[0].mxu0 %v3054
    %v3119 = vpop.f32.mrb[0].mxu0
    %v3120 = vadd.f32 %v3033, %v3119
    %v3121 = vpop.f32.mrb[0].mxu0
    %v3122 = vpop.f32.mrb[0].mxu0
    %v3123 = vadd.f32 %v3033, %v3122
    %v3124 = vpop.f32.mrb[0].mxu0
    %3125 = vmatprep.mubr.bf16.mxu0 0
    %3126 = vmatmul.mubr.bf16.gmra.mrb[0].mxu0 %v3057
    %v3127 = vpop.f32.mrb[0].mxu0
    %v3128 = vadd.f32 %v3033, %v3127
    %v3129 = vpop.f32.mrb[0].mxu0
    %v3130 = vpop.f32.mrb[0].mxu0
    %v3131 = vadd.f32 %v3033, %v3130
    %v3132 = vpop.f32.mrb[0].mxu0
    %3133 = vmatprep.mubr.bf16.mxu0 0
    %3134 = vmatmul.mubr.bf16.gmra.mrb[0].mxu0 %v3060
    %v3135 = vpop.f32.mrb[0].mxu0
    %v3136 = vadd.f32 %v3033, %v3135
    %v3137 = vpop.f32.mrb[0].mxu0
    %v3138 = vpop.f32.mrb[0].mxu0
    %v3139 = vadd.f32 %v3033, %v3138
    %v3140 = vpop.f32.mrb[0].mxu0
    %3141 = vmatprep.mubr.bf16.mxu0 0
    %3142 = vmatmul.mubr.bf16.gmra.mrb[0].mxu0 %v3063
    %v3143 = vpop.f32.mrb[0].mxu0
    %v3144 = vadd.f32 %v3033, %v3143
    %v3145 = vpop.f32.mrb[0].mxu0
    %v3146 = vpop.f32.mrb[0].mxu0
    %v3147 = vadd.f32 %v3033, %v3146
    %v3148 = vpop.f32.mrb[0].mxu0
    %3149 = vmatprep.mubr.bf16.mxu0 0
    %3150 = vmatmul.mubr.bf16.gmra.mrb[0].mxu0 %v3066
    %v3151 = vpop.f32.mrb[0].mxu0
    %v3152 = vadd.f32 %v3033, %v3151
    %v3153 = vpop.f32.mrb[0].mxu0
    %v3154 = vpop.f32.mrb[0].mxu0
    %v3155 = vadd.f32 %v3033, %v3154
    %v3156 = vpop.f32.mrb[0].mxu0
    %3157 = vmatprep.mubr.bf16.mxu0 0
    %3158 = vmatmul.mubr.bf16.gmra.mrb[0].mxu0 %v3069
    %v3159 = vpop.f32.mrb[0].mxu0
    %v3160 = vadd.f32 %v3033, %v3159
    %v3161 = vpop.f32.mrb[0].mxu0
    %v3162 = vpop.f32.mrb[0].mxu0
    %v3163 = vadd.f32 %v3033, %v3162
    %v3164 = vpop.f32.mrb[0].mxu0
    %3165 = vmatprep.mubr.bf16.mxu0 0
    %3166 = vmatmul.mubr.bf16.gmra.mrb[0].mxu0 %v3072
    %v3167 = vpop.f32.mrb[0].mxu0
    %v3168 = vadd.f32 %v3033, %v3167
    %v3169 = vpop.f32.mrb[0].mxu0
    %v3170 = vpop.f32.mrb[0].mxu0
    %v3171 = vadd.f32 %v3033, %v3170
    %v3172 = vpop.f32.mrb[0].mxu0
    %3173 = vdwg.mxu0
    %v3174 = vmax.f32 %v3112, 0.0
    %v3175 = vmax.f32 %v3115, 0.0
    %v3176 = vmax.f32 %v3120, 0.0
    %v3177 = vmax.f32 %v3123, 0.0
    %v3178 = vmax.f32 %v3128, 0.0
    %v3179 = vmax.f32 %v3131, 0.0
    %v3180 = vmax.f32 %v3136, 0.0
    %v3181 = vmax.f32 %v3139, 0.0
    %v3182 = vmax.f32 %v3144, 0.0
    %v3183 = vmax.f32 %v3147, 0.0
    %v3184 = vmax.f32 %v3152, 0.0
    %v3185 = vmax.f32 %v3155, 0.0
    %v3186 = vmax.f32 %v3160, 0.0
    %v3187 = vmax.f32 %v3163, 0.0
    %v3188 = vmax.f32 %v3168, 0.0
    %v3189 = vmax.f32 %v3171, 0.0
    %v3190 = vmax.f32 %v3174, %v3176
    %v3191 = vmax.f32 %v3175, %v3177
    %v3192 = vmax.f32 %v3178, %v3180
    %v3193 = vmax.f32 %v3179, %v3181
    %v3194 = vmax.f32 %v3182, %v3184
    %v3195 = vmax.f32 %v3183, %v3185
    %v3196 = vmax.f32 %v3186, %v3188
    %v3197 = vmax.f32 %v3187, %v3189
    %s3198 = scalar_lea.vmem [#allocation4], 128
    %3199 = vst.msk [vmem:[%s3198] sm:$0xff] %vm2814, %v3190
    %3200 = vst.msk [vmem:[%s3198 + $0x8] sm:$0xff] %vm2814, %v3191
    %3201 = vst.msk [vmem:[%s3198 + $0x10] sm:$0xff] %vm2814, %v3192
    %3202 = vst.msk [vmem:[%s3198 + $0x18] sm:$0xff] %vm2814, %v3193
    %3203 = vst.msk [vmem:[%s3198 + $0x20] sm:$0xff] %vm2814, %v3194
    %3204 = vst.msk [vmem:[%s3198 + $0x28] sm:$0xff] %vm2814, %v3195
    %3205 = vst.msk [vmem:[%s3198 + $0x30] sm:$0xff] %vm2814, %v3196
    %3206 = vst.msk [vmem:[%s3198 + $0x38] sm:$0xff] %vm2814, %v3197
    %v3207 = vld [vmem:[#allocation3 + $0xc0] sm:$0xff]
    %v3208 = vld [vmem:[#allocation3 + $0xc8] sm:$0xff]
    %v3209 = vld [vmem:[#allocation3 + $0xd0] sm:$0xff]
    %v3210 = vld [vmem:[#allocation3 + $0xd8] sm:$0xff]
    %v3211 = vld [vmem:[#allocation3 + $0xe0] sm:$0xff]
    %v3212 = vld [vmem:[#allocation3 + $0xe8] sm:$0xff]
    %v3213 = vld [vmem:[#allocation3 + $0xf0] sm:$0xff]
    %v3214 = vld [vmem:[#allocation3 + $0xf8] sm:$0xff]
    %v3215 = vld [vmem:[%s1] sm:$0xf]
    %v3216 = vld [vmem:[%s1 + $0x4] sm:$0xf]
    %v3217 = vld [vmem:[%s1 + $0x8] sm:$0xf]
    %v3218 = vld [vmem:[%s1 + $0xc] sm:$0xf]
    %v3219 = vld [vmem:[%s1 + $0x10] sm:$0x3]
    %v3220 = vld [vmem:[%s2] sm:$0x1]
    %v3222 = vlaneseq
    %v3223 = vshrl.u32 %v3222, 7
    %v3224 = vsub.s32 0, %v3223
    %v3225 = vrot.slane %v3220, %v3224
    %v3232 = vunpack.c.l.b16 %v3215
    %v3233 = vunpack.c.l.b16 %v3216
    %v3234 = vunpack.c.l.b16 %v3217
    %v3235 = vunpack.c.l.b16 %v3218
    %v3236 = vunpack.c.l.b16 %v3219
    %v3237 = vpack.c.b16 %v3233, %v3232
    %v3238 = vpack.c.b16 %v3235, %v3234
    %v3239 = vpack.c.b16 %v3236, %v3236
    %v3243 = vsel %vm2664, %v3207, 0
    %v3246 = vsel %vm2664, %v3208, 0
    %v3249 = vsel %vm2664, %v3209, 0
    %v3252 = vsel %vm2664, %v3210, 0
    %v3255 = vsel %vm2664, %v3211, 0
    %v3258 = vsel %vm2664, %v3212, 0
    %v3261 = vsel %vm2664, %v3213, 0
    %v3264 = vsel %vm2664, %v3214, 0
    %v3267 = vsel %vm2689, %v3239, 0
    %3269 = vmatprep.subr.bf16.mxu0 0
    %3270 = vmatpush1.bf16.msra.mxu0 %v3237
    %3271 = vmatprep.subr.bf16.mxu0 0
    %3272 = vmatpush1.bf16.msra.mxu0 %v3238
    %3273 = vmatprep.subr.bf16.mxu0 0
    %3274 = vmatpush1.bf16.msra.mxu0 %v3267
    %3275 = vmatprep.subr.bf16.mxu0 0
    %3276 = vmatpush1.bf16.msra.mxu0 0
    %3277 = vmatprep.subr.bf16.mxu0 0
    %3278 = vmatpush1.bf16.msra.mxu0 0
    %3279 = vmatprep.subr.bf16.mxu0 0
    %3280 = vmatpush1.bf16.msra.mxu0 0
    %3281 = vmatprep.subr.bf16.mxu0 0
    %3282 = vmatpush1.bf16.msra.mxu0 0
    %3283 = vmatprep.subr.bf16.mxu0 0
    %3284 = vmatpush1.bf16.msra.mxu0 0
    %3285 = vmatprep.subr.bf16.mxu0 0
    %3286 = vmatpush1.bf16.msra.mxu0 0
    %3287 = vmatprep.subr.bf16.mxu0 0
    %3288 = vmatpush1.bf16.msra.mxu0 0
    %3289 = vmatprep.subr.bf16.mxu0 0
    %3290 = vmatpush1.bf16.msra.mxu0 0
    %3291 = vmatprep.subr.bf16.mxu0 0
    %3292 = vmatpush1.bf16.msra.mxu0 0
    %3293 = vmatprep.subr.bf16.mxu0 0
    %3294 = vmatpush1.bf16.msra.mxu0 0
    %3295 = vmatprep.subr.bf16.mxu0 0
    %3296 = vmatpush1.bf16.msra.mxu0 0
    %3297 = vmatprep.subr.bf16.mxu0 0
    %3298 = vmatpush1.bf16.msra.mxu0 0
    %3299 = vmatprep.subr.bf16.mxu0 0
    %3300 = vmatpush1.bf16.msra.mxu0 0
    %3301 = vmatprep.mubr.bf16.mxu0 0
    %3302 = vmatmul.mubr.bf16.gmra.mrb[0].mxu0 %v3243
    %v3303 = vpop.f32.mrb[0].mxu0
    %v3304 = vadd.f32 %v3225, %v3303
    %v3305 = vpop.f32.mrb[0].mxu0
    %v3306 = vpop.f32.mrb[0].mxu0
    %v3307 = vadd.f32 %v3225, %v3306
    %v3308 = vpop.f32.mrb[0].mxu0
    %3309 = vmatprep.mubr.bf16.mxu0 0
    %3310 = vmatmul.mubr.bf16.gmra.mrb[0].mxu0 %v3246
    %v3311 = vpop.f32.mrb[0].mxu0
    %v3312 = vadd.f32 %v3225, %v3311
    %v3313 = vpop.f32.mrb[0].mxu0
    %v3314 = vpop.f32.mrb[0].mxu0
    %v3315 = vadd.f32 %v3225, %v3314
    %v3316 = vpop.f32.mrb[0].mxu0
    %3317 = vmatprep.mubr.bf16.mxu0 0
    %3318 = vmatmul.mubr.bf16.gmra.mrb[0].mxu0 %v3249
    %v3319 = vpop.f32.mrb[0].mxu0
    %v3320 = vadd.f32 %v3225, %v3319
    %v3321 = vpop.f32.mrb[0].mxu0
    %v3322 = vpop.f32.mrb[0].mxu0
    %v3323 = vadd.f32 %v3225, %v3322
    %v3324 = vpop.f32.mrb[0].mxu0
    %3325 = vmatprep.mubr.bf16.mxu0 0
    %3326 = vmatmul.mubr.bf16.gmra.mrb[0].mxu0 %v3252
    %v3327 = vpop.f32.mrb[0].mxu0
    %v3328 = vadd.f32 %v3225, %v3327
    %v3329 = vpop.f32.mrb[0].mxu0
    %v3330 = vpop.f32.mrb[0].mxu0
    %v3331 = vadd.f32 %v3225, %v3330
    %v3332 = vpop.f32.mrb[0].mxu0
    %3333 = vmatprep.mubr.bf16.mxu0 0
    %3334 = vmatmul.mubr.bf16.gmra.mrb[0].mxu0 %v3255
    %v3335 = vpop.f32.mrb[0].mxu0
    %v3336 = vadd.f32 %v3225, %v3335
    %v3337 = vpop.f32.mrb[0].mxu0
    %v3338 = vpop.f32.mrb[0].mxu0
    %v3339 = vadd.f32 %v3225, %v3338
    %v3340 = vpop.f32.mrb[0].mxu0
    %3341 = vmatprep.mubr.bf16.mxu0 0
    %3342 = vmatmul.mubr.bf16.gmra.mrb[0].mxu0 %v3258
    %v3343 = vpop.f32.mrb[0].mxu0
    %v3344 = vadd.f32 %v3225, %v3343
    %v3345 = vpop.f32.mrb[0].mxu0
    %v3346 = vpop.f32.mrb[0].mxu0
    %v3347 = vadd.f32 %v3225, %v3346
    %v3348 = vpop.f32.mrb[0].mxu0
    %3349 = vmatprep.mubr.bf16.mxu0 0
    %3350 = vmatmul.mubr.bf16.gmra.mrb[0].mxu0 %v3261
    %v3351 = vpop.f32.mrb[0].mxu0
    %v3352 = vadd.f32 %v3225, %v3351
    %v3353 = vpop.f32.mrb[0].mxu0
    %v3354 = vpop.f32.mrb[0].mxu0
    %v3355 = vadd.f32 %v3225, %v3354
    %v3356 = vpop.f32.mrb[0].mxu0
    %3357 = vmatprep.mubr.bf16.mxu0 0
    %3358 = vmatmul.mubr.bf16.gmra.mrb[0].mxu0 %v3264
    %v3359 = vpop.f32.mrb[0].mxu0
    %v3360 = vadd.f32 %v3225, %v3359
    %v3361 = vpop.f32.mrb[0].mxu0
    %v3362 = vpop.f32.mrb[0].mxu0
    %v3363 = vadd.f32 %v3225, %v3362
    %v3364 = vpop.f32.mrb[0].mxu0
    %3365 = vdwg.mxu0
    %v3366 = vmax.f32 %v3304, 0.0
    %v3367 = vmax.f32 %v3307, 0.0
    %v3368 = vmax.f32 %v3312, 0.0
    %v3369 = vmax.f32 %v3315, 0.0
    %v3370 = vmax.f32 %v3320, 0.0
    %v3371 = vmax.f32 %v3323, 0.0
    %v3372 = vmax.f32 %v3328, 0.0
    %v3373 = vmax.f32 %v3331, 0.0
    %v3374 = vmax.f32 %v3336, 0.0
    %v3375 = vmax.f32 %v3339, 0.0
    %v3376 = vmax.f32 %v3344, 0.0
    %v3377 = vmax.f32 %v3347, 0.0
    %v3378 = vmax.f32 %v3352, 0.0
    %v3379 = vmax.f32 %v3355, 0.0
    %v3380 = vmax.f32 %v3360, 0.0
    %v3381 = vmax.f32 %v3363, 0.0
    %v3382 = vmax.f32 %v3366, %v3368
    %v3383 = vmax.f32 %v3367, %v3369
    %v3384 = vmax.f32 %v3370, %v3372
    %v3385 = vmax.f32 %v3371, %v3373
    %v3386 = vmax.f32 %v3374, %v3376
    %v3387 = vmax.f32 %v3375, %v3377
    %v3388 = vmax.f32 %v3378, %v3380
    %v3389 = vmax.f32 %v3379, %v3381
    %s3390 = scalar_lea.vmem [#allocation4], 192
    %3391 = vst.msk [vmem:[%s3390] sm:$0xff] %vm2814, %v3382
    %3392 = vst.msk [vmem:[%s3390 + $0x8] sm:$0xff] %vm2814, %v3383
    %3393 = vst.msk [vmem:[%s3390 + $0x10] sm:$0xff] %vm2814, %v3384
    %3394 = vst.msk [vmem:[%s3390 + $0x18] sm:$0xff] %vm2814, %v3385
    %3395 = vst.msk [vmem:[%s3390 + $0x20] sm:$0xff] %vm2814, %v3386
    %3396 = vst.msk [vmem:[%s3390 + $0x28] sm:$0xff] %vm2814, %v3387
    %3397 = vst.msk [vmem:[%s3390 + $0x30] sm:$0xff] %vm2814, %v3388
    %3398 = vst.msk [vmem:[%s3390 + $0x38] sm:$0xff] %vm2814, %v3389
    %v3399 = vld [vmem:[#allocation4] ss:$2 sm:$0xff]
    %s3400 = scalar_lea.vmem [#allocation4], 16
    %v3401 = vld [vmem:[%s3400] ss:$2 sm:$0xff]
    %s3402 = scalar_lea.vmem [#allocation4], 32
    %v3403 = vld [vmem:[%s3402] ss:$2 sm:$0xff]
    %s3404 = scalar_lea.vmem [#allocation4], 48
    %v3405 = vld [vmem:[%s3404] ss:$2 sm:$0xff]
    %s3406 = scalar_lea.vmem [#allocation4], 64
    %v3407 = vld [vmem:[%s3406] ss:$2 sm:$0xff]
    %s3408 = scalar_lea.vmem [#allocation4], 80
    %v3409 = vld [vmem:[%s3408] ss:$2 sm:$0xff]
    %s3410 = scalar_lea.vmem [#allocation4], 96
    %v3411 = vld [vmem:[%s3410] ss:$2 sm:$0xff]
    %s3412 = scalar_lea.vmem [#allocation4], 112
    %v3413 = vld [vmem:[%s3412] ss:$2 sm:$0xff]
    %s3414 = scalar_lea.vmem [#allocation4], 128
    %v3415 = vld [vmem:[%s3414] ss:$2 sm:$0xff]
    %s3416 = scalar_lea.vmem [#allocation4], 144
    %v3417 = vld [vmem:[%s3416] ss:$2 sm:$0xff]
    %s3418 = scalar_lea.vmem [#allocation4], 160
    %v3419 = vld [vmem:[%s3418] ss:$2 sm:$0xff]
    %s3420 = scalar_lea.vmem [#allocation4], 176
    %v3421 = vld [vmem:[%s3420] ss:$2 sm:$0xff]
    %s3422 = scalar_lea.vmem [#allocation4], 192
    %v3423 = vld [vmem:[%s3422] ss:$2 sm:$0xff]
    %s3424 = scalar_lea.vmem [#allocation4], 208
    %v3425 = vld [vmem:[%s3424] ss:$2 sm:$0xff]
    %s3426 = scalar_lea.vmem [#allocation4], 224
    %v3427 = vld [vmem:[%s3426] ss:$2 sm:$0xff]
    %s3428 = scalar_lea.vmem [#allocation4], 240
    %v3429 = vld [vmem:[%s3428] ss:$2 sm:$0xff]
    %s3430 = scalar_lea.vmem [#allocation4], 1
    %v3431 = vld [vmem:[%s3430] ss:$2 sm:$0xff]
    %s3432 = scalar_lea.vmem [#allocation4], 17
    %v3433 = vld [vmem:[%s3432] ss:$2 sm:$0xff]
    %s3434 = scalar_lea.vmem [#allocation4], 33
    %v3435 = vld [vmem:[%s3434] ss:$2 sm:$0xff]
    %s3436 = scalar_lea.vmem [#allocation4], 49
    %v3437 = vld [vmem:[%s3436] ss:$2 sm:$0xff]
    %s3438 = scalar_lea.vmem [#allocation4], 65
    %v3439 = vld [vmem:[%s3438] ss:$2 sm:$0xff]
    %s3440 = scalar_lea.vmem [#allocation4], 81
    %v3441 = vld [vmem:[%s3440] ss:$2 sm:$0xff]
    %s3442 = scalar_lea.vmem [#allocation4], 97
    %v3443 = vld [vmem:[%s3442] ss:$2 sm:$0xff]
    %s3444 = scalar_lea.vmem [#allocation4], 113
    %v3445 = vld [vmem:[%s3444] ss:$2 sm:$0xff]
    %s3446 = scalar_lea.vmem [#allocation4], 129
    %v3447 = vld [vmem:[%s3446] ss:$2 sm:$0xff]
    %s3448 = scalar_lea.vmem [#allocation4], 145
    %v3449 = vld [vmem:[%s3448] ss:$2 sm:$0xff]
    %s3450 = scalar_lea.vmem [#allocation4], 161
    %v3451 = vld [vmem:[%s3450] ss:$2 sm:$0xff]
    %s3452 = scalar_lea.vmem [#allocation4], 177
    %v3453 = vld [vmem:[%s3452] ss:$2 sm:$0xff]
    %s3454 = scalar_lea.vmem [#allocation4], 193
    %v3455 = vld [vmem:[%s3454] ss:$2 sm:$0xff]
    %s3456 = scalar_lea.vmem [#allocation4], 209
    %v3457 = vld [vmem:[%s3456] ss:$2 sm:$0xff]
    %s3458 = scalar_lea.vmem [#allocation4], 225
    %v3459 = vld [vmem:[%s3458] ss:$2 sm:$0xff]
    %s3460 = scalar_lea.vmem [#allocation4], 241
    %v3461 = vld [vmem:[%s3460] ss:$2 sm:$0xff]
    %v3462 = vmax.f32 %v3399, %v3431
    %v3463 = vmax.f32 %v3401, %v3433
    %v3464 = vmax.f32 %v3403, %v3435
    %v3465 = vmax.f32 %v3405, %v3437
    %v3466 = vmax.f32 %v3407, %v3439
    %v3467 = vmax.f32 %v3409, %v3441
    %v3468 = vmax.f32 %v3411, %v3443
    %v3469 = vmax.f32 %v3413, %v3445
    %v3470 = vmax.f32 %v3415, %v3447
    %v3471 = vmax.f32 %v3417, %v3449
    %v3472 = vmax.f32 %v3419, %v3451
    %v3473 = vmax.f32 %v3421, %v3453
    %v3474 = vmax.f32 %v3423, %v3455
    %v3475 = vmax.f32 %v3425, %v3457
    %v3476 = vmax.f32 %v3427, %v3459
    %v3477 = vmax.f32 %v3429, %v3461
    %3478 = vst.msk [vmem:[#allocation5] sm:$0xff] %vm2814, 0.0
    %3479 = vst.msk [vmem:[#allocation5 + $0x8] sm:$0xff] %vm2814, 0.0
    %3480 = vst.msk [vmem:[#allocation5 + $0x10] sm:$0xff] %vm2814, 0.0
    %3481 = vst.msk [vmem:[#allocation5 + $0xf0] sm:$0xff] %vm2814, 0.0
    %3482 = vst.msk [vmem:[#allocation5 + $0xf8] sm:$0xff] %vm2814, 0.0
    %3483 = vst.msk [vmem:[#allocation5 + $0x100] sm:$0xff] %vm2814, 0.0
    %s3484 = scalar_lea.vmem [#allocation5], 216
    %3485 = vst.msk [vmem:[%s3484] sm:$0xff] %vm2814, 0.0
    %3486 = vst.msk [vmem:[%s3484 + $0x8] sm:$0xff] %vm2814, 0.0
    %3487 = vst.msk [vmem:[%s3484 + $0x10] sm:$0xff] %vm2814, 0.0
    %3488 = vst.msk [vmem:[%s3484 + $0xf0] sm:$0xff] %vm2814, 0.0
    %3489 = vst.msk [vmem:[%s3484 + $0xf8] sm:$0xff] %vm2814, 0.0
    %3490 = vst.msk [vmem:[%s3484 + $0x100] sm:$0xff] %vm2814, 0.0
    %3491 = vst.msk [vmem:[#allocation5] sm:$0xff] %vm2814, 0.0
    %3492 = vst.msk [vmem:[#allocation5 + $0x18] sm:$0xff] %vm2814, 0.0
    %3493 = vst.msk [vmem:[#allocation5 + $0x30] sm:$0xff] %vm2814, 0.0
    %3494 = vst.msk [vmem:[#allocation5 + $0x48] sm:$0xff] %vm2814, 0.0
    %3495 = vst.msk [vmem:[#allocation5 + $0x60] sm:$0xff] %vm2814, 0.0
    %3496 = vst.msk [vmem:[#allocation5 + $0x78] sm:$0xff] %vm2814, 0.0
    %3497 = vst.msk [vmem:[#allocation5 + $0x90] sm:$0xff] %vm2814, 0.0
    %3498 = vst.msk [vmem:[#allocation5 + $0xa8] sm:$0xff] %vm2814, 0.0
    %3499 = vst.msk [vmem:[#allocation5 + $0xc0] sm:$0xff] %vm2814, 0.0
    %3500 = vst.msk [vmem:[#allocation5 + $0xd8] sm:$0xff] %vm2814, 0.0
    %3501 = vst.msk [vmem:[#allocation5 + $0xf0] sm:$0xff] %vm2814, 0.0
    %3502 = vst.msk [vmem:[#allocation5 + $0x108] sm:$0xff] %vm2814, 0.0
    %3503 = vst.msk [vmem:[#allocation5 + $0x120] sm:$0xff] %vm2814, 0.0
    %3504 = vst.msk [vmem:[#allocation5 + $0x138] sm:$0xff] %vm2814, 0.0
    %3505 = vst.msk [vmem:[#allocation5 + $0x150] sm:$0xff] %vm2814, 0.0
    %3506 = vst.msk [vmem:[#allocation5 + $0x168] sm:$0xff] %vm2814, 0.0
    %3507 = vst.msk [vmem:[#allocation5 + $0x180] sm:$0xff] %vm2814, 0.0
    %3508 = vst.msk [vmem:[#allocation5 + $0x198] sm:$0xff] %vm2814, 0.0
    %3509 = vst.msk [vmem:[#allocation5 + $0x1b0] sm:$0xff] %vm2814, 0.0
    %3510 = vst.msk [vmem:[#allocation5 + $0x1c8] sm:$0xff] %vm2814, 0.0
    %3511 = vst.msk [vmem:[#allocation5 + $0x10] sm:$0xff] %vm2814, 0.0
    %3512 = vst.msk [vmem:[#allocation5 + $0x28] sm:$0xff] %vm2814, 0.0
    %3513 = vst.msk [vmem:[#allocation5 + $0x40] sm:$0xff] %vm2814, 0.0
    %3514 = vst.msk [vmem:[#allocation5 + $0x58] sm:$0xff] %vm2814, 0.0
    %3515 = vst.msk [vmem:[#allocation5 + $0x70] sm:$0xff] %vm2814, 0.0
    %3516 = vst.msk [vmem:[#allocation5 + $0x88] sm:$0xff] %vm2814, 0.0
    %3517 = vst.msk [vmem:[#allocation5 + $0xa0] sm:$0xff] %vm2814, 0.0
    %3518 = vst.msk [vmem:[#allocation5 + $0xb8] sm:$0xff] %vm2814, 0.0
    %3519 = vst.msk [vmem:[#allocation5 + $0xd0] sm:$0xff] %vm2814, 0.0
    %3520 = vst.msk [vmem:[#allocation5 + $0xe8] sm:$0xff] %vm2814, 0.0
    %3521 = vst.msk [vmem:[#allocation5 + $0x100] sm:$0xff] %vm2814, 0.0
    %3522 = vst.msk [vmem:[#allocation5 + $0x118] sm:$0xff] %vm2814, 0.0
    %3523 = vst.msk [vmem:[#allocation5 + $0x130] sm:$0xff] %vm2814, 0.0
    %3524 = vst.msk [vmem:[#allocation5 + $0x148] sm:$0xff] %vm2814, 0.0
    %3525 = vst.msk [vmem:[#allocation5 + $0x160] sm:$0xff] %vm2814, 0.0
    %3526 = vst.msk [vmem:[#allocation5 + $0x178] sm:$0xff] %vm2814, 0.0
    %3527 = vst.msk [vmem:[#allocation5 + $0x190] sm:$0xff] %vm2814, 0.0
    %3528 = vst.msk [vmem:[#allocation5 + $0x1a8] sm:$0xff] %vm2814, 0.0
    %3529 = vst.msk [vmem:[#allocation5 + $0x1c0] sm:$0xff] %vm2814, 0.0
    %3530 = vst.msk [vmem:[#allocation5 + $0x1d8] sm:$0xff] %vm2814, 0.0
    %s3531 = scalar_lea.vmem [#allocation5], 24
    %3532 = vst.msk [vmem:[%s3531 + $0x8] sm:$0xff] %vm2814, %v3462
    %3533 = vst.msk [vmem:[%s3531 + $0x20] sm:$0xff] %vm2814, %v3463
    %3534 = vst.msk [vmem:[%s3531 + $0x38] sm:$0xff] %vm2814, %v3464
    %3535 = vst.msk [vmem:[%s3531 + $0x50] sm:$0xff] %vm2814, %v3465
    %3536 = vst.msk [vmem:[%s3531 + $0x68] sm:$0xff] %vm2814, %v3466
    %3537 = vst.msk [vmem:[%s3531 + $0x80] sm:$0xff] %vm2814, %v3467
    %3538 = vst.msk [vmem:[%s3531 + $0x98] sm:$0xff] %vm2814, %v3468
    %3539 = vst.msk [vmem:[%s3531 + $0xb0] sm:$0xff] %vm2814, %v3469
    %3540 = vst.msk [vmem:[%s3531 + $0xf8] sm:$0xff] %vm2814, %v3470
    %3541 = vst.msk [vmem:[%s3531 + $0x110] sm:$0xff] %vm2814, %v3471
    %3542 = vst.msk [vmem:[%s3531 + $0x128] sm:$0xff] %vm2814, %v3472
    %3543 = vst.msk [vmem:[%s3531 + $0x140] sm:$0xff] %vm2814, %v3473
    %3544 = vst.msk [vmem:[%s3531 + $0x158] sm:$0xff] %vm2814, %v3474
    %3545 = vst.msk [vmem:[%s3531 + $0x170] sm:$0xff] %vm2814, %v3475
    %3546 = vst.msk [vmem:[%s3531 + $0x188] sm:$0xff] %vm2814, %v3476
    %3547 = vst.msk [vmem:[%s3531 + $0x1a0] sm:$0xff] %vm2814, %v3477
    %v3548 = vld [vmem:[#allocation5 + $0x7] sm:$0xff]
    %v3549 = vld [vmem:[#allocation5 + $0x1f] sm:$0xff]
    %v3550 = vld [vmem:[#allocation5 + $0x37] sm:$0xff]
    %v3551 = vld [vmem:[#allocation5 + $0x4f] sm:$0xff]
    %v3552 = vld [vmem:[#allocation5 + $0x67] sm:$0xff]
    %v3553 = vld [vmem:[#allocation5 + $0x7f] sm:$0xff]
    %v3554 = vld [vmem:[#allocation5 + $0x97] sm:$0xff]
    %v3555 = vld [vmem:[#allocation5 + $0xaf] sm:$0xff]
    %v3556 = vld [vmem:[#allocation5 + $0xf7] sm:$0xff]
    %v3557 = vld [vmem:[#allocation5 + $0x10f] sm:$0xff]
    %v3558 = vld [vmem:[#allocation5 + $0x127] sm:$0xff]
    %v3559 = vld [vmem:[#allocation5 + $0x13f] sm:$0xff]
    %v3560 = vld [vmem:[#allocation5 + $0x157] sm:$0xff]
    %v3561 = vld [vmem:[#allocation5 + $0x16f] sm:$0xff]
    %v3562 = vld [vmem:[#allocation5 + $0x187] sm:$0xff]
    %v3563 = vld [vmem:[#allocation5 + $0x19f] sm:$0xff]
    %v3564 = vpack.c.bf16 %v3549, %v3548
    %v3565 = vpack.c.bf16 %v3551, %v3550
    %v3566 = vpack.c.bf16 %v3553, %v3552
    %v3567 = vpack.c.bf16 %v3555, %v3554
    %v3568 = vpack.c.bf16 %v3557, %v3556
    %v3569 = vpack.c.bf16 %v3559, %v3558
    %v3570 = vpack.c.bf16 %v3561, %v3560
    %v3571 = vpack.c.bf16 %v3563, %v3562
    %3572 = vst.msk [vmem:[#allocation6] sm:$0xff] %vm2814, %v3564
    %3573 = vst.msk [vmem:[#allocation6 + $0x18] sm:$0xff] %vm2814, %v3565
    %3574 = vst.msk [vmem:[#allocation6 + $0x30] sm:$0xff] %vm2814, %v3566
    %3575 = vst.msk [vmem:[#allocation6 + $0x48] sm:$0xff] %vm2814, %v3567
    %3576 = vst.msk [vmem:[#allocation6 + $0x60] sm:$0xff] %vm2814, %v3568
    %3577 = vst.msk [vmem:[#allocation6 + $0x78] sm:$0xff] %vm2814, %v3569
    %3578 = vst.msk [vmem:[#allocation6 + $0x90] sm:$0xff] %vm2814, %v3570
    %3579 = vst.msk [vmem:[#allocation6 + $0xa8] sm:$0xff] %vm2814, %v3571
    %v3580 = vld [vmem:[#allocation5 + $0x8] sm:$0xff]
    %v3581 = vld [vmem:[#allocation5 + $0x20] sm:$0xff]
    %v3582 = vld [vmem:[#allocation5 + $0x38] sm:$0xff]
    %v3583 = vld [vmem:[#allocation5 + $0x50] sm:$0xff]
    %v3584 = vld [vmem:[#allocation5 + $0x68] sm:$0xff]
    %v3585 = vld [vmem:[#allocation5 + $0x80] sm:$0xff]
    %v3586 = vld [vmem:[#allocation5 + $0x98] sm:$0xff]
    %v3587 = vld [vmem:[#allocation5 + $0xb0] sm:$0xff]
    %v3588 = vld [vmem:[#allocation5 + $0xf8] sm:$0xff]
    %v3589 = vld [vmem:[#allocation5 + $0x110] sm:$0xff]
    %v3590 = vld [vmem:[#allocation5 + $0x128] sm:$0xff]
    %v3591 = vld [vmem:[#allocation5 + $0x140] sm:$0xff]
    %v3592 = vld [vmem:[#allocation5 + $0x158] sm:$0xff]
    %v3593 = vld [vmem:[#allocation5 + $0x170] sm:$0xff]
    %v3594 = vld [vmem:[#allocation5 + $0x188] sm:$0xff]
    %v3595 = vld [vmem:[#allocation5 + $0x1a0] sm:$0xff]
    %v3596 = vpack.c.bf16 %v3581, %v3580
    %v3597 = vpack.c.bf16 %v3583, %v3582
    %v3598 = vpack.c.bf16 %v3585, %v3584
    %v3599 = vpack.c.bf16 %v3587, %v3586
    %v3600 = vpack.c.bf16 %v3589, %v3588
    %v3601 = vpack.c.bf16 %v3591, %v3590
    %v3602 = vpack.c.bf16 %v3593, %v3592
    %v3603 = vpack.c.bf16 %v3595, %v3594
    %3612 = vrot.lane.b32.xlu0 %v3596, 32
    %v3613 = vpop.permute.xlu0 %3612
    %3614 = vrot.lane.b32.xlu0 %v3597, 32
    %v3615 = vpop.permute.xlu0 %3614
    %3616 = vrot.lane.b32.xlu0 %v3598, 32
    %v3617 = vpop.permute.xlu0 %3616
    %3618 = vrot.lane.b32.xlu0 %v3599, 32
    %v3619 = vpop.permute.xlu0 %3618
    %3620 = vrot.lane.b32.xlu0 %v3600, 32
    %v3621 = vpop.permute.xlu0 %3620
    %3622 = vrot.lane.b32.xlu0 %v3601, 32
    %v3623 = vpop.permute.xlu0 %3622
    %3624 = vrot.lane.b32.xlu0 %v3602, 32
    %v3625 = vpop.permute.xlu0 %3624
    %3626 = vrot.lane.b32.xlu0 %v3603, 32
    %v3627 = vpop.permute.xlu0 %3626
    %vm3636 = vcmask 523520
    %3637 = vst.msk [vmem:[#allocation6] sm:$0xff] %vm3636, %v3613
    %3638 = vst.msk [vmem:[#allocation6 + $0x18] sm:$0xff] %vm3636, %v3615
    %3639 = vst.msk [vmem:[#allocation6 + $0x30] sm:$0xff] %vm3636, %v3617
    %3640 = vst.msk [vmem:[#allocation6 + $0x48] sm:$0xff] %vm3636, %v3619
    %3641 = vst.msk [vmem:[#allocation6 + $0x60] sm:$0xff] %vm3636, %v3621
    %3642 = vst.msk [vmem:[#allocation6 + $0x78] sm:$0xff] %vm3636, %v3623
    %3643 = vst.msk [vmem:[#allocation6 + $0x90] sm:$0xff] %vm3636, %v3625
    %3644 = vst.msk [vmem:[#allocation6 + $0xa8] sm:$0xff] %vm3636, %v3627
    %v3645 = vld [vmem:[#allocation5 + $0x9] sm:$0xff]
    %v3646 = vld [vmem:[#allocation5 + $0x21] sm:$0xff]
    %v3647 = vld [vmem:[#allocation5 + $0x39] sm:$0xff]
    %v3648 = vld [vmem:[#allocation5 + $0x51] sm:$0xff]
    %v3649 = vld [vmem:[#allocation5 + $0x69] sm:$0xff]
    %v3650 = vld [vmem:[#allocation5 + $0x81] sm:$0xff]
    %v3651 = vld [vmem:[#allocation5 + $0x99] sm:$0xff]
    %v3652 = vld [vmem:[#allocation5 + $0xb1] sm:$0xff]
    %v3653 = vld [vmem:[#allocation5 + $0xf9] sm:$0xff]
    %v3654 = vld [vmem:[#allocation5 + $0x111] sm:$0xff]
    %v3655 = vld [vmem:[#allocation5 + $0x129] sm:$0xff]
    %v3656 = vld [vmem:[#allocation5 + $0x141] sm:$0xff]
    %v3657 = vld [vmem:[#allocation5 + $0x159] sm:$0xff]
    %v3658 = vld [vmem:[#allocation5 + $0x171] sm:$0xff]
    %v3659 = vld [vmem:[#allocation5 + $0x189] sm:$0xff]
    %v3660 = vld [vmem:[#allocation5 + $0x1a1] sm:$0xff]
    %v3661 = vpack.c.bf16 %v3646, %v3645
    %v3662 = vpack.c.bf16 %v3648, %v3647
    %v3663 = vpack.c.bf16 %v3650, %v3649
    %v3664 = vpack.c.bf16 %v3652, %v3651
    %v3665 = vpack.c.bf16 %v3654, %v3653
    %v3666 = vpack.c.bf16 %v3656, %v3655
    %v3667 = vpack.c.bf16 %v3658, %v3657
    %v3668 = vpack.c.bf16 %v3660, %v3659
    %3677 = vrot.lane.b32.xlu0 %v3661, 64
    %v3678 = vpop.permute.xlu0 %3677
    %3679 = vrot.lane.b32.xlu0 %v3662, 64
    %v3680 = vpop.permute.xlu0 %3679
    %3681 = vrot.lane.b32.xlu0 %v3663, 64
    %v3682 = vpop.permute.xlu0 %3681
    %3683 = vrot.lane.b32.xlu0 %v3664, 64
    %v3684 = vpop.permute.xlu0 %3683
    %3685 = vrot.lane.b32.xlu0 %v3665, 64
    %v3686 = vpop.permute.xlu0 %3685
    %3687 = vrot.lane.b32.xlu0 %v3666, 64
    %v3688 = vpop.permute.xlu0 %3687
    %3689 = vrot.lane.b32.xlu0 %v3667, 64
    %v3690 = vpop.permute.xlu0 %3689
    %3691 = vrot.lane.b32.xlu0 %v3668, 64
    %v3692 = vpop.permute.xlu0 %3691
    %vm3701 = vcmask 785920
    %3702 = vst.msk [vmem:[#allocation6] sm:$0xff] %vm3701, %v3678
    %3703 = vst.msk [vmem:[#allocation6 + $0x18] sm:$0xff] %vm3701, %v3680
    %3704 = vst.msk [vmem:[#allocation6 + $0x30] sm:$0xff] %vm3701, %v3682
    %3705 = vst.msk [vmem:[#allocation6 + $0x48] sm:$0xff] %vm3701, %v3684
    %3706 = vst.msk [vmem:[#allocation6 + $0x60] sm:$0xff] %vm3701, %v3686
    %3707 = vst.msk [vmem:[#allocation6 + $0x78] sm:$0xff] %vm3701, %v3688
    %3708 = vst.msk [vmem:[#allocation6 + $0x90] sm:$0xff] %vm3701, %v3690
    %3709 = vst.msk [vmem:[#allocation6 + $0xa8] sm:$0xff] %vm3701, %v3692
    %v3710 = vld [vmem:[%s3531 + $0x7] sm:$0xff]
    %v3711 = vld [vmem:[%s3531 + $0x1f] sm:$0xff]
    %v3712 = vld [vmem:[%s3531 + $0x37] sm:$0xff]
    %v3713 = vld [vmem:[%s3531 + $0x4f] sm:$0xff]
    %v3714 = vld [vmem:[%s3531 + $0x67] sm:$0xff]
    %v3715 = vld [vmem:[%s3531 + $0x7f] sm:$0xff]
    %v3716 = vld [vmem:[%s3531 + $0x97] sm:$0xff]
    %v3717 = vld [vmem:[%s3531 + $0xaf] sm:$0xff]
    %v3718 = vld [vmem:[%s3531 + $0xf7] sm:$0xff]
    %v3719 = vld [vmem:[%s3531 + $0x10f] sm:$0xff]
    %v3720 = vld [vmem:[%s3531 + $0x127] sm:$0xff]
    %v3721 = vld [vmem:[%s3531 + $0x13f] sm:$0xff]
    %v3722 = vld [vmem:[%s3531 + $0x157] sm:$0xff]
    %v3723 = vld [vmem:[%s3531 + $0x16f] sm:$0xff]
    %v3724 = vld [vmem:[%s3531 + $0x187] sm:$0xff]
    %v3725 = vld [vmem:[%s3531 + $0x19f] sm:$0xff]
    %v3726 = vpack.c.bf16 %v3711, %v3710
    %v3727 = vpack.c.bf16 %v3713, %v3712
    %v3728 = vpack.c.bf16 %v3715, %v3714
    %v3729 = vpack.c.bf16 %v3717, %v3716
    %v3730 = vpack.c.bf16 %v3719, %v3718
    %v3731 = vpack.c.bf16 %v3721, %v3720
    %v3732 = vpack.c.bf16 %v3723, %v3722
    %v3733 = vpack.c.bf16 %v3725, %v3724
    %3742 = vrot.lane.b32.xlu0 %v3726, 96
    %v3743 = vpop.permute.xlu0 %3742
    %3744 = vrot.lane.b32.xlu0 %v3727, 96
    %v3745 = vpop.permute.xlu0 %3744
    %3746 = vrot.lane.b32.xlu0 %v3728, 96
    %v3747 = vpop.permute.xlu0 %3746
    %3748 = vrot.lane.b32.xlu0 %v3729, 96
    %v3749 = vpop.permute.xlu0 %3748
    %3750 = vrot.lane.b32.xlu0 %v3730, 96
    %v3751 = vpop.permute.xlu0 %3750
    %3752 = vrot.lane.b32.xlu0 %v3731, 96
    %v3753 = vpop.permute.xlu0 %3752
    %3754 = vrot.lane.b32.xlu0 %v3732, 96
    %v3755 = vpop.permute.xlu0 %3754
    %3756 = vrot.lane.b32.xlu0 %v3733, 96
    %v3757 = vpop.permute.xlu0 %3756
    %vm3766 = vcmask 1048320
    %3767 = vst.msk [vmem:[#allocation6] sm:$0xff] %vm3766, %v3743
    %3768 = vst.msk [vmem:[#allocation6 + $0x18] sm:$0xff] %vm3766, %v3745
    %3769 = vst.msk [vmem:[#allocation6 + $0x30] sm:$0xff] %vm3766, %v3747
    %3770 = vst.msk [vmem:[#allocation6 + $0x48] sm:$0xff] %vm3766, %v3749
    %3771 = vst.msk [vmem:[#allocation6 + $0x60] sm:$0xff] %vm3766, %v3751
    %3772 = vst.msk [vmem:[#allocation6 + $0x78] sm:$0xff] %vm3766, %v3753
    %3773 = vst.msk [vmem:[#allocation6 + $0x90] sm:$0xff] %vm3766, %v3755
    %3774 = vst.msk [vmem:[#allocation6 + $0xa8] sm:$0xff] %vm3766, %v3757
    %v3775 = vld [vmem:[%s3531 + $0x8] sm:$0xff]
    %v3776 = vld [vmem:[%s3531 + $0x20] sm:$0xff]
    %v3777 = vld [vmem:[%s3531 + $0x38] sm:$0xff]
    %v3778 = vld [vmem:[%s3531 + $0x50] sm:$0xff]
    %v3779 = vld [vmem:[%s3531 + $0x68] sm:$0xff]
    %v3780 = vld [vmem:[%s3531 + $0x80] sm:$0xff]
    %v3781 = vld [vmem:[%s3531 + $0x98] sm:$0xff]
    %v3782 = vld [vmem:[%s3531 + $0xb0] sm:$0xff]
    %v3783 = vld [vmem:[%s3531 + $0xf8] sm:$0xff]
    %v3784 = vld [vmem:[%s3531 + $0x110] sm:$0xff]
    %v3785 = vld [vmem:[%s3531 + $0x128] sm:$0xff]
    %v3786 = vld [vmem:[%s3531 + $0x140] sm:$0xff]
    %v3787 = vld [vmem:[%s3531 + $0x158] sm:$0xff]
    %v3788 = vld [vmem:[%s3531 + $0x170] sm:$0xff]
    %v3789 = vld [vmem:[%s3531 + $0x188] sm:$0xff]
    %v3790 = vld [vmem:[%s3531 + $0x1a0] sm:$0xff]
    %v3791 = vpack.c.bf16 %v3776, %v3775
    %v3792 = vpack.c.bf16 %v3778, %v3777
    %v3793 = vpack.c.bf16 %v3780, %v3779
    %v3794 = vpack.c.bf16 %v3782, %v3781
    %v3795 = vpack.c.bf16 %v3784, %v3783
    %v3796 = vpack.c.bf16 %v3786, %v3785
    %v3797 = vpack.c.bf16 %v3788, %v3787
    %v3798 = vpack.c.bf16 %v3790, %v3789
    %3799 = vst.msk [vmem:[#allocation6 + $0x8] sm:$0xff] %vm2814, %v3791
    %3800 = vst.msk [vmem:[#allocation6 + $0x20] sm:$0xff] %vm2814, %v3792
    %3801 = vst.msk [vmem:[#allocation6 + $0x38] sm:$0xff] %vm2814, %v3793
    %3802 = vst.msk [vmem:[#allocation6 + $0x50] sm:$0xff] %vm2814, %v3794
    %3803 = vst.msk [vmem:[#allocation6 + $0x68] sm:$0xff] %vm2814, %v3795
    %3804 = vst.msk [vmem:[#allocation6 + $0x80] sm:$0xff] %vm2814, %v3796
    %3805 = vst.msk [vmem:[#allocation6 + $0x98] sm:$0xff] %vm2814, %v3797
    %3806 = vst.msk [vmem:[#allocation6 + $0xb0] sm:$0xff] %vm2814, %v3798
    %v3807 = vld [vmem:[%s3531 + $0x9] sm:$0xff]
    %v3808 = vld [vmem:[%s3531 + $0x21] sm:$0xff]
    %v3809 = vld [vmem:[%s3531 + $0x39] sm:$0xff]
    %v3810 = vld [vmem:[%s3531 + $0x51] sm:$0xff]
    %v3811 = vld [vmem:[%s3531 + $0x69] sm:$0xff]
    %v3812 = vld [vmem:[%s3531 + $0x81] sm:$0xff]
    %v3813 = vld [vmem:[%s3531 + $0x99] sm:$0xff]
    %v3814 = vld [vmem:[%s3531 + $0xb1] sm:$0xff]
    %v3815 = vld [vmem:[%s3531 + $0xf9] sm:$0xff]
    %v3816 = vld [vmem:[%s3531 + $0x111] sm:$0xff]
    %v3817 = vld [vmem:[%s3531 + $0x129] sm:$0xff]
    %v3818 = vld [vmem:[%s3531 + $0x141] sm:$0xff]
    %v3819 = vld [vmem:[%s3531 + $0x159] sm:$0xff]
    %v3820 = vld [vmem:[%s3531 + $0x171] sm:$0xff]
    %v3821 = vld [vmem:[%s3531 + $0x189] sm:$0xff]
    %v3822 = vld [vmem:[%s3531 + $0x1a1] sm:$0xff]
    %v3823 = vpack.c.bf16 %v3808, %v3807
    %v3824 = vpack.c.bf16 %v3810, %v3809
    %v3825 = vpack.c.bf16 %v3812, %v3811
    %v3826 = vpack.c.bf16 %v3814, %v3813
    %v3827 = vpack.c.bf16 %v3816, %v3815
    %v3828 = vpack.c.bf16 %v3818, %v3817
    %v3829 = vpack.c.bf16 %v3820, %v3819
    %v3830 = vpack.c.bf16 %v3822, %v3821
    %3839 = vrot.lane.b32.xlu0 %v3823, 32
    %v3840 = vpop.permute.xlu0 %3839
    %3841 = vrot.lane.b32.xlu0 %v3824, 32
    %v3842 = vpop.permute.xlu0 %3841
    %3843 = vrot.lane.b32.xlu0 %v3825, 32
    %v3844 = vpop.permute.xlu0 %3843
    %3845 = vrot.lane.b32.xlu0 %v3826, 32
    %v3846 = vpop.permute.xlu0 %3845
    %3847 = vrot.lane.b32.xlu0 %v3827, 32
    %v3848 = vpop.permute.xlu0 %3847
    %3849 = vrot.lane.b32.xlu0 %v3828, 32
    %v3850 = vpop.permute.xlu0 %3849
    %3851 = vrot.lane.b32.xlu0 %v3829, 32
    %v3852 = vpop.permute.xlu0 %3851
    %3853 = vrot.lane.b32.xlu0 %v3830, 32
    %v3854 = vpop.permute.xlu0 %3853
    %3863 = vst.msk [vmem:[#allocation6 + $0x8] sm:$0xff] %vm3636, %v3840
    %3864 = vst.msk [vmem:[#allocation6 + $0x20] sm:$0xff] %vm3636, %v3842
    %3865 = vst.msk [vmem:[#allocation6 + $0x38] sm:$0xff] %vm3636, %v3844
    %3866 = vst.msk [vmem:[#allocation6 + $0x50] sm:$0xff] %vm3636, %v3846
    %3867 = vst.msk [vmem:[#allocation6 + $0x68] sm:$0xff] %vm3636, %v3848
    %3868 = vst.msk [vmem:[#allocation6 + $0x80] sm:$0xff] %vm3636, %v3850
    %3869 = vst.msk [vmem:[#allocation6 + $0x98] sm:$0xff] %vm3636, %v3852
    %3870 = vst.msk [vmem:[#allocation6 + $0xb0] sm:$0xff] %vm3636, %v3854
    %s3871 = scalar_lea.vmem [#allocation5], 48
    %v3872 = vld [vmem:[%s3871 + $0x7] sm:$0xff]
    %v3873 = vld [vmem:[%s3871 + $0x1f] sm:$0xff]
    %v3874 = vld [vmem:[%s3871 + $0x37] sm:$0xff]
    %v3875 = vld [vmem:[%s3871 + $0x4f] sm:$0xff]
    %v3876 = vld [vmem:[%s3871 + $0x67] sm:$0xff]
    %v3877 = vld [vmem:[%s3871 + $0x7f] sm:$0xff]
    %v3878 = vld [vmem:[%s3871 + $0x97] sm:$0xff]
    %v3879 = vld [vmem:[%s3871 + $0xaf] sm:$0xff]
    %v3880 = vld [vmem:[%s3871 + $0xf7] sm:$0xff]
    %v3881 = vld [vmem:[%s3871 + $0x10f] sm:$0xff]
    %v3882 = vld [vmem:[%s3871 + $0x127] sm:$0xff]
    %v3883 = vld [vmem:[%s3871 + $0x13f] sm:$0xff]
    %v3884 = vld [vmem:[%s3871 + $0x157] sm:$0xff]
    %v3885 = vld [vmem:[%s3871 + $0x16f] sm:$0xff]
    %v3886 = vld [vmem:[%s3871 + $0x187] sm:$0xff]
    %v3887 = vld [vmem:[%s3871 + $0x19f] sm:$0xff]
    %v3888 = vpack.c.bf16 %v3873, %v3872
    %v3889 = vpack.c.bf16 %v3875, %v3874
    %v3890 = vpack.c.bf16 %v3877, %v3876
    %v3891 = vpack.c.bf16 %v3879, %v3878
    %v3892 = vpack.c.bf16 %v3881, %v3880
    %v3893 = vpack.c.bf16 %v3883, %v3882
    %v3894 = vpack.c.bf16 %v3885, %v3884
    %v3895 = vpack.c.bf16 %v3887, %v3886
    %3904 = vrot.lane.b32.xlu0 %v3888, 64
    %v3905 = vpop.permute.xlu0 %3904
    %3906 = vrot.lane.b32.xlu0 %v3889, 64
    %v3907 = vpop.permute.xlu0 %3906
    %3908 = vrot.lane.b32.xlu0 %v3890, 64
    %v3909 = vpop.permute.xlu0 %3908
    %3910 = vrot.lane.b32.xlu0 %v3891, 64
    %v3911 = vpop.permute.xlu0 %3910
    %3912 = vrot.lane.b32.xlu0 %v3892, 64
    %v3913 = vpop.permute.xlu0 %3912
    %3914 = vrot.lane.b32.xlu0 %v3893, 64
    %v3915 = vpop.permute.xlu0 %3914
    %3916 = vrot.lane.b32.xlu0 %v3894, 64
    %v3917 = vpop.permute.xlu0 %3916
    %3918 = vrot.lane.b32.xlu0 %v3895, 64
    %v3919 = vpop.permute.xlu0 %3918
    %3928 = vst.msk [vmem:[#allocation6 + $0x8] sm:$0xff] %vm3701, %v3905
    %3929 = vst.msk [vmem:[#allocation6 + $0x20] sm:$0xff] %vm3701, %v3907
    %3930 = vst.msk [vmem:[#allocation6 + $0x38] sm:$0xff] %vm3701, %v3909
    %3931 = vst.msk [vmem:[#allocation6 + $0x50] sm:$0xff] %vm3701, %v3911
    %3932 = vst.msk [vmem:[#allocation6 + $0x68] sm:$0xff] %vm3701, %v3913
    %3933 = vst.msk [vmem:[#allocation6 + $0x80] sm:$0xff] %vm3701, %v3915
    %3934 = vst.msk [vmem:[#allocation6 + $0x98] sm:$0xff] %vm3701, %v3917
    %3935 = vst.msk [vmem:[#allocation6 + $0xb0] sm:$0xff] %vm3701, %v3919
    %v3936 = vld [vmem:[%s3871 + $0x8] sm:$0xff]
    %v3937 = vld [vmem:[%s3871 + $0x20] sm:$0xff]
    %v3938 = vld [vmem:[%s3871 + $0x38] sm:$0xff]
    %v3939 = vld [vmem:[%s3871 + $0x50] sm:$0xff]
    %v3940 = vld [vmem:[%s3871 + $0x68] sm:$0xff]
    %v3941 = vld [vmem:[%s3871 + $0x80] sm:$0xff]
    %v3942 = vld [vmem:[%s3871 + $0x98] sm:$0xff]
    %v3943 = vld [vmem:[%s3871 + $0xb0] sm:$0xff]
    %v3944 = vld [vmem:[%s3871 + $0xf8] sm:$0xff]
    %v3945 = vld [vmem:[%s3871 + $0x110] sm:$0xff]
    %v3946 = vld [vmem:[%s3871 + $0x128] sm:$0xff]
    %v3947 = vld [vmem:[%s3871 + $0x140] sm:$0xff]
    %v3948 = vld [vmem:[%s3871 + $0x158] sm:$0xff]
    %v3949 = vld [vmem:[%s3871 + $0x170] sm:$0xff]
    %v3950 = vld [vmem:[%s3871 + $0x188] sm:$0xff]
    %v3951 = vld [vmem:[%s3871 + $0x1a0] sm:$0xff]
    %v3952 = vpack.c.bf16 %v3937, %v3936
    %v3953 = vpack.c.bf16 %v3939, %v3938
    %v3954 = vpack.c.bf16 %v3941, %v3940
    %v3955 = vpack.c.bf16 %v3943, %v3942
    %v3956 = vpack.c.bf16 %v3945, %v3944
    %v3957 = vpack.c.bf16 %v3947, %v3946
    %v3958 = vpack.c.bf16 %v3949, %v3948
    %v3959 = vpack.c.bf16 %v3951, %v3950
    %3968 = vrot.lane.b32.xlu0 %v3952, 96
    %v3969 = vpop.permute.xlu0 %3968
    %3970 = vrot.lane.b32.xlu0 %v3953, 96
    %v3971 = vpop.permute.xlu0 %3970
    %3972 = vrot.lane.b32.xlu0 %v3954, 96
    %v3973 = vpop.permute.xlu0 %3972
    %3974 = vrot.lane.b32.xlu0 %v3955, 96
    %v3975 = vpop.permute.xlu0 %3974
    %3976 = vrot.lane.b32.xlu0 %v3956, 96
    %v3977 = vpop.permute.xlu0 %3976
    %3978 = vrot.lane.b32.xlu0 %v3957, 96
    %v3979 = vpop.permute.xlu0 %3978
    %3980 = vrot.lane.b32.xlu0 %v3958, 96
    %v3981 = vpop.permute.xlu0 %3980
    %3982 = vrot.lane.b32.xlu0 %v3959, 96
    %v3983 = vpop.permute.xlu0 %3982
    %3992 = vst.msk [vmem:[#allocation6 + $0x8] sm:$0xff] %vm3766, %v3969
    %3993 = vst.msk [vmem:[#allocation6 + $0x20] sm:$0xff] %vm3766, %v3971
    %3994 = vst.msk [vmem:[#allocation6 + $0x38] sm:$0xff] %vm3766, %v3973
    %3995 = vst.msk [vmem:[#allocation6 + $0x50] sm:$0xff] %vm3766, %v3975
    %3996 = vst.msk [vmem:[#allocation6 + $0x68] sm:$0xff] %vm3766, %v3977
    %3997 = vst.msk [vmem:[#allocation6 + $0x80] sm:$0xff] %vm3766, %v3979
    %3998 = vst.msk [vmem:[#allocation6 + $0x98] sm:$0xff] %vm3766, %v3981
    %3999 = vst.msk [vmem:[#allocation6 + $0xb0] sm:$0xff] %vm3766, %v3983
    %v4000 = vld [vmem:[%s3871 + $0x9] sm:$0xff]
    %v4001 = vld [vmem:[%s3871 + $0x21] sm:$0xff]
    %v4002 = vld [vmem:[%s3871 + $0x39] sm:$0xff]
    %v4003 = vld [vmem:[%s3871 + $0x51] sm:$0xff]
    %v4004 = vld [vmem:[%s3871 + $0x69] sm:$0xff]
    %v4005 = vld [vmem:[%s3871 + $0x81] sm:$0xff]
    %v4006 = vld [vmem:[%s3871 + $0x99] sm:$0xff]
    %v4007 = vld [vmem:[%s3871 + $0xb1] sm:$0xff]
    %v4008 = vld [vmem:[%s3871 + $0xf9] sm:$0xff]
    %v4009 = vld [vmem:[%s3871 + $0x111] sm:$0xff]
    %v4010 = vld [vmem:[%s3871 + $0x129] sm:$0xff]
    %v4011 = vld [vmem:[%s3871 + $0x141] sm:$0xff]
    %v4012 = vld [vmem:[%s3871 + $0x159] sm:$0xff]
    %v4013 = vld [vmem:[%s3871 + $0x171] sm:$0xff]
    %v4014 = vld [vmem:[%s3871 + $0x189] sm:$0xff]
    %v4015 = vld [vmem:[%s3871 + $0x1a1] sm:$0xff]
    %v4016 = vpack.c.bf16 %v4001, %v4000
    %v4017 = vpack.c.bf16 %v4003, %v4002
    %v4018 = vpack.c.bf16 %v4005, %v4004
    %v4019 = vpack.c.bf16 %v4007, %v4006
    %v4020 = vpack.c.bf16 %v4009, %v4008
    %v4021 = vpack.c.bf16 %v4011, %v4010
    %v4022 = vpack.c.bf16 %v4013, %v4012
    %v4023 = vpack.c.bf16 %v4015, %v4014
    %4024 = vst.msk [vmem:[#allocation6 + $0x10] sm:$0xff] %vm2814, %v4016
    %4025 = vst.msk [vmem:[#allocation6 + $0x28] sm:$0xff] %vm2814, %v4017
    %4026 = vst.msk [vmem:[#allocation6 + $0x40] sm:$0xff] %vm2814, %v4018
    %4027 = vst.msk [vmem:[#allocation6 + $0x58] sm:$0xff] %vm2814, %v4019
    %4028 = vst.msk [vmem:[#allocation6 + $0x70] sm:$0xff] %vm2814, %v4020
    %4029 = vst.msk [vmem:[#allocation6 + $0x88] sm:$0xff] %vm2814, %v4021
    %4030 = vst.msk [vmem:[#allocation6 + $0xa0] sm:$0xff] %vm2814, %v4022
    %4031 = vst.msk [vmem:[#allocation6 + $0xb8] sm:$0xff] %vm2814, %v4023
    %v4032 = vld [vmem:[#allocation6] sm:$0xff]
    %v4033 = vld [vmem:[#allocation6 + $0x8] sm:$0xff]
    %v4034 = vld [vmem:[#allocation6 + $0x10] sm:$0xff]
    %v4035 = vld [vmem:[#allocation6 + $0x18] sm:$0xff]
    %v4036 = vld [vmem:[#allocation6 + $0x20] sm:$0xff]
    %v4037 = vld [vmem:[#allocation6 + $0x28] sm:$0xff]
    %v4038 = vld [vmem:[#allocation6 + $0x30] sm:$0xff]
    %v4039 = vld [vmem:[#allocation6 + $0x38] sm:$0xff]
    %v4040 = vld [vmem:[#allocation6 + $0x40] sm:$0xff]
    %v4041 = vld [vmem:[#allocation6 + $0x48] sm:$0xff]
    %v4042 = vld [vmem:[#allocation6 + $0x50] sm:$0xff]
    %v4043 = vld [vmem:[#allocation6 + $0x58] sm:$0xff]
    %v4044 = vld [vmem:[#allocation6 + $0x60] sm:$0xff]
    %v4045 = vld [vmem:[#allocation6 + $0x68] sm:$0xff]
    %v4046 = vld [vmem:[#allocation6 + $0x70] sm:$0xff]
    %v4047 = vld [vmem:[#allocation6 + $0x78] sm:$0xff]
    %v4048 = vld [vmem:[#allocation6 + $0x80] sm:$0xff]
    %v4049 = vld [vmem:[#allocation6 + $0x88] sm:$0xff]
    %v4050 = vld [vmem:[#allocation6 + $0x90] sm:$0xff]
    %v4051 = vld [vmem:[#allocation6 + $0x98] sm:$0xff]
    %v4052 = vld [vmem:[#allocation6 + $0xa0] sm:$0xff]
    %v4053 = vld [vmem:[#allocation6 + $0xa8] sm:$0xff]
    %v4054 = vld [vmem:[#allocation6 + $0xb0] sm:$0xff]
    %v4055 = vld [vmem:[#allocation6 + $0xb8] sm:$0xff]
    %v4056 = vld [vmem:[%s3] sm:$0xf]
    %v4057 = vld [vmem:[%s3 + $0x4] sm:$0xf]
    %v4058 = vld [vmem:[%s3 + $0x8] sm:$0xf]
    %v4059 = vld [vmem:[%s3 + $0xc] sm:$0xf]
    %v4060 = vld [vmem:[%s3 + $0x10] sm:$0xf]
    %v4061 = vld [vmem:[%s3 + $0x14] sm:$0xf]
    %v4062 = vld [vmem:[%s3 + $0x18] sm:$0xf]
    %v4063 = vld [vmem:[%s3 + $0x1c] sm:$0xf]
    %v4064 = vld [vmem:[%s3 + $0x20] sm:$0xf]
    %v4065 = vld [vmem:[%s3 + $0x24] sm:$0xf]
    %v4066 = vld [vmem:[%s3 + $0x28] sm:$0xf]
    %v4067 = vld [vmem:[%s3 + $0x2c] sm:$0xf]
    %v4068 = vld [vmem:[%s3 + $0x30] sm:$0xf]
    %v4069 = vld [vmem:[%s3 + $0x34] sm:$0xf]
    %v4070 = vld [vmem:[%s3 + $0x38] sm:$0xf]
    %v4071 = vld [vmem:[%s3 + $0x3c] sm:$0xf]
    %v4072 = vld [vmem:[%s3 + $0x40] sm:$0xf]
    %v4073 = vld [vmem:[%s3 + $0x44] sm:$0xf]
    %v4074 = vld [vmem:[%s3 + $0x48] sm:$0xf]
    %v4075 = vld [vmem:[%s3 + $0x4c] sm:$0xf]
    %v4076 = vld [vmem:[%s3 + $0x50] sm:$0xf]
    %v4077 = vld [vmem:[%s3 + $0x54] sm:$0xf]
    %v4078 = vld [vmem:[%s3 + $0x58] sm:$0xf]
    %v4079 = vld [vmem:[%s3 + $0x5c] sm:$0xf]
    %v4080 = vld [vmem:[%s3 + $0x60] sm:$0xf]
    %v4081 = vld [vmem:[%s3 + $0x64] sm:$0xf]
    %v4082 = vld [vmem:[%s3 + $0x68] sm:$0xf]
    %v4083 = vld [vmem:[%s3 + $0x6c] sm:$0xf]
    %v4084 = vld [vmem:[%s3 + $0x70] sm:$0xf]
    %v4085 = vld [vmem:[%s3 + $0x74] sm:$0xf]
    %v4086 = vld [vmem:[%s3 + $0x78] sm:$0xf]
    %v4087 = vld [vmem:[%s3 + $0x7c] sm:$0xf]
    %v4088 = vld [vmem:[%s3 + $0x80] sm:$0xf]
    %v4089 = vld [vmem:[%s3 + $0x84] sm:$0xf]
    %v4090 = vld [vmem:[%s3 + $0x88] sm:$0xf]
    %v4091 = vld [vmem:[%s3 + $0x8c] sm:$0xf]
    %v4092 = vld [vmem:[%s4] sm:$0x1]
    %v4094 = vlaneseq
    %v4095 = vshrl.u32 %v4094, 7
    %v4096 = vsub.s32 0, %v4095
    %v4097 = vrot.slane %v4092, %v4096
    %v4135 = vunpack.c.l.b16 %v4056
    %v4136 = vunpack.c.l.b16 %v4057
    %v4137 = vunpack.c.l.b16 %v4058
    %v4138 = vunpack.c.l.b16 %v4059
    %v4139 = vunpack.c.l.b16 %v4060
    %v4140 = vunpack.c.l.b16 %v4061
    %v4141 = vunpack.c.l.b16 %v4062
    %v4142 = vunpack.c.l.b16 %v4063
    %v4143 = vunpack.c.l.b16 %v4064
    %v4144 = vunpack.c.l.b16 %v4065
    %v4145 = vunpack.c.l.b16 %v4066
    %v4146 = vunpack.c.l.b16 %v4067
    %v4147 = vunpack.c.l.b16 %v4068
    %v4148 = vunpack.c.l.b16 %v4069
    %v4149 = vunpack.c.l.b16 %v4070
    %v4150 = vunpack.c.l.b16 %v4071
    %v4151 = vunpack.c.l.b16 %v4072
    %v4152 = vunpack.c.l.b16 %v4073
    %v4153 = vunpack.c.l.b16 %v4074
    %v4154 = vunpack.c.l.b16 %v4075
    %v4155 = vunpack.c.l.b16 %v4076
    %v4156 = vunpack.c.l.b16 %v4077
    %v4157 = vunpack.c.l.b16 %v4078
    %v4158 = vunpack.c.l.b16 %v4079
    %v4159 = vunpack.c.l.b16 %v4080
    %v4160 = vunpack.c.l.b16 %v4081
    %v4161 = vunpack.c.l.b16 %v4082
    %v4162 = vunpack.c.l.b16 %v4083
    %v4163 = vunpack.c.l.b16 %v4084
    %v4164 = vunpack.c.l.b16 %v4085
    %v4165 = vunpack.c.l.b16 %v4086
    %v4166 = vunpack.c.l.b16 %v4087
    %v4167 = vunpack.c.l.b16 %v4088
    %v4168 = vunpack.c.l.b16 %v4089
    %v4169 = vunpack.c.l.b16 %v4090
    %v4170 = vunpack.c.l.b16 %v4091
    %v4171 = vpack.c.b16 %v4136, %v4135
    %v4172 = vpack.c.b16 %v4138, %v4137
    %v4173 = vpack.c.b16 %v4140, %v4139
    %v4174 = vpack.c.b16 %v4142, %v4141
    %v4175 = vpack.c.b16 %v4144, %v4143
    %v4176 = vpack.c.b16 %v4146, %v4145
    %v4177 = vpack.c.b16 %v4148, %v4147
    %v4178 = vpack.c.b16 %v4150, %v4149
    %v4179 = vpack.c.b16 %v4152, %v4151
    %v4180 = vpack.c.b16 %v4154, %v4153
    %v4181 = vpack.c.b16 %v4156, %v4155
    %v4182 = vpack.c.b16 %v4158, %v4157
    %v4183 = vpack.c.b16 %v4160, %v4159
    %v4184 = vpack.c.b16 %v4162, %v4161
    %v4185 = vpack.c.b16 %v4164, %v4163
    %v4186 = vpack.c.b16 %v4166, %v4165
    %v4187 = vpack.c.b16 %v4168, %v4167
    %v4188 = vpack.c.b16 %v4170, %v4169
    %v4208 = vsel %vm2814, %v4034, 0
    %v4211 = vsel %vm2814, %v4037, 0
    %v4214 = vsel %vm2814, %v4040, 0
    %v4217 = vsel %vm2814, %v4043, 0
    %v4220 = vsel %vm2814, %v4046, 0
    %v4223 = vsel %vm2814, %v4049, 0
    %v4226 = vsel %vm2814, %v4052, 0
    %v4229 = vsel %vm2814, %v4055, 0
    %4231 = vmatprep.subr.bf16.mxu0 0
    %4232 = vmatpush1.bf16.msra.mxu0 %v4171
    %4233 = vmatprep.subr.bf16.mxu0 0
    %4234 = vmatpush1.bf16.msra.mxu0 %v4172
    %4235 = vmatprep.subr.bf16.mxu0 0
    %4236 = vmatpush1.bf16.msra.mxu0 %v4173
    %4237 = vmatprep.subr.bf16.mxu0 0
    %4238 = vmatpush1.bf16.msra.mxu0 %v4174
    %4239 = vmatprep.subr.bf16.mxu0 0
    %4240 = vmatpush1.bf16.msra.mxu0 %v4175
    %4241 = vmatprep.subr.bf16.mxu0 0
    %4242 = vmatpush1.bf16.msra.mxu0 %v4176
    %4243 = vmatprep.subr.bf16.mxu0 0
    %4244 = vmatpush1.bf16.msra.mxu0 %v4177
    %4245 = vmatprep.subr.bf16.mxu0 0
    %4246 = vmatpush1.bf16.msra.mxu0 %v4178
    %4247 = vmatprep.subr.bf16.mxu0 0
    %4248 = vmatpush1.bf16.msra.mxu0 %v4179
    %4249 = vmatprep.subr.bf16.mxu0 0
    %4250 = vmatpush1.bf16.msra.mxu0 %v4180
    %4251 = vmatprep.subr.bf16.mxu0 0
    %4252 = vmatpush1.bf16.msra.mxu0 %v4181
    %4253 = vmatprep.subr.bf16.mxu0 0
    %4254 = vmatpush1.bf16.msra.mxu0 %v4182
    %4255 = vmatprep.subr.bf16.mxu0 0
    %4256 = vmatpush1.bf16.msra.mxu0 %v4183
    %4257 = vmatprep.subr.bf16.mxu0 0
    %4258 = vmatpush1.bf16.msra.mxu0 %v4184
    %4259 = vmatprep.subr.bf16.mxu0 0
    %4260 = vmatpush1.bf16.msra.mxu0 %v4185
    %4261 = vmatprep.subr.bf16.mxu0 0
    %4262 = vmatpush1.bf16.msra.mxu0 %v4186
    %4263 = vmatprep.mubr.bf16.mxu0 %v4033
    %4264 = vmatmul.mubr.bf16.gmra.mrb[0].mxu0 %v4032
    %v4265 = vpop.f32.mrb[0].mxu0
    %v4266 = vadd.f32 %v4097, %v4265
    %v4267 = vpop.f32.mrb[0].mxu0
    %v4268 = vpop.f32.mrb[0].mxu0
    %v4269 = vadd.f32 %v4097, %v4268
    %v4270 = vpop.f32.mrb[0].mxu0
    %4271 = vmatprep.mubr.bf16.mxu0 %v4036
    %4272 = vmatmul.mubr.bf16.gmra.mrb[0].mxu0 %v4035
    %v4273 = vpop.f32.mrb[0].mxu0
    %v4274 = vadd.f32 %v4097, %v4273
    %v4275 = vpop.f32.mrb[0].mxu0
    %v4276 = vpop.f32.mrb[0].mxu0
    %v4277 = vadd.f32 %v4097, %v4276
    %v4278 = vpop.f32.mrb[0].mxu0
    %4279 = vmatprep.mubr.bf16.mxu0 %v4039
    %4280 = vmatmul.mubr.bf16.gmra.mrb[0].mxu0 %v4038
    %v4281 = vpop.f32.mrb[0].mxu0
    %v4282 = vadd.f32 %v4097, %v4281
    %v4283 = vpop.f32.mrb[0].mxu0
    %v4284 = vpop.f32.mrb[0].mxu0
    %v4285 = vadd.f32 %v4097, %v4284
    %v4286 = vpop.f32.mrb[0].mxu0
    %4287 = vmatprep.mubr.bf16.mxu0 %v4042
    %4288 = vmatmul.mubr.bf16.gmra.mrb[0].mxu0 %v4041
    %v4289 = vpop.f32.mrb[0].mxu0
    %v4290 = vadd.f32 %v4097, %v4289
    %v4291 = vpop.f32.mrb[0].mxu0
    %v4292 = vpop.f32.mrb[0].mxu0
    %v4293 = vadd.f32 %v4097, %v4292
    %v4294 = vpop.f32.mrb[0].mxu0
    %4295 = vmatprep.mubr.bf16.mxu0 %v4045
    %4296 = vmatmul.mubr.bf16.gmra.mrb[0].mxu0 %v4044
    %v4297 = vpop.f32.mrb[0].mxu0
    %v4298 = vadd.f32 %v4097, %v4297
    %v4299 = vpop.f32.mrb[0].mxu0
    %v4300 = vpop.f32.mrb[0].mxu0
    %v4301 = vadd.f32 %v4097, %v4300
    %v4302 = vpop.f32.mrb[0].mxu0
    %4303 = vmatprep.mubr.bf16.mxu0 %v4048
    %4304 = vmatmul.mubr.bf16.gmra.mrb[0].mxu0 %v4047
    %v4305 = vpop.f32.mrb[0].mxu0
    %v4306 = vadd.f32 %v4097, %v4305
    %v4307 = vpop.f32.mrb[0].mxu0
    %v4308 = vpop.f32.mrb[0].mxu0
    %v4309 = vadd.f32 %v4097, %v4308
    %v4310 = vpop.f32.mrb[0].mxu0
    %4311 = vmatprep.mubr.bf16.mxu0 %v4051
    %4312 = vmatmul.mubr.bf16.gmra.mrb[0].mxu0 %v4050
    %v4313 = vpop.f32.mrb[0].mxu0
    %v4314 = vadd.f32 %v4097, %v4313
    %v4315 = vpop.f32.mrb[0].mxu0
    %v4316 = vpop.f32.mrb[0].mxu0
    %v4317 = vadd.f32 %v4097, %v4316
    %v4318 = vpop.f32.mrb[0].mxu0
    %4319 = vmatprep.mubr.bf16.mxu0 %v4054
    %4320 = vmatmul.mubr.bf16.gmra.mrb[0].mxu0 %v4053
    %v4321 = vpop.f32.mrb[0].mxu0
    %v4322 = vadd.f32 %v4097, %v4321
    %v4323 = vpop.f32.mrb[0].mxu0
    %v4324 = vpop.f32.mrb[0].mxu0
    %v4325 = vadd.f32 %v4097, %v4324
    %v4326 = vpop.f32.mrb[0].mxu0
    %4327 = vdwg.mxu0
    %4328 = vmatprep.subr.bf16.mxu0 0
    %4329 = vmatpush1.bf16.msra.mxu0 %v4187
    %4330 = vmatprep.subr.bf16.mxu0 0
    %4331 = vmatpush1.bf16.msra.mxu0 %v4188
    %4332 = vmatprep.subr.bf16.mxu0 0
    %4333 = vmatpush1.bf16.msra.mxu0 0
    %4334 = vmatprep.subr.bf16.mxu0 0
    %4335 = vmatpush1.bf16.msra.mxu0 0
    %4336 = vmatprep.subr.bf16.mxu0 0
    %4337 = vmatpush1.bf16.msra.mxu0 0
    %4338 = vmatprep.subr.bf16.mxu0 0
    %4339 = vmatpush1.bf16.msra.mxu0 0
    %4340 = vmatprep.subr.bf16.mxu0 0
    %4341 = vmatpush1.bf16.msra.mxu0 0
    %4342 = vmatprep.subr.bf16.mxu0 0
    %4343 = vmatpush1.bf16.msra.mxu0 0
    %4344 = vmatprep.subr.bf16.mxu0 0
    %4345 = vmatpush1.bf16.msra.mxu0 0
    %4346 = vmatprep.subr.bf16.mxu0 0
    %4347 = vmatpush1.bf16.msra.mxu0 0
    %4348 = vmatprep.subr.bf16.mxu0 0
    %4349 = vmatpush1.bf16.msra.mxu0 0
    %4350 = vmatprep.subr.bf16.mxu0 0
    %4351 = vmatpush1.bf16.msra.mxu0 0
    %4352 = vmatprep.subr.bf16.mxu0 0
    %4353 = vmatpush1.bf16.msra.mxu0 0
    %4354 = vmatprep.subr.bf16.mxu0 0
    %4355 = vmatpush1.bf16.msra.mxu0 0
    %4356 = vmatprep.subr.bf16.mxu0 0
    %4357 = vmatpush1.bf16.msra.mxu0 0
    %4358 = vmatprep.subr.bf16.mxu0 0
    %4359 = vmatpush1.bf16.msra.mxu0 0
    %4360 = vmatprep.mubr.bf16.mxu0 0
    %4361 = vmatmul.mubr.bf16.gmra.mrb[0].mxu0 %v4208
    %v4362 = vpop.f32.mrb[0].mxu0
    %v4363 = vadd.f32 %v4266, %v4362
    %v4364 = vpop.f32.mrb[0].mxu0
    %v4365 = vpop.f32.mrb[0].mxu0
    %v4366 = vadd.f32 %v4269, %v4365
    %v4367 = vpop.f32.mrb[0].mxu0
    %4368 = vmatprep.mubr.bf16.mxu0 0
    %4369 = vmatmul.mubr.bf16.gmra.mrb[0].mxu0 %v4211
    %v4370 = vpop.f32.mrb[0].mxu0
    %v4371 = vadd.f32 %v4274, %v4370
    %v4372 = vpop.f32.mrb[0].mxu0
    %v4373 = vpop.f32.mrb[0].mxu0
    %v4374 = vadd.f32 %v4277, %v4373
    %v4375 = vpop.f32.mrb[0].mxu0
    %4376 = vmatprep.mubr.bf16.mxu0 0
    %4377 = vmatmul.mubr.bf16.gmra.mrb[0].mxu0 %v4214
    %v4378 = vpop.f32.mrb[0].mxu0
    %v4379 = vadd.f32 %v4282, %v4378
    %v4380 = vpop.f32.mrb[0].mxu0
    %v4381 = vpop.f32.mrb[0].mxu0
    %v4382 = vadd.f32 %v4285, %v4381
    %v4383 = vpop.f32.mrb[0].mxu0
    %4384 = vmatprep.mubr.bf16.mxu0 0
    %4385 = vmatmul.mubr.bf16.gmra.mrb[0].mxu0 %v4217
    %v4386 = vpop.f32.mrb[0].mxu0
    %v4387 = vadd.f32 %v4290, %v4386
    %v4388 = vpop.f32.mrb[0].mxu0
    %v4389 = vpop.f32.mrb[0].mxu0
    %v4390 = vadd.f32 %v4293, %v4389
    %v4391 = vpop.f32.mrb[0].mxu0
    %4392 = vmatprep.mubr.bf16.mxu0 0
    %4393 = vmatmul.mubr.bf16.gmra.mrb[0].mxu0 %v4220
    %v4394 = vpop.f32.mrb[0].mxu0
    %v4395 = vadd.f32 %v4298, %v4394
    %v4396 = vpop.f32.mrb[0].mxu0
    %v4397 = vpop.f32.mrb[0].mxu0
    %v4398 = vadd.f32 %v4301, %v4397
    %v4399 = vpop.f32.mrb[0].mxu0
    %4400 = vmatprep.mubr.bf16.mxu0 0
    %4401 = vmatmul.mubr.bf16.gmra.mrb[0].mxu0 %v4223
    %v4402 = vpop.f32.mrb[0].mxu0
    %v4403 = vadd.f32 %v4306, %v4402
    %v4404 = vpop.f32.mrb[0].mxu0
    %v4405 = vpop.f32.mrb[0].mxu0
    %v4406 = vadd.f32 %v4309, %v4405
    %v4407 = vpop.f32.mrb[0].mxu0
    %4408 = vmatprep.mubr.bf16.mxu0 0
    %4409 = vmatmul.mubr.bf16.gmra.mrb[0].mxu0 %v4226
    %v4410 = vpop.f32.mrb[0].mxu0
    %v4411 = vadd.f32 %v4314, %v4410
    %v4412 = vpop.f32.mrb[0].mxu0
    %v4413 = vpop.f32.mrb[0].mxu0
    %v4414 = vadd.f32 %v4317, %v4413
    %v4415 = vpop.f32.mrb[0].mxu0
    %4416 = vmatprep.mubr.bf16.mxu0 0
    %4417 = vmatmul.mubr.bf16.gmra.mrb[0].mxu0 %v4229
    %v4418 = vpop.f32.mrb[0].mxu0
    %v4419 = vadd.f32 %v4322, %v4418
    %v4420 = vpop.f32.mrb[0].mxu0
    %v4421 = vpop.f32.mrb[0].mxu0
    %v4422 = vadd.f32 %v4325, %v4421
    %v4423 = vpop.f32.mrb[0].mxu0
    %4424 = vdwg.mxu0
    %v4425 = vmax.f32 %v4363, 0.0
    %v4426 = vmax.f32 %v4366, 0.0
    %v4427 = vmax.f32 %v4371, 0.0
    %v4428 = vmax.f32 %v4374, 0.0
    %v4429 = vmax.f32 %v4379, 0.0
    %v4430 = vmax.f32 %v4382, 0.0
    %v4431 = vmax.f32 %v4387, 0.0
    %v4432 = vmax.f32 %v4390, 0.0
    %v4433 = vmax.f32 %v4395, 0.0
    %v4434 = vmax.f32 %v4398, 0.0
    %v4435 = vmax.f32 %v4403, 0.0
    %v4436 = vmax.f32 %v4406, 0.0
    %v4437 = vmax.f32 %v4411, 0.0
    %v4438 = vmax.f32 %v4414, 0.0
    %v4439 = vmax.f32 %v4419, 0.0
    %v4440 = vmax.f32 %v4422, 0.0
    %v4441 = vmax.f32 %v4425, %v4426
    %v4442 = vmax.f32 %v4427, %v4428
    %v4443 = vmax.f32 %v4429, %v4430
    %v4444 = vmax.f32 %v4431, %v4432
    %v4445 = vmax.f32 %v4433, %v4434
    %v4446 = vmax.f32 %v4435, %v4436
    %v4447 = vmax.f32 %v4437, %v4438
    %v4448 = vmax.f32 %v4439, %v4440
    %4449 = vst.msk [vmem:[#allocation7] sm:$0xff] %vm2814, %v4441
    %4450 = vst.msk [vmem:[#allocation7 + $0x8] sm:$0xff] %vm2814, %v4442
    %4451 = vst.msk [vmem:[#allocation7 + $0x10] sm:$0xff] %vm2814, %v4443
    %4452 = vst.msk [vmem:[#allocation7 + $0x18] sm:$0xff] %vm2814, %v4444
    %4453 = vst.msk [vmem:[#allocation7 + $0x20] sm:$0xff] %vm2814, %v4445
    %4454 = vst.msk [vmem:[#allocation7 + $0x28] sm:$0xff] %vm2814, %v4446
    %4455 = vst.msk [vmem:[#allocation7 + $0x30] sm:$0xff] %vm2814, %v4447
    %4456 = vst.msk [vmem:[#allocation7 + $0x38] sm:$0xff] %vm2814, %v4448
    %v4457 = vld [vmem:[#allocation7] sm:$0x1]
    %v4458 = vld [vmem:[#allocation7 + $0x20] sm:$0x1]
    %v4459 = vld [vmem:[#allocation7 + $0x1] sm:$0x1]
    %v4460 = vld [vmem:[#allocation7 + $0x21] sm:$0x1]
    %v4461 = vmax.f32 %v4457, %v4459
    %v4462 = vmax.f32 %v4458, %v4460
    %v4463 = vpack.c.bf16 %v4461, %v4461
    %v4464 = vpack.c.bf16 %v4462, %v4462
    %v4468 = vunpack.c.l.s4 1966171168
    %v4469 = vunpack.c.0.s8 %v4468
    %v4470 = vlaneseq
    %v4471 = vshrl.u32 %v4470, 7
    %v4472 = vsub.s32 %v4469, %v4471
    %v4473 = vrot.slane %v4463, %v4472
    %v4475 = vunpack.c.l.s4 1966171168
    %v4476 = vunpack.c.0.s8 %v4475
    %v4477 = vlaneseq
    %v4478 = vshrl.u32 %v4477, 7
    %v4479 = vsub.s32 %v4476, %v4478
    %v4480 = vrot.slane %v4473, %v4479
    %v4482 = vunpack.c.l.s4 1966171168
    %v4483 = vunpack.c.0.s8 %v4482
    %v4484 = vlaneseq
    %v4485 = vshrl.u32 %v4484, 7
    %v4486 = vsub.s32 %v4483, %v4485
    %v4487 = vrot.slane %v4464, %v4486
    %v4489 = vunpack.c.l.s4 1966171168
    %v4490 = vunpack.c.0.s8 %v4489
    %v4491 = vlaneseq
    %v4492 = vshrl.u32 %v4491, 7
    %v4493 = vsub.s32 %v4490, %v4492
    %v4494 = vrot.slane %v4487, %v4493
    %v4496 = vunpack.c.l.s4 1935823168
    %v4497 = vunpack.c.0.s8 %v4496
    %v4498 = vlaneseq
    %v4499 = vshrl.u32 %v4498, 7
    %v4500 = vsub.s32 %v4497, %v4499
    %v4501 = vrot.slane %v4480, %v4500
    %v4503 = vunpack.c.l.s4 1935823168
    %v4504 = vunpack.c.0.s8 %v4503
    %v4505 = vlaneseq
    %v4506 = vshrl.u32 %v4505, 7
    %v4507 = vsub.s32 %v4504, %v4506
    %v4508 = vrot.slane %v4501, %v4507
    %v4510 = vunpack.c.l.s4 1935823168
    %v4511 = vunpack.c.0.s8 %v4510
    %v4512 = vlaneseq
    %v4513 = vshrl.u32 %v4512, 7
    %v4514 = vsub.s32 %v4511, %v4513
    %v4515 = vrot.slane %v4494, %v4514
    %v4517 = vunpack.c.l.s4 1935823168
    %v4518 = vunpack.c.0.s8 %v4517
    %v4519 = vlaneseq
    %v4520 = vshrl.u32 %v4519, 7
    %v4521 = vsub.s32 %v4518, %v4520
    %v4522 = vrot.slane %v4515, %v4521
    %v4523 = vunpack.c.l.b16 %v4508
    %v4524 = vunpack.c.l.b16 %v4522
    %v4525 = vrot.slane %v4524, 7
    %vm4526 = vcmask 1041409
    %v4527 = vsel %vm4526, %v4525, %v4523
    %v4528 = vpack.c.b16 %v4527, %v4527
    %v4530 = vunpack.c.l.s4 1966171168
    %v4531 = vunpack.c.0.s8 %v4530
    %v4532 = vlaneseq
    %v4533 = vshrl.u32 %v4532, 7
    %v4534 = vsub.s32 %v4531, %v4533
    %v4535 = vrot.slane %v4528, %v4534
    %v4537 = vunpack.c.l.s4 1966171168
    %v4538 = vunpack.c.0.s8 %v4537
    %v4539 = vlaneseq
    %v4540 = vshrl.u32 %v4539, 7
    %v4541 = vsub.s32 %v4538, %v4540
    %v4542 = vrot.slane %v4535, %v4541
    %vm4544 = vcmask 253952
    %4545 = vst.msk [vmem:[#allocation8] sm:$0x1] %vm4544, %v4542
    %v4546 = vld [vmem:[#allocation7 + $0x2] sm:$0x1]
    %v4547 = vld [vmem:[#allocation7 + $0x22] sm:$0x1]
    %v4548 = vld [vmem:[#allocation7 + $0x3] sm:$0x1]
    %v4549 = vld [vmem:[#allocation7 + $0x23] sm:$0x1]
    %v4550 = vmax.f32 %v4546, %v4548
    %v4551 = vmax.f32 %v4547, %v4549
    %v4552 = vpack.c.bf16 %v4550, %v4550
    %v4553 = vpack.c.bf16 %v4551, %v4551
    %v4557 = vunpack.c.l.s4 1966171168
    %v4558 = vunpack.c.0.s8 %v4557
    %v4559 = vlaneseq
    %v4560 = vshrl.u32 %v4559, 7
    %v4561 = vsub.s32 %v4558, %v4560
    %v4562 = vrot.slane %v4552, %v4561
    %v4564 = vunpack.c.l.s4 1966171168
    %v4565 = vunpack.c.0.s8 %v4564
    %v4566 = vlaneseq
    %v4567 = vshrl.u32 %v4566, 7
    %v4568 = vsub.s32 %v4565, %v4567
    %v4569 = vrot.slane %v4562, %v4568
    %v4571 = vunpack.c.l.s4 1966171168
    %v4572 = vunpack.c.0.s8 %v4571
    %v4573 = vlaneseq
    %v4574 = vshrl.u32 %v4573, 7
    %v4575 = vsub.s32 %v4572, %v4574
    %v4576 = vrot.slane %v4553, %v4575
    %v4578 = vunpack.c.l.s4 1966171168
    %v4579 = vunpack.c.0.s8 %v4578
    %v4580 = vlaneseq
    %v4581 = vshrl.u32 %v4580, 7
    %v4582 = vsub.s32 %v4579, %v4581
    %v4583 = vrot.slane %v4576, %v4582
    %v4585 = vunpack.c.l.s4 1935823168
    %v4586 = vunpack.c.0.s8 %v4585
    %v4587 = vlaneseq
    %v4588 = vshrl.u32 %v4587, 7
    %v4589 = vsub.s32 %v4586, %v4588
    %v4590 = vrot.slane %v4569, %v4589
    %v4592 = vunpack.c.l.s4 1935823168
    %v4593 = vunpack.c.0.s8 %v4592
    %v4594 = vlaneseq
    %v4595 = vshrl.u32 %v4594, 7
    %v4596 = vsub.s32 %v4593, %v4595
    %v4597 = vrot.slane %v4590, %v4596
    %v4599 = vunpack.c.l.s4 1935823168
    %v4600 = vunpack.c.0.s8 %v4599
    %v4601 = vlaneseq
    %v4602 = vshrl.u32 %v4601, 7
    %v4603 = vsub.s32 %v4600, %v4602
    %v4604 = vrot.slane %v4583, %v4603
    %v4606 = vunpack.c.l.s4 1935823168
    %v4607 = vunpack.c.0.s8 %v4606
    %v4608 = vlaneseq
    %v4609 = vshrl.u32 %v4608, 7
    %v4610 = vsub.s32 %v4607, %v4609
    %v4611 = vrot.slane %v4604, %v4610
    %v4612 = vunpack.c.l.b16 %v4597
    %v4613 = vunpack.c.l.b16 %v4611
    %v4614 = vrot.slane %v4613, 7
    %v4615 = vsel %vm4526, %v4614, %v4612
    %v4616 = vpack.c.b16 %v4615, %v4615
    %v4618 = vunpack.c.l.s4 1966171168
    %v4619 = vunpack.c.0.s8 %v4618
    %v4620 = vlaneseq
    %v4621 = vshrl.u32 %v4620, 7
    %v4622 = vsub.s32 %v4619, %v4621
    %v4623 = vrot.slane %v4616, %v4622
    %v4625 = vunpack.c.l.s4 1966171168
    %v4626 = vunpack.c.0.s8 %v4625
    %v4627 = vlaneseq
    %v4628 = vshrl.u32 %v4627, 7
    %v4629 = vsub.s32 %v4626, %v4628
    %v4630 = vrot.slane %v4623, %v4629
    %4631 = vrot.lane.b32.xlu0 %v4630, 32
    %v4632 = vpop.permute.xlu0 %4631
    %vm4634 = vcmask 516352
    %4635 = vst.msk [vmem:[#allocation8] sm:$0x1] %vm4634, %v4632
    %v4636 = vld [vmem:[#allocation7 + $0x4] sm:$0x1]
    %v4637 = vld [vmem:[#allocation7 + $0x24] sm:$0x1]
    %v4638 = vld [vmem:[#allocation7 + $0x5] sm:$0x1]
    %v4639 = vld [vmem:[#allocation7 + $0x25] sm:$0x1]
    %v4640 = vmax.f32 %v4636, %v4638
    %v4641 = vmax.f32 %v4637, %v4639
    %v4642 = vpack.c.bf16 %v4640, %v4640
    %v4643 = vpack.c.bf16 %v4641, %v4641
    %v4647 = vunpack.c.l.s4 1966171168
    %v4648 = vunpack.c.0.s8 %v4647
    %v4649 = vlaneseq
    %v4650 = vshrl.u32 %v4649, 7
    %v4651 = vsub.s32 %v4648, %v4650
    %v4652 = vrot.slane %v4642, %v4651
    %v4654 = vunpack.c.l.s4 1966171168
    %v4655 = vunpack.c.0.s8 %v4654
    %v4656 = vlaneseq
    %v4657 = vshrl.u32 %v4656, 7
    %v4658 = vsub.s32 %v4655, %v4657
    %v4659 = vrot.slane %v4652, %v4658
    %v4661 = vunpack.c.l.s4 1966171168
    %v4662 = vunpack.c.0.s8 %v4661
    %v4663 = vlaneseq
    %v4664 = vshrl.u32 %v4663, 7
    %v4665 = vsub.s32 %v4662, %v4664
    %v4666 = vrot.slane %v4643, %v4665
    %v4668 = vunpack.c.l.s4 1966171168
    %v4669 = vunpack.c.0.s8 %v4668
    %v4670 = vlaneseq
    %v4671 = vshrl.u32 %v4670, 7
    %v4672 = vsub.s32 %v4669, %v4671
    %v4673 = vrot.slane %v4666, %v4672
    %v4675 = vunpack.c.l.s4 1935823168
    %v4676 = vunpack.c.0.s8 %v4675
    %v4677 = vlaneseq
    %v4678 = vshrl.u32 %v4677, 7
    %v4679 = vsub.s32 %v4676, %v4678
    %v4680 = vrot.slane %v4659, %v4679
    %v4682 = vunpack.c.l.s4 1935823168
    %v4683 = vunpack.c.0.s8 %v4682
    %v4684 = vlaneseq
    %v4685 = vshrl.u32 %v4684, 7
    %v4686 = vsub.s32 %v4683, %v4685
    %v4687 = vrot.slane %v4680, %v4686
    %v4689 = vunpack.c.l.s4 1935823168
    %v4690 = vunpack.c.0.s8 %v4689
    %v4691 = vlaneseq
    %v4692 = vshrl.u32 %v4691, 7
    %v4693 = vsub.s32 %v4690, %v4692
    %v4694 = vrot.slane %v4673, %v4693
    %v4696 = vunpack.c.l.s4 1935823168
    %v4697 = vunpack.c.0.s8 %v4696
    %v4698 = vlaneseq
    %v4699 = vshrl.u32 %v4698, 7
    %v4700 = vsub.s32 %v4697, %v4699
    %v4701 = vrot.slane %v4694, %v4700
    %v4702 = vunpack.c.l.b16 %v4687
    %v4703 = vunpack.c.l.b16 %v4701
    %v4704 = vrot.slane %v4703, 7
    %v4705 = vsel %vm4526, %v4704, %v4702
    %v4706 = vpack.c.b16 %v4705, %v4705
    %v4708 = vunpack.c.l.s4 1966171168
    %v4709 = vunpack.c.0.s8 %v4708
    %v4710 = vlaneseq
    %v4711 = vshrl.u32 %v4710, 7
    %v4712 = vsub.s32 %v4709, %v4711
    %v4713 = vrot.slane %v4706, %v4712
    %v4715 = vunpack.c.l.s4 1966171168
    %v4716 = vunpack.c.0.s8 %v4715
    %v4717 = vlaneseq
    %v4718 = vshrl.u32 %v4717, 7
    %v4719 = vsub.s32 %v4716, %v4718
    %v4720 = vrot.slane %v4713, %v4719
    %4721 = vrot.lane.b32.xlu0 %v4720, 64
    %v4722 = vpop.permute.xlu0 %4721
    %vm4724 = vcmask 778752
    %4725 = vst.msk [vmem:[#allocation8] sm:$0x1] %vm4724, %v4722
    %v4726 = vld [vmem:[#allocation7 + $0x6] sm:$0x1]
    %v4727 = vld [vmem:[#allocation7 + $0x26] sm:$0x1]
    %v4728 = vld [vmem:[#allocation7 + $0x7] sm:$0x1]
    %v4729 = vld [vmem:[#allocation7 + $0x27] sm:$0x1]
    %v4730 = vmax.f32 %v4726, %v4728
    %v4731 = vmax.f32 %v4727, %v4729
    %v4732 = vpack.c.bf16 %v4730, %v4730
    %v4733 = vpack.c.bf16 %v4731, %v4731
    %v4737 = vunpack.c.l.s4 1966171168
    %v4738 = vunpack.c.0.s8 %v4737
    %v4739 = vlaneseq
    %v4740 = vshrl.u32 %v4739, 7
    %v4741 = vsub.s32 %v4738, %v4740
    %v4742 = vrot.slane %v4732, %v4741
    %v4744 = vunpack.c.l.s4 1966171168
    %v4745 = vunpack.c.0.s8 %v4744
    %v4746 = vlaneseq
    %v4747 = vshrl.u32 %v4746, 7
    %v4748 = vsub.s32 %v4745, %v4747
    %v4749 = vrot.slane %v4742, %v4748
    %v4751 = vunpack.c.l.s4 1966171168
    %v4752 = vunpack.c.0.s8 %v4751
    %v4753 = vlaneseq
    %v4754 = vshrl.u32 %v4753, 7
    %v4755 = vsub.s32 %v4752, %v4754
    %v4756 = vrot.slane %v4733, %v4755
    %v4758 = vunpack.c.l.s4 1966171168
    %v4759 = vunpack.c.0.s8 %v4758
    %v4760 = vlaneseq
    %v4761 = vshrl.u32 %v4760, 7
    %v4762 = vsub.s32 %v4759, %v4761
    %v4763 = vrot.slane %v4756, %v4762
    %v4765 = vunpack.c.l.s4 1935823168
    %v4766 = vunpack.c.0.s8 %v4765
    %v4767 = vlaneseq
    %v4768 = vshrl.u32 %v4767, 7
    %v4769 = vsub.s32 %v4766, %v4768
    %v4770 = vrot.slane %v4749, %v4769
    %v4772 = vunpack.c.l.s4 1935823168
    %v4773 = vunpack.c.0.s8 %v4772
    %v4774 = vlaneseq
    %v4775 = vshrl.u32 %v4774, 7
    %v4776 = vsub.s32 %v4773, %v4775
    %v4777 = vrot.slane %v4770, %v4776
    %v4779 = vunpack.c.l.s4 1935823168
    %v4780 = vunpack.c.0.s8 %v4779
    %v4781 = vlaneseq
    %v4782 = vshrl.u32 %v4781, 7
    %v4783 = vsub.s32 %v4780, %v4782
    %v4784 = vrot.slane %v4763, %v4783
    %v4786 = vunpack.c.l.s4 1935823168
    %v4787 = vunpack.c.0.s8 %v4786
    %v4788 = vlaneseq
    %v4789 = vshrl.u32 %v4788, 7
    %v4790 = vsub.s32 %v4787, %v4789
    %v4791 = vrot.slane %v4784, %v4790
    %v4792 = vunpack.c.l.b16 %v4777
    %v4793 = vunpack.c.l.b16 %v4791
    %v4794 = vrot.slane %v4793, 7
    %v4795 = vsel %vm4526, %v4794, %v4792
    %v4796 = vpack.c.b16 %v4795, %v4795
    %v4798 = vunpack.c.l.s4 1966171168
    %v4799 = vunpack.c.0.s8 %v4798
    %v4800 = vlaneseq
    %v4801 = vshrl.u32 %v4800, 7
    %v4802 = vsub.s32 %v4799, %v4801
    %v4803 = vrot.slane %v4796, %v4802
    %v4805 = vunpack.c.l.s4 1966171168
    %v4806 = vunpack.c.0.s8 %v4805
    %v4807 = vlaneseq
    %v4808 = vshrl.u32 %v4807, 7
    %v4809 = vsub.s32 %v4806, %v4808
    %v4810 = vrot.slane %v4803, %v4809
    %4811 = vrot.lane.b32.xlu0 %v4810, 96
    %v4812 = vpop.permute.xlu0 %4811
    %vm4814 = vcmask 1041152
    %4815 = vst.msk [vmem:[#allocation8] sm:$0x1] %vm4814, %v4812
    %s4816 = scalar_lea.vmem [#allocation7], 8
    %v4817 = vld [vmem:[%s4816] sm:$0x1]
    %v4818 = vld [vmem:[%s4816 + $0x20] sm:$0x1]
    %v4819 = vld [vmem:[%s4816 + $0x1] sm:$0x1]
    %v4820 = vld [vmem:[%s4816 + $0x21] sm:$0x1]
    %v4821 = vmax.f32 %v4817, %v4819
    %v4822 = vmax.f32 %v4818, %v4820
    %v4823 = vpack.c.bf16 %v4821, %v4821
    %v4824 = vpack.c.bf16 %v4822, %v4822
    %v4828 = vunpack.c.l.s4 1966171168
    %v4829 = vunpack.c.0.s8 %v4828
    %v4830 = vlaneseq
    %v4831 = vshrl.u32 %v4830, 7
    %v4832 = vsub.s32 %v4829, %v4831
    %v4833 = vrot.slane %v4823, %v4832
    %v4835 = vunpack.c.l.s4 1966171168
    %v4836 = vunpack.c.0.s8 %v4835
    %v4837 = vlaneseq
    %v4838 = vshrl.u32 %v4837, 7
    %v4839 = vsub.s32 %v4836, %v4838
    %v4840 = vrot.slane %v4833, %v4839
    %v4842 = vunpack.c.l.s4 1966171168
    %v4843 = vunpack.c.0.s8 %v4842
    %v4844 = vlaneseq
    %v4845 = vshrl.u32 %v4844, 7
    %v4846 = vsub.s32 %v4843, %v4845
    %v4847 = vrot.slane %v4824, %v4846
    %v4849 = vunpack.c.l.s4 1966171168
    %v4850 = vunpack.c.0.s8 %v4849
    %v4851 = vlaneseq
    %v4852 = vshrl.u32 %v4851, 7
    %v4853 = vsub.s32 %v4850, %v4852
    %v4854 = vrot.slane %v4847, %v4853
    %v4856 = vunpack.c.l.s4 1935823168
    %v4857 = vunpack.c.0.s8 %v4856
    %v4858 = vlaneseq
    %v4859 = vshrl.u32 %v4858, 7
    %v4860 = vsub.s32 %v4857, %v4859
    %v4861 = vrot.slane %v4840, %v4860
    %v4863 = vunpack.c.l.s4 1935823168
    %v4864 = vunpack.c.0.s8 %v4863
    %v4865 = vlaneseq
    %v4866 = vshrl.u32 %v4865, 7
    %v4867 = vsub.s32 %v4864, %v4866
    %v4868 = vrot.slane %v4861, %v4867
    %v4870 = vunpack.c.l.s4 1935823168
    %v4871 = vunpack.c.0.s8 %v4870
    %v4872 = vlaneseq
    %v4873 = vshrl.u32 %v4872, 7
    %v4874 = vsub.s32 %v4871, %v4873
    %v4875 = vrot.slane %v4854, %v4874
    %v4877 = vunpack.c.l.s4 1935823168
    %v4878 = vunpack.c.0.s8 %v4877
    %v4879 = vlaneseq
    %v4880 = vshrl.u32 %v4879, 7
    %v4881 = vsub.s32 %v4878, %v4880
    %v4882 = vrot.slane %v4875, %v4881
    %v4883 = vunpack.c.l.b16 %v4868
    %v4884 = vunpack.c.l.b16 %v4882
    %v4885 = vrot.slane %v4884, 7
    %v4886 = vsel %vm4526, %v4885, %v4883
    %v4887 = vpack.c.b16 %v4886, %v4886
    %v4889 = vunpack.c.l.s4 1966171168
    %v4890 = vunpack.c.0.s8 %v4889
    %v4891 = vlaneseq
    %v4892 = vshrl.u32 %v4891, 7
    %v4893 = vsub.s32 %v4890, %v4892
    %v4894 = vrot.slane %v4887, %v4893
    %v4896 = vunpack.c.l.s4 1966171168
    %v4897 = vunpack.c.0.s8 %v4896
    %v4898 = vlaneseq
    %v4899 = vshrl.u32 %v4898, 7
    %v4900 = vsub.s32 %v4897, %v4899
    %v4901 = vrot.slane %v4894, %v4900
    %4903 = vst.msk [vmem:[#allocation8 + $0x1] sm:$0x1] %vm4544, %v4901
    %v4904 = vld [vmem:[%s4816 + $0x2] sm:$0x1]
    %v4905 = vld [vmem:[%s4816 + $0x22] sm:$0x1]
    %v4906 = vld [vmem:[%s4816 + $0x3] sm:$0x1]
    %v4907 = vld [vmem:[%s4816 + $0x23] sm:$0x1]
    %v4908 = vmax.f32 %v4904, %v4906
    %v4909 = vmax.f32 %v4905, %v4907
    %v4910 = vpack.c.bf16 %v4908, %v4908
    %v4911 = vpack.c.bf16 %v4909, %v4909
    %v4915 = vunpack.c.l.s4 1966171168
    %v4916 = vunpack.c.0.s8 %v4915
    %v4917 = vlaneseq
    %v4918 = vshrl.u32 %v4917, 7
    %v4919 = vsub.s32 %v4916, %v4918
    %v4920 = vrot.slane %v4910, %v4919
    %v4922 = vunpack.c.l.s4 1966171168
    %v4923 = vunpack.c.0.s8 %v4922
    %v4924 = vlaneseq
    %v4925 = vshrl.u32 %v4924, 7
    %v4926 = vsub.s32 %v4923, %v4925
    %v4927 = vrot.slane %v4920, %v4926
    %v4929 = vunpack.c.l.s4 1966171168
    %v4930 = vunpack.c.0.s8 %v4929
    %v4931 = vlaneseq
    %v4932 = vshrl.u32 %v4931, 7
    %v4933 = vsub.s32 %v4930, %v4932
    %v4934 = vrot.slane %v4911, %v4933
    %v4936 = vunpack.c.l.s4 1966171168
    %v4937 = vunpack.c.0.s8 %v4936
    %v4938 = vlaneseq
    %v4939 = vshrl.u32 %v4938, 7
    %v4940 = vsub.s32 %v4937, %v4939
    %v4941 = vrot.slane %v4934, %v4940
    %v4943 = vunpack.c.l.s4 1935823168
    %v4944 = vunpack.c.0.s8 %v4943
    %v4945 = vlaneseq
    %v4946 = vshrl.u32 %v4945, 7
    %v4947 = vsub.s32 %v4944, %v4946
    %v4948 = vrot.slane %v4927, %v4947
    %v4950 = vunpack.c.l.s4 1935823168
    %v4951 = vunpack.c.0.s8 %v4950
    %v4952 = vlaneseq
    %v4953 = vshrl.u32 %v4952, 7
    %v4954 = vsub.s32 %v4951, %v4953
    %v4955 = vrot.slane %v4948, %v4954
    %v4957 = vunpack.c.l.s4 1935823168
    %v4958 = vunpack.c.0.s8 %v4957
    %v4959 = vlaneseq
    %v4960 = vshrl.u32 %v4959, 7
    %v4961 = vsub.s32 %v4958, %v4960
    %v4962 = vrot.slane %v4941, %v4961
    %v4964 = vunpack.c.l.s4 1935823168
    %v4965 = vunpack.c.0.s8 %v4964
    %v4966 = vlaneseq
    %v4967 = vshrl.u32 %v4966, 7
    %v4968 = vsub.s32 %v4965, %v4967
    %v4969 = vrot.slane %v4962, %v4968
    %v4970 = vunpack.c.l.b16 %v4955
    %v4971 = vunpack.c.l.b16 %v4969
    %v4972 = vrot.slane %v4971, 7
    %v4973 = vsel %vm4526, %v4972, %v4970
    %v4974 = vpack.c.b16 %v4973, %v4973
    %v4976 = vunpack.c.l.s4 1966171168
    %v4977 = vunpack.c.0.s8 %v4976
    %v4978 = vlaneseq
    %v4979 = vshrl.u32 %v4978, 7
    %v4980 = vsub.s32 %v4977, %v4979
    %v4981 = vrot.slane %v4974, %v4980
    %v4983 = vunpack.c.l.s4 1966171168
    %v4984 = vunpack.c.0.s8 %v4983
    %v4985 = vlaneseq
    %v4986 = vshrl.u32 %v4985, 7
    %v4987 = vsub.s32 %v4984, %v4986
    %v4988 = vrot.slane %v4981, %v4987
    %4989 = vrot.lane.b32.xlu0 %v4988, 32
    %v4990 = vpop.permute.xlu0 %4989
    %4992 = vst.msk [vmem:[#allocation8 + $0x1] sm:$0x1] %vm4634, %v4990
    %v4993 = vld [vmem:[%s4816 + $0x4] sm:$0x1]
    %v4994 = vld [vmem:[%s4816 + $0x24] sm:$0x1]
    %v4995 = vld [vmem:[%s4816 + $0x5] sm:$0x1]
    %v4996 = vld [vmem:[%s4816 + $0x25] sm:$0x1]
    %v4997 = vmax.f32 %v4993, %v4995
    %v4998 = vmax.f32 %v4994, %v4996
    %v4999 = vpack.c.bf16 %v4997, %v4997
    %v5000 = vpack.c.bf16 %v4998, %v4998
    %v5004 = vunpack.c.l.s4 1966171168
    %v5005 = vunpack.c.0.s8 %v5004
    %v5006 = vlaneseq
    %v5007 = vshrl.u32 %v5006, 7
    %v5008 = vsub.s32 %v5005, %v5007
    %v5009 = vrot.slane %v4999, %v5008
    %v5011 = vunpack.c.l.s4 1966171168
    %v5012 = vunpack.c.0.s8 %v5011
    %v5013 = vlaneseq
    %v5014 = vshrl.u32 %v5013, 7
    %v5015 = vsub.s32 %v5012, %v5014
    %v5016 = vrot.slane %v5009, %v5015
    %v5018 = vunpack.c.l.s4 1966171168
    %v5019 = vunpack.c.0.s8 %v5018
    %v5020 = vlaneseq
    %v5021 = vshrl.u32 %v5020, 7
    %v5022 = vsub.s32 %v5019, %v5021
    %v5023 = vrot.slane %v5000, %v5022
    %v5025 = vunpack.c.l.s4 1966171168
    %v5026 = vunpack.c.0.s8 %v5025
    %v5027 = vlaneseq
    %v5028 = vshrl.u32 %v5027, 7
    %v5029 = vsub.s32 %v5026, %v5028
    %v5030 = vrot.slane %v5023, %v5029
    %v5032 = vunpack.c.l.s4 1935823168
    %v5033 = vunpack.c.0.s8 %v5032
    %v5034 = vlaneseq
    %v5035 = vshrl.u32 %v5034, 7
    %v5036 = vsub.s32 %v5033, %v5035
    %v5037 = vrot.slane %v5016, %v5036
    %v5039 = vunpack.c.l.s4 1935823168
    %v5040 = vunpack.c.0.s8 %v5039
    %v5041 = vlaneseq
    %v5042 = vshrl.u32 %v5041, 7
    %v5043 = vsub.s32 %v5040, %v5042
    %v5044 = vrot.slane %v5037, %v5043
    %v5046 = vunpack.c.l.s4 1935823168
    %v5047 = vunpack.c.0.s8 %v5046
    %v5048 = vlaneseq
    %v5049 = vshrl.u32 %v5048, 7
    %v5050 = vsub.s32 %v5047, %v5049
    %v5051 = vrot.slane %v5030, %v5050
    %v5053 = vunpack.c.l.s4 1935823168
    %v5054 = vunpack.c.0.s8 %v5053
    %v5055 = vlaneseq
    %v5056 = vshrl.u32 %v5055, 7
    %v5057 = vsub.s32 %v5054, %v5056
    %v5058 = vrot.slane %v5051, %v5057
    %v5059 = vunpack.c.l.b16 %v5044
    %v5060 = vunpack.c.l.b16 %v5058
    %v5061 = vrot.slane %v5060, 7
    %v5062 = vsel %vm4526, %v5061, %v5059
    %v5063 = vpack.c.b16 %v5062, %v5062
    %v5065 = vunpack.c.l.s4 1966171168
    %v5066 = vunpack.c.0.s8 %v5065
    %v5067 = vlaneseq
    %v5068 = vshrl.u32 %v5067, 7
    %v5069 = vsub.s32 %v5066, %v5068
    %v5070 = vrot.slane %v5063, %v5069
    %v5072 = vunpack.c.l.s4 1966171168
    %v5073 = vunpack.c.0.s8 %v5072
    %v5074 = vlaneseq
    %v5075 = vshrl.u32 %v5074, 7
    %v5076 = vsub.s32 %v5073, %v5075
    %v5077 = vrot.slane %v5070, %v5076
    %5078 = vrot.lane.b32.xlu0 %v5077, 64
    %v5079 = vpop.permute.xlu0 %5078
    %5081 = vst.msk [vmem:[#allocation8 + $0x1] sm:$0x1] %vm4724, %v5079
    %v5082 = vld [vmem:[%s4816 + $0x6] sm:$0x1]
    %v5083 = vld [vmem:[%s4816 + $0x26] sm:$0x1]
    %v5084 = vld [vmem:[%s4816 + $0x7] sm:$0x1]
    %v5085 = vld [vmem:[%s4816 + $0x27] sm:$0x1]
    %v5086 = vmax.f32 %v5082, %v5084
    %v5087 = vmax.f32 %v5083, %v5085
    %v5088 = vpack.c.bf16 %v5086, %v5086
    %v5089 = vpack.c.bf16 %v5087, %v5087
    %v5093 = vunpack.c.l.s4 1966171168
    %v5094 = vunpack.c.0.s8 %v5093
    %v5095 = vlaneseq
    %v5096 = vshrl.u32 %v5095, 7
    %v5097 = vsub.s32 %v5094, %v5096
    %v5098 = vrot.slane %v5088, %v5097
    %v5100 = vunpack.c.l.s4 1966171168
    %v5101 = vunpack.c.0.s8 %v5100
    %v5102 = vlaneseq
    %v5103 = vshrl.u32 %v5102, 7
    %v5104 = vsub.s32 %v5101, %v5103
    %v5105 = vrot.slane %v5098, %v5104
    %v5107 = vunpack.c.l.s4 1966171168
    %v5108 = vunpack.c.0.s8 %v5107
    %v5109 = vlaneseq
    %v5110 = vshrl.u32 %v5109, 7
    %v5111 = vsub.s32 %v5108, %v5110
    %v5112 = vrot.slane %v5089, %v5111
    %v5114 = vunpack.c.l.s4 1966171168
    %v5115 = vunpack.c.0.s8 %v5114
    %v5116 = vlaneseq
    %v5117 = vshrl.u32 %v5116, 7
    %v5118 = vsub.s32 %v5115, %v5117
    %v5119 = vrot.slane %v5112, %v5118
    %v5121 = vunpack.c.l.s4 1935823168
    %v5122 = vunpack.c.0.s8 %v5121
    %v5123 = vlaneseq
    %v5124 = vshrl.u32 %v5123, 7
    %v5125 = vsub.s32 %v5122, %v5124
    %v5126 = vrot.slane %v5105, %v5125
    %v5128 = vunpack.c.l.s4 1935823168
    %v5129 = vunpack.c.0.s8 %v5128
    %v5130 = vlaneseq
    %v5131 = vshrl.u32 %v5130, 7
    %v5132 = vsub.s32 %v5129, %v5131
    %v5133 = vrot.slane %v5126, %v5132
    %v5135 = vunpack.c.l.s4 1935823168
    %v5136 = vunpack.c.0.s8 %v5135
    %v5137 = vlaneseq
    %v5138 = vshrl.u32 %v5137, 7
    %v5139 = vsub.s32 %v5136, %v5138
    %v5140 = vrot.slane %v5119, %v5139
    %v5142 = vunpack.c.l.s4 1935823168
    %v5143 = vunpack.c.0.s8 %v5142
    %v5144 = vlaneseq
    %v5145 = vshrl.u32 %v5144, 7
    %v5146 = vsub.s32 %v5143, %v5145
    %v5147 = vrot.slane %v5140, %v5146
    %v5148 = vunpack.c.l.b16 %v5133
    %v5149 = vunpack.c.l.b16 %v5147
    %v5150 = vrot.slane %v5149, 7
    %v5151 = vsel %vm4526, %v5150, %v5148
    %v5152 = vpack.c.b16 %v5151, %v5151
    %v5154 = vunpack.c.l.s4 1966171168
    %v5155 = vunpack.c.0.s8 %v5154
    %v5156 = vlaneseq
    %v5157 = vshrl.u32 %v5156, 7
    %v5158 = vsub.s32 %v5155, %v5157
    %v5159 = vrot.slane %v5152, %v5158
    %v5161 = vunpack.c.l.s4 1966171168
    %v5162 = vunpack.c.0.s8 %v5161
    %v5163 = vlaneseq
    %v5164 = vshrl.u32 %v5163, 7
    %v5165 = vsub.s32 %v5162, %v5164
    %v5166 = vrot.slane %v5159, %v5165
    %5167 = vrot.lane.b32.xlu0 %v5166, 96
    %v5168 = vpop.permute.xlu0 %5167
    %5170 = vst.msk [vmem:[#allocation8 + $0x1] sm:$0x1] %vm4814, %v5168
    %s5171 = scalar_lea.vmem [#allocation7], 16
    %v5172 = vld [vmem:[%s5171] sm:$0x1]
    %v5173 = vld [vmem:[%s5171 + $0x20] sm:$0x1]
    %v5174 = vld [vmem:[%s5171 + $0x1] sm:$0x1]
    %v5175 = vld [vmem:[%s5171 + $0x21] sm:$0x1]
    %v5176 = vmax.f32 %v5172, %v5174
    %v5177 = vmax.f32 %v5173, %v5175
    %v5178 = vpack.c.bf16 %v5176, %v5176
    %v5179 = vpack.c.bf16 %v5177, %v5177
    %v5183 = vunpack.c.l.s4 1966171168
    %v5184 = vunpack.c.0.s8 %v5183
    %v5185 = vlaneseq
    %v5186 = vshrl.u32 %v5185, 7
    %v5187 = vsub.s32 %v5184, %v5186
    %v5188 = vrot.slane %v5178, %v5187
    %v5190 = vunpack.c.l.s4 1966171168
    %v5191 = vunpack.c.0.s8 %v5190
    %v5192 = vlaneseq
    %v5193 = vshrl.u32 %v5192, 7
    %v5194 = vsub.s32 %v5191, %v5193
    %v5195 = vrot.slane %v5188, %v5194
    %v5197 = vunpack.c.l.s4 1966171168
    %v5198 = vunpack.c.0.s8 %v5197
    %v5199 = vlaneseq
    %v5200 = vshrl.u32 %v5199, 7
    %v5201 = vsub.s32 %v5198, %v5200
    %v5202 = vrot.slane %v5179, %v5201
    %v5204 = vunpack.c.l.s4 1966171168
    %v5205 = vunpack.c.0.s8 %v5204
    %v5206 = vlaneseq
    %v5207 = vshrl.u32 %v5206, 7
    %v5208 = vsub.s32 %v5205, %v5207
    %v5209 = vrot.slane %v5202, %v5208
    %v5211 = vunpack.c.l.s4 1935823168
    %v5212 = vunpack.c.0.s8 %v5211
    %v5213 = vlaneseq
    %v5214 = vshrl.u32 %v5213, 7
    %v5215 = vsub.s32 %v5212, %v5214
    %v5216 = vrot.slane %v5195, %v5215
    %v5218 = vunpack.c.l.s4 1935823168
    %v5219 = vunpack.c.0.s8 %v5218
    %v5220 = vlaneseq
    %v5221 = vshrl.u32 %v5220, 7
    %v5222 = vsub.s32 %v5219, %v5221
    %v5223 = vrot.slane %v5216, %v5222
    %v5225 = vunpack.c.l.s4 1935823168
    %v5226 = vunpack.c.0.s8 %v5225
    %v5227 = vlaneseq
    %v5228 = vshrl.u32 %v5227, 7
    %v5229 = vsub.s32 %v5226, %v5228
    %v5230 = vrot.slane %v5209, %v5229
    %v5232 = vunpack.c.l.s4 1935823168
    %v5233 = vunpack.c.0.s8 %v5232
    %v5234 = vlaneseq
    %v5235 = vshrl.u32 %v5234, 7
    %v5236 = vsub.s32 %v5233, %v5235
    %v5237 = vrot.slane %v5230, %v5236
    %v5238 = vunpack.c.l.b16 %v5223
    %v5239 = vunpack.c.l.b16 %v5237
    %v5240 = vrot.slane %v5239, 7
    %v5241 = vsel %vm4526, %v5240, %v5238
    %v5242 = vpack.c.b16 %v5241, %v5241
    %v5244 = vunpack.c.l.s4 1966171168
    %v5245 = vunpack.c.0.s8 %v5244
    %v5246 = vlaneseq
    %v5247 = vshrl.u32 %v5246, 7
    %v5248 = vsub.s32 %v5245, %v5247
    %v5249 = vrot.slane %v5242, %v5248
    %v5251 = vunpack.c.l.s4 1966171168
    %v5252 = vunpack.c.0.s8 %v5251
    %v5253 = vlaneseq
    %v5254 = vshrl.u32 %v5253, 7
    %v5255 = vsub.s32 %v5252, %v5254
    %v5256 = vrot.slane %v5249, %v5255
    %5258 = vst.msk [vmem:[#allocation8 + $0x2] sm:$0x1] %vm4544, %v5256
    %v5259 = vld [vmem:[%s5171 + $0x2] sm:$0x1]
    %v5260 = vld [vmem:[%s5171 + $0x22] sm:$0x1]
    %v5261 = vld [vmem:[%s5171 + $0x3] sm:$0x1]
    %v5262 = vld [vmem:[%s5171 + $0x23] sm:$0x1]
    %v5263 = vmax.f32 %v5259, %v5261
    %v5264 = vmax.f32 %v5260, %v5262
    %v5265 = vpack.c.bf16 %v5263, %v5263
    %v5266 = vpack.c.bf16 %v5264, %v5264
    %v5270 = vunpack.c.l.s4 1966171168
    %v5271 = vunpack.c.0.s8 %v5270
    %v5272 = vlaneseq
    %v5273 = vshrl.u32 %v5272, 7
    %v5274 = vsub.s32 %v5271, %v5273
    %v5275 = vrot.slane %v5265, %v5274
    %v5277 = vunpack.c.l.s4 1966171168
    %v5278 = vunpack.c.0.s8 %v5277
    %v5279 = vlaneseq
    %v5280 = vshrl.u32 %v5279, 7
    %v5281 = vsub.s32 %v5278, %v5280
    %v5282 = vrot.slane %v5275, %v5281
    %v5284 = vunpack.c.l.s4 1966171168
    %v5285 = vunpack.c.0.s8 %v5284
    %v5286 = vlaneseq
    %v5287 = vshrl.u32 %v5286, 7
    %v5288 = vsub.s32 %v5285, %v5287
    %v5289 = vrot.slane %v5266, %v5288
    %v5291 = vunpack.c.l.s4 1966171168
    %v5292 = vunpack.c.0.s8 %v5291
    %v5293 = vlaneseq
    %v5294 = vshrl.u32 %v5293, 7
    %v5295 = vsub.s32 %v5292, %v5294
    %v5296 = vrot.slane %v5289, %v5295
    %v5298 = vunpack.c.l.s4 1935823168
    %v5299 = vunpack.c.0.s8 %v5298
    %v5300 = vlaneseq
    %v5301 = vshrl.u32 %v5300, 7
    %v5302 = vsub.s32 %v5299, %v5301
    %v5303 = vrot.slane %v5282, %v5302
    %v5305 = vunpack.c.l.s4 1935823168
    %v5306 = vunpack.c.0.s8 %v5305
    %v5307 = vlaneseq
    %v5308 = vshrl.u32 %v5307, 7
    %v5309 = vsub.s32 %v5306, %v5308
    %v5310 = vrot.slane %v5303, %v5309
    %v5312 = vunpack.c.l.s4 1935823168
    %v5313 = vunpack.c.0.s8 %v5312
    %v5314 = vlaneseq
    %v5315 = vshrl.u32 %v5314, 7
    %v5316 = vsub.s32 %v5313, %v5315
    %v5317 = vrot.slane %v5296, %v5316
    %v5319 = vunpack.c.l.s4 1935823168
    %v5320 = vunpack.c.0.s8 %v5319
    %v5321 = vlaneseq
    %v5322 = vshrl.u32 %v5321, 7
    %v5323 = vsub.s32 %v5320, %v5322
    %v5324 = vrot.slane %v5317, %v5323
    %v5325 = vunpack.c.l.b16 %v5310
    %v5326 = vunpack.c.l.b16 %v5324
    %v5327 = vrot.slane %v5326, 7
    %v5328 = vsel %vm4526, %v5327, %v5325
    %v5329 = vpack.c.b16 %v5328, %v5328
    %v5331 = vunpack.c.l.s4 1966171168
    %v5332 = vunpack.c.0.s8 %v5331
    %v5333 = vlaneseq
    %v5334 = vshrl.u32 %v5333, 7
    %v5335 = vsub.s32 %v5332, %v5334
    %v5336 = vrot.slane %v5329, %v5335
    %v5338 = vunpack.c.l.s4 1966171168
    %v5339 = vunpack.c.0.s8 %v5338
    %v5340 = vlaneseq
    %v5341 = vshrl.u32 %v5340, 7
    %v5342 = vsub.s32 %v5339, %v5341
    %v5343 = vrot.slane %v5336, %v5342
    %5344 = vrot.lane.b32.xlu0 %v5343, 32
    %v5345 = vpop.permute.xlu0 %5344
    %5347 = vst.msk [vmem:[#allocation8 + $0x2] sm:$0x1] %vm4634, %v5345
    %v5348 = vld [vmem:[%s5171 + $0x4] sm:$0x1]
    %v5349 = vld [vmem:[%s5171 + $0x24] sm:$0x1]
    %v5350 = vld [vmem:[%s5171 + $0x5] sm:$0x1]
    %v5351 = vld [vmem:[%s5171 + $0x25] sm:$0x1]
    %v5352 = vmax.f32 %v5348, %v5350
    %v5353 = vmax.f32 %v5349, %v5351
    %v5354 = vpack.c.bf16 %v5352, %v5352
    %v5355 = vpack.c.bf16 %v5353, %v5353
    %v5359 = vunpack.c.l.s4 1966171168
    %v5360 = vunpack.c.0.s8 %v5359
    %v5361 = vlaneseq
    %v5362 = vshrl.u32 %v5361, 7
    %v5363 = vsub.s32 %v5360, %v5362
    %v5364 = vrot.slane %v5354, %v5363
    %v5366 = vunpack.c.l.s4 1966171168
    %v5367 = vunpack.c.0.s8 %v5366
    %v5368 = vlaneseq
    %v5369 = vshrl.u32 %v5368, 7
    %v5370 = vsub.s32 %v5367, %v5369
    %v5371 = vrot.slane %v5364, %v5370
    %v5373 = vunpack.c.l.s4 1966171168
    %v5374 = vunpack.c.0.s8 %v5373
    %v5375 = vlaneseq
    %v5376 = vshrl.u32 %v5375, 7
    %v5377 = vsub.s32 %v5374, %v5376
    %v5378 = vrot.slane %v5355, %v5377
    %v5380 = vunpack.c.l.s4 1966171168
    %v5381 = vunpack.c.0.s8 %v5380
    %v5382 = vlaneseq
    %v5383 = vshrl.u32 %v5382, 7
    %v5384 = vsub.s32 %v5381, %v5383
    %v5385 = vrot.slane %v5378, %v5384
    %v5387 = vunpack.c.l.s4 1935823168
    %v5388 = vunpack.c.0.s8 %v5387
    %v5389 = vlaneseq
    %v5390 = vshrl.u32 %v5389, 7
    %v5391 = vsub.s32 %v5388, %v5390
    %v5392 = vrot.slane %v5371, %v5391
    %v5394 = vunpack.c.l.s4 1935823168
    %v5395 = vunpack.c.0.s8 %v5394
    %v5396 = vlaneseq
    %v5397 = vshrl.u32 %v5396, 7
    %v5398 = vsub.s32 %v5395, %v5397
    %v5399 = vrot.slane %v5392, %v5398
    %v5401 = vunpack.c.l.s4 1935823168
    %v5402 = vunpack.c.0.s8 %v5401
    %v5403 = vlaneseq
    %v5404 = vshrl.u32 %v5403, 7
    %v5405 = vsub.s32 %v5402, %v5404
    %v5406 = vrot.slane %v5385, %v5405
    %v5408 = vunpack.c.l.s4 1935823168
    %v5409 = vunpack.c.0.s8 %v5408
    %v5410 = vlaneseq
    %v5411 = vshrl.u32 %v5410, 7
    %v5412 = vsub.s32 %v5409, %v5411
    %v5413 = vrot.slane %v5406, %v5412
    %v5414 = vunpack.c.l.b16 %v5399
    %v5415 = vunpack.c.l.b16 %v5413
    %v5416 = vrot.slane %v5415, 7
    %v5417 = vsel %vm4526, %v5416, %v5414
    %v5418 = vpack.c.b16 %v5417, %v5417
    %v5420 = vunpack.c.l.s4 1966171168
    %v5421 = vunpack.c.0.s8 %v5420
    %v5422 = vlaneseq
    %v5423 = vshrl.u32 %v5422, 7
    %v5424 = vsub.s32 %v5421, %v5423
    %v5425 = vrot.slane %v5418, %v5424
    %v5427 = vunpack.c.l.s4 1966171168
    %v5428 = vunpack.c.0.s8 %v5427
    %v5429 = vlaneseq
    %v5430 = vshrl.u32 %v5429, 7
    %v5431 = vsub.s32 %v5428, %v5430
    %v5432 = vrot.slane %v5425, %v5431
    %5433 = vrot.lane.b32.xlu0 %v5432, 64
    %v5434 = vpop.permute.xlu0 %5433
    %5436 = vst.msk [vmem:[#allocation8 + $0x2] sm:$0x1] %vm4724, %v5434
    %v5437 = vld [vmem:[%s5171 + $0x6] sm:$0x1]
    %v5438 = vld [vmem:[%s5171 + $0x26] sm:$0x1]
    %v5439 = vld [vmem:[%s5171 + $0x7] sm:$0x1]
    %v5440 = vld [vmem:[%s5171 + $0x27] sm:$0x1]
    %v5441 = vmax.f32 %v5437, %v5439
    %v5442 = vmax.f32 %v5438, %v5440
    %v5443 = vpack.c.bf16 %v5441, %v5441
    %v5444 = vpack.c.bf16 %v5442, %v5442
    %v5448 = vunpack.c.l.s4 1966171168
    %v5449 = vunpack.c.0.s8 %v5448
    %v5450 = vlaneseq
    %v5451 = vshrl.u32 %v5450, 7
    %v5452 = vsub.s32 %v5449, %v5451
    %v5453 = vrot.slane %v5443, %v5452
    %v5455 = vunpack.c.l.s4 1966171168
    %v5456 = vunpack.c.0.s8 %v5455
    %v5457 = vlaneseq
    %v5458 = vshrl.u32 %v5457, 7
    %v5459 = vsub.s32 %v5456, %v5458
    %v5460 = vrot.slane %v5453, %v5459
    %v5462 = vunpack.c.l.s4 1966171168
    %v5463 = vunpack.c.0.s8 %v5462
    %v5464 = vlaneseq
    %v5465 = vshrl.u32 %v5464, 7
    %v5466 = vsub.s32 %v5463, %v5465
    %v5467 = vrot.slane %v5444, %v5466
    %v5469 = vunpack.c.l.s4 1966171168
    %v5470 = vunpack.c.0.s8 %v5469
    %v5471 = vlaneseq
    %v5472 = vshrl.u32 %v5471, 7
    %v5473 = vsub.s32 %v5470, %v5472
    %v5474 = vrot.slane %v5467, %v5473
    %v5476 = vunpack.c.l.s4 1935823168
    %v5477 = vunpack.c.0.s8 %v5476
    %v5478 = vlaneseq
    %v5479 = vshrl.u32 %v5478, 7
    %v5480 = vsub.s32 %v5477, %v5479
    %v5481 = vrot.slane %v5460, %v5480
    %v5483 = vunpack.c.l.s4 1935823168
    %v5484 = vunpack.c.0.s8 %v5483
    %v5485 = vlaneseq
    %v5486 = vshrl.u32 %v5485, 7
    %v5487 = vsub.s32 %v5484, %v5486
    %v5488 = vrot.slane %v5481, %v5487
    %v5490 = vunpack.c.l.s4 1935823168
    %v5491 = vunpack.c.0.s8 %v5490
    %v5492 = vlaneseq
    %v5493 = vshrl.u32 %v5492, 7
    %v5494 = vsub.s32 %v5491, %v5493
    %v5495 = vrot.slane %v5474, %v5494
    %v5497 = vunpack.c.l.s4 1935823168
    %v5498 = vunpack.c.0.s8 %v5497
    %v5499 = vlaneseq
    %v5500 = vshrl.u32 %v5499, 7
    %v5501 = vsub.s32 %v5498, %v5500
    %v5502 = vrot.slane %v5495, %v5501
    %v5503 = vunpack.c.l.b16 %v5488
    %v5504 = vunpack.c.l.b16 %v5502
    %v5505 = vrot.slane %v5504, 7
    %v5506 = vsel %vm4526, %v5505, %v5503
    %v5507 = vpack.c.b16 %v5506, %v5506
    %v5509 = vunpack.c.l.s4 1966171168
    %v5510 = vunpack.c.0.s8 %v5509
    %v5511 = vlaneseq
    %v5512 = vshrl.u32 %v5511, 7
    %v5513 = vsub.s32 %v5510, %v5512
    %v5514 = vrot.slane %v5507, %v5513
    %v5516 = vunpack.c.l.s4 1966171168
    %v5517 = vunpack.c.0.s8 %v5516
    %v5518 = vlaneseq
    %v5519 = vshrl.u32 %v5518, 7
    %v5520 = vsub.s32 %v5517, %v5519
    %v5521 = vrot.slane %v5514, %v5520
    %5522 = vrot.lane.b32.xlu0 %v5521, 96
    %v5523 = vpop.permute.xlu0 %5522
    %5525 = vst.msk [vmem:[#allocation8 + $0x2] sm:$0x1] %vm4814, %v5523
    %s5526 = scalar_lea.vmem [#allocation7], 24
    %v5527 = vld [vmem:[%s5526] sm:$0x1]
    %v5528 = vld [vmem:[%s5526 + $0x20] sm:$0x1]
    %v5529 = vld [vmem:[%s5526 + $0x1] sm:$0x1]
    %v5530 = vld [vmem:[%s5526 + $0x21] sm:$0x1]
    %v5531 = vmax.f32 %v5527, %v5529
    %v5532 = vmax.f32 %v5528, %v5530
    %v5533 = vpack.c.bf16 %v5531, %v5531
    %v5534 = vpack.c.bf16 %v5532, %v5532
    %v5538 = vunpack.c.l.s4 1966171168
    %v5539 = vunpack.c.0.s8 %v5538
    %v5540 = vlaneseq
    %v5541 = vshrl.u32 %v5540, 7
    %v5542 = vsub.s32 %v5539, %v5541
    %v5543 = vrot.slane %v5533, %v5542
    %v5545 = vunpack.c.l.s4 1966171168
    %v5546 = vunpack.c.0.s8 %v5545
    %v5547 = vlaneseq
    %v5548 = vshrl.u32 %v5547, 7
    %v5549 = vsub.s32 %v5546, %v5548
    %v5550 = vrot.slane %v5543, %v5549
    %v5552 = vunpack.c.l.s4 1966171168
    %v5553 = vunpack.c.0.s8 %v5552
    %v5554 = vlaneseq
    %v5555 = vshrl.u32 %v5554, 7
    %v5556 = vsub.s32 %v5553, %v5555
    %v5557 = vrot.slane %v5534, %v5556
    %v5559 = vunpack.c.l.s4 1966171168
    %v5560 = vunpack.c.0.s8 %v5559
    %v5561 = vlaneseq
    %v5562 = vshrl.u32 %v5561, 7
    %v5563 = vsub.s32 %v5560, %v5562
    %v5564 = vrot.slane %v5557, %v5563
    %v5566 = vunpack.c.l.s4 1935823168
    %v5567 = vunpack.c.0.s8 %v5566
    %v5568 = vlaneseq
    %v5569 = vshrl.u32 %v5568, 7
    %v5570 = vsub.s32 %v5567, %v5569
    %v5571 = vrot.slane %v5550, %v5570
    %v5573 = vunpack.c.l.s4 1935823168
    %v5574 = vunpack.c.0.s8 %v5573
    %v5575 = vlaneseq
    %v5576 = vshrl.u32 %v5575, 7
    %v5577 = vsub.s32 %v5574, %v5576
    %v5578 = vrot.slane %v5571, %v5577
    %v5580 = vunpack.c.l.s4 1935823168
    %v5581 = vunpack.c.0.s8 %v5580
    %v5582 = vlaneseq
    %v5583 = vshrl.u32 %v5582, 7
    %v5584 = vsub.s32 %v5581, %v5583
    %v5585 = vrot.slane %v5564, %v5584
    %v5587 = vunpack.c.l.s4 1935823168
    %v5588 = vunpack.c.0.s8 %v5587
    %v5589 = vlaneseq
    %v5590 = vshrl.u32 %v5589, 7
    %v5591 = vsub.s32 %v5588, %v5590
    %v5592 = vrot.slane %v5585, %v5591
    %v5593 = vunpack.c.l.b16 %v5578
    %v5594 = vunpack.c.l.b16 %v5592
    %v5595 = vrot.slane %v5594, 7
    %v5596 = vsel %vm4526, %v5595, %v5593
    %v5597 = vpack.c.b16 %v5596, %v5596
    %v5599 = vunpack.c.l.s4 1966171168
    %v5600 = vunpack.c.0.s8 %v5599
    %v5601 = vlaneseq
    %v5602 = vshrl.u32 %v5601, 7
    %v5603 = vsub.s32 %v5600, %v5602
    %v5604 = vrot.slane %v5597, %v5603
    %v5606 = vunpack.c.l.s4 1966171168
    %v5607 = vunpack.c.0.s8 %v5606
    %v5608 = vlaneseq
    %v5609 = vshrl.u32 %v5608, 7
    %v5610 = vsub.s32 %v5607, %v5609
    %v5611 = vrot.slane %v5604, %v5610
    %5613 = vst.msk [vmem:[#allocation8 + $0x3] sm:$0x1] %vm4544, %v5611
    %v5614 = vld [vmem:[%s5526 + $0x2] sm:$0x1]
    %v5615 = vld [vmem:[%s5526 + $0x22] sm:$0x1]
    %v5616 = vld [vmem:[%s5526 + $0x3] sm:$0x1]
    %v5617 = vld [vmem:[%s5526 + $0x23] sm:$0x1]
    %v5618 = vmax.f32 %v5614, %v5616
    %v5619 = vmax.f32 %v5615, %v5617
    %v5620 = vpack.c.bf16 %v5618, %v5618
    %v5621 = vpack.c.bf16 %v5619, %v5619
    %v5625 = vunpack.c.l.s4 1966171168
    %v5626 = vunpack.c.0.s8 %v5625
    %v5627 = vlaneseq
    %v5628 = vshrl.u32 %v5627, 7
    %v5629 = vsub.s32 %v5626, %v5628
    %v5630 = vrot.slane %v5620, %v5629
    %v5632 = vunpack.c.l.s4 1966171168
    %v5633 = vunpack.c.0.s8 %v5632
    %v5634 = vlaneseq
    %v5635 = vshrl.u32 %v5634, 7
    %v5636 = vsub.s32 %v5633, %v5635
    %v5637 = vrot.slane %v5630, %v5636
    %v5639 = vunpack.c.l.s4 1966171168
    %v5640 = vunpack.c.0.s8 %v5639
    %v5641 = vlaneseq
    %v5642 = vshrl.u32 %v5641, 7
    %v5643 = vsub.s32 %v5640, %v5642
    %v5644 = vrot.slane %v5621, %v5643
    %v5646 = vunpack.c.l.s4 1966171168
    %v5647 = vunpack.c.0.s8 %v5646
    %v5648 = vlaneseq
    %v5649 = vshrl.u32 %v5648, 7
    %v5650 = vsub.s32 %v5647, %v5649
    %v5651 = vrot.slane %v5644, %v5650
    %v5653 = vunpack.c.l.s4 1935823168
    %v5654 = vunpack.c.0.s8 %v5653
    %v5655 = vlaneseq
    %v5656 = vshrl.u32 %v5655, 7
    %v5657 = vsub.s32 %v5654, %v5656
    %v5658 = vrot.slane %v5637, %v5657
    %v5660 = vunpack.c.l.s4 1935823168
    %v5661 = vunpack.c.0.s8 %v5660
    %v5662 = vlaneseq
    %v5663 = vshrl.u32 %v5662, 7
    %v5664 = vsub.s32 %v5661, %v5663
    %v5665 = vrot.slane %v5658, %v5664
    %v5667 = vunpack.c.l.s4 1935823168
    %v5668 = vunpack.c.0.s8 %v5667
    %v5669 = vlaneseq
    %v5670 = vshrl.u32 %v5669, 7
    %v5671 = vsub.s32 %v5668, %v5670
    %v5672 = vrot.slane %v5651, %v5671
    %v5674 = vunpack.c.l.s4 1935823168
    %v5675 = vunpack.c.0.s8 %v5674
    %v5676 = vlaneseq
    %v5677 = vshrl.u32 %v5676, 7
    %v5678 = vsub.s32 %v5675, %v5677
    %v5679 = vrot.slane %v5672, %v5678
    %v5680 = vunpack.c.l.b16 %v5665
    %v5681 = vunpack.c.l.b16 %v5679
    %v5682 = vrot.slane %v5681, 7
    %v5683 = vsel %vm4526, %v5682, %v5680
    %v5684 = vpack.c.b16 %v5683, %v5683
    %v5686 = vunpack.c.l.s4 1966171168
    %v5687 = vunpack.c.0.s8 %v5686
    %v5688 = vlaneseq
    %v5689 = vshrl.u32 %v5688, 7
    %v5690 = vsub.s32 %v5687, %v5689
    %v5691 = vrot.slane %v5684, %v5690
    %v5693 = vunpack.c.l.s4 1966171168
    %v5694 = vunpack.c.0.s8 %v5693
    %v5695 = vlaneseq
    %v5696 = vshrl.u32 %v5695, 7
    %v5697 = vsub.s32 %v5694, %v5696
    %v5698 = vrot.slane %v5691, %v5697
    %5699 = vrot.lane.b32.xlu0 %v5698, 32
    %v5700 = vpop.permute.xlu0 %5699
    %5702 = vst.msk [vmem:[#allocation8 + $0x3] sm:$0x1] %vm4634, %v5700
    %v5703 = vld [vmem:[%s5526 + $0x4] sm:$0x1]
    %v5704 = vld [vmem:[%s5526 + $0x24] sm:$0x1]
    %v5705 = vld [vmem:[%s5526 + $0x5] sm:$0x1]
    %v5706 = vld [vmem:[%s5526 + $0x25] sm:$0x1]
    %v5707 = vmax.f32 %v5703, %v5705
    %v5708 = vmax.f32 %v5704, %v5706
    %v5709 = vpack.c.bf16 %v5707, %v5707
    %v5710 = vpack.c.bf16 %v5708, %v5708
    %v5714 = vunpack.c.l.s4 1966171168
    %v5715 = vunpack.c.0.s8 %v5714
    %v5716 = vlaneseq
    %v5717 = vshrl.u32 %v5716, 7
    %v5718 = vsub.s32 %v5715, %v5717
    %v5719 = vrot.slane %v5709, %v5718
    %v5721 = vunpack.c.l.s4 1966171168
    %v5722 = vunpack.c.0.s8 %v5721
    %v5723 = vlaneseq
    %v5724 = vshrl.u32 %v5723, 7
    %v5725 = vsub.s32 %v5722, %v5724
    %v5726 = vrot.slane %v5719, %v5725
    %v5728 = vunpack.c.l.s4 1966171168
    %v5729 = vunpack.c.0.s8 %v5728
    %v5730 = vlaneseq
    %v5731 = vshrl.u32 %v5730, 7
    %v5732 = vsub.s32 %v5729, %v5731
    %v5733 = vrot.slane %v5710, %v5732
    %v5735 = vunpack.c.l.s4 1966171168
    %v5736 = vunpack.c.0.s8 %v5735
    %v5737 = vlaneseq
    %v5738 = vshrl.u32 %v5737, 7
    %v5739 = vsub.s32 %v5736, %v5738
    %v5740 = vrot.slane %v5733, %v5739
    %v5742 = vunpack.c.l.s4 1935823168
    %v5743 = vunpack.c.0.s8 %v5742
    %v5744 = vlaneseq
    %v5745 = vshrl.u32 %v5744, 7
    %v5746 = vsub.s32 %v5743, %v5745
    %v5747 = vrot.slane %v5726, %v5746
    %v5749 = vunpack.c.l.s4 1935823168
    %v5750 = vunpack.c.0.s8 %v5749
    %v5751 = vlaneseq
    %v5752 = vshrl.u32 %v5751, 7
    %v5753 = vsub.s32 %v5750, %v5752
    %v5754 = vrot.slane %v5747, %v5753
    %v5756 = vunpack.c.l.s4 1935823168
    %v5757 = vunpack.c.0.s8 %v5756
    %v5758 = vlaneseq
    %v5759 = vshrl.u32 %v5758, 7
    %v5760 = vsub.s32 %v5757, %v5759
    %v5761 = vrot.slane %v5740, %v5760
    %v5763 = vunpack.c.l.s4 1935823168
    %v5764 = vunpack.c.0.s8 %v5763
    %v5765 = vlaneseq
    %v5766 = vshrl.u32 %v5765, 7
    %v5767 = vsub.s32 %v5764, %v5766
    %v5768 = vrot.slane %v5761, %v5767
    %v5769 = vunpack.c.l.b16 %v5754
    %v5770 = vunpack.c.l.b16 %v5768
    %v5771 = vrot.slane %v5770, 7
    %v5772 = vsel %vm4526, %v5771, %v5769
    %v5773 = vpack.c.b16 %v5772, %v5772
    %v5775 = vunpack.c.l.s4 1966171168
    %v5776 = vunpack.c.0.s8 %v5775
    %v5777 = vlaneseq
    %v5778 = vshrl.u32 %v5777, 7
    %v5779 = vsub.s32 %v5776, %v5778
    %v5780 = vrot.slane %v5773, %v5779
    %v5782 = vunpack.c.l.s4 1966171168
    %v5783 = vunpack.c.0.s8 %v5782
    %v5784 = vlaneseq
    %v5785 = vshrl.u32 %v5784, 7
    %v5786 = vsub.s32 %v5783, %v5785
    %v5787 = vrot.slane %v5780, %v5786
    %5788 = vrot.lane.b32.xlu0 %v5787, 64
    %v5789 = vpop.permute.xlu0 %5788
    %5791 = vst.msk [vmem:[#allocation8 + $0x3] sm:$0x1] %vm4724, %v5789
    %v5792 = vld [vmem:[%s5526 + $0x6] sm:$0x1]
    %v5793 = vld [vmem:[%s5526 + $0x26] sm:$0x1]
    %v5794 = vld [vmem:[%s5526 + $0x7] sm:$0x1]
    %v5795 = vld [vmem:[%s5526 + $0x27] sm:$0x1]
    %v5796 = vmax.f32 %v5792, %v5794
    %v5797 = vmax.f32 %v5793, %v5795
    %v5798 = vpack.c.bf16 %v5796, %v5796
    %v5799 = vpack.c.bf16 %v5797, %v5797
    %v5803 = vunpack.c.l.s4 1966171168
    %v5804 = vunpack.c.0.s8 %v5803
    %v5805 = vlaneseq
    %v5806 = vshrl.u32 %v5805, 7
    %v5807 = vsub.s32 %v5804, %v5806
    %v5808 = vrot.slane %v5798, %v5807
    %v5810 = vunpack.c.l.s4 1966171168
    %v5811 = vunpack.c.0.s8 %v5810
    %v5812 = vlaneseq
    %v5813 = vshrl.u32 %v5812, 7
    %v5814 = vsub.s32 %v5811, %v5813
    %v5815 = vrot.slane %v5808, %v5814
    %v5817 = vunpack.c.l.s4 1966171168
    %v5818 = vunpack.c.0.s8 %v5817
    %v5819 = vlaneseq
    %v5820 = vshrl.u32 %v5819, 7
    %v5821 = vsub.s32 %v5818, %v5820
    %v5822 = vrot.slane %v5799, %v5821
    %v5824 = vunpack.c.l.s4 1966171168
    %v5825 = vunpack.c.0.s8 %v5824
    %v5826 = vlaneseq
    %v5827 = vshrl.u32 %v5826, 7
    %v5828 = vsub.s32 %v5825, %v5827
    %v5829 = vrot.slane %v5822, %v5828
    %v5831 = vunpack.c.l.s4 1935823168
    %v5832 = vunpack.c.0.s8 %v5831
    %v5833 = vlaneseq
    %v5834 = vshrl.u32 %v5833, 7
    %v5835 = vsub.s32 %v5832, %v5834
    %v5836 = vrot.slane %v5815, %v5835
    %v5838 = vunpack.c.l.s4 1935823168
    %v5839 = vunpack.c.0.s8 %v5838
    %v5840 = vlaneseq
    %v5841 = vshrl.u32 %v5840, 7
    %v5842 = vsub.s32 %v5839, %v5841
    %v5843 = vrot.slane %v5836, %v5842
    %v5845 = vunpack.c.l.s4 1935823168
    %v5846 = vunpack.c.0.s8 %v5845
    %v5847 = vlaneseq
    %v5848 = vshrl.u32 %v5847, 7
    %v5849 = vsub.s32 %v5846, %v5848
    %v5850 = vrot.slane %v5829, %v5849
    %v5852 = vunpack.c.l.s4 1935823168
    %v5853 = vunpack.c.0.s8 %v5852
    %v5854 = vlaneseq
    %v5855 = vshrl.u32 %v5854, 7
    %v5856 = vsub.s32 %v5853, %v5855
    %v5857 = vrot.slane %v5850, %v5856
    %v5858 = vunpack.c.l.b16 %v5843
    %v5859 = vunpack.c.l.b16 %v5857
    %v5860 = vrot.slane %v5859, 7
    %v5861 = vsel %vm4526, %v5860, %v5858
    %v5862 = vpack.c.b16 %v5861, %v5861
    %v5864 = vunpack.c.l.s4 1966171168
    %v5865 = vunpack.c.0.s8 %v5864
    %v5866 = vlaneseq
    %v5867 = vshrl.u32 %v5866, 7
    %v5868 = vsub.s32 %v5865, %v5867
    %v5869 = vrot.slane %v5862, %v5868
    %v5871 = vunpack.c.l.s4 1966171168
    %v5872 = vunpack.c.0.s8 %v5871
    %v5873 = vlaneseq
    %v5874 = vshrl.u32 %v5873, 7
    %v5875 = vsub.s32 %v5872, %v5874
    %v5876 = vrot.slane %v5869, %v5875
    %5877 = vrot.lane.b32.xlu0 %v5876, 96
    %v5878 = vpop.permute.xlu0 %5877
    %5880 = vst.msk [vmem:[#allocation8 + $0x3] sm:$0x1] %vm4814, %v5878
    %s5881 = smul.u32 4, 64
    %s5882 = smul.u32 %s5881, 4
    %s5883 = sshll.u32 %s5882, 4
    %5884 = dma.done [#allocation12], %s5883
    %v5885 = vld [vmem:[#allocation8] sm:$0xf]
    %v5886 = vld [vmem:[#allocation9] sm:$0xff]
    %v5887 = vld [vmem:[#allocation9 + $0x8] sm:$0xff]
    %v5888 = vld [vmem:[#allocation9 + $0x10] sm:$0xff]
    %v5889 = vld [vmem:[#allocation9 + $0x18] sm:$0xff]
    %v5890 = vld [vmem:[#allocation9 + $0x20] sm:$0xff]
    %v5891 = vld [vmem:[#allocation9 + $0x28] sm:$0xff]
    %v5892 = vld [vmem:[#allocation9 + $0x30] sm:$0xff]
    %v5893 = vld [vmem:[#allocation9 + $0x38] sm:$0xff]
    %v5894 = vld [vmem:[#allocation9 + $0x40] sm:$0xff]
    %v5895 = vld [vmem:[#allocation9 + $0x48] sm:$0xff]
    %v5896 = vld [vmem:[#allocation9 + $0x50] sm:$0xff]
    %v5897 = vld [vmem:[#allocation9 + $0x58] sm:$0xff]
    %v5898 = vld [vmem:[#allocation9 + $0x60] sm:$0xff]
    %v5899 = vld [vmem:[#allocation9 + $0x68] sm:$0xff]
    %v5900 = vld [vmem:[#allocation9 + $0x70] sm:$0xff]
    %v5901 = vld [vmem:[#allocation9 + $0x78] sm:$0xff]
    %v5902 = vld [vmem:[#allocation9 + $0x80] sm:$0xff]
    %v5903 = vld [vmem:[#allocation9 + $0x88] sm:$0xff]
    %v5904 = vld [vmem:[#allocation9 + $0x90] sm:$0xff]
    %v5905 = vld [vmem:[#allocation9 + $0x98] sm:$0xff]
    %v5906 = vld [vmem:[#allocation9 + $0xa0] sm:$0xff]
    %v5907 = vld [vmem:[#allocation9 + $0xa8] sm:$0xff]
    %v5908 = vld [vmem:[#allocation9 + $0xb0] sm:$0xff]
    %v5909 = vld [vmem:[#allocation9 + $0xb8] sm:$0xff]
    %v5910 = vld [vmem:[#allocation9 + $0xc0] sm:$0xff]
    %v5911 = vld [vmem:[#allocation9 + $0xc8] sm:$0xff]
    %v5912 = vld [vmem:[#allocation9 + $0xd0] sm:$0xff]
    %v5913 = vld [vmem:[#allocation9 + $0xd8] sm:$0xff]
    %v5914 = vld [vmem:[#allocation9 + $0xe0] sm:$0xff]
    %v5915 = vld [vmem:[#allocation9 + $0xe8] sm:$0xff]
    %v5916 = vld [vmem:[#allocation9 + $0xf0] sm:$0xff]
    %v5917 = vld [vmem:[#allocation9 + $0xf8] sm:$0xff]
    %v5918 = vld [vmem:[#allocation9 + $0x100] sm:$0xff]
    %v5919 = vld [vmem:[#allocation9 + $0x108] sm:$0xff]
    %v5920 = vld [vmem:[#allocation9 + $0x110] sm:$0xff]
    %v5921 = vld [vmem:[#allocation9 + $0x118] sm:$0xff]
    %v5922 = vld [vmem:[#allocation9 + $0x120] sm:$0xff]
    %v5923 = vld [vmem:[#allocation9 + $0x128] sm:$0xff]
    %v5924 = vld [vmem:[#allocation9 + $0x130] sm:$0xff]
    %v5925 = vld [vmem:[#allocation9 + $0x138] sm:$0xff]
    %v5926 = vld [vmem:[#allocation9 + $0x140] sm:$0xff]
    %v5927 = vld [vmem:[#allocation9 + $0x148] sm:$0xff]
    %v5928 = vld [vmem:[#allocation9 + $0x150] sm:$0xff]
    %v5929 = vld [vmem:[#allocation9 + $0x158] sm:$0xff]
    %v5930 = vld [vmem:[#allocation9 + $0x160] sm:$0xff]
    %v5931 = vld [vmem:[#allocation9 + $0x168] sm:$0xff]
    %v5932 = vld [vmem:[#allocation9 + $0x170] sm:$0xff]
    %v5933 = vld [vmem:[#allocation9 + $0x178] sm:$0xff]
    %v5934 = vld [vmem:[#allocation9 + $0x180] sm:$0xff]
    %v5935 = vld [vmem:[#allocation9 + $0x188] sm:$0xff]
    %v5936 = vld [vmem:[#allocation9 + $0x190] sm:$0xff]
    %v5937 = vld [vmem:[#allocation9 + $0x198] sm:$0xff]
    %v5938 = vld [vmem:[#allocation9 + $0x1a0] sm:$0xff]
    %v5939 = vld [vmem:[#allocation9 + $0x1a8] sm:$0xff]
    %v5940 = vld [vmem:[#allocation9 + $0x1b0] sm:$0xff]
    %v5941 = vld [vmem:[#allocation9 + $0x1b8] sm:$0xff]
    %v5942 = vld [vmem:[#allocation9 + $0x1c0] sm:$0xff]
    %v5943 = vld [vmem:[#allocation9 + $0x1c8] sm:$0xff]
    %v5944 = vld [vmem:[#allocation9 + $0x1d0] sm:$0xff]
    %v5945 = vld [vmem:[#allocation9 + $0x1d8] sm:$0xff]
    %v5946 = vld [vmem:[#allocation9 + $0x1e0] sm:$0xff]
    %v5947 = vld [vmem:[#allocation9 + $0x1e8] sm:$0xff]
    %v5948 = vld [vmem:[#allocation9 + $0x1f0] sm:$0xff]
    %v5949 = vld [vmem:[#allocation9 + $0x1f8] sm:$0xff]
    %v5950 = vld [vmem:[#allocation9 + $0x200] sm:$0xff]
    %v5951 = vld [vmem:[#allocation9 + $0x208] sm:$0xff]
    %v5952 = vld [vmem:[#allocation9 + $0x210] sm:$0xff]
    %v5953 = vld [vmem:[#allocation9 + $0x218] sm:$0xff]
    %v5954 = vld [vmem:[#allocation9 + $0x220] sm:$0xff]
    %v5955 = vld [vmem:[#allocation9 + $0x228] sm:$0xff]
    %v5956 = vld [vmem:[#allocation9 + $0x230] sm:$0xff]
    %v5957 = vld [vmem:[#allocation9 + $0x238] sm:$0xff]
    %v5958 = vld [vmem:[#allocation9 + $0x240] sm:$0xff]
    %v5959 = vld [vmem:[#allocation9 + $0x248] sm:$0xff]
    %v5960 = vld [vmem:[#allocation9 + $0x250] sm:$0xff]
    %v5961 = vld [vmem:[#allocation9 + $0x258] sm:$0xff]
    %v5962 = vld [vmem:[#allocation9 + $0x260] sm:$0xff]
    %v5963 = vld [vmem:[#allocation9 + $0x268] sm:$0xff]
    %v5964 = vld [vmem:[#allocation9 + $0x270] sm:$0xff]
    %v5965 = vld [vmem:[#allocation9 + $0x278] sm:$0xff]
    %v5966 = vld [vmem:[#allocation9 + $0x280] sm:$0xff]
    %v5967 = vld [vmem:[#allocation9 + $0x288] sm:$0xff]
    %v5968 = vld [vmem:[#allocation9 + $0x290] sm:$0xff]
    %v5969 = vld [vmem:[#allocation9 + $0x298] sm:$0xff]
    %v5970 = vld [vmem:[#allocation9 + $0x2a0] sm:$0xff]
    %v5971 = vld [vmem:[#allocation9 + $0x2a8] sm:$0xff]
    %v5972 = vld [vmem:[#allocation9 + $0x2b0] sm:$0xff]
    %v5973 = vld [vmem:[#allocation9 + $0x2b8] sm:$0xff]
    %v5974 = vld [vmem:[#allocation9 + $0x2c0] sm:$0xff]
    %v5975 = vld [vmem:[#allocation9 + $0x2c8] sm:$0xff]
    %v5976 = vld [vmem:[#allocation9 + $0x2d0] sm:$0xff]
    %v5977 = vld [vmem:[#allocation9 + $0x2d8] sm:$0xff]
    %v5978 = vld [vmem:[#allocation9 + $0x2e0] sm:$0xff]
    %v5979 = vld [vmem:[#allocation9 + $0x2e8] sm:$0xff]
    %v5980 = vld [vmem:[#allocation9 + $0x2f0] sm:$0xff]
    %v5981 = vld [vmem:[#allocation9 + $0x2f8] sm:$0xff]
    %v5982 = vld [vmem:[#allocation9 + $0x300] sm:$0xff]
    %v5983 = vld [vmem:[#allocation9 + $0x308] sm:$0xff]
    %v5984 = vld [vmem:[#allocation9 + $0x310] sm:$0xff]
    %v5985 = vld [vmem:[#allocation9 + $0x318] sm:$0xff]
    %v5986 = vld [vmem:[#allocation9 + $0x320] sm:$0xff]
    %v5987 = vld [vmem:[#allocation9 + $0x328] sm:$0xff]
    %v5988 = vld [vmem:[#allocation9 + $0x330] sm:$0xff]
    %v5989 = vld [vmem:[#allocation9 + $0x338] sm:$0xff]
    %v5990 = vld [vmem:[#allocation9 + $0x340] sm:$0xff]
    %v5991 = vld [vmem:[#allocation9 + $0x348] sm:$0xff]
    %v5992 = vld [vmem:[#allocation9 + $0x350] sm:$0xff]
    %v5993 = vld [vmem:[#allocation9 + $0x358] sm:$0xff]
    %v5994 = vld [vmem:[#allocation9 + $0x360] sm:$0xff]
    %v5995 = vld [vmem:[#allocation9 + $0x368] sm:$0xff]
    %v5996 = vld [vmem:[#allocation9 + $0x370] sm:$0xff]
    %v5997 = vld [vmem:[#allocation9 + $0x378] sm:$0xff]
    %v5998 = vld [vmem:[#allocation9 + $0x380] sm:$0xff]
    %v5999 = vld [vmem:[#allocation9 + $0x388] sm:$0xff]
    %v6000 = vld [vmem:[#allocation9 + $0x390] sm:$0xff]
    %v6001 = vld [vmem:[#allocation9 + $0x398] sm:$0xff]
    %v6002 = vld [vmem:[#allocation9 + $0x3a0] sm:$0xff]
    %v6003 = vld [vmem:[#allocation9 + $0x3a8] sm:$0xff]
    %v6004 = vld [vmem:[#allocation9 + $0x3b0] sm:$0xff]
    %v6005 = vld [vmem:[#allocation9 + $0x3b8] sm:$0xff]
    %v6006 = vld [vmem:[#allocation9 + $0x3c0] sm:$0xff]
    %v6007 = vld [vmem:[#allocation9 + $0x3c8] sm:$0xff]
    %v6008 = vld [vmem:[#allocation9 + $0x3d0] sm:$0xff]
    %v6009 = vld [vmem:[#allocation9 + $0x3d8] sm:$0xff]
    %v6010 = vld [vmem:[#allocation9 + $0x3e0] sm:$0xff]
    %v6011 = vld [vmem:[#allocation9 + $0x3e8] sm:$0xff]
    %v6012 = vld [vmem:[#allocation9 + $0x3f0] sm:$0xff]
    %v6013 = vld [vmem:[#allocation9 + $0x3f8] sm:$0xff]
    %v6014 = vld [vmem:[%s5] sm:$0xf]
    %v6016 = vlaneseq
    %v6017 = vshrl.u32 %v6016, 7
    %v6018 = vsub.s32 0, %v6017
    %v6019 = vrot.slane %v6014, %v6018
    %v6020 = vlaneseq
    %v6021 = vshrl.u32 %v6020, 7
    %v6022 = vsub.s32 1, %v6021
    %v6023 = vrot.slane %v6014, %v6022
    %v6024 = vlaneseq
    %v6025 = vshrl.u32 %v6024, 7
    %v6026 = vsub.s32 2, %v6025
    %v6027 = vrot.slane %v6014, %v6026
    %v6028 = vlaneseq
    %v6029 = vshrl.u32 %v6028, 7
    %v6030 = vsub.s32 3, %v6029
    %v6031 = vrot.slane %v6014, %v6030
    %v6038 = vunpack.c.l.s4 1966171168
    %v6039 = vunpack.c.0.s8 %v6038
    %v6040 = vlaneseq
    %v6041 = vshrl.u32 %v6040, 7
    %v6042 = vsub.s32 %v6039, %v6041
    %v6043 = vrot.slane %v5885, %v6042
    %v6044 = vcombine.high %v6043, %v6043
    %v6046 = vunpack.c.l.s4 1966171168
    %v6047 = vunpack.c.0.s8 %v6046
    %v6048 = vlaneseq
    %v6049 = vshrl.u32 %v6048, 7
    %v6050 = vsub.s32 %v6047, %v6049
    %v6051 = vrot.slane %v6043, %v6050
    %v6053 = vunpack.c.l.s4 1966171168
    %v6054 = vunpack.c.0.s8 %v6053
    %v6055 = vlaneseq
    %v6056 = vshrl.u32 %v6055, 7
    %v6057 = vsub.s32 %v6054, %v6056
    %v6058 = vrot.slane %v6044, %v6057
    %v6059 = vcombine.high %v6051, %v6051
    %v6060 = vcombine.high %v6058, %v6058
    %6065 = vmatprep.subr.bf16.mxu0 %v5887
    %6066 = vmatpush1.bf16.msra.mxu0 %v5886
    %6067 = vmatprep.subr.bf16.mxu0 %v5891
    %6068 = vmatpush1.bf16.msra.mxu0 %v5890
    %6069 = vmatprep.subr.bf16.mxu0 %v5895
    %6070 = vmatpush1.bf16.msra.mxu0 %v5894
    %6071 = vmatprep.subr.bf16.mxu0 %v5899
    %6072 = vmatpush1.bf16.msra.mxu0 %v5898
    %6073 = vmatprep.subr.bf16.mxu0 %v5903
    %6074 = vmatpush1.bf16.msra.mxu0 %v5902
    %6075 = vmatprep.subr.bf16.mxu0 %v5907
    %6076 = vmatpush1.bf16.msra.mxu0 %v5906
    %6077 = vmatprep.subr.bf16.mxu0 %v5911
    %6078 = vmatpush1.bf16.msra.mxu0 %v5910
    %6079 = vmatprep.subr.bf16.mxu0 %v5915
    %6080 = vmatpush1.bf16.msra.mxu0 %v5914
    %6081 = vmatprep.subr.bf16.mxu0 %v5919
    %6082 = vmatpush1.bf16.msra.mxu0 %v5918
    %6083 = vmatprep.subr.bf16.mxu0 %v5923
    %6084 = vmatpush1.bf16.msra.mxu0 %v5922
    %6085 = vmatprep.subr.bf16.mxu0 %v5927
    %6086 = vmatpush1.bf16.msra.mxu0 %v5926
    %6087 = vmatprep.subr.bf16.mxu0 %v5931
    %6088 = vmatpush1.bf16.msra.mxu0 %v5930
    %6089 = vmatprep.subr.bf16.mxu0 %v5935
    %6090 = vmatpush1.bf16.msra.mxu0 %v5934
    %6091 = vmatprep.subr.bf16.mxu0 %v5939
    %6092 = vmatpush1.bf16.msra.mxu0 %v5938
    %6093 = vmatprep.subr.bf16.mxu0 %v5943
    %6094 = vmatpush1.bf16.msra.mxu0 %v5942
    %6095 = vmatprep.subr.bf16.mxu0 %v5947
    %6096 = vmatpush1.bf16.msra.mxu0 %v5946
    %6097 = vmatprep.mubr.bf16.mxu0 %v6058
    %6098 = vmatmul.mubr.bf16.gmra.mrb[0].mxu0 %v6051
    %v6099 = vpop.f32.mrb[0].mxu0
    %v6100 = vadd.f32 %v6019, %v6099
    %v6101 = vpop.f32.mrb[0].mxu0
    %v6102 = vadd.f32 %v6023, %v6101
    %v6103 = vpop.f32.mrb[0].mxu0
    %v6104 = vpop.f32.mrb[0].mxu0
    %6105 = vdwg.mxu0
    %6106 = vmatprep.subr.bf16.mxu0 %v5951
    %6107 = vmatpush1.bf16.msra.mxu0 %v5950
    %6108 = vmatprep.subr.bf16.mxu0 %v5955
    %6109 = vmatpush1.bf16.msra.mxu0 %v5954
    %6110 = vmatprep.subr.bf16.mxu0 %v5959
    %6111 = vmatpush1.bf16.msra.mxu0 %v5958
    %6112 = vmatprep.subr.bf16.mxu0 %v5963
    %6113 = vmatpush1.bf16.msra.mxu0 %v5962
    %6114 = vmatprep.subr.bf16.mxu0 %v5967
    %6115 = vmatpush1.bf16.msra.mxu0 %v5966
    %6116 = vmatprep.subr.bf16.mxu0 %v5971
    %6117 = vmatpush1.bf16.msra.mxu0 %v5970
    %6118 = vmatprep.subr.bf16.mxu0 %v5975
    %6119 = vmatpush1.bf16.msra.mxu0 %v5974
    %6120 = vmatprep.subr.bf16.mxu0 %v5979
    %6121 = vmatpush1.bf16.msra.mxu0 %v5978
    %6122 = vmatprep.subr.bf16.mxu0 %v5983
    %6123 = vmatpush1.bf16.msra.mxu0 %v5982
    %6124 = vmatprep.subr.bf16.mxu0 %v5987
    %6125 = vmatpush1.bf16.msra.mxu0 %v5986
    %6126 = vmatprep.subr.bf16.mxu0 %v5991
    %6127 = vmatpush1.bf16.msra.mxu0 %v5990
    %6128 = vmatprep.subr.bf16.mxu0 %v5995
    %6129 = vmatpush1.bf16.msra.mxu0 %v5994
    %6130 = vmatprep.subr.bf16.mxu0 %v5999
    %6131 = vmatpush1.bf16.msra.mxu0 %v5998
    %6132 = vmatprep.subr.bf16.mxu0 %v6003
    %6133 = vmatpush1.bf16.msra.mxu0 %v6002
    %6134 = vmatprep.subr.bf16.mxu0 %v6007
    %6135 = vmatpush1.bf16.msra.mxu0 %v6006
    %6136 = vmatprep.subr.bf16.mxu0 %v6011
    %6137 = vmatpush1.bf16.msra.mxu0 %v6010
    %6138 = vmatprep.mubr.bf16.mxu0 %v6060
    %6139 = vmatmul.mubr.bf16.gmra.mrb[0].mxu0 %v6059
    %v6140 = vpop.f32.mrb[0].mxu0
    %v6141 = vadd.f32 %v6100, %v6140
    %v6142 = vpop.f32.mrb[0].mxu0
    %v6143 = vadd.f32 %v6102, %v6142
    %v6144 = vpop.f32.mrb[0].mxu0
    %v6145 = vpop.f32.mrb[0].mxu0
    %6146 = vdwg.mxu0
    %6147 = vmatprep.subr.bf16.mxu0 %v5889
    %6148 = vmatpush1.bf16.msra.mxu0 %v5888
    %6149 = vmatprep.subr.bf16.mxu0 %v5893
    %6150 = vmatpush1.bf16.msra.mxu0 %v5892
    %6151 = vmatprep.subr.bf16.mxu0 %v5897
    %6152 = vmatpush1.bf16.msra.mxu0 %v5896
    %6153 = vmatprep.subr.bf16.mxu0 %v5901
    %6154 = vmatpush1.bf16.msra.mxu0 %v5900
    %6155 = vmatprep.subr.bf16.mxu0 %v5905
    %6156 = vmatpush1.bf16.msra.mxu0 %v5904
    %6157 = vmatprep.subr.bf16.mxu0 %v5909
    %6158 = vmatpush1.bf16.msra.mxu0 %v5908
    %6159 = vmatprep.subr.bf16.mxu0 %v5913
    %6160 = vmatpush1.bf16.msra.mxu0 %v5912
    %6161 = vmatprep.subr.bf16.mxu0 %v5917
    %6162 = vmatpush1.bf16.msra.mxu0 %v5916
    %6163 = vmatprep.subr.bf16.mxu0 %v5921
    %6164 = vmatpush1.bf16.msra.mxu0 %v5920
    %6165 = vmatprep.subr.bf16.mxu0 %v5925
    %6166 = vmatpush1.bf16.msra.mxu0 %v5924
    %6167 = vmatprep.subr.bf16.mxu0 %v5929
    %6168 = vmatpush1.bf16.msra.mxu0 %v5928
    %6169 = vmatprep.subr.bf16.mxu0 %v5933
    %6170 = vmatpush1.bf16.msra.mxu0 %v5932
    %6171 = vmatprep.subr.bf16.mxu0 %v5937
    %6172 = vmatpush1.bf16.msra.mxu0 %v5936
    %6173 = vmatprep.subr.bf16.mxu0 %v5941
    %6174 = vmatpush1.bf16.msra.mxu0 %v5940
    %6175 = vmatprep.subr.bf16.mxu0 %v5945
    %6176 = vmatpush1.bf16.msra.mxu0 %v5944
    %6177 = vmatprep.subr.bf16.mxu0 %v5949
    %6178 = vmatpush1.bf16.msra.mxu0 %v5948
    %6179 = vmatprep.mubr.bf16.mxu0 %v6058
    %6180 = vmatmul.mubr.bf16.gmra.mrb[0].mxu0 %v6051
    %v6181 = vpop.f32.mrb[0].mxu0
    %v6182 = vadd.f32 %v6027, %v6181
    %v6183 = vpop.f32.mrb[0].mxu0
    %v6184 = vadd.f32 %v6031, %v6183
    %v6185 = vpop.f32.mrb[0].mxu0
    %v6186 = vpop.f32.mrb[0].mxu0
    %6187 = vdwg.mxu0
    %6188 = vmatprep.subr.bf16.mxu0 %v5953
    %6189 = vmatpush1.bf16.msra.mxu0 %v5952
    %6190 = vmatprep.subr.bf16.mxu0 %v5957
    %6191 = vmatpush1.bf16.msra.mxu0 %v5956
    %6192 = vmatprep.subr.bf16.mxu0 %v5961
    %6193 = vmatpush1.bf16.msra.mxu0 %v5960
    %6194 = vmatprep.subr.bf16.mxu0 %v5965
    %6195 = vmatpush1.bf16.msra.mxu0 %v5964
    %6196 = vmatprep.subr.bf16.mxu0 %v5969
    %6197 = vmatpush1.bf16.msra.mxu0 %v5968
    %6198 = vmatprep.subr.bf16.mxu0 %v5973
    %6199 = vmatpush1.bf16.msra.mxu0 %v5972
    %6200 = vmatprep.subr.bf16.mxu0 %v5977
    %6201 = vmatpush1.bf16.msra.mxu0 %v5976
    %6202 = vmatprep.subr.bf16.mxu0 %v5981
    %6203 = vmatpush1.bf16.msra.mxu0 %v5980
    %6204 = vmatprep.subr.bf16.mxu0 %v5985
    %6205 = vmatpush1.bf16.msra.mxu0 %v5984
    %6206 = vmatprep.subr.bf16.mxu0 %v5989
    %6207 = vmatpush1.bf16.msra.mxu0 %v5988
    %6208 = vmatprep.subr.bf16.mxu0 %v5993
    %6209 = vmatpush1.bf16.msra.mxu0 %v5992
    %6210 = vmatprep.subr.bf16.mxu0 %v5997
    %6211 = vmatpush1.bf16.msra.mxu0 %v5996
    %6212 = vmatprep.subr.bf16.mxu0 %v6001
    %6213 = vmatpush1.bf16.msra.mxu0 %v6000
    %6214 = vmatprep.subr.bf16.mxu0 %v6005
    %6215 = vmatpush1.bf16.msra.mxu0 %v6004
    %6216 = vmatprep.subr.bf16.mxu0 %v6009
    %6217 = vmatpush1.bf16.msra.mxu0 %v6008
    %6218 = vmatprep.subr.bf16.mxu0 %v6013
    %6219 = vmatpush1.bf16.msra.mxu0 %v6012
    %6220 = vmatprep.mubr.bf16.mxu0 %v6060
    %6221 = vmatmul.mubr.bf16.gmra.mrb[0].mxu0 %v6059
    %v6222 = vpop.f32.mrb[0].mxu0
    %v6223 = vadd.f32 %v6182, %v6222
    %v6224 = vpop.f32.mrb[0].mxu0
    %v6225 = vadd.f32 %v6184, %v6224
    %v6226 = vpop.f32.mrb[0].mxu0
    %v6227 = vpop.f32.mrb[0].mxu0
    %6228 = vdwg.mxu0
    %vm6229 = vcmp.gt.f32.partialorder %v6141, 0.0
    %vm6230 = vcmp.gt.f32.partialorder %v6143, 0.0
    %vm6231 = vcmp.gt.f32.partialorder %v6223, 0.0
    %vm6232 = vcmp.gt.f32.partialorder %v6225, 0.0
    %s6233 = sld [smem:[#allocation13]]
    %v6234 = vstv %s6233
    %v6235 = vmul.f32 %v6234, %v6141
    %v6236 = vmul.f32 %v6234, %v6143
    %v6237 = vmul.f32 %v6234, %v6223
    %v6238 = vmul.f32 %v6234, %v6225
    %v6239 = vsel %vm6229, %v6141, %v6235
    %v6240 = vsel %vm6230, %v6143, %v6236
    %v6241 = vsel %vm6231, %v6223, %v6237
    %v6242 = vsel %vm6232, %v6225, %v6238
    %s6243 = sshll.u32 %s5882, 4
    %6244 = dma.done %s85, %s6243
    %v6245 = vpack.c.bf16 %v6239, %v6239
    %v6246 = vpack.c.bf16 %v6240, %v6240
    %v6247 = vpack.c.bf16 %v6241, %v6241
    %v6248 = vpack.c.bf16 %v6242, %v6242
    %v6249 = vld [vmem:[#allocation10] sm:$0xff]
    %v6250 = vld [vmem:[#allocation10 + $0x8] sm:$0xff]
    %v6251 = vld [vmem:[#allocation10 + $0x10] sm:$0xff]
    %v6252 = vld [vmem:[#allocation10 + $0x18] sm:$0xff]
    %v6253 = vld [vmem:[#allocation10 + $0x20] sm:$0xff]
    %v6254 = vld [vmem:[#allocation10 + $0x28] sm:$0xff]
    %v6255 = vld [vmem:[#allocation10 + $0x30] sm:$0xff]
    %v6256 = vld [vmem:[#allocation10 + $0x38] sm:$0xff]
    %v6257 = vld [vmem:[#allocation10 + $0x40] sm:$0xff]
    %v6258 = vld [vmem:[#allocation10 + $0x48] sm:$0xff]
    %v6259 = vld [vmem:[#allocation10 + $0x50] sm:$0xff]
    %v6260 = vld [vmem:[#allocation10 + $0x58] sm:$0xff]
    %v6261 = vld [vmem:[#allocation10 + $0x60] sm:$0xff]
    %v6262 = vld [vmem:[#allocation10 + $0x68] sm:$0xff]
    %v6263 = vld [vmem:[#allocation10 + $0x70] sm:$0xff]
    %v6264 = vld [vmem:[#allocation10 + $0x78] sm:$0xff]
    %v6265 = vld [vmem:[#allocation10 + $0x80] sm:$0xff]
    %v6266 = vld [vmem:[#allocation10 + $0x88] sm:$0xff]
    %v6267 = vld [vmem:[#allocation10 + $0x90] sm:$0xff]
    %v6268 = vld [vmem:[#allocation10 + $0x98] sm:$0xff]
    %v6269 = vld [vmem:[#allocation10 + $0xa0] sm:$0xff]
    %v6270 = vld [vmem:[#allocation10 + $0xa8] sm:$0xff]
    %v6271 = vld [vmem:[#allocation10 + $0xb0] sm:$0xff]
    %v6272 = vld [vmem:[#allocation10 + $0xb8] sm:$0xff]
    %v6273 = vld [vmem:[#allocation10 + $0xc0] sm:$0xff]
    %v6274 = vld [vmem:[#allocation10 + $0xc8] sm:$0xff]
    %v6275 = vld [vmem:[#allocation10 + $0xd0] sm:$0xff]
    %v6276 = vld [vmem:[#allocation10 + $0xd8] sm:$0xff]
    %v6277 = vld [vmem:[#allocation10 + $0xe0] sm:$0xff]
    %v6278 = vld [vmem:[#allocation10 + $0xe8] sm:$0xff]
    %v6279 = vld [vmem:[#allocation10 + $0xf0] sm:$0xff]
    %v6280 = vld [vmem:[#allocation10 + $0xf8] sm:$0xff]
    %v6281 = vld [vmem:[#allocation10 + $0x100] sm:$0xff]
    %v6282 = vld [vmem:[#allocation10 + $0x108] sm:$0xff]
    %v6283 = vld [vmem:[#allocation10 + $0x110] sm:$0xff]
    %v6284 = vld [vmem:[#allocation10 + $0x118] sm:$0xff]
    %v6285 = vld [vmem:[#allocation10 + $0x120] sm:$0xff]
    %v6286 = vld [vmem:[#allocation10 + $0x128] sm:$0xff]
    %v6287 = vld [vmem:[#allocation10 + $0x130] sm:$0xff]
    %v6288 = vld [vmem:[#allocation10 + $0x138] sm:$0xff]
    %v6289 = vld [vmem:[#allocation10 + $0x140] sm:$0xff]
    %v6290 = vld [vmem:[#allocation10 + $0x148] sm:$0xff]
    %v6291 = vld [vmem:[#allocation10 + $0x150] sm:$0xff]
    %v6292 = vld [vmem:[#allocation10 + $0x158] sm:$0xff]
    %v6293 = vld [vmem:[#allocation10 + $0x160] sm:$0xff]
    %v6294 = vld [vmem:[#allocation10 + $0x168] sm:$0xff]
    %v6295 = vld [vmem:[#allocation10 + $0x170] sm:$0xff]
    %v6296 = vld [vmem:[#allocation10 + $0x178] sm:$0xff]
    %v6297 = vld [vmem:[#allocation10 + $0x180] sm:$0xff]
    %v6298 = vld [vmem:[#allocation10 + $0x188] sm:$0xff]
    %v6299 = vld [vmem:[#allocation10 + $0x190] sm:$0xff]
    %v6300 = vld [vmem:[#allocation10 + $0x198] sm:$0xff]
    %v6301 = vld [vmem:[#allocation10 + $0x1a0] sm:$0xff]
    %v6302 = vld [vmem:[#allocation10 + $0x1a8] sm:$0xff]
    %v6303 = vld [vmem:[#allocation10 + $0x1b0] sm:$0xff]
    %v6304 = vld [vmem:[#allocation10 + $0x1b8] sm:$0xff]
    %v6305 = vld [vmem:[#allocation10 + $0x1c0] sm:$0xff]
    %v6306 = vld [vmem:[#allocation10 + $0x1c8] sm:$0xff]
    %v6307 = vld [vmem:[#allocation10 + $0x1d0] sm:$0xff]
    %v6308 = vld [vmem:[#allocation10 + $0x1d8] sm:$0xff]
    %v6309 = vld [vmem:[#allocation10 + $0x1e0] sm:$0xff]
    %v6310 = vld [vmem:[#allocation10 + $0x1e8] sm:$0xff]
    %v6311 = vld [vmem:[#allocation10 + $0x1f0] sm:$0xff]
    %v6312 = vld [vmem:[#allocation10 + $0x1f8] sm:$0xff]
    %v6313 = vld [vmem:[#allocation10 + $0x200] sm:$0xff]
    %v6314 = vld [vmem:[#allocation10 + $0x208] sm:$0xff]
    %v6315 = vld [vmem:[#allocation10 + $0x210] sm:$0xff]
    %v6316 = vld [vmem:[#allocation10 + $0x218] sm:$0xff]
    %v6317 = vld [vmem:[#allocation10 + $0x220] sm:$0xff]
    %v6318 = vld [vmem:[#allocation10 + $0x228] sm:$0xff]
    %v6319 = vld [vmem:[#allocation10 + $0x230] sm:$0xff]
    %v6320 = vld [vmem:[#allocation10 + $0x238] sm:$0xff]
    %v6321 = vld [vmem:[#allocation10 + $0x240] sm:$0xff]
    %v6322 = vld [vmem:[#allocation10 + $0x248] sm:$0xff]
    %v6323 = vld [vmem:[#allocation10 + $0x250] sm:$0xff]
    %v6324 = vld [vmem:[#allocation10 + $0x258] sm:$0xff]
    %v6325 = vld [vmem:[#allocation10 + $0x260] sm:$0xff]
    %v6326 = vld [vmem:[#allocation10 + $0x268] sm:$0xff]
    %v6327 = vld [vmem:[#allocation10 + $0x270] sm:$0xff]
    %v6328 = vld [vmem:[#allocation10 + $0x278] sm:$0xff]
    %v6329 = vld [vmem:[#allocation10 + $0x280] sm:$0xff]
    %v6330 = vld [vmem:[#allocation10 + $0x288] sm:$0xff]
    %v6331 = vld [vmem:[#allocation10 + $0x290] sm:$0xff]
    %v6332 = vld [vmem:[#allocation10 + $0x298] sm:$0xff]
    %v6333 = vld [vmem:[#allocation10 + $0x2a0] sm:$0xff]
    %v6334 = vld [vmem:[#allocation10 + $0x2a8] sm:$0xff]
    %v6335 = vld [vmem:[#allocation10 + $0x2b0] sm:$0xff]
    %v6336 = vld [vmem:[#allocation10 + $0x2b8] sm:$0xff]
    %v6337 = vld [vmem:[#allocation10 + $0x2c0] sm:$0xff]
    %v6338 = vld [vmem:[#allocation10 + $0x2c8] sm:$0xff]
    %v6339 = vld [vmem:[#allocation10 + $0x2d0] sm:$0xff]
    %v6340 = vld [vmem:[#allocation10 + $0x2d8] sm:$0xff]
    %v6341 = vld [vmem:[#allocation10 + $0x2e0] sm:$0xff]
    %v6342 = vld [vmem:[#allocation10 + $0x2e8] sm:$0xff]
    %v6343 = vld [vmem:[#allocation10 + $0x2f0] sm:$0xff]
    %v6344 = vld [vmem:[#allocation10 + $0x2f8] sm:$0xff]
    %v6345 = vld [vmem:[#allocation10 + $0x300] sm:$0xff]
    %v6346 = vld [vmem:[#allocation10 + $0x308] sm:$0xff]
    %v6347 = vld [vmem:[#allocation10 + $0x310] sm:$0xff]
    %v6348 = vld [vmem:[#allocation10 + $0x318] sm:$0xff]
    %v6349 = vld [vmem:[#allocation10 + $0x320] sm:$0xff]
    %v6350 = vld [vmem:[#allocation10 + $0x328] sm:$0xff]
    %v6351 = vld [vmem:[#allocation10 + $0x330] sm:$0xff]
    %v6352 = vld [vmem:[#allocation10 + $0x338] sm:$0xff]
    %v6353 = vld [vmem:[#allocation10 + $0x340] sm:$0xff]
    %v6354 = vld [vmem:[#allocation10 + $0x348] sm:$0xff]
    %v6355 = vld [vmem:[#allocation10 + $0x350] sm:$0xff]
    %v6356 = vld [vmem:[#allocation10 + $0x358] sm:$0xff]
    %v6357 = vld [vmem:[#allocation10 + $0x360] sm:$0xff]
    %v6358 = vld [vmem:[#allocation10 + $0x368] sm:$0xff]
    %v6359 = vld [vmem:[#allocation10 + $0x370] sm:$0xff]
    %v6360 = vld [vmem:[#allocation10 + $0x378] sm:$0xff]
    %v6361 = vld [vmem:[#allocation10 + $0x380] sm:$0xff]
    %v6362 = vld [vmem:[#allocation10 + $0x388] sm:$0xff]
    %v6363 = vld [vmem:[#allocation10 + $0x390] sm:$0xff]
    %v6364 = vld [vmem:[#allocation10 + $0x398] sm:$0xff]
    %v6365 = vld [vmem:[#allocation10 + $0x3a0] sm:$0xff]
    %v6366 = vld [vmem:[#allocation10 + $0x3a8] sm:$0xff]
    %v6367 = vld [vmem:[#allocation10 + $0x3b0] sm:$0xff]
    %v6368 = vld [vmem:[#allocation10 + $0x3b8] sm:$0xff]
    %v6369 = vld [vmem:[#allocation10 + $0x3c0] sm:$0xff]
    %v6370 = vld [vmem:[#allocation10 + $0x3c8] sm:$0xff]
    %v6371 = vld [vmem:[#allocation10 + $0x3d0] sm:$0xff]
    %v6372 = vld [vmem:[#allocation10 + $0x3d8] sm:$0xff]
    %v6373 = vld [vmem:[#allocation10 + $0x3e0] sm:$0xff]
    %v6374 = vld [vmem:[#allocation10 + $0x3e8] sm:$0xff]
    %v6375 = vld [vmem:[#allocation10 + $0x3f0] sm:$0xff]
    %v6376 = vld [vmem:[#allocation10 + $0x3f8] sm:$0xff]
    %v6377 = vld [vmem:[%s6] sm:$0xf]
    %v6379 = vlaneseq
    %v6380 = vshrl.u32 %v6379, 7
    %v6381 = vsub.s32 0, %v6380
    %v6382 = vrot.slane %v6377, %v6381
    %v6383 = vlaneseq
    %v6384 = vshrl.u32 %v6383, 7
    %v6385 = vsub.s32 1, %v6384
    %v6386 = vrot.slane %v6377, %v6385
    %v6387 = vlaneseq
    %v6388 = vshrl.u32 %v6387, 7
    %v6389 = vsub.s32 2, %v6388
    %v6390 = vrot.slane %v6377, %v6389
    %v6391 = vlaneseq
    %v6392 = vshrl.u32 %v6391, 7
    %v6393 = vsub.s32 3, %v6392
    %v6394 = vrot.slane %v6377, %v6393
    %6399 = vmatprep.subr.bf16.mxu0 %v6250
    %6400 = vmatpush1.bf16.msra.mxu0 %v6249
    %6401 = vmatprep.subr.bf16.mxu0 %v6254
    %6402 = vmatpush1.bf16.msra.mxu0 %v6253
    %6403 = vmatprep.subr.bf16.mxu0 %v6258
    %6404 = vmatpush1.bf16.msra.mxu0 %v6257
    %6405 = vmatprep.subr.bf16.mxu0 %v6262
    %6406 = vmatpush1.bf16.msra.mxu0 %v6261
    %6407 = vmatprep.subr.bf16.mxu0 %v6266
    %6408 = vmatpush1.bf16.msra.mxu0 %v6265
    %6409 = vmatprep.subr.bf16.mxu0 %v6270
    %6410 = vmatpush1.bf16.msra.mxu0 %v6269
    %6411 = vmatprep.subr.bf16.mxu0 %v6274
    %6412 = vmatpush1.bf16.msra.mxu0 %v6273
    %6413 = vmatprep.subr.bf16.mxu0 %v6278
    %6414 = vmatpush1.bf16.msra.mxu0 %v6277
    %6415 = vmatprep.subr.bf16.mxu0 %v6282
    %6416 = vmatpush1.bf16.msra.mxu0 %v6281
    %6417 = vmatprep.subr.bf16.mxu0 %v6286
    %6418 = vmatpush1.bf16.msra.mxu0 %v6285
    %6419 = vmatprep.subr.bf16.mxu0 %v6290
    %6420 = vmatpush1.bf16.msra.mxu0 %v6289
    %6421 = vmatprep.subr.bf16.mxu0 %v6294
    %6422 = vmatpush1.bf16.msra.mxu0 %v6293
    %6423 = vmatprep.subr.bf16.mxu0 %v6298
    %6424 = vmatpush1.bf16.msra.mxu0 %v6297
    %6425 = vmatprep.subr.bf16.mxu0 %v6302
    %6426 = vmatpush1.bf16.msra.mxu0 %v6301
    %6427 = vmatprep.subr.bf16.mxu0 %v6306
    %6428 = vmatpush1.bf16.msra.mxu0 %v6305
    %6429 = vmatprep.subr.bf16.mxu0 %v6310
    %6430 = vmatpush1.bf16.msra.mxu0 %v6309
    %6431 = vmatprep.mubr.bf16.mxu0 %v6246
    %6432 = vmatmul.mubr.bf16.gmra.mrb[0].mxu0 %v6245
    %v6433 = vpop.f32.mrb[0].mxu0
    %v6434 = vadd.f32 %v6382, %v6433
    %v6435 = vpop.f32.mrb[0].mxu0
    %v6436 = vadd.f32 %v6386, %v6435
    %v6437 = vpop.f32.mrb[0].mxu0
    %v6438 = vpop.f32.mrb[0].mxu0
    %6439 = vdwg.mxu0
    %6440 = vmatprep.subr.bf16.mxu0 %v6314
    %6441 = vmatpush1.bf16.msra.mxu0 %v6313
    %6442 = vmatprep.subr.bf16.mxu0 %v6318
    %6443 = vmatpush1.bf16.msra.mxu0 %v6317
    %6444 = vmatprep.subr.bf16.mxu0 %v6322
    %6445 = vmatpush1.bf16.msra.mxu0 %v6321
    %6446 = vmatprep.subr.bf16.mxu0 %v6326
    %6447 = vmatpush1.bf16.msra.mxu0 %v6325
    %6448 = vmatprep.subr.bf16.mxu0 %v6330
    %6449 = vmatpush1.bf16.msra.mxu0 %v6329
    %6450 = vmatprep.subr.bf16.mxu0 %v6334
    %6451 = vmatpush1.bf16.msra.mxu0 %v6333
    %6452 = vmatprep.subr.bf16.mxu0 %v6338
    %6453 = vmatpush1.bf16.msra.mxu0 %v6337
    %6454 = vmatprep.subr.bf16.mxu0 %v6342
    %6455 = vmatpush1.bf16.msra.mxu0 %v6341
    %6456 = vmatprep.subr.bf16.mxu0 %v6346
    %6457 = vmatpush1.bf16.msra.mxu0 %v6345
    %6458 = vmatprep.subr.bf16.mxu0 %v6350
    %6459 = vmatpush1.bf16.msra.mxu0 %v6349
    %6460 = vmatprep.subr.bf16.mxu0 %v6354
    %6461 = vmatpush1.bf16.msra.mxu0 %v6353
    %6462 = vmatprep.subr.bf16.mxu0 %v6358
    %6463 = vmatpush1.bf16.msra.mxu0 %v6357
    %6464 = vmatprep.subr.bf16.mxu0 %v6362
    %6465 = vmatpush1.bf16.msra.mxu0 %v6361
    %6466 = vmatprep.subr.bf16.mxu0 %v6366
    %6467 = vmatpush1.bf16.msra.mxu0 %v6365
    %6468 = vmatprep.subr.bf16.mxu0 %v6370
    %6469 = vmatpush1.bf16.msra.mxu0 %v6369
    %6470 = vmatprep.subr.bf16.mxu0 %v6374
    %6471 = vmatpush1.bf16.msra.mxu0 %v6373
    %6472 = vmatprep.mubr.bf16.mxu0 %v6248
    %6473 = vmatmul.mubr.bf16.gmra.mrb[0].mxu0 %v6247
    %v6474 = vpop.f32.mrb[0].mxu0
    %v6475 = vadd.f32 %v6434, %v6474
    %v6476 = vpop.f32.mrb[0].mxu0
    %v6477 = vadd.f32 %v6436, %v6476
    %v6478 = vpop.f32.mrb[0].mxu0
    %v6479 = vpop.f32.mrb[0].mxu0
    %6480 = vdwg.mxu0
    %6481 = vmatprep.subr.bf16.mxu0 %v6252
    %6482 = vmatpush1.bf16.msra.mxu0 %v6251
    %6483 = vmatprep.subr.bf16.mxu0 %v6256
    %6484 = vmatpush1.bf16.msra.mxu0 %v6255
    %6485 = vmatprep.subr.bf16.mxu0 %v6260
    %6486 = vmatpush1.bf16.msra.mxu0 %v6259
    %6487 = vmatprep.subr.bf16.mxu0 %v6264
    %6488 = vmatpush1.bf16.msra.mxu0 %v6263
    %6489 = vmatprep.subr.bf16.mxu0 %v6268
    %6490 = vmatpush1.bf16.msra.mxu0 %v6267
    %6491 = vmatprep.subr.bf16.mxu0 %v6272
    %6492 = vmatpush1.bf16.msra.mxu0 %v6271
    %6493 = vmatprep.subr.bf16.mxu0 %v6276
    %6494 = vmatpush1.bf16.msra.mxu0 %v6275
    %6495 = vmatprep.subr.bf16.mxu0 %v6280
    %6496 = vmatpush1.bf16.msra.mxu0 %v6279
    %6497 = vmatprep.subr.bf16.mxu0 %v6284
    %6498 = vmatpush1.bf16.msra.mxu0 %v6283
    %6499 = vmatprep.subr.bf16.mxu0 %v6288
    %6500 = vmatpush1.bf16.msra.mxu0 %v6287
    %6501 = vmatprep.subr.bf16.mxu0 %v6292
    %6502 = vmatpush1.bf16.msra.mxu0 %v6291
    %6503 = vmatprep.subr.bf16.mxu0 %v6296
    %6504 = vmatpush1.bf16.msra.mxu0 %v6295
    %6505 = vmatprep.subr.bf16.mxu0 %v6300
    %6506 = vmatpush1.bf16.msra.mxu0 %v6299
    %6507 = vmatprep.subr.bf16.mxu0 %v6304
    %6508 = vmatpush1.bf16.msra.mxu0 %v6303
    %6509 = vmatprep.subr.bf16.mxu0 %v6308
    %6510 = vmatpush1.bf16.msra.mxu0 %v6307
    %6511 = vmatprep.subr.bf16.mxu0 %v6312
    %6512 = vmatpush1.bf16.msra.mxu0 %v6311
    %6513 = vmatprep.mubr.bf16.mxu0 %v6246
    %6514 = vmatmul.mubr.bf16.gmra.mrb[0].mxu0 %v6245
    %v6515 = vpop.f32.mrb[0].mxu0
    %v6516 = vadd.f32 %v6390, %v6515
    %v6517 = vpop.f32.mrb[0].mxu0
    %v6518 = vadd.f32 %v6394, %v6517
    %v6519 = vpop.f32.mrb[0].mxu0
    %v6520 = vpop.f32.mrb[0].mxu0
    %6521 = vdwg.mxu0
    %6522 = vmatprep.subr.bf16.mxu0 %v6316
    %6523 = vmatpush1.bf16.msra.mxu0 %v6315
    %6524 = vmatprep.subr.bf16.mxu0 %v6320
    %6525 = vmatpush1.bf16.msra.mxu0 %v6319
    %6526 = vmatprep.subr.bf16.mxu0 %v6324
    %6527 = vmatpush1.bf16.msra.mxu0 %v6323
    %6528 = vmatprep.subr.bf16.mxu0 %v6328
    %6529 = vmatpush1.bf16.msra.mxu0 %v6327
    %6530 = vmatprep.subr.bf16.mxu0 %v6332
    %6531 = vmatpush1.bf16.msra.mxu0 %v6331
    %6532 = vmatprep.subr.bf16.mxu0 %v6336
    %6533 = vmatpush1.bf16.msra.mxu0 %v6335
    %6534 = vmatprep.subr.bf16.mxu0 %v6340
    %6535 = vmatpush1.bf16.msra.mxu0 %v6339
    %6536 = vmatprep.subr.bf16.mxu0 %v6344
    %6537 = vmatpush1.bf16.msra.mxu0 %v6343
    %6538 = vmatprep.subr.bf16.mxu0 %v6348
    %6539 = vmatpush1.bf16.msra.mxu0 %v6347
    %6540 = vmatprep.subr.bf16.mxu0 %v6352
    %6541 = vmatpush1.bf16.msra.mxu0 %v6351
    %6542 = vmatprep.subr.bf16.mxu0 %v6356
    %6543 = vmatpush1.bf16.msra.mxu0 %v6355
    %6544 = vmatprep.subr.bf16.mxu0 %v6360
    %6545 = vmatpush1.bf16.msra.mxu0 %v6359
    %6546 = vmatprep.subr.bf16.mxu0 %v6364
    %6547 = vmatpush1.bf16.msra.mxu0 %v6363
    %6548 = vmatprep.subr.bf16.mxu0 %v6368
    %6549 = vmatpush1.bf16.msra.mxu0 %v6367
    %6550 = vmatprep.subr.bf16.mxu0 %v6372
    %6551 = vmatpush1.bf16.msra.mxu0 %v6371
    %6552 = vmatprep.subr.bf16.mxu0 %v6376
    %6553 = vmatpush1.bf16.msra.mxu0 %v6375
    %6554 = vmatprep.mubr.bf16.mxu0 %v6248
    %6555 = vmatmul.mubr.bf16.gmra.mrb[0].mxu0 %v6247
    %v6556 = vpop.f32.mrb[0].mxu0
    %v6557 = vadd.f32 %v6516, %v6556
    %v6558 = vpop.f32.mrb[0].mxu0
    %v6559 = vadd.f32 %v6518, %v6558
    %v6560 = vpop.f32.mrb[0].mxu0
    %v6561 = vpop.f32.mrb[0].mxu0
    %6562 = vdwg.mxu0
    %vm6563 = vcmp.gt.f32.partialorder %v6475, 0.0
    %vm6564 = vcmp.gt.f32.partialorder %v6477, 0.0
    %vm6565 = vcmp.gt.f32.partialorder %v6557, 0.0
    %vm6566 = vcmp.gt.f32.partialorder %v6559, 0.0
    %s6567 = sld [smem:[#allocation13 + $0x1]]
    %v6568 = vstv %s6567
    %v6569 = vmul.f32 %v6568, %v6475
    %v6570 = vmul.f32 %v6568, %v6477
    %v6571 = vmul.f32 %v6568, %v6557
    %v6572 = vmul.f32 %v6568, %v6559
    %v6573 = vsel %vm6563, %v6475, %v6569
    %v6574 = vsel %vm6564, %v6477, %v6570
    %v6575 = vsel %vm6565, %v6557, %v6571
    %v6576 = vsel %vm6566, %v6559, %v6572
    %s6577 = smul.u32 %s5881, 1
    %s6578 = sshll.u32 %s6577, 4
    %6579 = dma.done %s120, %s6578
    %v6580 = vpack.c.bf16 %v6573, %v6573
    %v6581 = vpack.c.bf16 %v6574, %v6574
    %v6582 = vpack.c.bf16 %v6575, %v6575
    %v6583 = vpack.c.bf16 %v6576, %v6576
    %v6584 = vld [vmem:[#allocation11] sm:$0xff]
    %v6585 = vld [vmem:[#allocation11 + $0x8] sm:$0xff]
    %v6586 = vld [vmem:[#allocation11 + $0x10] sm:$0xff]
    %v6587 = vld [vmem:[#allocation11 + $0x18] sm:$0xff]
    %v6588 = vld [vmem:[#allocation11 + $0x20] sm:$0xff]
    %v6589 = vld [vmem:[#allocation11 + $0x28] sm:$0xff]
    %v6590 = vld [vmem:[#allocation11 + $0x30] sm:$0xff]
    %v6591 = vld [vmem:[#allocation11 + $0x38] sm:$0xff]
    %v6592 = vld [vmem:[#allocation11 + $0x40] sm:$0xff]
    %v6593 = vld [vmem:[#allocation11 + $0x48] sm:$0xff]
    %v6594 = vld [vmem:[#allocation11 + $0x50] sm:$0xff]
    %v6595 = vld [vmem:[#allocation11 + $0x58] sm:$0xff]
    %v6596 = vld [vmem:[#allocation11 + $0x60] sm:$0xff]
    %v6597 = vld [vmem:[#allocation11 + $0x68] sm:$0xff]
    %v6598 = vld [vmem:[#allocation11 + $0x70] sm:$0xff]
    %v6599 = vld [vmem:[#allocation11 + $0x78] sm:$0xff]
    %v6600 = vld [vmem:[#allocation11 + $0x80] sm:$0xff]
    %v6601 = vld [vmem:[#allocation11 + $0x88] sm:$0xff]
    %v6602 = vld [vmem:[#allocation11 + $0x90] sm:$0xff]
    %v6603 = vld [vmem:[#allocation11 + $0x98] sm:$0xff]
    %v6604 = vld [vmem:[#allocation11 + $0xa0] sm:$0xff]
    %v6605 = vld [vmem:[#allocation11 + $0xa8] sm:$0xff]
    %v6606 = vld [vmem:[#allocation11 + $0xb0] sm:$0xff]
    %v6607 = vld [vmem:[#allocation11 + $0xb8] sm:$0xff]
    %v6608 = vld [vmem:[#allocation11 + $0xc0] sm:$0xff]
    %v6609 = vld [vmem:[#allocation11 + $0xc8] sm:$0xff]
    %v6610 = vld [vmem:[#allocation11 + $0xd0] sm:$0xff]
    %v6611 = vld [vmem:[#allocation11 + $0xd8] sm:$0xff]
    %v6612 = vld [vmem:[#allocation11 + $0xe0] sm:$0xff]
    %v6613 = vld [vmem:[#allocation11 + $0xe8] sm:$0xff]
    %v6614 = vld [vmem:[#allocation11 + $0xf0] sm:$0xff]
    %v6615 = vld [vmem:[#allocation11 + $0xf8] sm:$0xff]
    %v6616 = vld [vmem:[%s7] sm:$0x1]
    %v6618 = vlaneseq
    %v6619 = vshrl.u32 %v6618, 7
    %v6620 = vsub.s32 0, %v6619
    %v6621 = vrot.slane %v6616, %v6620
    %6623 = vmatprep.subr.bf16.mxu0 0
    %6624 = vmatpush1.bf16.msra.mxu0 %v6584
    %6625 = vmatprep.subr.bf16.mxu0 0
    %6626 = vmatpush1.bf16.msra.mxu0 %v6585
    %6627 = vmatprep.subr.bf16.mxu0 0
    %6628 = vmatpush1.bf16.msra.mxu0 %v6586
    %6629 = vmatprep.subr.bf16.mxu0 0
    %6630 = vmatpush1.bf16.msra.mxu0 %v6587
    %6631 = vmatprep.subr.bf16.mxu0 0
    %6632 = vmatpush1.bf16.msra.mxu0 %v6588
    %6633 = vmatprep.subr.bf16.mxu0 0
    %6634 = vmatpush1.bf16.msra.mxu0 %v6589
    %6635 = vmatprep.subr.bf16.mxu0 0
    %6636 = vmatpush1.bf16.msra.mxu0 %v6590
    %6637 = vmatprep.subr.bf16.mxu0 0
    %6638 = vmatpush1.bf16.msra.mxu0 %v6591
    %6639 = vmatprep.subr.bf16.mxu0 0
    %6640 = vmatpush1.bf16.msra.mxu0 %v6592
    %6641 = vmatprep.subr.bf16.mxu0 0
    %6642 = vmatpush1.bf16.msra.mxu0 %v6593
    %6643 = vmatprep.subr.bf16.mxu0 0
    %6644 = vmatpush1.bf16.msra.mxu0 %v6594
    %6645 = vmatprep.subr.bf16.mxu0 0
    %6646 = vmatpush1.bf16.msra.mxu0 %v6595
    %6647 = vmatprep.subr.bf16.mxu0 0
    %6648 = vmatpush1.bf16.msra.mxu0 %v6596
    %6649 = vmatprep.subr.bf16.mxu0 0
    %6650 = vmatpush1.bf16.msra.mxu0 %v6597
    %6651 = vmatprep.subr.bf16.mxu0 0
    %6652 = vmatpush1.bf16.msra.mxu0 %v6598
    %6653 = vmatprep.subr.bf16.mxu0 0
    %6654 = vmatpush1.bf16.msra.mxu0 %v6599
    %6655 = vmatprep.mubr.bf16.mxu0 %v6581
    %6656 = vmatmul.mubr.bf16.gmra.mrb[0].mxu0 %v6580
    %v6657 = vpop.f32.mrb[0].mxu0
    %v6658 = vadd.f32 %v6621, %v6657
    %v6659 = vpop.f32.mrb[0].mxu0
    %v6660 = vpop.f32.mrb[0].mxu0
    %v6661 = vpop.f32.mrb[0].mxu0
    %6662 = vdwg.mxu0
    %6663 = vmatprep.subr.bf16.mxu0 0
    %6664 = vmatpush1.bf16.msra.mxu0 %v6600
    %6665 = vmatprep.subr.bf16.mxu0 0
    %6666 = vmatpush1.bf16.msra.mxu0 %v6601
    %6667 = vmatprep.subr.bf16.mxu0 0
    %6668 = vmatpush1.bf16.msra.mxu0 %v6602
    %6669 = vmatprep.subr.bf16.mxu0 0
    %6670 = vmatpush1.bf16.msra.mxu0 %v6603
    %6671 = vmatprep.subr.bf16.mxu0 0
    %6672 = vmatpush1.bf16.msra.mxu0 %v6604
    %6673 = vmatprep.subr.bf16.mxu0 0
    %6674 = vmatpush1.bf16.msra.mxu0 %v6605
    %6675 = vmatprep.subr.bf16.mxu0 0
    %6676 = vmatpush1.bf16.msra.mxu0 %v6606
    %6677 = vmatprep.subr.bf16.mxu0 0
    %6678 = vmatpush1.bf16.msra.mxu0 %v6607
    %6679 = vmatprep.subr.bf16.mxu0 0
    %6680 = vmatpush1.bf16.msra.mxu0 %v6608
    %6681 = vmatprep.subr.bf16.mxu0 0
    %6682 = vmatpush1.bf16.msra.mxu0 %v6609
    %6683 = vmatprep.subr.bf16.mxu0 0
    %6684 = vmatpush1.bf16.msra.mxu0 %v6610
    %6685 = vmatprep.subr.bf16.mxu0 0
    %6686 = vmatpush1.bf16.msra.mxu0 %v6611
    %6687 = vmatprep.subr.bf16.mxu0 0
    %6688 = vmatpush1.bf16.msra.mxu0 %v6612
    %6689 = vmatprep.subr.bf16.mxu0 0
    %6690 = vmatpush1.bf16.msra.mxu0 %v6613
    %6691 = vmatprep.subr.bf16.mxu0 0
    %6692 = vmatpush1.bf16.msra.mxu0 %v6614
    %6693 = vmatprep.subr.bf16.mxu0 0
    %6694 = vmatpush1.bf16.msra.mxu0 %v6615
    %6695 = vmatprep.mubr.bf16.mxu0 %v6583
    %6696 = vmatmul.mubr.bf16.gmra.mrb[0].mxu0 %v6582
    %v6697 = vpop.f32.mrb[0].mxu0
    %v6698 = vadd.f32 %v6658, %v6697
    %v6699 = vpop.f32.mrb[0].mxu0
    %v6700 = vpop.f32.mrb[0].mxu0
    %v6701 = vpop.f32.mrb[0].mxu0
    %6702 = vdwg.mxu0
    %6703 = vst [vmem:[#allocation16] sm:$0x3] %v6698
    // Predicated region
    $region76: #{vgg_forward.1} parent=1 // pred_check
      _
    $region77: #{vgg_forward.1} parent=1 // pred_check_branch
      %6705 = sbr.rel (0) target = $region79
    $region78: #{vgg_forward.1} parent=1 // pred_region
      %s6707 = ssub.s32 32, 32
      %6708 = vsyncadd [#allocation14], %s6707
      %s6710 = sshll.u32 [#allocation16], 4
      %s6711 = int_to_ptr.vmem [resolvable:$true] %s6710
      %6713 = dma.vmem_to_hbm [thread:$0]  %s6711, 32, %s12, [#allocation14]
    $region79: #{vgg_forward.1} parent=1 // pred_fallthru
      _
    // Predicated region
    $region80: #{vgg_forward.1} parent=1 // pred_check
      _
    $region81: #{vgg_forward.1} parent=1 // pred_check_branch
      %6715 = sbr.rel (0) target = $region83
    $region82: #{vgg_forward.1} parent=1 // pred_region
      %6716 = dma.done [#allocation14], 32
    $region83: #{vgg_forward.1} parent=1 // pred_fallthru
      _
    %6717 = vsyncpa [#allocation14], 1
    %6718 = vsyncpa [#allocation15], 1
  %6719 = vsyncmov [#allocation12]
  %s6720 = vpop.sfrf %6719
  %p6721 = scmp.eq.s32.totalorder %s6720, 0
  %p6722 = pneg %p6721
  %6724 = shalt.err (%p6722)
  %s6725 = scalar_lea.sflag [#allocation12], 1
  %6726 = vsyncmov %s6725
  %s6727 = vpop.sfrf %6726
  %p6728 = scmp.eq.s32.totalorder %s6727, 0
  %p6729 = pneg %p6728
  %6731 = shalt.err (%p6729)
  %s6732 = scalar_lea.sflag [#allocation12], 2
  %6733 = vsyncmov %s6732
  %s6734 = vpop.sfrf %6733
  %p6735 = scmp.eq.s32.totalorder %s6734, 0
  %p6736 = pneg %p6735
  %6738 = shalt.err (%p6736)

</llo_original>
